<compile_context>
chip_gen: v6e
topology: v6e:2x2x1
jax: 0.10.0
libtpu: 0.0.40
codegen_flags: <defaults>
</compile_context>

<pallas_src>
import functools

import jax
import jax.numpy as jnp
from jax import lax
from jax.experimental import pallas as pl
from jax.experimental.pallas import tpu as pltpu


# ----------------------------------------------------------------------------
# Fused Pallas kernel: 3 GAT layers + global mean pool + MLP decoder
# ----------------------------------------------------------------------------
def _fused_gat_ae_kernel(x_ref, adjb_ref, pool_ref,
                         w1_ref, as1_ref, ad1_ref, b1_ref,
                         w2_ref, as2_ref, ad2_ref, b2_ref,
                         w3_ref, as3_ref, ad3_ref, b3_ref,
                         hmask_ref, dw1_ref, db1_ref, dw2_ref, db2_ref,
                         xr_ref, z_ref,
                         ew_ref, hbd_ref, *,
                         heads, negative_slope):
    n = x_ref.shape[0]
    hmask = hmask_ref[...]            # [H, H*F] 0/1 head-column masks (hoisted)

    def leaky(v):
        return jnp.where(v > 0, v, negative_slope * v)

    def elu(v):
        return jnp.where(v > 0, v, jnp.exp(v) - 1.0)

    def concat_gat_layer(h_in, w_ref, as_ref, ad_ref, b_ref):
        # Feature transform on the MXU: bf16 operands, f32 accumulation.
        h = jnp.dot(h_in.astype(jnp.bfloat16), w_ref[...],
                    preferred_element_type=jnp.float32)                    # [N, H*F]

        # Attention-logit projections (degenerate output dim = H: negligible
        # MXU work, kept f32 so the softmax logits stay accurate).
        a_src_t = lax.dot_general(as_ref[...], h, (((1,), (1,)), ((), ())),
                                  preferred_element_type=jnp.float32)      # [H, N]
        a_dst = jnp.dot(h, ad_ref[...],
                        preferred_element_type=jnp.float32)                # [N, H]

        # Stage per-head raw logits and the block-diagonal RHS directly into
        # VMEM scratch (no jnp.concatenate: live vregs stay one head wide).
        for hd in range(heads):
            ew_ref[:, hd * n:(hd + 1) * n] = (a_dst[:, hd:hd + 1]
                                              + a_src_t[hd:hd + 1, :])
            hbd_ref[hd * n:(hd + 1) * n, :] = (
                h * hmask[hd:hd + 1, :]).astype(jnp.bfloat16)

        # One wide elementwise/EUP pass over all heads at once:
        # LeakyReLU, additive adjacency mask, max-shift, exp.  Per-head
        # softmax is shift-invariant, so the global row max is a valid shift.
        e = leaky(ew_ref[...]) + adjb_ref[...]                             # [N, H*N]
        e = e - jnp.max(e, axis=-1, keepdims=True)
        ew_ref[...] = jnp.exp(e)

        # Exact per-head softmax denominators (tiny XLU reductions); broadcast
        # 1/denominator to each head's F-wide output block via the head mask.
        inv_wide = None
        for hd in range(heads):
            denom = jnp.sum(ew_ref[:, hd * n:(hd + 1) * n],
                            axis=-1, keepdims=True)                        # [N, 1]
            term = (1.0 / denom) * hmask[hd:hd + 1, :]                     # [N, H*F]
            inv_wide = term if inv_wide is None else inv_wide + term

        # All-heads neighborhood aggregation as ONE lane-dense block-diagonal
        # bf16 matmul; normalization folded in after the matmul (aggregation
        # is linear in the unnormalized weights, so this is identical).
        o = jnp.dot(ew_ref[...].astype(jnp.bfloat16), hbd_ref[...],
                    preferred_element_type=jnp.float32)                    # [N, H*F]
        return elu(o * inv_wide + b_ref[...])

    # ---- encoder: two concat GAT layers + ELU -------------------------------
    h1 = concat_gat_layer(x_ref[...], w1_ref, as1_ref, ad1_ref, b1_ref)
    h2 = concat_gat_layer(h1, w2_ref, as2_ref, ad2_ref, b2_ref)

    # ---- layer 3: single head, mean aggregation (identity for 1 head),
    #      no ELU; latent width zero-padded to 128 lanes (lane-dense tiles).
    h3p = jnp.dot(h2.astype(jnp.bfloat16), w3_ref[...],
                  preferred_element_type=jnp.float32)                      # [N, 128]
    a_src_t3 = lax.dot_general(as3_ref[...], h3p, (((1,), (1,)), ((), ())),
                               preferred_element_type=jnp.float32)         # [1, N]
    a_dst3 = jnp.dot(h3p, ad3_ref[...],
                     preferred_element_type=jnp.float32)                   # [N, 1]
    e3 = leaky(a_dst3 + a_src_t3) + adjb_ref[:, :n]     # head-0 block of the mask
    e3 = e3 - jnp.max(e3, axis=-1, keepdims=True)
    p3 = jnp.exp(e3)
    inv3 = 1.0 / jnp.sum(p3, axis=-1, keepdims=True)                       # exact
    h3 = (jnp.dot(p3.astype(jnp.bfloat16), h3p.astype(jnp.bfloat16),
                  preferred_element_type=jnp.float32) * inv3
          + b3_ref[...])                                                   # [N, 128]

    # ---- global_mean_pool (matmul with pooling matrix) + MLP decoder --------
    z = jnp.dot(pool_ref[...], h3, preferred_element_type=jnp.float32)     # [B, 128]
    z_ref[...] = z[:, :z_ref.shape[1]]                                     # [B, 16]
    a1 = jnp.maximum(
        jnp.dot(z, dw1_ref[...], preferred_element_type=jnp.float32)
        + db1_ref[...], 0.0)                                               # ReLU
    xr_ref[...] = (jnp.dot(a1, dw2_ref[...], preferred_element_type=jnp.float32)
                   + db2_ref[...])


# ----------------------------------------------------------------------------
# Wrapper
# ----------------------------------------------------------------------------
def _vmem():
    return pl.BlockSpec(memory_space=pltpu.MemorySpace.VMEM)


def gat_autoencoder_forward(prep, x, adj_bias_wide, pool, *, heads=4,
                            hidden_dim=32, latent_dim=16):
    """Single fused pallas_call for the whole forward pass.

    `adj_bias_wide` is the additive softmax mask pre-tiled across heads:
    shape [N, heads * N], 0 where there is an edge / self loop, -1e9 elsewhere.
    """
    num_graphs = pool.shape[0]
    n, input_dim = x.shape
    kernel = functools.partial(_fused_gat_ae_kernel, heads=heads,
                               negative_slope=0.2)
    x_recon, z = pl.pallas_call(
        kernel,
        out_shape=(jax.ShapeDtypeStruct((num_graphs, input_dim), jnp.float32),
                   jax.ShapeDtypeStruct((num_graphs, latent_dim), jnp.float32)),
        in_specs=[_vmem() for _ in range(20)],
        out_specs=(_vmem(), _vmem()),
        scratch_shapes=[
            # wide logits / softmax numerators for all heads, [N, H*N] f32
            pltpu.VMEM((n, heads * n), jnp.float32),
            # block-diagonal aggregation RHS, [H*N, H*F] bf16
            pltpu.VMEM((heads * n, heads * hidden_dim), jnp.bfloat16),
        ],
    )(x, adj_bias_wide, pool,
      prep["w1"], prep["as1"], prep["ad1"], prep["b1"],
      prep["w2"], prep["as2"], prep["ad2"], prep["b2"],
      prep["w3"], prep["as3"], prep["ad3"], prep["b3"],
      prep["hmask"], prep["dw1"], prep["db1"], prep["dw2"], prep["db2"])
    return x_recon, z      # matches PyTorch return order (x_recon, z)


def prepare_params(params, heads=4, hidden_dim=32, latent_dim=16,
                   latent_pad=128):
    """One-time packing: block attention matrices, bf16 weights, head masks,
    and zero-padding of the 16-wide latent path to 128 lanes."""
    def block_attn(a_src, a_dst, n_heads, f_out, pad_to=None):
        dim = n_heads * f_out
        asrcT = jnp.zeros((n_heads, dim), jnp.float32)
        adstM = jnp.zeros((dim, n_heads), jnp.float32)
        for hd in range(n_heads):
            asrcT = asrcT.at[hd, hd * f_out:(hd + 1) * f_out].set(a_src[hd])
            adstM = adstM.at[hd * f_out:(hd + 1) * f_out, hd].set(a_dst[hd])
        if pad_to is not None and pad_to > dim:
            asrcT = jnp.pad(asrcT, ((0, 0), (0, pad_to - dim)))
            adstM = jnp.pad(adstM, ((0, pad_to - dim), (0, 0)))
        return asrcT, adstM

    hf = heads * hidden_dim
    as1, ad1 = block_attn(params["as1"], params["ad1"], heads, hidden_dim)
    as2, ad2 = block_attn(params["as2"], params["ad2"], heads, hidden_dim)
    as3, ad3 = block_attn(params["as3"], params["ad3"], 1, latent_dim,
                          pad_to=latent_pad)
    # 0/1 head-column mask [H, H*F]: 1 where output column belongs to head hd.
    hmask = (jnp.arange(hf)[None, :] // hidden_dim
             == jnp.arange(heads)[:, None]).astype(jnp.float32)
    pad_l = latent_pad - latent_dim
    return {
        "w1": params["w1"].astype(jnp.bfloat16), "as1": as1, "ad1": ad1,
        "b1": params["b1"].reshape(1, -1).astype(jnp.float32),
        "w2": params["w2"].astype(jnp.bfloat16), "as2": as2, "ad2": ad2,
        "b2": params["b2"].reshape(1, -1).astype(jnp.float32),
        "w3": jnp.pad(params["w3"], ((0, 0), (0, pad_l))).astype(jnp.bfloat16),
        "as3": as3, "ad3": ad3,
        "b3": jnp.pad(params["b3"], (0, pad_l)).reshape(1, -1).astype(jnp.float32),
        "hmask": hmask,
        "dw1": jnp.pad(params["dw1"], ((0, pad_l), (0, 0))).astype(jnp.float32),
        "db1": params["db1"].reshape(1, -1).astype(jnp.float32),
        "dw2": params["dw2"].astype(jnp.float32),
        "db2": params["db2"].reshape(1, -1).astype(jnp.float32),
    }


# ----------------------------------------------------------------------------
# Pure-JAX reference (correctness check)
# ----------------------------------------------------------------------------
def _gat_layer_ref(x, w, a_src, a_dst, bias, adj, heads, f_out, concat,
                   apply_elu, slope=0.2):
    h = x @ w
    outs = []
    for hd in range(heads):
        h_h = h[:, hd * f_out:(hd + 1) * f_out]
        al_s = h_h @ a_src[hd]
        al_d = h_h @ a_dst[hd]
        e = al_d[:, None] + al_s[None, :]
        e = jnp.where(e > 0, e, slope * e)
        e = jnp.where(adj > 0, e, -1e9)
        e = e - e.max(-1, keepdims=True)
        p = jnp.exp(e)
        outs.append((p / p.sum(-1, keepdims=True)) @ h_h)
    o = (jnp.concatenate(outs, -1) if concat else sum(outs) / heads) + bias
    if apply_elu:
        o = jnp.where(o > 0, o, jnp.exp(o) - 1.0)
    return o


def _forward_ref(params, x, adj, pool):
    h1 = _gat_layer_ref(x, params["w1"], params["as1"], params["ad1"],
                        params["b1"], adj, 4, 32, True, True)
    h2 = _gat_layer_ref(h1, params["w2"], params["as2"], params["ad2"],
                        params["b2"], adj, 4, 32, True, True)
    h3 = _gat_layer_ref(h2, params["w3"], params["as3"], params["ad3"],
                        params["b3"], adj, 1, 16, False, False)
    z = pool @ h3
    a1 = jnp.maximum(z @ params["dw1"] + params["db1"], 0.0)
    return a1 @ params["dw2"] + params["db2"], z


# ----------------------------------------------------------------------------
# Deterministic parameter / graph construction
# ----------------------------------------------------------------------------
def _glorot(key, shape):
    scale = jnp.sqrt(2.0 / (shape[0] + shape[-1]))
    return (jax.random.normal(key, shape) * scale).astype(jnp.float32)


def make_params(key, input_dim=2, hidden_dim=32, latent_dim=16, heads=4):
    ks = jax.random.split(key, 16)
    hf = heads * hidden_dim
    return {
        "w1": _glorot(ks[0], (input_dim, hf)),
        "as1": _glorot(ks[1], (heads, hidden_dim)),
        "ad1": _glorot(ks[2], (heads, hidden_dim)),
        "b1": jnp.zeros((hf,), jnp.float32),
        "w2": _glorot(ks[3], (hf, hf)),
        "as2": _glorot(ks[4], (heads, hidden_dim)),
        "ad2": _glorot(ks[5], (heads, hidden_dim)),
        "b2": jnp.zeros((hf,), jnp.float32),
        "w3": _glorot(ks[6], (hf, latent_dim)),
        "as3": _glorot(ks[7], (1, latent_dim)),
        "ad3": _glorot(ks[8], (1, latent_dim)),
        "b3": jnp.zeros((latent_dim,), jnp.float32),
        "dw1": _glorot(ks[9], (latent_dim, 32)),
        "db1": jnp.zeros((32,), jnp.float32),
        "dw2": _glorot(ks[10], (32, input_dim)),
        "db2": jnp.zeros((input_dim,), jnp.float32),
    }


if __name__ == "__main__":
    NUM_GRAPHS = 2
    NODES_PER_GRAPH = 64
    N = NUM_GRAPHS * NODES_PER_GRAPH
    INPUT_DIM = 2
    HEADS = 4
    EDGES_PER_GRAPH = 200

    root = jax.random.PRNGKey(0)
    k_x, k_e, k_p = jax.random.split(root, 3)

    x = jax.random.normal(k_x, (N, INPUT_DIM), jnp.float32)

    # Synthetic symmetric adjacency with self loops, edges only within graphs.
    adj = jnp.zeros((N, N), jnp.float32)
    edge_keys = jax.random.split(k_e, NUM_GRAPHS)
    for g in range(NUM_GRAPHS):
        ks, kd = jax.random.split(edge_keys[g])
        off = g * NODES_PER_GRAPH
        src = jax.random.randint(ks, (EDGES_PER_GRAPH,), 0, NODES_PER_GRAPH) + off
        dst = jax.random.randint(kd, (EDGES_PER_GRAPH,), 0, NODES_PER_GRAPH) + off
        adj = adj.at[dst, src].set(1.0)
        adj = adj.at[src, dst].set(1.0)
    # Self loops are required: every row must have >=1 unmasked entry so the
    # softmax denominator is never zero.
    adj = jnp.maximum(adj, jnp.eye(N, dtype=jnp.float32))

    # Additive softmax mask (0 where edge/self loop, -1e9 elsewhere),
    # pre-tiled across heads once: [N, HEADS * N].
    adj_bias = (adj - 1.0) * 1e9
    adj_bias_wide = jnp.tile(adj_bias, (1, HEADS))

    # batch -> mean-pooling matrix [NUM_GRAPHS, N]
    batch = jnp.repeat(jnp.arange(NUM_GRAPHS), NODES_PER_GRAPH)
    pool = (jax.nn.one_hot(batch, NUM_GRAPHS, dtype=jnp.float32).T
            / float(NODES_PER_GRAPH))

    params = make_params(k_p, input_dim=INPUT_DIM, hidden_dim=32,
                         latent_dim=16, heads=HEADS)
    prep = prepare_params(params, heads=HEADS, hidden_dim=32, latent_dim=16)

    x_recon, z = gat_autoencoder_forward(prep, x, adj_bias_wide, pool,
                                         heads=HEADS, hidden_dim=32,
                                         latent_dim=16)
    jax.block_until_ready((x_recon, z))

    x_recon_ref, z_ref = _forward_ref(params, x, adj, pool)
    assert x_recon.shape == (NUM_GRAPHS, INPUT_DIM)
    assert z.shape == (NUM_GRAPHS, 16)
    # Tolerance accounts for bf16 MXU operands on the feature-transform and
    # aggregation matmuls (softmax elementwise math and normalization are
    # exact f32), accumulated over 3 layers.
    assert jnp.allclose(z, z_ref, rtol=2e-2, atol=2e-2)
    assert jnp.allclose(x_recon, x_recon_ref, rtol=2e-2, atol=2e-2)

    print("KERNEL_OK")
</pallas_src>

<mosaic_0001>
module attributes {stable_mosaic.version = 11 : i64} {
  func.func @_fused_gat_ae_kernel(%arg0: memref<128x2xf32, #tpu.memory_space<vmem>>, %arg1: memref<128x512xf32, #tpu.memory_space<vmem>>, %arg2: memref<2x128xf32, #tpu.memory_space<vmem>>, %arg3: memref<2x128xbf16, #tpu.memory_space<vmem>>, %arg4: memref<4x128xf32, #tpu.memory_space<vmem>>, %arg5: memref<128x4xf32, #tpu.memory_space<vmem>>, %arg6: memref<1x128xf32, #tpu.memory_space<vmem>>, %arg7: memref<128x128xbf16, #tpu.memory_space<vmem>>, %arg8: memref<4x128xf32, #tpu.memory_space<vmem>>, %arg9: memref<128x4xf32, #tpu.memory_space<vmem>>, %arg10: memref<1x128xf32, #tpu.memory_space<vmem>>, %arg11: memref<128x128xbf16, #tpu.memory_space<vmem>>, %arg12: memref<1x128xf32, #tpu.memory_space<vmem>>, %arg13: memref<128x1xf32, #tpu.memory_space<vmem>>, %arg14: memref<1x128xf32, #tpu.memory_space<vmem>>, %arg15: memref<4x128xf32, #tpu.memory_space<vmem>>, %arg16: memref<128x32xf32, #tpu.memory_space<vmem>>, %arg17: memref<1x32xf32, #tpu.memory_space<vmem>>, %arg18: memref<32x2xf32, #tpu.memory_space<vmem>>, %arg19: memref<1x2xf32, #tpu.memory_space<vmem>>, %arg20: memref<2x2xf32, #tpu.memory_space<vmem>>, %arg21: memref<2x16xf32, #tpu.memory_space<vmem>>, %arg22: memref<128x512xf32, #tpu.memory_space<vmem>>, %arg23: memref<512x128xbf16, #tpu.memory_space<vmem>>) attributes {dimension_semantics = [], scalar_prefetch = 0 : i64, scratch_operands = 2 : i64, tpu.core_type = #tpu.core_type<tc>} {
    %c0 = arith.constant 0 : index
    %c0_0 = arith.constant 0 : index
    %0 = vector.load %arg15[%c0, %c0_0] : memref<4x128xf32, #tpu.memory_space<vmem>>, vector<4x128xf32>
    %c0_1 = arith.constant 0 : index
    %c0_2 = arith.constant 0 : index
    %1 = vector.load %arg0[%c0_1, %c0_2] : memref<128x2xf32, #tpu.memory_space<vmem>>, vector<128x2xf32>
    %2 = arith.truncf %1 : vector<128x2xf32> to vector<128x2xbf16>
    %c0_3 = arith.constant 0 : index
    %c0_4 = arith.constant 0 : index
    %3 = vector.load %arg3[%c0_3, %c0_4] : memref<2x128xbf16, #tpu.memory_space<vmem>>, vector<2x128xbf16>
    %cst = arith.constant dense<0.000000e+00> : vector<128x128xf32>
    %4 = tpu.matmul %2, %3, %cst {dimension_numbers = #tpu.dot_dimension_numbers<[1], [0], [0], [1], [0, 0, 1, 1], [], []>} : vector<128x2xbf16>, vector<2x128xbf16>, vector<128x128xf32> -> vector<128x128xf32>
    %c0_5 = arith.constant 0 : index
    %c0_6 = arith.constant 0 : index
    %5 = vector.load %arg4[%c0_5, %c0_6] : memref<4x128xf32, #tpu.memory_space<vmem>>, vector<4x128xf32>
    %cst_7 = arith.constant dense<0.000000e+00> : vector<4x128xf32>
    %6 = tpu.matmul %5, %4, %cst_7 {dimension_numbers = #tpu.dot_dimension_numbers<[1], [1], [0], [0], [0, 0, 1, 0], [], []>} : vector<4x128xf32>, vector<128x128xf32>, vector<4x128xf32> -> vector<4x128xf32>
    %c0_8 = arith.constant 0 : index
    %c0_9 = arith.constant 0 : index
    %7 = vector.load %arg5[%c0_8, %c0_9] : memref<128x4xf32, #tpu.memory_space<vmem>>, vector<128x4xf32>
    %cst_10 = arith.constant dense<0.000000e+00> : vector<128x4xf32>
    %8 = tpu.matmul %4, %7, %cst_10 {dimension_numbers = #tpu.dot_dimension_numbers<[1], [0], [0], [1], [0, 0, 1, 1], [], []>} : vector<128x128xf32>, vector<128x4xf32>, vector<128x4xf32> -> vector<128x4xf32>
    %9 = vector.extract_strided_slice %8 {offsets = [0, 0], sizes = [128, 1], strides = [1, 1]} : vector<128x4xf32> to vector<128x1xf32>
    %10 = vector.extract_strided_slice %6 {offsets = [0, 0], sizes = [1, 128], strides = [1, 1]} : vector<4x128xf32> to vector<1x128xf32>
    %11 = vector.broadcast %9 : vector<128x1xf32> to vector<128x128xf32>
    %12 = vector.broadcast %10 : vector<1x128xf32> to vector<128x128xf32>
    %13 = arith.addf %11, %12 : vector<128x128xf32>
    %c0_11 = arith.constant 0 : index
    %c0_12 = arith.constant 0 : index
    %14 = vector.load %arg22[%c0_11, %c0_12] : memref<128x512xf32, #tpu.memory_space<vmem>>, vector<128x128xf32>
    tpu.vector_store %arg22[%c0_11, %c0_12], %13 {strides = array<i32>} : memref<128x512xf32, #tpu.memory_space<vmem>>, vector<128x128xf32>,
    %15 = vector.extract_strided_slice %0 {offsets = [0, 0], sizes = [1, 128], strides = [1, 1]} : vector<4x128xf32> to vector<1x128xf32>
    %16 = vector.broadcast %15 : vector<1x128xf32> to vector<128x128xf32>
    %17 = arith.mulf %4, %16 : vector<128x128xf32>
    %18 = arith.truncf %17 : vector<128x128xf32> to vector<128x128xbf16>
    %c0_13 = arith.constant 0 : index
    %c0_14 = arith.constant 0 : index
    %19 = vector.load %arg23[%c0_13, %c0_14] : memref<512x128xbf16, #tpu.memory_space<vmem>>, vector<128x128xbf16>
    tpu.vector_store %arg23[%c0_13, %c0_14], %18 {strides = array<i32>} : memref<512x128xbf16, #tpu.memory_space<vmem>>, vector<128x128xbf16>,
    %20 = vector.extract_strided_slice %8 {offsets = [0, 1], sizes = [128, 1], strides = [1, 1]} : vector<128x4xf32> to vector<128x1xf32>
    %21 = vector.extract_strided_slice %6 {offsets = [1, 0], sizes = [1, 128], strides = [1, 1]} : vector<4x128xf32> to vector<1x128xf32>
    %22 = vector.broadcast %20 : vector<128x1xf32> to vector<128x128xf32>
    %23 = vector.broadcast %21 : vector<1x128xf32> to vector<128x128xf32>
    %24 = arith.addf %22, %23 : vector<128x128xf32>
    %c0_15 = arith.constant 0 : index
    %c128 = arith.constant 128 : index
    %25 = vector.load %arg22[%c0_15, %c128] : memref<128x512xf32, #tpu.memory_space<vmem>>, vector<128x128xf32>
    tpu.vector_store %arg22[%c0_15, %c128], %24 {strides = array<i32>} : memref<128x512xf32, #tpu.memory_space<vmem>>, vector<128x128xf32>,
    %26 = vector.extract_strided_slice %0 {offsets = [1, 0], sizes = [1, 128], strides = [1, 1]} : vector<4x128xf32> to vector<1x128xf32>
    %27 = vector.broadcast %26 : vector<1x128xf32> to vector<128x128xf32>
    %28 = arith.mulf %4, %27 : vector<128x128xf32>
    %29 = arith.truncf %28 : vector<128x128xf32> to vector<128x128xbf16>
    %c128_16 = arith.constant 128 : index
    %c0_17 = arith.constant 0 : index
    %30 = vector.load %arg23[%c128_16, %c0_17] : memref<512x128xbf16, #tpu.memory_space<vmem>>, vector<128x128xbf16>
    tpu.vector_store %arg23[%c128_16, %c0_17], %29 {strides = array<i32>} : memref<512x128xbf16, #tpu.memory_space<vmem>>, vector<128x128xbf16>,
    %31 = vector.extract_strided_slice %8 {offsets = [0, 2], sizes = [128, 1], strides = [1, 1]} : vector<128x4xf32> to vector<128x1xf32>
    %32 = vector.extract_strided_slice %6 {offsets = [2, 0], sizes = [1, 128], strides = [1, 1]} : vector<4x128xf32> to vector<1x128xf32>
    %33 = vector.broadcast %31 : vector<128x1xf32> to vector<128x128xf32>
    %34 = vector.broadcast %32 : vector<1x128xf32> to vector<128x128xf32>
    %35 = arith.addf %33, %34 : vector<128x128xf32>
    %c0_18 = arith.constant 0 : index
    %c256 = arith.constant 256 : index
    %36 = vector.load %arg22[%c0_18, %c256] : memref<128x512xf32, #tpu.memory_space<vmem>>, vector<128x128xf32>
    tpu.vector_store %arg22[%c0_18, %c256], %35 {strides = array<i32>} : memref<128x512xf32, #tpu.memory_space<vmem>>, vector<128x128xf32>,
    %37 = vector.extract_strided_slice %0 {offsets = [2, 0], sizes = [1, 128], strides = [1, 1]} : vector<4x128xf32> to vector<1x128xf32>
    %38 = vector.broadcast %37 : vector<1x128xf32> to vector<128x128xf32>
    %39 = arith.mulf %4, %38 : vector<128x128xf32>
    %40 = arith.truncf %39 : vector<128x128xf32> to vector<128x128xbf16>
    %c256_19 = arith.constant 256 : index
    %c0_20 = arith.constant 0 : index
    %41 = vector.load %arg23[%c256_19, %c0_20] : memref<512x128xbf16, #tpu.memory_space<vmem>>, vector<128x128xbf16>
    tpu.vector_store %arg23[%c256_19, %c0_20], %40 {strides = array<i32>} : memref<512x128xbf16, #tpu.memory_space<vmem>>, vector<128x128xbf16>,
    %42 = vector.extract_strided_slice %8 {offsets = [0, 3], sizes = [128, 1], strides = [1, 1]} : vector<128x4xf32> to vector<128x1xf32>
    %43 = vector.extract_strided_slice %6 {offsets = [3, 0], sizes = [1, 128], strides = [1, 1]} : vector<4x128xf32> to vector<1x128xf32>
    %44 = vector.broadcast %42 : vector<128x1xf32> to vector<128x128xf32>
    %45 = vector.broadcast %43 : vector<1x128xf32> to vector<128x128xf32>
    %46 = arith.addf %44, %45 : vector<128x128xf32>
    %c0_21 = arith.constant 0 : index
    %c384 = arith.constant 384 : index
    %47 = vector.load %arg22[%c0_21, %c384] : memref<128x512xf32, #tpu.memory_space<vmem>>, vector<128x128xf32>
    tpu.vector_store %arg22[%c0_21, %c384], %46 {strides = array<i32>} : memref<128x512xf32, #tpu.memory_space<vmem>>, vector<128x128xf32>,
    %48 = vector.extract_strided_slice %0 {offsets = [3, 0], sizes = [1, 128], strides = [1, 1]} : vector<4x128xf32> to vector<1x128xf32>
    %49 = vector.broadcast %48 : vector<1x128xf32> to vector<128x128xf32>
    %50 = arith.mulf %4, %49 : vector<128x128xf32>
    %51 = arith.truncf %50 : vector<128x128xf32> to vector<128x128xbf16>
    %c384_22 = arith.constant 384 : index
    %c0_23 = arith.constant 0 : index
    %52 = vector.load %arg23[%c384_22, %c0_23] : memref<512x128xbf16, #tpu.memory_space<vmem>>, vector<128x128xbf16>
    tpu.vector_store %arg23[%c384_22, %c0_23], %51 {strides = array<i32>} : memref<512x128xbf16, #tpu.memory_space<vmem>>, vector<128x128xbf16>,
    %c0_24 = arith.constant 0 : index
    %c0_25 = arith.constant 0 : index
    %53 = vector.load %arg22[%c0_24, %c0_25] : memref<128x512xf32, #tpu.memory_space<vmem>>, vector<128x512xf32>
    %cst_26 = arith.constant 0.000000e+00 : f32
    %54 = vector.broadcast %cst_26 : f32 to vector<128x512xf32>
    %55 = arith.cmpf ogt, %53, %54 : vector<128x512xf32>
    %cst_27 = arith.constant 2.000000e-01 : f32
    %56 = vector.broadcast %cst_27 : f32 to vector<128x512xf32>
    %57 = arith.mulf %56, %53 : vector<128x512xf32>
    %58 = arith.select %55, %53, %57 : vector<128x512xi1>, vector<128x512xf32>
    %c0_28 = arith.constant 0 : index
    %c0_29 = arith.constant 0 : index
    %59 = vector.load %arg1[%c0_28, %c0_29] : memref<128x512xf32, #tpu.memory_space<vmem>>, vector<128x512xf32>
    %60 = arith.addf %58, %59 : vector<128x512xf32>
    %cst_30 = arith.constant dense<0xFF800000> : vector<128xf32>
    %61 = vector.multi_reduction <maximumf>, %60, %cst_30 [1] : vector<128x512xf32> to vector<128xf32>
    %62 = vector.shape_cast %61 : vector<128xf32> to vector<128x1xf32>
    %63 = vector.broadcast %62 : vector<128x1xf32> to vector<128x512xf32>
    %64 = arith.subf %60, %63 : vector<128x512xf32>
    %65 = math.exp %64 : vector<128x512xf32>
    %c0_31 = arith.constant 0 : index
    %c0_32 = arith.constant 0 : index
    %66 = vector.load %arg22[%c0_31, %c0_32] : memref<128x512xf32, #tpu.memory_space<vmem>>, vector<128x512xf32>
    tpu.vector_store %arg22[%c0_31, %c0_32], %65 {strides = array<i32>} : memref<128x512xf32, #tpu.memory_space<vmem>>, vector<128x512xf32>,
    %c0_33 = arith.constant 0 : index
    %c0_34 = arith.constant 0 : index
    %67 = vector.load %arg22[%c0_33, %c0_34] : memref<128x512xf32, #tpu.memory_space<vmem>>, vector<128x128xf32>
    %cst_35 = arith.constant dense<0.000000e+00> : vector<128xf32>
    %68 = vector.multi_reduction <add>, %67, %cst_35 [1] : vector<128x128xf32> to vector<128xf32>
    %69 = vector.shape_cast %68 : vector<128xf32> to vector<128x1xf32>
    %cst_36 = arith.constant 1.000000e+00 : f32
    %70 = vector.broadcast %cst_36 : f32 to vector<128x1xf32>
    %71 = arith.divf %70, %69 : vector<128x1xf32>
    %72 = vector.extract_strided_slice %0 {offsets = [0, 0], sizes = [1, 128], strides = [1, 1]} : vector<4x128xf32> to vector<1x128xf32>
    %73 = vector.broadcast %71 : vector<128x1xf32> to vector<128x128xf32>
    %74 = vector.broadcast %72 : vector<1x128xf32> to vector<128x128xf32>
    %75 = arith.mulf %73, %74 : vector<128x128xf32>
    %c0_37 = arith.constant 0 : index
    %c128_38 = arith.constant 128 : index
    %76 = vector.load %arg22[%c0_37, %c128_38] : memref<128x512xf32, #tpu.memory_space<vmem>>, vector<128x128xf32>
    %cst_39 = arith.constant dense<0.000000e+00> : vector<128xf32>
    %77 = vector.multi_reduction <add>, %76, %cst_39 [1] : vector<128x128xf32> to vector<128xf32>
    %78 = vector.shape_cast %77 : vector<128xf32> to vector<128x1xf32>
    %cst_40 = arith.constant 1.000000e+00 : f32
    %79 = vector.broadcast %cst_40 : f32 to vector<128x1xf32>
    %80 = arith.divf %79, %78 : vector<128x1xf32>
    %81 = vector.extract_strided_slice %0 {offsets = [1, 0], sizes = [1, 128], strides = [1, 1]} : vector<4x128xf32> to vector<1x128xf32>
    %82 = vector.broadcast %80 : vector<128x1xf32> to vector<128x128xf32>
    %83 = vector.broadcast %81 : vector<1x128xf32> to vector<128x128xf32>
    %84 = arith.mulf %82, %83 : vector<128x128xf32>
    %85 = arith.addf %75, %84 : vector<128x128xf32>
    %c0_41 = arith.constant 0 : index
    %c256_42 = arith.constant 256 : index
    %86 = vector.load %arg22[%c0_41, %c256_42] : memref<128x512xf32, #tpu.memory_space<vmem>>, vector<128x128xf32>
    %cst_43 = arith.constant dense<0.000000e+00> : vector<128xf32>
    %87 = vector.multi_reduction <add>, %86, %cst_43 [1] : vector<128x128xf32> to vector<128xf32>
    %88 = vector.shape_cast %87 : vector<128xf32> to vector<128x1xf32>
    %cst_44 = arith.constant 1.000000e+00 : f32
    %89 = vector.broadcast %cst_44 : f32 to vector<128x1xf32>
    %90 = arith.divf %89, %88 : vector<128x1xf32>
    %91 = vector.extract_strided_slice %0 {offsets = [2, 0], sizes = [1, 128], strides = [1, 1]} : vector<4x128xf32> to vector<1x128xf32>
    %92 = vector.broadcast %90 : vector<128x1xf32> to vector<128x128xf32>
    %93 = vector.broadcast %91 : vector<1x128xf32> to vector<128x128xf32>
    %94 = arith.mulf %92, %93 : vector<128x128xf32>
    %95 = arith.addf %85, %94 : vector<128x128xf32>
    %c0_45 = arith.constant 0 : index
    %c384_46 = arith.constant 384 : index
    %96 = vector.load %arg22[%c0_45, %c384_46] : memref<128x512xf32, #tpu.memory_space<vmem>>, vector<128x128xf32>
    %cst_47 = arith.constant dense<0.000000e+00> : vector<128xf32>
    %97 = vector.multi_reduction <add>, %96, %cst_47 [1] : vector<128x128xf32> to vector<128xf32>
    %98 = vector.shape_cast %97 : vector<128xf32> to vector<128x1xf32>
    %cst_48 = arith.constant 1.000000e+00 : f32
    %99 = vector.broadcast %cst_48 : f32 to vector<128x1xf32>
    %100 = arith.divf %99, %98 : vector<128x1xf32>
    %101 = vector.extract_strided_slice %0 {offsets = [3, 0], sizes = [1, 128], strides = [1, 1]} : vector<4x128xf32> to vector<1x128xf32>
    %102 = vector.broadcast %100 : vector<128x1xf32> to vector<128x128xf32>
    %103 = vector.broadcast %101 : vector<1x128xf32> to vector<128x128xf32>
    %104 = arith.mulf %102, %103 : vector<128x128xf32>
    %105 = arith.addf %95, %104 : vector<128x128xf32>
    %c0_49 = arith.constant 0 : index
    %c0_50 = arith.constant 0 : index
    %106 = vector.load %arg22[%c0_49, %c0_50] : memref<128x512xf32, #tpu.memory_space<vmem>>, vector<128x512xf32>
    %107 = arith.truncf %106 : vector<128x512xf32> to vector<128x512xbf16>
    %c0_51 = arith.constant 0 : index
    %c0_52 = arith.constant 0 : index
    %108 = vector.load %arg23[%c0_51, %c0_52] : memref<512x128xbf16, #tpu.memory_space<vmem>>, vector<512x128xbf16>
    %cst_53 = arith.constant dense<0.000000e+00> : vector<128x128xf32>
    %109 = tpu.matmul %107, %108, %cst_53 {dimension_numbers = #tpu.dot_dimension_numbers<[1], [0], [0], [1], [0, 0, 1, 1], [], []>} : vector<128x512xbf16>, vector<512x128xbf16>, vector<128x128xf32> -> vector<128x128xf32>
    %110 = arith.mulf %109, %105 : vector<128x128xf32>
    %c0_54 = arith.constant 0 : index
    %c0_55 = arith.constant 0 : index
    %111 = vector.load %arg6[%c0_54, %c0_55] : memref<1x128xf32, #tpu.memory_space<vmem>>, vector<1x128xf32>
    %112 = vector.broadcast %111 : vector<1x128xf32> to vector<128x128xf32>
    %113 = arith.addf %110, %112 : vector<128x128xf32>
    %cst_56 = arith.constant 0.000000e+00 : f32
    %114 = vector.broadcast %cst_56 : f32 to vector<128x128xf32>
    %115 = arith.cmpf ogt, %113, %114 : vector<128x128xf32>
    %116 = math.exp %113 : vector<128x128xf32>
    %cst_57 = arith.constant 1.000000e+00 : f32
    %117 = vector.broadcast %cst_57 : f32 to vector<128x128xf32>
    %118 = arith.subf %116, %117 : vector<128x128xf32>
    %119 = arith.select %115, %113, %118 : vector<128x128xi1>, vector<128x128xf32>
    %120 = arith.truncf %119 : vector<128x128xf32> to vector<128x128xbf16>
    %c0_58 = arith.constant 0 : index
    %c0_59 = arith.constant 0 : index
    %121 = vector.load %arg7[%c0_58, %c0_59] : memref<128x128xbf16, #tpu.memory_space<vmem>>, vector<128x128xbf16>
    %cst_60 = arith.constant dense<0.000000e+00> : vector<128x128xf32>
    %122 = tpu.matmul %120, %121, %cst_60 {dimension_numbers = #tpu.dot_dimension_numbers<[1], [0], [0], [1], [0, 0, 1, 1], [], []>} : vector<128x128xbf16>, vector<128x128xbf16>, vector<128x128xf32> -> vector<128x128xf32>
    %c0_61 = arith.constant 0 : index
    %c0_62 = arith.constant 0 : index
    %123 = vector.load %arg8[%c0_61, %c0_62] : memref<4x128xf32, #tpu.memory_space<vmem>>, vector<4x128xf32>
    %cst_63 = arith.constant dense<0.000000e+00> : vector<4x128xf32>
    %124 = tpu.matmul %123, %122, %cst_63 {dimension_numbers = #tpu.dot_dimension_numbers<[1], [1], [0], [0], [0, 0, 1, 0], [], []>} : vector<4x128xf32>, vector<128x128xf32>, vector<4x128xf32> -> vector<4x128xf32>
    %c0_64 = arith.constant 0 : index
    %c0_65 = arith.constant 0 : index
    %125 = vector.load %arg9[%c0_64, %c0_65] : memref<128x4xf32, #tpu.memory_space<vmem>>, vector<128x4xf32>
    %cst_66 = arith.constant dense<0.000000e+00> : vector<128x4xf32>
    %126 = tpu.matmul %122, %125, %cst_66 {dimension_numbers = #tpu.dot_dimension_numbers<[1], [0], [0], [1], [0, 0, 1, 1], [], []>} : vector<128x128xf32>, vector<128x4xf32>, vector<128x4xf32> -> vector<128x4xf32>
    %127 = vector.extract_strided_slice %126 {offsets = [0, 0], sizes = [128, 1], strides = [1, 1]} : vector<128x4xf32> to vector<128x1xf32>
    %128 = vector.extract_strided_slice %124 {offsets = [0, 0], sizes = [1, 128], strides = [1, 1]} : vector<4x128xf32> to vector<1x128xf32>
    %129 = vector.broadcast %127 : vector<128x1xf32> to vector<128x128xf32>
    %130 = vector.broadcast %128 : vector<1x128xf32> to vector<128x128xf32>
    %131 = arith.addf %129, %130 : vector<128x128xf32>
    %c0_67 = arith.constant 0 : index
    %c0_68 = arith.constant 0 : index
    %132 = vector.load %arg22[%c0_67, %c0_68] : memref<128x512xf32, #tpu.memory_space<vmem>>, vector<128x128xf32>
    tpu.vector_store %arg22[%c0_67, %c0_68], %131 {strides = array<i32>} : memref<128x512xf32, #tpu.memory_space<vmem>>, vector<128x128xf32>,
    %133 = vector.extract_strided_slice %0 {offsets = [0, 0], sizes = [1, 128], strides = [1, 1]} : vector<4x128xf32> to vector<1x128xf32>
    %134 = vector.broadcast %133 : vector<1x128xf32> to vector<128x128xf32>
    %135 = arith.mulf %122, %134 : vector<128x128xf32>
    %136 = arith.truncf %135 : vector<128x128xf32> to vector<128x128xbf16>
    %c0_69 = arith.constant 0 : index
    %c0_70 = arith.constant 0 : index
    %137 = vector.load %arg23[%c0_69, %c0_70] : memref<512x128xbf16, #tpu.memory_space<vmem>>, vector<128x128xbf16>
    tpu.vector_store %arg23[%c0_69, %c0_70], %136 {strides = array<i32>} : memref<512x128xbf16, #tpu.memory_space<vmem>>, vector<128x128xbf16>,
    %138 = vector.extract_strided_slice %126 {offsets = [0, 1], sizes = [128, 1], strides = [1, 1]} : vector<128x4xf32> to vector<128x1xf32>
    %139 = vector.extract_strided_slice %124 {offsets = [1, 0], sizes = [1, 128], strides = [1, 1]} : vector<4x128xf32> to vector<1x128xf32>
    %140 = vector.broadcast %138 : vector<128x1xf32> to vector<128x128xf32>
    %141 = vector.broadcast %139 : vector<1x128xf32> to vector<128x128xf32>
    %142 = arith.addf %140, %141 : vector<128x128xf32>
    %c0_71 = arith.constant 0 : index
    %c128_72 = arith.constant 128 : index
    %143 = vector.load %arg22[%c0_71, %c128_72] : memref<128x512xf32, #tpu.memory_space<vmem>>, vector<128x128xf32>
    tpu.vector_store %arg22[%c0_71, %c128_72], %142 {strides = array<i32>} : memref<128x512xf32, #tpu.memory_space<vmem>>, vector<128x128xf32>,
    %144 = vector.extract_strided_slice %0 {offsets = [1, 0], sizes = [1, 128], strides = [1, 1]} : vector<4x128xf32> to vector<1x128xf32>
    %145 = vector.broadcast %144 : vector<1x128xf32> to vector<128x128xf32>
    %146 = arith.mulf %122, %145 : vector<128x128xf32>
    %147 = arith.truncf %146 : vector<128x128xf32> to vector<128x128xbf16>
    %c128_73 = arith.constant 128 : index
    %c0_74 = arith.constant 0 : index
    %148 = vector.load %arg23[%c128_73, %c0_74] : memref<512x128xbf16, #tpu.memory_space<vmem>>, vector<128x128xbf16>
    tpu.vector_store %arg23[%c128_73, %c0_74], %147 {strides = array<i32>} : memref<512x128xbf16, #tpu.memory_space<vmem>>, vector<128x128xbf16>,
    %149 = vector.extract_strided_slice %126 {offsets = [0, 2], sizes = [128, 1], strides = [1, 1]} : vector<128x4xf32> to vector<128x1xf32>
    %150 = vector.extract_strided_slice %124 {offsets = [2, 0], sizes = [1, 128], strides = [1, 1]} : vector<4x128xf32> to vector<1x128xf32>
    %151 = vector.broadcast %149 : vector<128x1xf32> to vector<128x128xf32>
    %152 = vector.broadcast %150 : vector<1x128xf32> to vector<128x128xf32>
    %153 = arith.addf %151, %152 : vector<128x128xf32>
    %c0_75 = arith.constant 0 : index
    %c256_76 = arith.constant 256 : index
    %154 = vector.load %arg22[%c0_75, %c256_76] : memref<128x512xf32, #tpu.memory_space<vmem>>, vector<128x128xf32>
    tpu.vector_store %arg22[%c0_75, %c256_76], %153 {strides = array<i32>} : memref<128x512xf32, #tpu.memory_space<vmem>>, vector<128x128xf32>,
    %155 = vector.extract_strided_slice %0 {offsets = [2, 0], sizes = [1, 128], strides = [1, 1]} : vector<4x128xf32> to vector<1x128xf32>
    %156 = vector.broadcast %155 : vector<1x128xf32> to vector<128x128xf32>
    %157 = arith.mulf %122, %156 : vector<128x128xf32>
    %158 = arith.truncf %157 : vector<128x128xf32> to vector<128x128xbf16>
    %c256_77 = arith.constant 256 : index
    %c0_78 = arith.constant 0 : index
    %159 = vector.load %arg23[%c256_77, %c0_78] : memref<512x128xbf16, #tpu.memory_space<vmem>>, vector<128x128xbf16>
    tpu.vector_store %arg23[%c256_77, %c0_78], %158 {strides = array<i32>} : memref<512x128xbf16, #tpu.memory_space<vmem>>, vector<128x128xbf16>,
    %160 = vector.extract_strided_slice %126 {offsets = [0, 3], sizes = [128, 1], strides = [1, 1]} : vector<128x4xf32> to vector<128x1xf32>
    %161 = vector.extract_strided_slice %124 {offsets = [3, 0], sizes = [1, 128], strides = [1, 1]} : vector<4x128xf32> to vector<1x128xf32>
    %162 = vector.broadcast %160 : vector<128x1xf32> to vector<128x128xf32>
    %163 = vector.broadcast %161 : vector<1x128xf32> to vector<128x128xf32>
    %164 = arith.addf %162, %163 : vector<128x128xf32>
    %c0_79 = arith.constant 0 : index
    %c384_80 = arith.constant 384 : index
    %165 = vector.load %arg22[%c0_79, %c384_80] : memref<128x512xf32, #tpu.memory_space<vmem>>, vector<128x128xf32>
    tpu.vector_store %arg22[%c0_79, %c384_80], %164 {strides = array<i32>} : memref<128x512xf32, #tpu.memory_space<vmem>>, vector<128x128xf32>,
    %166 = vector.extract_strided_slice %0 {offsets = [3, 0], sizes = [1, 128], strides = [1, 1]} : vector<4x128xf32> to vector<1x128xf32>
    %167 = vector.broadcast %166 : vector<1x128xf32> to vector<128x128xf32>
    %168 = arith.mulf %122, %167 : vector<128x128xf32>
    %169 = arith.truncf %168 : vector<128x128xf32> to vector<128x128xbf16>
    %c384_81 = arith.constant 384 : index
    %c0_82 = arith.constant 0 : index
    %170 = vector.load %arg23[%c384_81, %c0_82] : memref<512x128xbf16, #tpu.memory_space<vmem>>, vector<128x128xbf16>
    tpu.vector_store %arg23[%c384_81, %c0_82], %169 {strides = array<i32>} : memref<512x128xbf16, #tpu.memory_space<vmem>>, vector<128x128xbf16>,
    %c0_83 = arith.constant 0 : index
    %c0_84 = arith.constant 0 : index
    %171 = vector.load %arg22[%c0_83, %c0_84] : memref<128x512xf32, #tpu.memory_space<vmem>>, vector<128x512xf32>
    %cst_85 = arith.constant 0.000000e+00 : f32
    %172 = vector.broadcast %cst_85 : f32 to vector<128x512xf32>
    %173 = arith.cmpf ogt, %171, %172 : vector<128x512xf32>
    %cst_86 = arith.constant 2.000000e-01 : f32
    %174 = vector.broadcast %cst_86 : f32 to vector<128x512xf32>
    %175 = arith.mulf %174, %171 : vector<128x512xf32>
    %176 = arith.select %173, %171, %175 : vector<128x512xi1>, vector<128x512xf32>
    %c0_87 = arith.constant 0 : index
    %c0_88 = arith.constant 0 : index
    %177 = vector.load %arg1[%c0_87, %c0_88] : memref<128x512xf32, #tpu.memory_space<vmem>>, vector<128x512xf32>
    %178 = arith.addf %176, %177 : vector<128x512xf32>
    %cst_89 = arith.constant dense<0xFF800000> : vector<128xf32>
    %179 = vector.multi_reduction <maximumf>, %178, %cst_89 [1] : vector<128x512xf32> to vector<128xf32>
    %180 = vector.shape_cast %179 : vector<128xf32> to vector<128x1xf32>
    %181 = vector.broadcast %180 : vector<128x1xf32> to vector<128x512xf32>
    %182 = arith.subf %178, %181 : vector<128x512xf32>
    %183 = math.exp %182 : vector<128x512xf32>
    %c0_90 = arith.constant 0 : index
    %c0_91 = arith.constant 0 : index
    %184 = vector.load %arg22[%c0_90, %c0_91] : memref<128x512xf32, #tpu.memory_space<vmem>>, vector<128x512xf32>
    tpu.vector_store %arg22[%c0_90, %c0_91], %183 {strides = array<i32>} : memref<128x512xf32, #tpu.memory_space<vmem>>, vector<128x512xf32>,
    %c0_92 = arith.constant 0 : index
    %c0_93 = arith.constant 0 : index
    %185 = vector.load %arg22[%c0_92, %c0_93] : memref<128x512xf32, #tpu.memory_space<vmem>>, vector<128x128xf32>
    %cst_94 = arith.constant dense<0.000000e+00> : vector<128xf32>
    %186 = vector.multi_reduction <add>, %185, %cst_94 [1] : vector<128x128xf32> to vector<128xf32>
    %187 = vector.shape_cast %186 : vector<128xf32> to vector<128x1xf32>
    %cst_95 = arith.constant 1.000000e+00 : f32
    %188 = vector.broadcast %cst_95 : f32 to vector<128x1xf32>
    %189 = arith.divf %188, %187 : vector<128x1xf32>
    %190 = vector.extract_strided_slice %0 {offsets = [0, 0], sizes = [1, 128], strides = [1, 1]} : vector<4x128xf32> to vector<1x128xf32>
    %191 = vector.broadcast %189 : vector<128x1xf32> to vector<128x128xf32>
    %192 = vector.broadcast %190 : vector<1x128xf32> to vector<128x128xf32>
    %193 = arith.mulf %191, %192 : vector<128x128xf32>
    %c0_96 = arith.constant 0 : index
    %c128_97 = arith.constant 128 : index
    %194 = vector.load %arg22[%c0_96, %c128_97] : memref<128x512xf32, #tpu.memory_space<vmem>>, vector<128x128xf32>
    %cst_98 = arith.constant dense<0.000000e+00> : vector<128xf32>
    %195 = vector.multi_reduction <add>, %194, %cst_98 [1] : vector<128x128xf32> to vector<128xf32>
    %196 = vector.shape_cast %195 : vector<128xf32> to vector<128x1xf32>
    %cst_99 = arith.constant 1.000000e+00 : f32
    %197 = vector.broadcast %cst_99 : f32 to vector<128x1xf32>
    %198 = arith.divf %197, %196 : vector<128x1xf32>
    %199 = vector.extract_strided_slice %0 {offsets = [1, 0], sizes = [1, 128], strides = [1, 1]} : vector<4x128xf32> to vector<1x128xf32>
    %200 = vector.broadcast %198 : vector<128x1xf32> to vector<128x128xf32>
    %201 = vector.broadcast %199 : vector<1x128xf32> to vector<128x128xf32>
    %202 = arith.mulf %200, %201 : vector<128x128xf32>
    %203 = arith.addf %193, %202 : vector<128x128xf32>
    %c0_100 = arith.constant 0 : index
    %c256_101 = arith.constant 256 : index
    %204 = vector.load %arg22[%c0_100, %c256_101] : memref<128x512xf32, #tpu.memory_space<vmem>>, vector<128x128xf32>
    %cst_102 = arith.constant dense<0.000000e+00> : vector<128xf32>
    %205 = vector.multi_reduction <add>, %204, %cst_102 [1] : vector<128x128xf32> to vector<128xf32>
    %206 = vector.shape_cast %205 : vector<128xf32> to vector<128x1xf32>
    %cst_103 = arith.constant 1.000000e+00 : f32
    %207 = vector.broadcast %cst_103 : f32 to vector<128x1xf32>
    %208 = arith.divf %207, %206 : vector<128x1xf32>
    %209 = vector.extract_strided_slice %0 {offsets = [2, 0], sizes = [1, 128], strides = [1, 1]} : vector<4x128xf32> to vector<1x128xf32>
    %210 = vector.broadcast %208 : vector<128x1xf32> to vector<128x128xf32>
    %211 = vector.broadcast %209 : vector<1x128xf32> to vector<128x128xf32>
    %212 = arith.mulf %210, %211 : vector<128x128xf32>
    %213 = arith.addf %203, %212 : vector<128x128xf32>
    %c0_104 = arith.constant 0 : index
    %c384_105 = arith.constant 384 : index
    %214 = vector.load %arg22[%c0_104, %c384_105] : memref<128x512xf32, #tpu.memory_space<vmem>>, vector<128x128xf32>
    %cst_106 = arith.constant dense<0.000000e+00> : vector<128xf32>
    %215 = vector.multi_reduction <add>, %214, %cst_106 [1] : vector<128x128xf32> to vector<128xf32>
    %216 = vector.shape_cast %215 : vector<128xf32> to vector<128x1xf32>
    %cst_107 = arith.constant 1.000000e+00 : f32
    %217 = vector.broadcast %cst_107 : f32 to vector<128x1xf32>
    %218 = arith.divf %217, %216 : vector<128x1xf32>
    %219 = vector.extract_strided_slice %0 {offsets = [3, 0], sizes = [1, 128], strides = [1, 1]} : vector<4x128xf32> to vector<1x128xf32>
    %220 = vector.broadcast %218 : vector<128x1xf32> to vector<128x128xf32>
    %221 = vector.broadcast %219 : vector<1x128xf32> to vector<128x128xf32>
    %222 = arith.mulf %220, %221 : vector<128x128xf32>
    %223 = arith.addf %213, %222 : vector<128x128xf32>
    %c0_108 = arith.constant 0 : index
    %c0_109 = arith.constant 0 : index
    %224 = vector.load %arg22[%c0_108, %c0_109] : memref<128x512xf32, #tpu.memory_space<vmem>>, vector<128x512xf32>
    %225 = arith.truncf %224 : vector<128x512xf32> to vector<128x512xbf16>
    %c0_110 = arith.constant 0 : index
    %c0_111 = arith.constant 0 : index
    %226 = vector.load %arg23[%c0_110, %c0_111] : memref<512x128xbf16, #tpu.memory_space<vmem>>, vector<512x128xbf16>
    %cst_112 = arith.constant dense<0.000000e+00> : vector<128x128xf32>
    %227 = tpu.matmul %225, %226, %cst_112 {dimension_numbers = #tpu.dot_dimension_numbers<[1], [0], [0], [1], [0, 0, 1, 1], [], []>} : vector<128x512xbf16>, vector<512x128xbf16>, vector<128x128xf32> -> vector<128x128xf32>
    %228 = arith.mulf %227, %223 : vector<128x128xf32>
    %c0_113 = arith.constant 0 : index
    %c0_114 = arith.constant 0 : index
    %229 = vector.load %arg10[%c0_113, %c0_114] : memref<1x128xf32, #tpu.memory_space<vmem>>, vector<1x128xf32>
    %230 = vector.broadcast %229 : vector<1x128xf32> to vector<128x128xf32>
    %231 = arith.addf %228, %230 : vector<128x128xf32>
    %cst_115 = arith.constant 0.000000e+00 : f32
    %232 = vector.broadcast %cst_115 : f32 to vector<128x128xf32>
    %233 = arith.cmpf ogt, %231, %232 : vector<128x128xf32>
    %234 = math.exp %231 : vector<128x128xf32>
    %cst_116 = arith.constant 1.000000e+00 : f32
    %235 = vector.broadcast %cst_116 : f32 to vector<128x128xf32>
    %236 = arith.subf %234, %235 : vector<128x128xf32>
    %237 = arith.select %233, %231, %236 : vector<128x128xi1>, vector<128x128xf32>
    %238 = arith.truncf %237 : vector<128x128xf32> to vector<128x128xbf16>
    %c0_117 = arith.constant 0 : index
    %c0_118 = arith.constant 0 : index
    %239 = vector.load %arg11[%c0_117, %c0_118] : memref<128x128xbf16, #tpu.memory_space<vmem>>, vector<128x128xbf16>
    %cst_119 = arith.constant dense<0.000000e+00> : vector<128x128xf32>
    %240 = tpu.matmul %238, %239, %cst_119 {dimension_numbers = #tpu.dot_dimension_numbers<[1], [0], [0], [1], [0, 0, 1, 1], [], []>} : vector<128x128xbf16>, vector<128x128xbf16>, vector<128x128xf32> -> vector<128x128xf32>
    %c0_120 = arith.constant 0 : index
    %c0_121 = arith.constant 0 : index
    %241 = vector.load %arg12[%c0_120, %c0_121] : memref<1x128xf32, #tpu.memory_space<vmem>>, vector<1x128xf32>
    %cst_122 = arith.constant dense<0.000000e+00> : vector<1x128xf32>
    %242 = tpu.matmul %241, %240, %cst_122 {dimension_numbers = #tpu.dot_dimension_numbers<[1], [1], [0], [0], [0, 0, 1, 0], [], []>} : vector<1x128xf32>, vector<128x128xf32>, vector<1x128xf32> -> vector<1x128xf32>
    %c0_123 = arith.constant 0 : index
    %c0_124 = arith.constant 0 : index
    %243 = vector.load %arg13[%c0_123, %c0_124] : memref<128x1xf32, #tpu.memory_space<vmem>>, vector<128x1xf32>
    %cst_125 = arith.constant dense<0.000000e+00> : vector<128x1xf32>
    %244 = tpu.matmul %240, %243, %cst_125 {dimension_numbers = #tpu.dot_dimension_numbers<[1], [0], [0], [1], [0, 0, 1, 1], [], []>} : vector<128x128xf32>, vector<128x1xf32>, vector<128x1xf32> -> vector<128x1xf32>
    %245 = vector.broadcast %244 : vector<128x1xf32> to vector<128x128xf32>
    %246 = vector.broadcast %242 : vector<1x128xf32> to vector<128x128xf32>
    %247 = arith.addf %245, %246 : vector<128x128xf32>
    %cst_126 = arith.constant 0.000000e+00 : f32
    %248 = vector.broadcast %cst_126 : f32 to vector<128x128xf32>
    %249 = arith.cmpf ogt, %247, %248 : vector<128x128xf32>
    %cst_127 = arith.constant 2.000000e-01 : f32
    %250 = vector.broadcast %cst_127 : f32 to vector<128x128xf32>
    %251 = arith.mulf %250, %247 : vector<128x128xf32>
    %252 = arith.select %249, %247, %251 : vector<128x128xi1>, vector<128x128xf32>
    %c0_128 = arith.constant 0 : index
    %c0_129 = arith.constant 0 : index
    %253 = vector.load %arg1[%c0_128, %c0_129] : memref<128x512xf32, #tpu.memory_space<vmem>>, vector<128x128xf32>
    %254 = arith.addf %252, %253 : vector<128x128xf32>
    %cst_130 = arith.constant dense<0xFF800000> : vector<128xf32>
    %255 = vector.multi_reduction <maximumf>, %254, %cst_130 [1] : vector<128x128xf32> to vector<128xf32>
    %256 = vector.shape_cast %255 : vector<128xf32> to vector<128x1xf32>
    %257 = vector.broadcast %256 : vector<128x1xf32> to vector<128x128xf32>
    %258 = arith.subf %254, %257 : vector<128x128xf32>
    %259 = math.exp %258 : vector<128x128xf32>
    %cst_131 = arith.constant dense<0.000000e+00> : vector<128xf32>
    %260 = vector.multi_reduction <add>, %259, %cst_131 [1] : vector<128x128xf32> to vector<128xf32>
    %261 = vector.shape_cast %260 : vector<128xf32> to vector<128x1xf32>
    %cst_132 = arith.constant 1.000000e+00 : f32
    %262 = vector.broadcast %cst_132 : f32 to vector<128x1xf32>
    %263 = arith.divf %262, %261 : vector<128x1xf32>
    %264 = arith.truncf %259 : vector<128x128xf32> to vector<128x128xbf16>
    %265 = arith.truncf %240 : vector<128x128xf32> to vector<128x128xbf16>
    %cst_133 = arith.constant dense<0.000000e+00> : vector<128x128xf32>
    %266 = tpu.matmul %264, %265, %cst_133 {dimension_numbers = #tpu.dot_dimension_numbers<[1], [0], [0], [1], [0, 0, 1, 1], [], []>} : vector<128x128xbf16>, vector<128x128xbf16>, vector<128x128xf32> -> vector<128x128xf32>
    %267 = vector.broadcast %263 : vector<128x1xf32> to vector<128x128xf32>
    %268 = arith.mulf %266, %267 : vector<128x128xf32>
    %c0_134 = arith.constant 0 : index
    %c0_135 = arith.constant 0 : index
    %269 = vector.load %arg14[%c0_134, %c0_135] : memref<1x128xf32, #tpu.memory_space<vmem>>, vector<1x128xf32>
    %270 = vector.broadcast %269 : vector<1x128xf32> to vector<128x128xf32>
    %271 = arith.addf %268, %270 : vector<128x128xf32>
    %c0_136 = arith.constant 0 : index
    %c0_137 = arith.constant 0 : index
    %272 = vector.load %arg2[%c0_136, %c0_137] : memref<2x128xf32, #tpu.memory_space<vmem>>, vector<2x128xf32>
    %cst_138 = arith.constant dense<0.000000e+00> : vector<2x128xf32>
    %273 = tpu.matmul %272, %271, %cst_138 {dimension_numbers = #tpu.dot_dimension_numbers<[1], [0], [0], [1], [0, 0, 1, 1], [], []>} : vector<2x128xf32>, vector<128x128xf32>, vector<2x128xf32> -> vector<2x128xf32>
    %274 = vector.extract_strided_slice %273 {offsets = [0, 0], sizes = [2, 16], strides = [1, 1]} : vector<2x128xf32> to vector<2x16xf32>
    %c0_139 = arith.constant 0 : index
    %c0_140 = arith.constant 0 : index
    %275 = vector.load %arg21[%c0_139, %c0_140] : memref<2x16xf32, #tpu.memory_space<vmem>>, vector<2x16xf32>
    tpu.vector_store %arg21[%c0_139, %c0_140], %274 {strides = array<i32>} : memref<2x16xf32, #tpu.memory_space<vmem>>, vector<2x16xf32>,
    %c0_141 = arith.constant 0 : index
    %c0_142 = arith.constant 0 : index
    %276 = vector.load %arg16[%c0_141, %c0_142] : memref<128x32xf32, #tpu.memory_space<vmem>>, vector<128x32xf32>
    %cst_143 = arith.constant dense<0.000000e+00> : vector<2x32xf32>
    %277 = tpu.matmul %273, %276, %cst_143 {dimension_numbers = #tpu.dot_dimension_numbers<[1], [0], [0], [1], [0, 0, 1, 1], [], []>} : vector<2x128xf32>, vector<128x32xf32>, vector<2x32xf32> -> vector<2x32xf32>
    %c0_144 = arith.constant 0 : index
    %c0_145 = arith.constant 0 : index
    %278 = vector.load %arg17[%c0_144, %c0_145] : memref<1x32xf32, #tpu.memory_space<vmem>>, vector<1x32xf32>
    %279 = vector.broadcast %278 : vector<1x32xf32> to vector<2x32xf32>
    %280 = arith.addf %277, %279 : vector<2x32xf32>
    %cst_146 = arith.constant 0.000000e+00 : f32
    %281 = vector.broadcast %cst_146 : f32 to vector<2x32xf32>
    %282 = arith.maximumf %280, %281 : vector<2x32xf32>
    %c0_147 = arith.constant 0 : index
    %c0_148 = arith.constant 0 : index
    %283 = vector.load %arg18[%c0_147, %c0_148] : memref<32x2xf32, #tpu.memory_space<vmem>>, vector<32x2xf32>
    %cst_149 = arith.constant dense<0.000000e+00> : vector<2x2xf32>
    %284 = tpu.matmul %282, %283, %cst_149 {dimension_numbers = #tpu.dot_dimension_numbers<[1], [0], [0], [1], [0, 0, 1, 1], [], []>} : vector<2x32xf32>, vector<32x2xf32>, vector<2x2xf32> -> vector<2x2xf32>
    %c0_150 = arith.constant 0 : index
    %c0_151 = arith.constant 0 : index
    %285 = vector.load %arg19[%c0_150, %c0_151] : memref<1x2xf32, #tpu.memory_space<vmem>>, vector<1x2xf32>
    %286 = vector.broadcast %285 : vector<1x2xf32> to vector<2x2xf32>
    %287 = arith.addf %284, %286 : vector<2x2xf32>
    %c0_152 = arith.constant 0 : index
    %c0_153 = arith.constant 0 : index
    %288 = vector.load %arg20[%c0_152, %c0_153] : memref<2x2xf32, #tpu.memory_space<vmem>>, vector<2x2xf32>
    tpu.vector_store %arg20[%c0_152, %c0_153], %287 {strides = array<i32>} : memref<2x2xf32, #tpu.memory_space<vmem>>, vector<2x2xf32>,
    return
  }
}

</mosaic_0001>

<llo_original>
// kernel: tpu_custom_call.1
$region0: #{tpu_custom_call.1}
  #allocation0 [shape = 'u32[]', space=smem, size = 0x4, offset = 0x4, fixed_abs, tag = 'smem constant byte address 0x4 - core index']
  #allocation1 [shape = 'u32[144,128]{1,0:T(1,128)}', space=vmem, size = 0x12000, scoped, tag = 'internal scratch']
  #allocation2 [shape = 'f32[128,512]{1,0:T(8,128)}', space=vmem, size = 0x40000, scoped, tag = 'scratch operand']
  #allocation3 [shape = 'bf16[512,128]{1,0:T(8,128)(2,1)}', space=vmem, size = 0x20000, scoped, tag = 'scratch operand']
  %s0 = inlined_call_operand.vmem [shape: f32[128,2], index: 0, kind: input, shape index: {}]
  %s1 = inlined_call_operand.vmem [shape: f32[128,512], index: 1, kind: input, shape index: {}]
  %s2 = inlined_call_operand.vmem [shape: f32[2,128], index: 2, kind: input, shape index: {}]
  %s3 = inlined_call_operand.vmem [shape: bf16[2,128], index: 3, kind: input, shape index: {}]
  %s4 = inlined_call_operand.vmem [shape: f32[4,128], index: 4, kind: input, shape index: {}]
  %s5 = inlined_call_operand.vmem [shape: f32[128,4], index: 5, kind: input, shape index: {}]
  %s6 = inlined_call_operand.vmem [shape: f32[1,128], index: 6, kind: input, shape index: {}]
  %s7 = inlined_call_operand.vmem [shape: bf16[128,128], index: 7, kind: input, shape index: {}]
  %s8 = inlined_call_operand.vmem [shape: f32[4,128], index: 8, kind: input, shape index: {}]
  %s9 = inlined_call_operand.vmem [shape: f32[128,4], index: 9, kind: input, shape index: {}]
  %s10 = inlined_call_operand.vmem [shape: f32[1,128], index: 10, kind: input, shape index: {}]
  %s11 = inlined_call_operand.vmem [shape: bf16[128,128], index: 11, kind: input, shape index: {}]
  %s12 = inlined_call_operand.vmem [shape: f32[1,128], index: 12, kind: input, shape index: {}]
  %s13 = inlined_call_operand.vmem [shape: f32[128,1], index: 13, kind: input, shape index: {}]
  %s14 = inlined_call_operand.vmem [shape: f32[1,128], index: 14, kind: input, shape index: {}]
  %s15 = inlined_call_operand.vmem [shape: f32[4,128], index: 15, kind: input, shape index: {}]
  %s16 = inlined_call_operand.vmem [shape: f32[128,32], index: 16, kind: input, shape index: {}]
  %s17 = inlined_call_operand.vmem [shape: f32[1,32], index: 17, kind: input, shape index: {}]
  %s18 = inlined_call_operand.vmem [shape: f32[32,2], index: 18, kind: input, shape index: {}]
  %s19 = inlined_call_operand.vmem [shape: f32[1,2], index: 19, kind: input, shape index: {}]
  %s20 = inlined_call_operand.hbm [shape: f32[2,2], index: 20, kind: output, shape index: {0}]
  %s21 = inlined_call_operand.hbm [shape: f32[2,16], index: 21, kind: output, shape index: {1}]
  %22 = xla_tuple %s20, %s21
  %s23 = sld [smem:[#allocation0]]
  $region98: #{tpu_custom_call.1} parent=0
    _
  %s25 = ssub.s32 1, %s23
  %s26 = scalar_select 0, %s25, %s23
  $region1: #{tpu_custom_call.1} parent=0
    #allocation4 [shape = 'u8[1024]{0}', space=vmem, size = 0x400, scoped, tag = 'output window, operand 0, single buffered']
    #allocation5 [shape = 's32[1]{0}', space=sflag, size = 0x4, scoped, tag = 'scoped memory for tpu_custom_call.1']
    #allocation6 [shape = 'u8[1024]{0}', space=vmem, size = 0x400, scoped, tag = 'output window, operand 1, single buffered']
    #allocation7 [shape = 's32[1]{0}', space=sflag, size = 0x4, scoped, tag = 'scoped memory for tpu_custom_call.1']
    %27 = vsyncpa [#allocation5], 0
    %28 = vsyncpa [#allocation7], 0
    // Predicated region
    $region2: #{tpu_custom_call.1} parent=1 // pred_check
      _
    $region3: #{tpu_custom_call.1} parent=1 // pred_check_branch
      %30 = sbr.rel (0) target = $region5
    $region4: #{tpu_custom_call.1} parent=1 // pred_region
      _
    $region5: #{tpu_custom_call.1} parent=1 // pred_fallthru
      _
    // Predicated region
    $region6: #{tpu_custom_call.1} parent=1 // pred_check
      _
    $region7: #{tpu_custom_call.1} parent=1 // pred_check_branch
      %32 = sbr.rel (0) target = $region9
    $region8: #{tpu_custom_call.1} parent=1 // pred_region
      _
    $region9: #{tpu_custom_call.1} parent=1 // pred_fallthru
      _
    // Predicated region
    $region10: #{tpu_custom_call.1} parent=1 // pred_check
      _
    $region11: #{tpu_custom_call.1} parent=1 // pred_check_branch
      %34 = sbr.rel (0) target = $region13
    $region12: #{tpu_custom_call.1} parent=1 // pred_region
      _
    $region13: #{tpu_custom_call.1} parent=1 // pred_fallthru
      _
    // Predicated region
    $region14: #{tpu_custom_call.1} parent=1 // pred_check
      _
    $region15: #{tpu_custom_call.1} parent=1 // pred_check_branch
      %36 = sbr.rel (0) target = $region17
    $region16: #{tpu_custom_call.1} parent=1 // pred_region
      _
    $region17: #{tpu_custom_call.1} parent=1 // pred_fallthru
      _
    // Predicated region
    $region18: #{tpu_custom_call.1} parent=1 // pred_check
      _
    $region19: #{tpu_custom_call.1} parent=1 // pred_check_branch
      %38 = sbr.rel (0) target = $region21
    $region20: #{tpu_custom_call.1} parent=1 // pred_region
      _
    $region21: #{tpu_custom_call.1} parent=1 // pred_fallthru
      _
    // Predicated region
    $region22: #{tpu_custom_call.1} parent=1 // pred_check
      _
    $region23: #{tpu_custom_call.1} parent=1 // pred_check_branch
      %40 = sbr.rel (0) target = $region25
    $region24: #{tpu_custom_call.1} parent=1 // pred_region
      _
    $region25: #{tpu_custom_call.1} parent=1 // pred_fallthru
      _
    // Predicated region
    $region26: #{tpu_custom_call.1} parent=1 // pred_check
      _
    $region27: #{tpu_custom_call.1} parent=1 // pred_check_branch
      %42 = sbr.rel (0) target = $region29
    $region28: #{tpu_custom_call.1} parent=1 // pred_region
      _
    $region29: #{tpu_custom_call.1} parent=1 // pred_fallthru
      _
    // Predicated region
    $region30: #{tpu_custom_call.1} parent=1 // pred_check
      _
    $region31: #{tpu_custom_call.1} parent=1 // pred_check_branch
      %44 = sbr.rel (0) target = $region33
    $region32: #{tpu_custom_call.1} parent=1 // pred_region
      _
    $region33: #{tpu_custom_call.1} parent=1 // pred_fallthru
      _
    // Predicated region
    $region34: #{tpu_custom_call.1} parent=1 // pred_check
      _
    $region35: #{tpu_custom_call.1} parent=1 // pred_check_branch
      %46 = sbr.rel (0) target = $region37
    $region36: #{tpu_custom_call.1} parent=1 // pred_region
      _
    $region37: #{tpu_custom_call.1} parent=1 // pred_fallthru
      _
    // Predicated region
    $region38: #{tpu_custom_call.1} parent=1 // pred_check
      _
    $region39: #{tpu_custom_call.1} parent=1 // pred_check_branch
      %48 = sbr.rel (0) target = $region41
    $region40: #{tpu_custom_call.1} parent=1 // pred_region
      _
    $region41: #{tpu_custom_call.1} parent=1 // pred_fallthru
      _
    // Predicated region
    $region42: #{tpu_custom_call.1} parent=1 // pred_check
      _
    $region43: #{tpu_custom_call.1} parent=1 // pred_check_branch
      %50 = sbr.rel (0) target = $region45
    $region44: #{tpu_custom_call.1} parent=1 // pred_region
      _
    $region45: #{tpu_custom_call.1} parent=1 // pred_fallthru
      _
    // Predicated region
    $region46: #{tpu_custom_call.1} parent=1 // pred_check
      _
    $region47: #{tpu_custom_call.1} parent=1 // pred_check_branch
      %52 = sbr.rel (0) target = $region49
    $region48: #{tpu_custom_call.1} parent=1 // pred_region
      _
    $region49: #{tpu_custom_call.1} parent=1 // pred_fallthru
      _
    // Predicated region
    $region50: #{tpu_custom_call.1} parent=1 // pred_check
      _
    $region51: #{tpu_custom_call.1} parent=1 // pred_check_branch
      %54 = sbr.rel (0) target = $region53
    $region52: #{tpu_custom_call.1} parent=1 // pred_region
      _
    $region53: #{tpu_custom_call.1} parent=1 // pred_fallthru
      _
    // Predicated region
    $region54: #{tpu_custom_call.1} parent=1 // pred_check
      _
    $region55: #{tpu_custom_call.1} parent=1 // pred_check_branch
      %56 = sbr.rel (0) target = $region57
    $region56: #{tpu_custom_call.1} parent=1 // pred_region
      _
    $region57: #{tpu_custom_call.1} parent=1 // pred_fallthru
      _
    // Predicated region
    $region58: #{tpu_custom_call.1} parent=1 // pred_check
      _
    $region59: #{tpu_custom_call.1} parent=1 // pred_check_branch
      %58 = sbr.rel (0) target = $region61
    $region60: #{tpu_custom_call.1} parent=1 // pred_region
      _
    $region61: #{tpu_custom_call.1} parent=1 // pred_fallthru
      _
    // Predicated region
    $region62: #{tpu_custom_call.1} parent=1 // pred_check
      _
    $region63: #{tpu_custom_call.1} parent=1 // pred_check_branch
      %60 = sbr.rel (0) target = $region65
    $region64: #{tpu_custom_call.1} parent=1 // pred_region
      _
    $region65: #{tpu_custom_call.1} parent=1 // pred_fallthru
      _
    // Predicated region
    $region66: #{tpu_custom_call.1} parent=1 // pred_check
      _
    $region67: #{tpu_custom_call.1} parent=1 // pred_check_branch
      %62 = sbr.rel (0) target = $region69
    $region68: #{tpu_custom_call.1} parent=1 // pred_region
      _
    $region69: #{tpu_custom_call.1} parent=1 // pred_fallthru
      _
    // Predicated region
    $region70: #{tpu_custom_call.1} parent=1 // pred_check
      _
    $region71: #{tpu_custom_call.1} parent=1 // pred_check_branch
      %64 = sbr.rel (0) target = $region73
    $region72: #{tpu_custom_call.1} parent=1 // pred_region
      _
    $region73: #{tpu_custom_call.1} parent=1 // pred_fallthru
      _
    // Predicated region
    $region74: #{tpu_custom_call.1} parent=1 // pred_check
      _
    $region75: #{tpu_custom_call.1} parent=1 // pred_check_branch
      %66 = sbr.rel (0) target = $region77
    $region76: #{tpu_custom_call.1} parent=1 // pred_region
      _
    $region77: #{tpu_custom_call.1} parent=1 // pred_fallthru
      _
    // Predicated region
    $region78: #{tpu_custom_call.1} parent=1 // pred_check
      _
    $region79: #{tpu_custom_call.1} parent=1 // pred_check_branch
      %68 = sbr.rel (0) target = $region81
    $region80: #{tpu_custom_call.1} parent=1 // pred_region
      _
    $region81: #{tpu_custom_call.1} parent=1 // pred_fallthru
      _
    %v70 = vld [vmem:[%s15] sm:$0xf]
    %v71 = vld [vmem:[%s0] sm:$0xff]
    %v72 = vld [vmem:[%s0 + $0x8] sm:$0xff]
    %v73 = vld [vmem:[%s0 + $0x10] sm:$0xff]
    %v74 = vld [vmem:[%s0 + $0x18] sm:$0xff]
    %v75 = vld [vmem:[%s0 + $0x20] sm:$0xff]
    %v76 = vld [vmem:[%s0 + $0x28] sm:$0xff]
    %v77 = vld [vmem:[%s0 + $0x30] sm:$0xff]
    %v78 = vld [vmem:[%s0 + $0x38] sm:$0xff]
    %v79 = vld [vmem:[%s0 + $0x40] sm:$0xff]
    %v80 = vld [vmem:[%s0 + $0x48] sm:$0xff]
    %v81 = vld [vmem:[%s0 + $0x50] sm:$0xff]
    %v82 = vld [vmem:[%s0 + $0x58] sm:$0xff]
    %v83 = vld [vmem:[%s0 + $0x60] sm:$0xff]
    %v84 = vld [vmem:[%s0 + $0x68] sm:$0xff]
    %v85 = vld [vmem:[%s0 + $0x70] sm:$0xff]
    %v86 = vld [vmem:[%s0 + $0x78] sm:$0xff]
    %v87 = vpack.c.bf16 %v72, %v71
    %v88 = vpack.c.bf16 %v74, %v73
    %v89 = vpack.c.bf16 %v76, %v75
    %v90 = vpack.c.bf16 %v78, %v77
    %v91 = vpack.c.bf16 %v80, %v79
    %v92 = vpack.c.bf16 %v82, %v81
    %v93 = vpack.c.bf16 %v84, %v83
    %v94 = vpack.c.bf16 %v86, %v85
    %v95 = vld [vmem:[%s3] sm:$0x1]
    %vm96 = vcmask 15360
    %v98 = vsel %vm96, %v87, 0
    %v101 = vsel %vm96, %v88, 0
    %v104 = vsel %vm96, %v89, 0
    %v107 = vsel %vm96, %v90, 0
    %v110 = vsel %vm96, %v91, 0
    %v113 = vsel %vm96, %v92, 0
    %v116 = vsel %vm96, %v93, 0
    %v119 = vsel %vm96, %v94, 0
    %vm121 = vcmask 1040384
    %v123 = vsel %vm121, %v95, 0
    %125 = vmatprep.subr.bf16.mxu0 0
    %126 = vmatpush1.bf16.msra.mxu0 0
    %127 = vmatprep.subr.bf16.mxu0 0
    %128 = vmatpush1.bf16.msra.mxu0 0
    %129 = vmatprep.subr.bf16.mxu0 0
    %130 = vmatpush1.bf16.msra.mxu0 0
    %131 = vmatprep.subr.bf16.mxu0 0
    %132 = vmatpush1.bf16.msra.mxu0 0
    %133 = vmatprep.subr.bf16.mxu0 0
    %134 = vmatpush1.bf16.msra.mxu0 0
    %135 = vmatprep.subr.bf16.mxu0 0
    %136 = vmatpush1.bf16.msra.mxu0 0
    %137 = vmatprep.subr.bf16.mxu0 0
    %138 = vmatpush1.bf16.msra.mxu0 0
    %139 = vmatprep.subr.bf16.mxu0 0
    %140 = vmatpush1.bf16.msra.mxu0 %v123
    %141 = vmatprep.subr.bf16.mxu0 0
    %142 = vmatpush2.bf16.msra.mxu0 0
    %143 = vmatprep.subr.bf16.mxu0 0
    %144 = vmatpush2.bf16.msra.mxu0 0
    %145 = vmatprep.subr.bf16.mxu0 0
    %146 = vmatpush2.bf16.msra.mxu0 0
    %147 = vmatprep.subr.bf16.mxu0 0
    %148 = vmatpush2.bf16.msra.mxu0 0
    %149 = vmatprep.subr.bf16.mxu0 0
    %150 = vmatpush2.bf16.msra.mxu0 0
    %151 = vmatprep.subr.bf16.mxu0 0
    %152 = vmatpush2.bf16.msra.mxu0 0
    %153 = vmatprep.subr.bf16.mxu0 0
    %154 = vmatpush2.bf16.msra.mxu0 0
    %155 = vmatprep.subr.bf16.mxu0 0
    %156 = vmatpush2.bf16.msra.mxu0 0
    %157 = vmatprep.mubr.bf16.mxu0 0
    %158 = vmatmul.mubr.bf16.gmra.mxu0 %v98
    %v159 = vpop.f32.mrf.mxu0
    %v160 = vadd.f32 0.0, %v159
    %v161 = vpop.f32.mrf.mxu0
    %v162 = vpop.f32.mrf.mxu0
    %v163 = vadd.f32 0.0, %v162
    %v164 = vpop.f32.mrf.mxu0
    %165 = vmatprep.mubr.bf16.mxu0 0
    %166 = vmatmul.mubr.bf16.gmra.mxu0 %v101
    %v167 = vpop.f32.mrf.mxu0
    %v168 = vadd.f32 0.0, %v167
    %v169 = vpop.f32.mrf.mxu0
    %v170 = vpop.f32.mrf.mxu0
    %v171 = vadd.f32 0.0, %v170
    %v172 = vpop.f32.mrf.mxu0
    %173 = vmatprep.mubr.bf16.mxu0 0
    %174 = vmatmul.mubr.bf16.gmra.mxu0 %v104
    %v175 = vpop.f32.mrf.mxu0
    %v176 = vadd.f32 0.0, %v175
    %v177 = vpop.f32.mrf.mxu0
    %v178 = vpop.f32.mrf.mxu0
    %v179 = vadd.f32 0.0, %v178
    %v180 = vpop.f32.mrf.mxu0
    %181 = vmatprep.mubr.bf16.mxu0 0
    %182 = vmatmul.mubr.bf16.gmra.mxu0 %v107
    %v183 = vpop.f32.mrf.mxu0
    %v184 = vadd.f32 0.0, %v183
    %v185 = vpop.f32.mrf.mxu0
    %v186 = vpop.f32.mrf.mxu0
    %v187 = vadd.f32 0.0, %v186
    %v188 = vpop.f32.mrf.mxu0
    %189 = vmatprep.mubr.bf16.mxu0 0
    %190 = vmatmul.mubr.bf16.gmra.mxu0 %v110
    %v191 = vpop.f32.mrf.mxu0
    %v192 = vadd.f32 0.0, %v191
    %v193 = vpop.f32.mrf.mxu0
    %v194 = vpop.f32.mrf.mxu0
    %v195 = vadd.f32 0.0, %v194
    %v196 = vpop.f32.mrf.mxu0
    %197 = vmatprep.mubr.bf16.mxu0 0
    %198 = vmatmul.mubr.bf16.gmra.mxu0 %v113
    %v199 = vpop.f32.mrf.mxu0
    %v200 = vadd.f32 0.0, %v199
    %v201 = vpop.f32.mrf.mxu0
    %v202 = vpop.f32.mrf.mxu0
    %v203 = vadd.f32 0.0, %v202
    %v204 = vpop.f32.mrf.mxu0
    %205 = vmatprep.mubr.bf16.mxu0 0
    %206 = vmatmul.mubr.bf16.gmra.mxu0 %v116
    %v207 = vpop.f32.mrf.mxu0
    %v208 = vadd.f32 0.0, %v207
    %v209 = vpop.f32.mrf.mxu0
    %v210 = vpop.f32.mrf.mxu0
    %v211 = vadd.f32 0.0, %v210
    %v212 = vpop.f32.mrf.mxu0
    %213 = vmatprep.mubr.bf16.mxu0 0
    %214 = vmatmul.mubr.bf16.gmra.mxu0 %v119
    %v215 = vpop.f32.mrf.mxu0
    %v216 = vadd.f32 0.0, %v215
    %v217 = vpop.f32.mrf.mxu0
    %v218 = vpop.f32.mrf.mxu0
    %v219 = vadd.f32 0.0, %v218
    %v220 = vpop.f32.mrf.mxu0
    %221 = vdwg.mxu0
    %v222 = vld [vmem:[%s4] sm:$0xf]
    %223 = vmatprep.subr.mxu0 0.0
    %224 = vmatpush1.xpose.msra.mxu0 %v219
    %225 = vmatprep.subr.mxu0 0.0
    %226 = vmatpush1.xpose.msra.mxu0 %v216
    %227 = vmatprep.subr.mxu0 0.0
    %228 = vmatpush1.xpose.msra.mxu0 %v211
    %229 = vmatprep.subr.mxu0 0.0
    %230 = vmatpush1.xpose.msra.mxu0 %v208
    %231 = vmatprep.subr.mxu0 0.0
    %232 = vmatpush1.xpose.msra.mxu0 %v203
    %233 = vmatprep.subr.mxu0 0.0
    %234 = vmatpush1.xpose.msra.mxu0 %v200
    %235 = vmatprep.subr.mxu0 0.0
    %236 = vmatpush1.xpose.msra.mxu0 %v195
    %237 = vmatprep.subr.mxu0 0.0
    %238 = vmatpush1.xpose.msra.mxu0 %v192
    %239 = vmatprep.subr.mxu0 0.0
    %240 = vmatpush1.xpose.msra.mxu0 %v187
    %241 = vmatprep.subr.mxu0 0.0
    %242 = vmatpush1.xpose.msra.mxu0 %v184
    %243 = vmatprep.subr.mxu0 0.0
    %244 = vmatpush1.xpose.msra.mxu0 %v179
    %245 = vmatprep.subr.mxu0 0.0
    %246 = vmatpush1.xpose.msra.mxu0 %v176
    %247 = vmatprep.subr.mxu0 0.0
    %248 = vmatpush1.xpose.msra.mxu0 %v171
    %249 = vmatprep.subr.mxu0 0.0
    %250 = vmatpush1.xpose.msra.mxu0 %v168
    %251 = vmatprep.subr.mxu0 0.0
    %252 = vmatpush1.xpose.msra.mxu0 %v163
    %253 = vmatprep.subr.mxu0 0.0
    %254 = vmatpush1.xpose.msra.mxu0 %v160
    %255 = vmatprep.subr.mxu0 0.0
    %256 = vmatpush2.xpose.msra.mxu0 0.0
    %257 = vmatprep.subr.mxu0 0.0
    %258 = vmatpush2.xpose.msra.mxu0 0.0
    %259 = vmatprep.subr.mxu0 0.0
    %260 = vmatpush2.xpose.msra.mxu0 0.0
    %261 = vmatprep.subr.mxu0 0.0
    %262 = vmatpush2.xpose.msra.mxu0 0.0
    %263 = vmatprep.subr.mxu0 0.0
    %264 = vmatpush2.xpose.msra.mxu0 0.0
    %265 = vmatprep.subr.mxu0 0.0
    %266 = vmatpush2.xpose.msra.mxu0 0.0
    %267 = vmatprep.subr.mxu0 0.0
    %268 = vmatpush2.xpose.msra.mxu0 0.0
    %269 = vmatprep.subr.mxu0 0.0
    %270 = vmatpush2.xpose.msra.mxu0 0.0
    %271 = vmatprep.subr.mxu0 0.0
    %272 = vmatpush2.xpose.msra.mxu0 0.0
    %273 = vmatprep.subr.mxu0 0.0
    %274 = vmatpush2.xpose.msra.mxu0 0.0
    %275 = vmatprep.subr.mxu0 0.0
    %276 = vmatpush2.xpose.msra.mxu0 0.0
    %277 = vmatprep.subr.mxu0 0.0
    %278 = vmatpush2.xpose.msra.mxu0 0.0
    %279 = vmatprep.subr.mxu0 0.0
    %280 = vmatpush2.xpose.msra.mxu0 0.0
    %281 = vmatprep.subr.mxu0 0.0
    %282 = vmatpush2.xpose.msra.mxu0 0.0
    %283 = vmatprep.subr.mxu0 0.0
    %284 = vmatpush2.xpose.msra.mxu0 0.0
    %285 = vmatprep.subr.mxu0 0.0
    %286 = vmatpush2.xpose.msra.mxu0 0.0
    %287 = vmatprep.mubr.f32.mxu0 0.0
    %288 = vmatmul.mubr.f32.gmra.mxu0 %v222
    %v289 = vpop.f32.mrf.mxu0
    %v290 = vadd.f32 0.0, %v289
    %v291 = vpop.f32.mrf.mxu0
    %292 = vdwg.mxu0
    %v293 = vld [vmem:[%s5] sm:$0xff]
    %v294 = vld [vmem:[%s5 + $0x8] sm:$0xff]
    %v295 = vld [vmem:[%s5 + $0x10] sm:$0xff]
    %v296 = vld [vmem:[%s5 + $0x18] sm:$0xff]
    %v297 = vld [vmem:[%s5 + $0x20] sm:$0xff]
    %v298 = vld [vmem:[%s5 + $0x28] sm:$0xff]
    %v299 = vld [vmem:[%s5 + $0x30] sm:$0xff]
    %v300 = vld [vmem:[%s5 + $0x38] sm:$0xff]
    %v301 = vld [vmem:[%s5 + $0x40] sm:$0xff]
    %v302 = vld [vmem:[%s5 + $0x48] sm:$0xff]
    %v303 = vld [vmem:[%s5 + $0x50] sm:$0xff]
    %v304 = vld [vmem:[%s5 + $0x58] sm:$0xff]
    %v305 = vld [vmem:[%s5 + $0x60] sm:$0xff]
    %v306 = vld [vmem:[%s5 + $0x68] sm:$0xff]
    %v307 = vld [vmem:[%s5 + $0x70] sm:$0xff]
    %v308 = vld [vmem:[%s5 + $0x78] sm:$0xff]
    %309 = vmatprep.subr.mxu0 0.0
    %310 = vmatpush1.msra.mxu0 %v308
    %311 = vmatprep.subr.mxu0 0.0
    %312 = vmatpush1.msra.mxu0 %v307
    %313 = vmatprep.subr.mxu0 0.0
    %314 = vmatpush1.msra.mxu0 %v306
    %315 = vmatprep.subr.mxu0 0.0
    %316 = vmatpush1.msra.mxu0 %v305
    %317 = vmatprep.subr.mxu0 0.0
    %318 = vmatpush1.msra.mxu0 %v304
    %319 = vmatprep.subr.mxu0 0.0
    %320 = vmatpush1.msra.mxu0 %v303
    %321 = vmatprep.subr.mxu0 0.0
    %322 = vmatpush1.msra.mxu0 %v302
    %323 = vmatprep.subr.mxu0 0.0
    %324 = vmatpush1.msra.mxu0 %v301
    %325 = vmatprep.subr.mxu0 0.0
    %326 = vmatpush1.msra.mxu0 %v300
    %327 = vmatprep.subr.mxu0 0.0
    %328 = vmatpush1.msra.mxu0 %v299
    %329 = vmatprep.subr.mxu0 0.0
    %330 = vmatpush1.msra.mxu0 %v298
    %331 = vmatprep.subr.mxu0 0.0
    %332 = vmatpush1.msra.mxu0 %v297
    %333 = vmatprep.subr.mxu0 0.0
    %334 = vmatpush1.msra.mxu0 %v296
    %335 = vmatprep.subr.mxu0 0.0
    %336 = vmatpush1.msra.mxu0 %v295
    %337 = vmatprep.subr.mxu0 0.0
    %338 = vmatpush1.msra.mxu0 %v294
    %339 = vmatprep.subr.mxu0 0.0
    %340 = vmatpush1.msra.mxu0 %v293
    %341 = vmatprep.subr.mxu0 0.0
    %342 = vmatpush2.msra.mxu0 0.0
    %343 = vmatprep.subr.mxu0 0.0
    %344 = vmatpush2.msra.mxu0 0.0
    %345 = vmatprep.subr.mxu0 0.0
    %346 = vmatpush2.msra.mxu0 0.0
    %347 = vmatprep.subr.mxu0 0.0
    %348 = vmatpush2.msra.mxu0 0.0
    %349 = vmatprep.subr.mxu0 0.0
    %350 = vmatpush2.msra.mxu0 0.0
    %351 = vmatprep.subr.mxu0 0.0
    %352 = vmatpush2.msra.mxu0 0.0
    %353 = vmatprep.subr.mxu0 0.0
    %354 = vmatpush2.msra.mxu0 0.0
    %355 = vmatprep.subr.mxu0 0.0
    %356 = vmatpush2.msra.mxu0 0.0
    %357 = vmatprep.subr.mxu0 0.0
    %358 = vmatpush2.msra.mxu0 0.0
    %359 = vmatprep.subr.mxu0 0.0
    %360 = vmatpush2.msra.mxu0 0.0
    %361 = vmatprep.subr.mxu0 0.0
    %362 = vmatpush2.msra.mxu0 0.0
    %363 = vmatprep.subr.mxu0 0.0
    %364 = vmatpush2.msra.mxu0 0.0
    %365 = vmatprep.subr.mxu0 0.0
    %366 = vmatpush2.msra.mxu0 0.0
    %367 = vmatprep.subr.mxu0 0.0
    %368 = vmatpush2.msra.mxu0 0.0
    %369 = vmatprep.subr.mxu0 0.0
    %370 = vmatpush2.msra.mxu0 0.0
    %371 = vmatprep.subr.mxu0 0.0
    %372 = vmatpush2.msra.mxu0 0.0
    %373 = vmatprep.mubr.f32.mxu0 0.0
    %374 = vmatmul.mubr.f32.gmra.mxu0 %v160
    %v375 = vpop.f32.mrf.mxu0
    %v376 = vadd.f32 0.0, %v375
    %v377 = vpop.f32.mrf.mxu0
    %378 = vmatprep.mubr.f32.mxu0 0.0
    %379 = vmatmul.mubr.f32.gmra.mxu0 %v163
    %v380 = vpop.f32.mrf.mxu0
    %v381 = vadd.f32 0.0, %v380
    %v382 = vpop.f32.mrf.mxu0
    %383 = vmatprep.mubr.f32.mxu0 0.0
    %384 = vmatmul.mubr.f32.gmra.mxu0 %v168
    %v385 = vpop.f32.mrf.mxu0
    %v386 = vadd.f32 0.0, %v385
    %v387 = vpop.f32.mrf.mxu0
    %388 = vmatprep.mubr.f32.mxu0 0.0
    %389 = vmatmul.mubr.f32.gmra.mxu0 %v171
    %v390 = vpop.f32.mrf.mxu0
    %v391 = vadd.f32 0.0, %v390
    %v392 = vpop.f32.mrf.mxu0
    %393 = vmatprep.mubr.f32.mxu0 0.0
    %394 = vmatmul.mubr.f32.gmra.mxu0 %v176
    %v395 = vpop.f32.mrf.mxu0
    %v396 = vadd.f32 0.0, %v395
    %v397 = vpop.f32.mrf.mxu0
    %398 = vmatprep.mubr.f32.mxu0 0.0
    %399 = vmatmul.mubr.f32.gmra.mxu0 %v179
    %v400 = vpop.f32.mrf.mxu0
    %v401 = vadd.f32 0.0, %v400
    %v402 = vpop.f32.mrf.mxu0
    %403 = vmatprep.mubr.f32.mxu0 0.0
    %404 = vmatmul.mubr.f32.gmra.mxu0 %v184
    %v405 = vpop.f32.mrf.mxu0
    %v406 = vadd.f32 0.0, %v405
    %v407 = vpop.f32.mrf.mxu0
    %408 = vmatprep.mubr.f32.mxu0 0.0
    %409 = vmatmul.mubr.f32.gmra.mxu0 %v187
    %v410 = vpop.f32.mrf.mxu0
    %v411 = vadd.f32 0.0, %v410
    %v412 = vpop.f32.mrf.mxu0
    %413 = vmatprep.mubr.f32.mxu0 0.0
    %414 = vmatmul.mubr.f32.gmra.mxu0 %v192
    %v415 = vpop.f32.mrf.mxu0
    %v416 = vadd.f32 0.0, %v415
    %v417 = vpop.f32.mrf.mxu0
    %418 = vmatprep.mubr.f32.mxu0 0.0
    %419 = vmatmul.mubr.f32.gmra.mxu0 %v195
    %v420 = vpop.f32.mrf.mxu0
    %v421 = vadd.f32 0.0, %v420
    %v422 = vpop.f32.mrf.mxu0
    %423 = vmatprep.mubr.f32.mxu0 0.0
    %424 = vmatmul.mubr.f32.gmra.mxu0 %v200
    %v425 = vpop.f32.mrf.mxu0
    %v426 = vadd.f32 0.0, %v425
    %v427 = vpop.f32.mrf.mxu0
    %428 = vmatprep.mubr.f32.mxu0 0.0
    %429 = vmatmul.mubr.f32.gmra.mxu0 %v203
    %v430 = vpop.f32.mrf.mxu0
    %v431 = vadd.f32 0.0, %v430
    %v432 = vpop.f32.mrf.mxu0
    %433 = vmatprep.mubr.f32.mxu0 0.0
    %434 = vmatmul.mubr.f32.gmra.mxu0 %v208
    %v435 = vpop.f32.mrf.mxu0
    %v436 = vadd.f32 0.0, %v435
    %v437 = vpop.f32.mrf.mxu0
    %438 = vmatprep.mubr.f32.mxu0 0.0
    %439 = vmatmul.mubr.f32.gmra.mxu0 %v211
    %v440 = vpop.f32.mrf.mxu0
    %v441 = vadd.f32 0.0, %v440
    %v442 = vpop.f32.mrf.mxu0
    %443 = vmatprep.mubr.f32.mxu0 0.0
    %444 = vmatmul.mubr.f32.gmra.mxu0 %v216
    %v445 = vpop.f32.mrf.mxu0
    %v446 = vadd.f32 0.0, %v445
    %v447 = vpop.f32.mrf.mxu0
    %448 = vmatprep.mubr.f32.mxu0 0.0
    %449 = vmatmul.mubr.f32.gmra.mxu0 %v219
    %v450 = vpop.f32.mrf.mxu0
    %v451 = vadd.f32 0.0, %v450
    %v452 = vpop.f32.mrf.mxu0
    %453 = vdwg.mxu0
    %455 = vset.pattern.permute.xlu0 0
    %456 = vperm.xlu0 %455, %v376
    %v457 = vpop.permute.xlu0 %456
    %460 = vset.pattern.permute.xlu0 0
    %461 = vperm.xlu0 %460, %v381
    %v462 = vpop.permute.xlu0 %461
    %465 = vset.pattern.permute.xlu0 0
    %466 = vperm.xlu0 %465, %v386
    %v467 = vpop.permute.xlu0 %466
    %470 = vset.pattern.permute.xlu0 0
    %471 = vperm.xlu0 %470, %v391
    %v472 = vpop.permute.xlu0 %471
    %475 = vset.pattern.permute.xlu0 0
    %476 = vperm.xlu0 %475, %v396
    %v477 = vpop.permute.xlu0 %476
    %480 = vset.pattern.permute.xlu0 0
    %481 = vperm.xlu0 %480, %v401
    %v482 = vpop.permute.xlu0 %481
    %485 = vset.pattern.permute.xlu0 0
    %486 = vperm.xlu0 %485, %v406
    %v487 = vpop.permute.xlu0 %486
    %490 = vset.pattern.permute.xlu0 0
    %491 = vperm.xlu0 %490, %v411
    %v492 = vpop.permute.xlu0 %491
    %495 = vset.pattern.permute.xlu0 0
    %496 = vperm.xlu0 %495, %v416
    %v497 = vpop.permute.xlu0 %496
    %500 = vset.pattern.permute.xlu0 0
    %501 = vperm.xlu0 %500, %v421
    %v502 = vpop.permute.xlu0 %501
    %505 = vset.pattern.permute.xlu0 0
    %506 = vperm.xlu0 %505, %v426
    %v507 = vpop.permute.xlu0 %506
    %510 = vset.pattern.permute.xlu0 0
    %511 = vperm.xlu0 %510, %v431
    %v512 = vpop.permute.xlu0 %511
    %515 = vset.pattern.permute.xlu0 0
    %516 = vperm.xlu0 %515, %v436
    %v517 = vpop.permute.xlu0 %516
    %520 = vset.pattern.permute.xlu0 0
    %521 = vperm.xlu0 %520, %v441
    %v522 = vpop.permute.xlu0 %521
    %525 = vset.pattern.permute.xlu0 0
    %526 = vperm.xlu0 %525, %v446
    %v527 = vpop.permute.xlu0 %526
    %530 = vset.pattern.permute.xlu0 0
    %531 = vperm.xlu0 %530, %v451
    %v532 = vpop.permute.xlu0 %531
    %v534 = vlaneseq
    %v535 = vshrl.u32 %v534, 7
    %v536 = vsub.s32 0, %v535
    %v537 = vrot.slane %v290, %v536
    %v538 = vadd.f32 %v457, %v537
    %v539 = vadd.f32 %v462, %v537
    %v540 = vadd.f32 %v467, %v537
    %v541 = vadd.f32 %v472, %v537
    %v542 = vadd.f32 %v477, %v537
    %v543 = vadd.f32 %v482, %v537
    %v544 = vadd.f32 %v487, %v537
    %v545 = vadd.f32 %v492, %v537
    %v546 = vadd.f32 %v497, %v537
    %v547 = vadd.f32 %v502, %v537
    %v548 = vadd.f32 %v507, %v537
    %v549 = vadd.f32 %v512, %v537
    %v550 = vadd.f32 %v517, %v537
    %v551 = vadd.f32 %v522, %v537
    %v552 = vadd.f32 %v527, %v537
    %v553 = vadd.f32 %v532, %v537
    %554 = vst [vmem:[#allocation2] sm:$0xff] %v538
    %555 = vst [vmem:[#allocation2 + $0x20] sm:$0xff] %v539
    %556 = vst [vmem:[#allocation2 + $0x40] sm:$0xff] %v540
    %557 = vst [vmem:[#allocation2 + $0x60] sm:$0xff] %v541
    %558 = vst [vmem:[#allocation2 + $0x80] sm:$0xff] %v542
    %559 = vst [vmem:[#allocation2 + $0xa0] sm:$0xff] %v543
    %560 = vst [vmem:[#allocation2 + $0xc0] sm:$0xff] %v544
    %561 = vst [vmem:[#allocation2 + $0xe0] sm:$0xff] %v545
    %562 = vst [vmem:[#allocation2 + $0x100] sm:$0xff] %v546
    %563 = vst [vmem:[#allocation2 + $0x120] sm:$0xff] %v547
    %564 = vst [vmem:[#allocation2 + $0x140] sm:$0xff] %v548
    %565 = vst [vmem:[#allocation2 + $0x160] sm:$0xff] %v549
    %566 = vst [vmem:[#allocation2 + $0x180] sm:$0xff] %v550
    %567 = vst [vmem:[#allocation2 + $0x1a0] sm:$0xff] %v551
    %568 = vst [vmem:[#allocation2 + $0x1c0] sm:$0xff] %v552
    %569 = vst [vmem:[#allocation2 + $0x1e0] sm:$0xff] %v553
    %v570 = vlaneseq
    %v571 = vshrl.u32 %v570, 7
    %v572 = vsub.s32 0, %v571
    %v573 = vrot.slane %v70, %v572
    %v574 = vmul.f32 %v160, %v573
    %v575 = vmul.f32 %v163, %v573
    %v576 = vmul.f32 %v168, %v573
    %v577 = vmul.f32 %v171, %v573
    %v578 = vmul.f32 %v176, %v573
    %v579 = vmul.f32 %v179, %v573
    %v580 = vmul.f32 %v184, %v573
    %v581 = vmul.f32 %v187, %v573
    %v582 = vmul.f32 %v192, %v573
    %v583 = vmul.f32 %v195, %v573
    %v584 = vmul.f32 %v200, %v573
    %v585 = vmul.f32 %v203, %v573
    %v586 = vmul.f32 %v208, %v573
    %v587 = vmul.f32 %v211, %v573
    %v588 = vmul.f32 %v216, %v573
    %v589 = vmul.f32 %v219, %v573
    %v590 = vpack.c.bf16 %v575, %v574
    %v591 = vpack.c.bf16 %v577, %v576
    %v592 = vpack.c.bf16 %v579, %v578
    %v593 = vpack.c.bf16 %v581, %v580
    %v594 = vpack.c.bf16 %v583, %v582
    %v595 = vpack.c.bf16 %v585, %v584
    %v596 = vpack.c.bf16 %v587, %v586
    %v597 = vpack.c.bf16 %v589, %v588
    %v606 = vunpack.c.l.b16 %v590
    %v607 = vunpack.c.h.b16 %v590
    %v608 = vunpack.c.l.b16 %v591
    %v609 = vunpack.c.h.b16 %v591
    %v610 = vunpack.c.l.b16 %v592
    %v611 = vunpack.c.h.b16 %v592
    %v612 = vunpack.c.l.b16 %v593
    %v613 = vunpack.c.h.b16 %v593
    %v614 = vunpack.c.l.b16 %v594
    %v615 = vunpack.c.h.b16 %v594
    %v616 = vunpack.c.l.b16 %v595
    %v617 = vunpack.c.h.b16 %v595
    %v618 = vunpack.c.l.b16 %v596
    %v619 = vunpack.c.h.b16 %v596
    %v620 = vunpack.c.l.b16 %v597
    %v621 = vunpack.c.h.b16 %v597
    %v622 = vpack.c.b16 %v606, %v606
    %v623 = vpack.c.b16 %v607, %v607
    %v624 = vpack.c.b16 %v608, %v608
    %v625 = vpack.c.b16 %v609, %v609
    %v626 = vpack.c.b16 %v610, %v610
    %v627 = vpack.c.b16 %v611, %v611
    %v628 = vpack.c.b16 %v612, %v612
    %v629 = vpack.c.b16 %v613, %v613
    %v630 = vpack.c.b16 %v614, %v614
    %v631 = vpack.c.b16 %v615, %v615
    %v632 = vpack.c.b16 %v616, %v616
    %v633 = vpack.c.b16 %v617, %v617
    %v634 = vpack.c.b16 %v618, %v618
    %v635 = vpack.c.b16 %v619, %v619
    %v636 = vpack.c.b16 %v620, %v620
    %v637 = vpack.c.b16 %v621, %v621
    %654 = vst [vmem:[#allocation3] sm:$0xf] %v622
    %655 = vst [vmem:[#allocation3 + $0x4] sm:$0xf] %v623
    %656 = vst [vmem:[#allocation3 + $0x8] sm:$0xf] %v624
    %657 = vst [vmem:[#allocation3 + $0xc] sm:$0xf] %v625
    %658 = vst [vmem:[#allocation3 + $0x10] sm:$0xf] %v626
    %659 = vst [vmem:[#allocation3 + $0x14] sm:$0xf] %v627
    %660 = vst [vmem:[#allocation3 + $0x18] sm:$0xf] %v628
    %661 = vst [vmem:[#allocation3 + $0x1c] sm:$0xf] %v629
    %662 = vst [vmem:[#allocation3 + $0x20] sm:$0xf] %v630
    %663 = vst [vmem:[#allocation3 + $0x24] sm:$0xf] %v631
    %664 = vst [vmem:[#allocation3 + $0x28] sm:$0xf] %v632
    %665 = vst [vmem:[#allocation3 + $0x2c] sm:$0xf] %v633
    %666 = vst [vmem:[#allocation3 + $0x30] sm:$0xf] %v634
    %667 = vst [vmem:[#allocation3 + $0x34] sm:$0xf] %v635
    %668 = vst [vmem:[#allocation3 + $0x38] sm:$0xf] %v636
    %669 = vst [vmem:[#allocation3 + $0x3c] sm:$0xf] %v637
    %670 = vset.pattern.permute.xlu0 1
    %671 = vperm.xlu0 %670, %v376
    %v672 = vpop.permute.xlu0 %671
    %674 = vset.pattern.permute.xlu0 1
    %675 = vperm.xlu0 %674, %v381
    %v676 = vpop.permute.xlu0 %675
    %678 = vset.pattern.permute.xlu0 1
    %679 = vperm.xlu0 %678, %v386
    %v680 = vpop.permute.xlu0 %679
    %682 = vset.pattern.permute.xlu0 1
    %683 = vperm.xlu0 %682, %v391
    %v684 = vpop.permute.xlu0 %683
    %686 = vset.pattern.permute.xlu0 1
    %687 = vperm.xlu0 %686, %v396
    %v688 = vpop.permute.xlu0 %687
    %690 = vset.pattern.permute.xlu0 1
    %691 = vperm.xlu0 %690, %v401
    %v692 = vpop.permute.xlu0 %691
    %694 = vset.pattern.permute.xlu0 1
    %695 = vperm.xlu0 %694, %v406
    %v696 = vpop.permute.xlu0 %695
    %698 = vset.pattern.permute.xlu0 1
    %699 = vperm.xlu0 %698, %v411
    %v700 = vpop.permute.xlu0 %699
    %702 = vset.pattern.permute.xlu0 1
    %703 = vperm.xlu0 %702, %v416
    %v704 = vpop.permute.xlu0 %703
    %706 = vset.pattern.permute.xlu0 1
    %707 = vperm.xlu0 %706, %v421
    %v708 = vpop.permute.xlu0 %707
    %710 = vset.pattern.permute.xlu0 1
    %711 = vperm.xlu0 %710, %v426
    %v712 = vpop.permute.xlu0 %711
    %714 = vset.pattern.permute.xlu0 1
    %715 = vperm.xlu0 %714, %v431
    %v716 = vpop.permute.xlu0 %715
    %718 = vset.pattern.permute.xlu0 1
    %719 = vperm.xlu0 %718, %v436
    %v720 = vpop.permute.xlu0 %719
    %722 = vset.pattern.permute.xlu0 1
    %723 = vperm.xlu0 %722, %v441
    %v724 = vpop.permute.xlu0 %723
    %726 = vset.pattern.permute.xlu0 1
    %727 = vperm.xlu0 %726, %v446
    %v728 = vpop.permute.xlu0 %727
    %730 = vset.pattern.permute.xlu0 1
    %731 = vperm.xlu0 %730, %v451
    %v732 = vpop.permute.xlu0 %731
    %v734 = vlaneseq
    %v735 = vshrl.u32 %v734, 7
    %v736 = vsub.s32 1, %v735
    %v737 = vrot.slane %v290, %v736
    %v738 = vadd.f32 %v672, %v737
    %v739 = vadd.f32 %v676, %v737
    %v740 = vadd.f32 %v680, %v737
    %v741 = vadd.f32 %v684, %v737
    %v742 = vadd.f32 %v688, %v737
    %v743 = vadd.f32 %v692, %v737
    %v744 = vadd.f32 %v696, %v737
    %v745 = vadd.f32 %v700, %v737
    %v746 = vadd.f32 %v704, %v737
    %v747 = vadd.f32 %v708, %v737
    %v748 = vadd.f32 %v712, %v737
    %v749 = vadd.f32 %v716, %v737
    %v750 = vadd.f32 %v720, %v737
    %v751 = vadd.f32 %v724, %v737
    %v752 = vadd.f32 %v728, %v737
    %v753 = vadd.f32 %v732, %v737
    %754 = vst [vmem:[#allocation2 + $0x8] sm:$0xff] %v738
    %755 = vst [vmem:[#allocation2 + $0x28] sm:$0xff] %v739
    %756 = vst [vmem:[#allocation2 + $0x48] sm:$0xff] %v740
    %757 = vst [vmem:[#allocation2 + $0x68] sm:$0xff] %v741
    %758 = vst [vmem:[#allocation2 + $0x88] sm:$0xff] %v742
    %759 = vst [vmem:[#allocation2 + $0xa8] sm:$0xff] %v743
    %760 = vst [vmem:[#allocation2 + $0xc8] sm:$0xff] %v744
    %761 = vst [vmem:[#allocation2 + $0xe8] sm:$0xff] %v745
    %762 = vst [vmem:[#allocation2 + $0x108] sm:$0xff] %v746
    %763 = vst [vmem:[#allocation2 + $0x128] sm:$0xff] %v747
    %764 = vst [vmem:[#allocation2 + $0x148] sm:$0xff] %v748
    %765 = vst [vmem:[#allocation2 + $0x168] sm:$0xff] %v749
    %766 = vst [vmem:[#allocation2 + $0x188] sm:$0xff] %v750
    %767 = vst [vmem:[#allocation2 + $0x1a8] sm:$0xff] %v751
    %768 = vst [vmem:[#allocation2 + $0x1c8] sm:$0xff] %v752
    %769 = vst [vmem:[#allocation2 + $0x1e8] sm:$0xff] %v753
    %v770 = vlaneseq
    %v771 = vshrl.u32 %v770, 7
    %v772 = vsub.s32 1, %v771
    %v773 = vrot.slane %v70, %v772
    %v774 = vmul.f32 %v160, %v773
    %v775 = vmul.f32 %v163, %v773
    %v776 = vmul.f32 %v168, %v773
    %v777 = vmul.f32 %v171, %v773
    %v778 = vmul.f32 %v176, %v773
    %v779 = vmul.f32 %v179, %v773
    %v780 = vmul.f32 %v184, %v773
    %v781 = vmul.f32 %v187, %v773
    %v782 = vmul.f32 %v192, %v773
    %v783 = vmul.f32 %v195, %v773
    %v784 = vmul.f32 %v200, %v773
    %v785 = vmul.f32 %v203, %v773
    %v786 = vmul.f32 %v208, %v773
    %v787 = vmul.f32 %v211, %v773
    %v788 = vmul.f32 %v216, %v773
    %v789 = vmul.f32 %v219, %v773
    %v790 = vpack.c.bf16 %v775, %v774
    %v791 = vpack.c.bf16 %v777, %v776
    %v792 = vpack.c.bf16 %v779, %v778
    %v793 = vpack.c.bf16 %v781, %v780
    %v794 = vpack.c.bf16 %v783, %v782
    %v795 = vpack.c.bf16 %v785, %v784
    %v796 = vpack.c.bf16 %v787, %v786
    %v797 = vpack.c.bf16 %v789, %v788
    %v806 = vunpack.c.l.b16 %v790
    %v807 = vunpack.c.h.b16 %v790
    %v808 = vunpack.c.l.b16 %v791
    %v809 = vunpack.c.h.b16 %v791
    %v810 = vunpack.c.l.b16 %v792
    %v811 = vunpack.c.h.b16 %v792
    %v812 = vunpack.c.l.b16 %v793
    %v813 = vunpack.c.h.b16 %v793
    %v814 = vunpack.c.l.b16 %v794
    %v815 = vunpack.c.h.b16 %v794
    %v816 = vunpack.c.l.b16 %v795
    %v817 = vunpack.c.h.b16 %v795
    %v818 = vunpack.c.l.b16 %v796
    %v819 = vunpack.c.h.b16 %v796
    %v820 = vunpack.c.l.b16 %v797
    %v821 = vunpack.c.h.b16 %v797
    %v822 = vpack.c.b16 %v806, %v806
    %v823 = vpack.c.b16 %v807, %v807
    %v824 = vpack.c.b16 %v808, %v808
    %v825 = vpack.c.b16 %v809, %v809
    %v826 = vpack.c.b16 %v810, %v810
    %v827 = vpack.c.b16 %v811, %v811
    %v828 = vpack.c.b16 %v812, %v812
    %v829 = vpack.c.b16 %v813, %v813
    %v830 = vpack.c.b16 %v814, %v814
    %v831 = vpack.c.b16 %v815, %v815
    %v832 = vpack.c.b16 %v816, %v816
    %v833 = vpack.c.b16 %v817, %v817
    %v834 = vpack.c.b16 %v818, %v818
    %v835 = vpack.c.b16 %v819, %v819
    %v836 = vpack.c.b16 %v820, %v820
    %v837 = vpack.c.b16 %v821, %v821
    %854 = vst [vmem:[#allocation3 + $0x40] sm:$0xf] %v822
    %855 = vst [vmem:[#allocation3 + $0x44] sm:$0xf] %v823
    %856 = vst [vmem:[#allocation3 + $0x48] sm:$0xf] %v824
    %857 = vst [vmem:[#allocation3 + $0x4c] sm:$0xf] %v825
    %858 = vst [vmem:[#allocation3 + $0x50] sm:$0xf] %v826
    %859 = vst [vmem:[#allocation3 + $0x54] sm:$0xf] %v827
    %860 = vst [vmem:[#allocation3 + $0x58] sm:$0xf] %v828
    %861 = vst [vmem:[#allocation3 + $0x5c] sm:$0xf] %v829
    %862 = vst [vmem:[#allocation3 + $0x60] sm:$0xf] %v830
    %863 = vst [vmem:[#allocation3 + $0x64] sm:$0xf] %v831
    %864 = vst [vmem:[#allocation3 + $0x68] sm:$0xf] %v832
    %865 = vst [vmem:[#allocation3 + $0x6c] sm:$0xf] %v833
    %866 = vst [vmem:[#allocation3 + $0x70] sm:$0xf] %v834
    %867 = vst [vmem:[#allocation3 + $0x74] sm:$0xf] %v835
    %868 = vst [vmem:[#allocation3 + $0x78] sm:$0xf] %v836
    %869 = vst [vmem:[#allocation3 + $0x7c] sm:$0xf] %v837
    %870 = vset.pattern.permute.xlu0 2
    %871 = vperm.xlu0 %870, %v376
    %v872 = vpop.permute.xlu0 %871
    %874 = vset.pattern.permute.xlu0 2
    %875 = vperm.xlu0 %874, %v381
    %v876 = vpop.permute.xlu0 %875
    %878 = vset.pattern.permute.xlu0 2
    %879 = vperm.xlu0 %878, %v386
    %v880 = vpop.permute.xlu0 %879
    %882 = vset.pattern.permute.xlu0 2
    %883 = vperm.xlu0 %882, %v391
    %v884 = vpop.permute.xlu0 %883
    %886 = vset.pattern.permute.xlu0 2
    %887 = vperm.xlu0 %886, %v396
    %v888 = vpop.permute.xlu0 %887
    %890 = vset.pattern.permute.xlu0 2
    %891 = vperm.xlu0 %890, %v401
    %v892 = vpop.permute.xlu0 %891
    %894 = vset.pattern.permute.xlu0 2
    %895 = vperm.xlu0 %894, %v406
    %v896 = vpop.permute.xlu0 %895
    %898 = vset.pattern.permute.xlu0 2
    %899 = vperm.xlu0 %898, %v411
    %v900 = vpop.permute.xlu0 %899
    %902 = vset.pattern.permute.xlu0 2
    %903 = vperm.xlu0 %902, %v416
    %v904 = vpop.permute.xlu0 %903
    %906 = vset.pattern.permute.xlu0 2
    %907 = vperm.xlu0 %906, %v421
    %v908 = vpop.permute.xlu0 %907
    %910 = vset.pattern.permute.xlu0 2
    %911 = vperm.xlu0 %910, %v426
    %v912 = vpop.permute.xlu0 %911
    %914 = vset.pattern.permute.xlu0 2
    %915 = vperm.xlu0 %914, %v431
    %v916 = vpop.permute.xlu0 %915
    %918 = vset.pattern.permute.xlu0 2
    %919 = vperm.xlu0 %918, %v436
    %v920 = vpop.permute.xlu0 %919
    %922 = vset.pattern.permute.xlu0 2
    %923 = vperm.xlu0 %922, %v441
    %v924 = vpop.permute.xlu0 %923
    %926 = vset.pattern.permute.xlu0 2
    %927 = vperm.xlu0 %926, %v446
    %v928 = vpop.permute.xlu0 %927
    %930 = vset.pattern.permute.xlu0 2
    %931 = vperm.xlu0 %930, %v451
    %v932 = vpop.permute.xlu0 %931
    %v934 = vlaneseq
    %v935 = vshrl.u32 %v934, 7
    %v936 = vsub.s32 2, %v935
    %v937 = vrot.slane %v290, %v936
    %v938 = vadd.f32 %v872, %v937
    %v939 = vadd.f32 %v876, %v937
    %v940 = vadd.f32 %v880, %v937
    %v941 = vadd.f32 %v884, %v937
    %v942 = vadd.f32 %v888, %v937
    %v943 = vadd.f32 %v892, %v937
    %v944 = vadd.f32 %v896, %v937
    %v945 = vadd.f32 %v900, %v937
    %v946 = vadd.f32 %v904, %v937
    %v947 = vadd.f32 %v908, %v937
    %v948 = vadd.f32 %v912, %v937
    %v949 = vadd.f32 %v916, %v937
    %v950 = vadd.f32 %v920, %v937
    %v951 = vadd.f32 %v924, %v937
    %v952 = vadd.f32 %v928, %v937
    %v953 = vadd.f32 %v932, %v937
    %954 = vst [vmem:[#allocation2 + $0x10] sm:$0xff] %v938
    %955 = vst [vmem:[#allocation2 + $0x30] sm:$0xff] %v939
    %956 = vst [vmem:[#allocation2 + $0x50] sm:$0xff] %v940
    %957 = vst [vmem:[#allocation2 + $0x70] sm:$0xff] %v941
    %958 = vst [vmem:[#allocation2 + $0x90] sm:$0xff] %v942
    %959 = vst [vmem:[#allocation2 + $0xb0] sm:$0xff] %v943
    %960 = vst [vmem:[#allocation2 + $0xd0] sm:$0xff] %v944
    %961 = vst [vmem:[#allocation2 + $0xf0] sm:$0xff] %v945
    %962 = vst [vmem:[#allocation2 + $0x110] sm:$0xff] %v946
    %963 = vst [vmem:[#allocation2 + $0x130] sm:$0xff] %v947
    %964 = vst [vmem:[#allocation2 + $0x150] sm:$0xff] %v948
    %965 = vst [vmem:[#allocation2 + $0x170] sm:$0xff] %v949
    %966 = vst [vmem:[#allocation2 + $0x190] sm:$0xff] %v950
    %967 = vst [vmem:[#allocation2 + $0x1b0] sm:$0xff] %v951
    %968 = vst [vmem:[#allocation2 + $0x1d0] sm:$0xff] %v952
    %969 = vst [vmem:[#allocation2 + $0x1f0] sm:$0xff] %v953
    %v970 = vlaneseq
    %v971 = vshrl.u32 %v970, 7
    %v972 = vsub.s32 2, %v971
    %v973 = vrot.slane %v70, %v972
    %v974 = vmul.f32 %v160, %v973
    %v975 = vmul.f32 %v163, %v973
    %v976 = vmul.f32 %v168, %v973
    %v977 = vmul.f32 %v171, %v973
    %v978 = vmul.f32 %v176, %v973
    %v979 = vmul.f32 %v179, %v973
    %v980 = vmul.f32 %v184, %v973
    %v981 = vmul.f32 %v187, %v973
    %v982 = vmul.f32 %v192, %v973
    %v983 = vmul.f32 %v195, %v973
    %v984 = vmul.f32 %v200, %v973
    %v985 = vmul.f32 %v203, %v973
    %v986 = vmul.f32 %v208, %v973
    %v987 = vmul.f32 %v211, %v973
    %v988 = vmul.f32 %v216, %v973
    %v989 = vmul.f32 %v219, %v973
    %v990 = vpack.c.bf16 %v975, %v974
    %v991 = vpack.c.bf16 %v977, %v976
    %v992 = vpack.c.bf16 %v979, %v978
    %v993 = vpack.c.bf16 %v981, %v980
    %v994 = vpack.c.bf16 %v983, %v982
    %v995 = vpack.c.bf16 %v985, %v984
    %v996 = vpack.c.bf16 %v987, %v986
    %v997 = vpack.c.bf16 %v989, %v988
    %v1006 = vunpack.c.l.b16 %v990
    %v1007 = vunpack.c.h.b16 %v990
    %v1008 = vunpack.c.l.b16 %v991
    %v1009 = vunpack.c.h.b16 %v991
    %v1010 = vunpack.c.l.b16 %v992
    %v1011 = vunpack.c.h.b16 %v992
    %v1012 = vunpack.c.l.b16 %v993
    %v1013 = vunpack.c.h.b16 %v993
    %v1014 = vunpack.c.l.b16 %v994
    %v1015 = vunpack.c.h.b16 %v994
    %v1016 = vunpack.c.l.b16 %v995
    %v1017 = vunpack.c.h.b16 %v995
    %v1018 = vunpack.c.l.b16 %v996
    %v1019 = vunpack.c.h.b16 %v996
    %v1020 = vunpack.c.l.b16 %v997
    %v1021 = vunpack.c.h.b16 %v997
    %v1022 = vpack.c.b16 %v1006, %v1006
    %v1023 = vpack.c.b16 %v1007, %v1007
    %v1024 = vpack.c.b16 %v1008, %v1008
    %v1025 = vpack.c.b16 %v1009, %v1009
    %v1026 = vpack.c.b16 %v1010, %v1010
    %v1027 = vpack.c.b16 %v1011, %v1011
    %v1028 = vpack.c.b16 %v1012, %v1012
    %v1029 = vpack.c.b16 %v1013, %v1013
    %v1030 = vpack.c.b16 %v1014, %v1014
    %v1031 = vpack.c.b16 %v1015, %v1015
    %v1032 = vpack.c.b16 %v1016, %v1016
    %v1033 = vpack.c.b16 %v1017, %v1017
    %v1034 = vpack.c.b16 %v1018, %v1018
    %v1035 = vpack.c.b16 %v1019, %v1019
    %v1036 = vpack.c.b16 %v1020, %v1020
    %v1037 = vpack.c.b16 %v1021, %v1021
    %1054 = vst [vmem:[#allocation3 + $0x80] sm:$0xf] %v1022
    %1055 = vst [vmem:[#allocation3 + $0x84] sm:$0xf] %v1023
    %1056 = vst [vmem:[#allocation3 + $0x88] sm:$0xf] %v1024
    %1057 = vst [vmem:[#allocation3 + $0x8c] sm:$0xf] %v1025
    %1058 = vst [vmem:[#allocation3 + $0x90] sm:$0xf] %v1026
    %1059 = vst [vmem:[#allocation3 + $0x94] sm:$0xf] %v1027
    %1060 = vst [vmem:[#allocation3 + $0x98] sm:$0xf] %v1028
    %1061 = vst [vmem:[#allocation3 + $0x9c] sm:$0xf] %v1029
    %1062 = vst [vmem:[#allocation3 + $0xa0] sm:$0xf] %v1030
    %1063 = vst [vmem:[#allocation3 + $0xa4] sm:$0xf] %v1031
    %1064 = vst [vmem:[#allocation3 + $0xa8] sm:$0xf] %v1032
    %1065 = vst [vmem:[#allocation3 + $0xac] sm:$0xf] %v1033
    %1066 = vst [vmem:[#allocation3 + $0xb0] sm:$0xf] %v1034
    %1067 = vst [vmem:[#allocation3 + $0xb4] sm:$0xf] %v1035
    %1068 = vst [vmem:[#allocation3 + $0xb8] sm:$0xf] %v1036
    %1069 = vst [vmem:[#allocation3 + $0xbc] sm:$0xf] %v1037
    %1070 = vset.pattern.permute.xlu0 3
    %1071 = vperm.xlu0 %1070, %v376
    %v1072 = vpop.permute.xlu0 %1071
    %1074 = vset.pattern.permute.xlu0 3
    %1075 = vperm.xlu0 %1074, %v381
    %v1076 = vpop.permute.xlu0 %1075
    %1078 = vset.pattern.permute.xlu0 3
    %1079 = vperm.xlu0 %1078, %v386
    %v1080 = vpop.permute.xlu0 %1079
    %1082 = vset.pattern.permute.xlu0 3
    %1083 = vperm.xlu0 %1082, %v391
    %v1084 = vpop.permute.xlu0 %1083
    %1086 = vset.pattern.permute.xlu0 3
    %1087 = vperm.xlu0 %1086, %v396
    %v1088 = vpop.permute.xlu0 %1087
    %1090 = vset.pattern.permute.xlu0 3
    %1091 = vperm.xlu0 %1090, %v401
    %v1092 = vpop.permute.xlu0 %1091
    %1094 = vset.pattern.permute.xlu0 3
    %1095 = vperm.xlu0 %1094, %v406
    %v1096 = vpop.permute.xlu0 %1095
    %1098 = vset.pattern.permute.xlu0 3
    %1099 = vperm.xlu0 %1098, %v411
    %v1100 = vpop.permute.xlu0 %1099
    %1102 = vset.pattern.permute.xlu0 3
    %1103 = vperm.xlu0 %1102, %v416
    %v1104 = vpop.permute.xlu0 %1103
    %1106 = vset.pattern.permute.xlu0 3
    %1107 = vperm.xlu0 %1106, %v421
    %v1108 = vpop.permute.xlu0 %1107
    %1110 = vset.pattern.permute.xlu0 3
    %1111 = vperm.xlu0 %1110, %v426
    %v1112 = vpop.permute.xlu0 %1111
    %1114 = vset.pattern.permute.xlu0 3
    %1115 = vperm.xlu0 %1114, %v431
    %v1116 = vpop.permute.xlu0 %1115
    %1118 = vset.pattern.permute.xlu0 3
    %1119 = vperm.xlu0 %1118, %v436
    %v1120 = vpop.permute.xlu0 %1119
    %1122 = vset.pattern.permute.xlu0 3
    %1123 = vperm.xlu0 %1122, %v441
    %v1124 = vpop.permute.xlu0 %1123
    %1126 = vset.pattern.permute.xlu0 3
    %1127 = vperm.xlu0 %1126, %v446
    %v1128 = vpop.permute.xlu0 %1127
    %1130 = vset.pattern.permute.xlu0 3
    %1131 = vperm.xlu0 %1130, %v451
    %v1132 = vpop.permute.xlu0 %1131
    %v1134 = vlaneseq
    %v1135 = vshrl.u32 %v1134, 7
    %v1136 = vsub.s32 3, %v1135
    %v1137 = vrot.slane %v290, %v1136
    %v1138 = vadd.f32 %v1072, %v1137
    %v1139 = vadd.f32 %v1076, %v1137
    %v1140 = vadd.f32 %v1080, %v1137
    %v1141 = vadd.f32 %v1084, %v1137
    %v1142 = vadd.f32 %v1088, %v1137
    %v1143 = vadd.f32 %v1092, %v1137
    %v1144 = vadd.f32 %v1096, %v1137
    %v1145 = vadd.f32 %v1100, %v1137
    %v1146 = vadd.f32 %v1104, %v1137
    %v1147 = vadd.f32 %v1108, %v1137
    %v1148 = vadd.f32 %v1112, %v1137
    %v1149 = vadd.f32 %v1116, %v1137
    %v1150 = vadd.f32 %v1120, %v1137
    %v1151 = vadd.f32 %v1124, %v1137
    %v1152 = vadd.f32 %v1128, %v1137
    %v1153 = vadd.f32 %v1132, %v1137
    %1154 = vst [vmem:[#allocation2 + $0x18] sm:$0xff] %v1138
    %1155 = vst [vmem:[#allocation2 + $0x38] sm:$0xff] %v1139
    %1156 = vst [vmem:[#allocation2 + $0x58] sm:$0xff] %v1140
    %1157 = vst [vmem:[#allocation2 + $0x78] sm:$0xff] %v1141
    %1158 = vst [vmem:[#allocation2 + $0x98] sm:$0xff] %v1142
    %1159 = vst [vmem:[#allocation2 + $0xb8] sm:$0xff] %v1143
    %1160 = vst [vmem:[#allocation2 + $0xd8] sm:$0xff] %v1144
    %1161 = vst [vmem:[#allocation2 + $0xf8] sm:$0xff] %v1145
    %1162 = vst [vmem:[#allocation2 + $0x118] sm:$0xff] %v1146
    %1163 = vst [vmem:[#allocation2 + $0x138] sm:$0xff] %v1147
    %1164 = vst [vmem:[#allocation2 + $0x158] sm:$0xff] %v1148
    %1165 = vst [vmem:[#allocation2 + $0x178] sm:$0xff] %v1149
    %1166 = vst [vmem:[#allocation2 + $0x198] sm:$0xff] %v1150
    %1167 = vst [vmem:[#allocation2 + $0x1b8] sm:$0xff] %v1151
    %1168 = vst [vmem:[#allocation2 + $0x1d8] sm:$0xff] %v1152
    %1169 = vst [vmem:[#allocation2 + $0x1f8] sm:$0xff] %v1153
    %v1170 = vlaneseq
    %v1171 = vshrl.u32 %v1170, 7
    %v1172 = vsub.s32 3, %v1171
    %v1173 = vrot.slane %v70, %v1172
    %v1174 = vmul.f32 %v160, %v1173
    %v1175 = vmul.f32 %v163, %v1173
    %v1176 = vmul.f32 %v168, %v1173
    %v1177 = vmul.f32 %v171, %v1173
    %v1178 = vmul.f32 %v176, %v1173
    %v1179 = vmul.f32 %v179, %v1173
    %v1180 = vmul.f32 %v184, %v1173
    %v1181 = vmul.f32 %v187, %v1173
    %v1182 = vmul.f32 %v192, %v1173
    %v1183 = vmul.f32 %v195, %v1173
    %v1184 = vmul.f32 %v200, %v1173
    %v1185 = vmul.f32 %v203, %v1173
    %v1186 = vmul.f32 %v208, %v1173
    %v1187 = vmul.f32 %v211, %v1173
    %v1188 = vmul.f32 %v216, %v1173
    %v1189 = vmul.f32 %v219, %v1173
    %v1190 = vpack.c.bf16 %v1175, %v1174
    %v1191 = vpack.c.bf16 %v1177, %v1176
    %v1192 = vpack.c.bf16 %v1179, %v1178
    %v1193 = vpack.c.bf16 %v1181, %v1180
    %v1194 = vpack.c.bf16 %v1183, %v1182
    %v1195 = vpack.c.bf16 %v1185, %v1184
    %v1196 = vpack.c.bf16 %v1187, %v1186
    %v1197 = vpack.c.bf16 %v1189, %v1188
    %v1206 = vunpack.c.l.b16 %v1190
    %v1207 = vunpack.c.h.b16 %v1190
    %v1208 = vunpack.c.l.b16 %v1191
    %v1209 = vunpack.c.h.b16 %v1191
    %v1210 = vunpack.c.l.b16 %v1192
    %v1211 = vunpack.c.h.b16 %v1192
    %v1212 = vunpack.c.l.b16 %v1193
    %v1213 = vunpack.c.h.b16 %v1193
    %v1214 = vunpack.c.l.b16 %v1194
    %v1215 = vunpack.c.h.b16 %v1194
    %v1216 = vunpack.c.l.b16 %v1195
    %v1217 = vunpack.c.h.b16 %v1195
    %v1218 = vunpack.c.l.b16 %v1196
    %v1219 = vunpack.c.h.b16 %v1196
    %v1220 = vunpack.c.l.b16 %v1197
    %v1221 = vunpack.c.h.b16 %v1197
    %v1222 = vpack.c.b16 %v1206, %v1206
    %v1223 = vpack.c.b16 %v1207, %v1207
    %v1224 = vpack.c.b16 %v1208, %v1208
    %v1225 = vpack.c.b16 %v1209, %v1209
    %v1226 = vpack.c.b16 %v1210, %v1210
    %v1227 = vpack.c.b16 %v1211, %v1211
    %v1228 = vpack.c.b16 %v1212, %v1212
    %v1229 = vpack.c.b16 %v1213, %v1213
    %v1230 = vpack.c.b16 %v1214, %v1214
    %v1231 = vpack.c.b16 %v1215, %v1215
    %v1232 = vpack.c.b16 %v1216, %v1216
    %v1233 = vpack.c.b16 %v1217, %v1217
    %v1234 = vpack.c.b16 %v1218, %v1218
    %v1235 = vpack.c.b16 %v1219, %v1219
    %v1236 = vpack.c.b16 %v1220, %v1220
    %v1237 = vpack.c.b16 %v1221, %v1221
    %1254 = vst [vmem:[#allocation3 + $0xc0] sm:$0xf] %v1222
    %1255 = vst [vmem:[#allocation3 + $0xc4] sm:$0xf] %v1223
    %1256 = vst [vmem:[#allocation3 + $0xc8] sm:$0xf] %v1224
    %1257 = vst [vmem:[#allocation3 + $0xcc] sm:$0xf] %v1225
    %1258 = vst [vmem:[#allocation3 + $0xd0] sm:$0xf] %v1226
    %1259 = vst [vmem:[#allocation3 + $0xd4] sm:$0xf] %v1227
    %1260 = vst [vmem:[#allocation3 + $0xd8] sm:$0xf] %v1228
    %1261 = vst [vmem:[#allocation3 + $0xdc] sm:$0xf] %v1229
    %1262 = vst [vmem:[#allocation3 + $0xe0] sm:$0xf] %v1230
    %1263 = vst [vmem:[#allocation3 + $0xe4] sm:$0xf] %v1231
    %1264 = vst [vmem:[#allocation3 + $0xe8] sm:$0xf] %v1232
    %1265 = vst [vmem:[#allocation3 + $0xec] sm:$0xf] %v1233
    %1266 = vst [vmem:[#allocation3 + $0xf0] sm:$0xf] %v1234
    %1267 = vst [vmem:[#allocation3 + $0xf4] sm:$0xf] %v1235
    %1268 = vst [vmem:[#allocation3 + $0xf8] sm:$0xf] %v1236
    %1269 = vst [vmem:[#allocation3 + $0xfc] sm:$0xf] %v1237
    %v1270 = vld [vmem:[#allocation2] sm:$0xff]
    %v1271 = vld [vmem:[#allocation2 + $0x8] sm:$0xff]
    %v1272 = vld [vmem:[#allocation2 + $0x10] sm:$0xff]
    %v1273 = vld [vmem:[#allocation2 + $0x18] sm:$0xff]
    %v1274 = vld [vmem:[#allocation2 + $0x20] sm:$0xff]
    %v1275 = vld [vmem:[#allocation2 + $0x28] sm:$0xff]
    %v1276 = vld [vmem:[#allocation2 + $0x30] sm:$0xff]
    %v1277 = vld [vmem:[#allocation2 + $0x38] sm:$0xff]
    %v1278 = vld [vmem:[#allocation2 + $0x40] sm:$0xff]
    %v1279 = vld [vmem:[#allocation2 + $0x48] sm:$0xff]
    %v1280 = vld [vmem:[#allocation2 + $0x50] sm:$0xff]
    %v1281 = vld [vmem:[#allocation2 + $0x58] sm:$0xff]
    %v1282 = vld [vmem:[#allocation2 + $0x60] sm:$0xff]
    %v1283 = vld [vmem:[#allocation2 + $0x68] sm:$0xff]
    %v1284 = vld [vmem:[#allocation2 + $0x70] sm:$0xff]
    %v1285 = vld [vmem:[#allocation2 + $0x78] sm:$0xff]
    %v1286 = vld [vmem:[#allocation2 + $0x80] sm:$0xff]
    %v1287 = vld [vmem:[#allocation2 + $0x88] sm:$0xff]
    %v1288 = vld [vmem:[#allocation2 + $0x90] sm:$0xff]
    %v1289 = vld [vmem:[#allocation2 + $0x98] sm:$0xff]
    %v1290 = vld [vmem:[#allocation2 + $0xa0] sm:$0xff]
    %v1291 = vld [vmem:[#allocation2 + $0xa8] sm:$0xff]
    %v1292 = vld [vmem:[#allocation2 + $0xb0] sm:$0xff]
    %v1293 = vld [vmem:[#allocation2 + $0xb8] sm:$0xff]
    %v1294 = vld [vmem:[#allocation2 + $0xc0] sm:$0xff]
    %v1295 = vld [vmem:[#allocation2 + $0xc8] sm:$0xff]
    %v1296 = vld [vmem:[#allocation2 + $0xd0] sm:$0xff]
    %v1297 = vld [vmem:[#allocation2 + $0xd8] sm:$0xff]
    %v1298 = vld [vmem:[#allocation2 + $0xe0] sm:$0xff]
    %v1299 = vld [vmem:[#allocation2 + $0xe8] sm:$0xff]
    %v1300 = vld [vmem:[#allocation2 + $0xf0] sm:$0xff]
    %v1301 = vld [vmem:[#allocation2 + $0xf8] sm:$0xff]
    %v1302 = vld [vmem:[#allocation2 + $0x100] sm:$0xff]
    %v1303 = vld [vmem:[#allocation2 + $0x108] sm:$0xff]
    %v1304 = vld [vmem:[#allocation2 + $0x110] sm:$0xff]
    %v1305 = vld [vmem:[#allocation2 + $0x118] sm:$0xff]
    %v1306 = vld [vmem:[#allocation2 + $0x120] sm:$0xff]
    %v1307 = vld [vmem:[#allocation2 + $0x128] sm:$0xff]
    %v1308 = vld [vmem:[#allocation2 + $0x130] sm:$0xff]
    %v1309 = vld [vmem:[#allocation2 + $0x138] sm:$0xff]
    %v1310 = vld [vmem:[#allocation2 + $0x140] sm:$0xff]
    %v1311 = vld [vmem:[#allocation2 + $0x148] sm:$0xff]
    %v1312 = vld [vmem:[#allocation2 + $0x150] sm:$0xff]
    %v1313 = vld [vmem:[#allocation2 + $0x158] sm:$0xff]
    %v1314 = vld [vmem:[#allocation2 + $0x160] sm:$0xff]
    %v1315 = vld [vmem:[#allocation2 + $0x168] sm:$0xff]
    %v1316 = vld [vmem:[#allocation2 + $0x170] sm:$0xff]
    %v1317 = vld [vmem:[#allocation2 + $0x178] sm:$0xff]
    %v1318 = vld [vmem:[#allocation2 + $0x180] sm:$0xff]
    %v1319 = vld [vmem:[#allocation2 + $0x188] sm:$0xff]
    %v1320 = vld [vmem:[#allocation2 + $0x190] sm:$0xff]
    %v1321 = vld [vmem:[#allocation2 + $0x198] sm:$0xff]
    %v1322 = vld [vmem:[#allocation2 + $0x1a0] sm:$0xff]
    %v1323 = vld [vmem:[#allocation2 + $0x1a8] sm:$0xff]
    %v1324 = vld [vmem:[#allocation2 + $0x1b0] sm:$0xff]
    %v1325 = vld [vmem:[#allocation2 + $0x1b8] sm:$0xff]
    %v1326 = vld [vmem:[#allocation2 + $0x1c0] sm:$0xff]
    %v1327 = vld [vmem:[#allocation2 + $0x1c8] sm:$0xff]
    %v1328 = vld [vmem:[#allocation2 + $0x1d0] sm:$0xff]
    %v1329 = vld [vmem:[#allocation2 + $0x1d8] sm:$0xff]
    %v1330 = vld [vmem:[#allocation2 + $0x1e0] sm:$0xff]
    %v1331 = vld [vmem:[#allocation2 + $0x1e8] sm:$0xff]
    %v1332 = vld [vmem:[#allocation2 + $0x1f0] sm:$0xff]
    %v1333 = vld [vmem:[#allocation2 + $0x1f8] sm:$0xff]
    %vm1334 = vcmp.gt.f32.partialorder %v1270, 0.0
    %vm1335 = vcmp.gt.f32.partialorder %v1271, 0.0
    %vm1336 = vcmp.gt.f32.partialorder %v1272, 0.0
    %vm1337 = vcmp.gt.f32.partialorder %v1273, 0.0
    %vm1338 = vcmp.gt.f32.partialorder %v1274, 0.0
    %vm1339 = vcmp.gt.f32.partialorder %v1275, 0.0
    %vm1340 = vcmp.gt.f32.partialorder %v1276, 0.0
    %vm1341 = vcmp.gt.f32.partialorder %v1277, 0.0
    %vm1342 = vcmp.gt.f32.partialorder %v1278, 0.0
    %vm1343 = vcmp.gt.f32.partialorder %v1279, 0.0
    %vm1344 = vcmp.gt.f32.partialorder %v1280, 0.0
    %vm1345 = vcmp.gt.f32.partialorder %v1281, 0.0
    %vm1346 = vcmp.gt.f32.partialorder %v1282, 0.0
    %vm1347 = vcmp.gt.f32.partialorder %v1283, 0.0
    %vm1348 = vcmp.gt.f32.partialorder %v1284, 0.0
    %vm1349 = vcmp.gt.f32.partialorder %v1285, 0.0
    %vm1350 = vcmp.gt.f32.partialorder %v1286, 0.0
    %vm1351 = vcmp.gt.f32.partialorder %v1287, 0.0
    %vm1352 = vcmp.gt.f32.partialorder %v1288, 0.0
    %vm1353 = vcmp.gt.f32.partialorder %v1289, 0.0
    %vm1354 = vcmp.gt.f32.partialorder %v1290, 0.0
    %vm1355 = vcmp.gt.f32.partialorder %v1291, 0.0
    %vm1356 = vcmp.gt.f32.partialorder %v1292, 0.0
    %vm1357 = vcmp.gt.f32.partialorder %v1293, 0.0
    %vm1358 = vcmp.gt.f32.partialorder %v1294, 0.0
    %vm1359 = vcmp.gt.f32.partialorder %v1295, 0.0
    %vm1360 = vcmp.gt.f32.partialorder %v1296, 0.0
    %vm1361 = vcmp.gt.f32.partialorder %v1297, 0.0
    %vm1362 = vcmp.gt.f32.partialorder %v1298, 0.0
    %vm1363 = vcmp.gt.f32.partialorder %v1299, 0.0
    %vm1364 = vcmp.gt.f32.partialorder %v1300, 0.0
    %vm1365 = vcmp.gt.f32.partialorder %v1301, 0.0
    %vm1366 = vcmp.gt.f32.partialorder %v1302, 0.0
    %vm1367 = vcmp.gt.f32.partialorder %v1303, 0.0
    %vm1368 = vcmp.gt.f32.partialorder %v1304, 0.0
    %vm1369 = vcmp.gt.f32.partialorder %v1305, 0.0
    %vm1370 = vcmp.gt.f32.partialorder %v1306, 0.0
    %vm1371 = vcmp.gt.f32.partialorder %v1307, 0.0
    %vm1372 = vcmp.gt.f32.partialorder %v1308, 0.0
    %vm1373 = vcmp.gt.f32.partialorder %v1309, 0.0
    %vm1374 = vcmp.gt.f32.partialorder %v1310, 0.0
    %vm1375 = vcmp.gt.f32.partialorder %v1311, 0.0
    %vm1376 = vcmp.gt.f32.partialorder %v1312, 0.0
    %vm1377 = vcmp.gt.f32.partialorder %v1313, 0.0
    %vm1378 = vcmp.gt.f32.partialorder %v1314, 0.0
    %vm1379 = vcmp.gt.f32.partialorder %v1315, 0.0
    %vm1380 = vcmp.gt.f32.partialorder %v1316, 0.0
    %vm1381 = vcmp.gt.f32.partialorder %v1317, 0.0
    %vm1382 = vcmp.gt.f32.partialorder %v1318, 0.0
    %vm1383 = vcmp.gt.f32.partialorder %v1319, 0.0
    %vm1384 = vcmp.gt.f32.partialorder %v1320, 0.0
    %vm1385 = vcmp.gt.f32.partialorder %v1321, 0.0
    %vm1386 = vcmp.gt.f32.partialorder %v1322, 0.0
    %vm1387 = vcmp.gt.f32.partialorder %v1323, 0.0
    %vm1388 = vcmp.gt.f32.partialorder %v1324, 0.0
    %vm1389 = vcmp.gt.f32.partialorder %v1325, 0.0
    %vm1390 = vcmp.gt.f32.partialorder %v1326, 0.0
    %vm1391 = vcmp.gt.f32.partialorder %v1327, 0.0
    %vm1392 = vcmp.gt.f32.partialorder %v1328, 0.0
    %vm1393 = vcmp.gt.f32.partialorder %v1329, 0.0
    %vm1394 = vcmp.gt.f32.partialorder %v1330, 0.0
    %vm1395 = vcmp.gt.f32.partialorder %v1331, 0.0
    %vm1396 = vcmp.gt.f32.partialorder %v1332, 0.0
    %vm1397 = vcmp.gt.f32.partialorder %v1333, 0.0
    %v1398 = vmul.f32 %v1270, 0.2
    %v1399 = vmul.f32 %v1271, 0.2
    %v1400 = vmul.f32 %v1272, 0.2
    %v1401 = vmul.f32 %v1273, 0.2
    %v1402 = vmul.f32 %v1274, 0.2
    %v1403 = vmul.f32 %v1275, 0.2
    %v1404 = vmul.f32 %v1276, 0.2
    %v1405 = vmul.f32 %v1277, 0.2
    %v1406 = vmul.f32 %v1278, 0.2
    %v1407 = vmul.f32 %v1279, 0.2
    %v1408 = vmul.f32 %v1280, 0.2
    %v1409 = vmul.f32 %v1281, 0.2
    %v1410 = vmul.f32 %v1282, 0.2
    %v1411 = vmul.f32 %v1283, 0.2
    %v1412 = vmul.f32 %v1284, 0.2
    %v1413 = vmul.f32 %v1285, 0.2
    %v1414 = vmul.f32 %v1286, 0.2
    %v1415 = vmul.f32 %v1287, 0.2
    %v1416 = vmul.f32 %v1288, 0.2
    %v1417 = vmul.f32 %v1289, 0.2
    %v1418 = vmul.f32 %v1290, 0.2
    %v1419 = vmul.f32 %v1291, 0.2
    %v1420 = vmul.f32 %v1292, 0.2
    %v1421 = vmul.f32 %v1293, 0.2
    %v1422 = vmul.f32 %v1294, 0.2
    %v1423 = vmul.f32 %v1295, 0.2
    %v1424 = vmul.f32 %v1296, 0.2
    %v1425 = vmul.f32 %v1297, 0.2
    %v1426 = vmul.f32 %v1298, 0.2
    %v1427 = vmul.f32 %v1299, 0.2
    %v1428 = vmul.f32 %v1300, 0.2
    %v1429 = vmul.f32 %v1301, 0.2
    %v1430 = vmul.f32 %v1302, 0.2
    %v1431 = vmul.f32 %v1303, 0.2
    %v1432 = vmul.f32 %v1304, 0.2
    %v1433 = vmul.f32 %v1305, 0.2
    %v1434 = vmul.f32 %v1306, 0.2
    %v1435 = vmul.f32 %v1307, 0.2
    %v1436 = vmul.f32 %v1308, 0.2
    %v1437 = vmul.f32 %v1309, 0.2
    %v1438 = vmul.f32 %v1310, 0.2
    %v1439 = vmul.f32 %v1311, 0.2
    %v1440 = vmul.f32 %v1312, 0.2
    %v1441 = vmul.f32 %v1313, 0.2
    %v1442 = vmul.f32 %v1314, 0.2
    %v1443 = vmul.f32 %v1315, 0.2
    %v1444 = vmul.f32 %v1316, 0.2
    %v1445 = vmul.f32 %v1317, 0.2
    %v1446 = vmul.f32 %v1318, 0.2
    %v1447 = vmul.f32 %v1319, 0.2
    %v1448 = vmul.f32 %v1320, 0.2
    %v1449 = vmul.f32 %v1321, 0.2
    %v1450 = vmul.f32 %v1322, 0.2
    %v1451 = vmul.f32 %v1323, 0.2
    %v1452 = vmul.f32 %v1324, 0.2
    %v1453 = vmul.f32 %v1325, 0.2
    %v1454 = vmul.f32 %v1326, 0.2
    %v1455 = vmul.f32 %v1327, 0.2
    %v1456 = vmul.f32 %v1328, 0.2
    %v1457 = vmul.f32 %v1329, 0.2
    %v1458 = vmul.f32 %v1330, 0.2
    %v1459 = vmul.f32 %v1331, 0.2
    %v1460 = vmul.f32 %v1332, 0.2
    %v1461 = vmul.f32 %v1333, 0.2
    %v1462 = vsel %vm1334, %v1270, %v1398
    %v1463 = vsel %vm1335, %v1271, %v1399
    %v1464 = vsel %vm1336, %v1272, %v1400
    %v1465 = vsel %vm1337, %v1273, %v1401
    %v1466 = vsel %vm1338, %v1274, %v1402
    %v1467 = vsel %vm1339, %v1275, %v1403
    %v1468 = vsel %vm1340, %v1276, %v1404
    %v1469 = vsel %vm1341, %v1277, %v1405
    %v1470 = vsel %vm1342, %v1278, %v1406
    %v1471 = vsel %vm1343, %v1279, %v1407
    %v1472 = vsel %vm1344, %v1280, %v1408
    %v1473 = vsel %vm1345, %v1281, %v1409
    %v1474 = vsel %vm1346, %v1282, %v1410
    %v1475 = vsel %vm1347, %v1283, %v1411
    %v1476 = vsel %vm1348, %v1284, %v1412
    %v1477 = vsel %vm1349, %v1285, %v1413
    %v1478 = vsel %vm1350, %v1286, %v1414
    %v1479 = vsel %vm1351, %v1287, %v1415
    %v1480 = vsel %vm1352, %v1288, %v1416
    %v1481 = vsel %vm1353, %v1289, %v1417
    %v1482 = vsel %vm1354, %v1290, %v1418
    %v1483 = vsel %vm1355, %v1291, %v1419
    %v1484 = vsel %vm1356, %v1292, %v1420
    %v1485 = vsel %vm1357, %v1293, %v1421
    %v1486 = vsel %vm1358, %v1294, %v1422
    %v1487 = vsel %vm1359, %v1295, %v1423
    %v1488 = vsel %vm1360, %v1296, %v1424
    %v1489 = vsel %vm1361, %v1297, %v1425
    %v1490 = vsel %vm1362, %v1298, %v1426
    %v1491 = vsel %vm1363, %v1299, %v1427
    %v1492 = vsel %vm1364, %v1300, %v1428
    %v1493 = vsel %vm1365, %v1301, %v1429
    %v1494 = vsel %vm1366, %v1302, %v1430
    %v1495 = vsel %vm1367, %v1303, %v1431
    %v1496 = vsel %vm1368, %v1304, %v1432
    %v1497 = vsel %vm1369, %v1305, %v1433
    %v1498 = vsel %vm1370, %v1306, %v1434
    %v1499 = vsel %vm1371, %v1307, %v1435
    %v1500 = vsel %vm1372, %v1308, %v1436
    %v1501 = vsel %vm1373, %v1309, %v1437
    %v1502 = vsel %vm1374, %v1310, %v1438
    %v1503 = vsel %vm1375, %v1311, %v1439
    %v1504 = vsel %vm1376, %v1312, %v1440
    %v1505 = vsel %vm1377, %v1313, %v1441
    %v1506 = vsel %vm1378, %v1314, %v1442
    %v1507 = vsel %vm1379, %v1315, %v1443
    %v1508 = vsel %vm1380, %v1316, %v1444
    %v1509 = vsel %vm1381, %v1317, %v1445
    %v1510 = vsel %vm1382, %v1318, %v1446
    %v1511 = vsel %vm1383, %v1319, %v1447
    %v1512 = vsel %vm1384, %v1320, %v1448
    %v1513 = vsel %vm1385, %v1321, %v1449
    %v1514 = vsel %vm1386, %v1322, %v1450
    %v1515 = vsel %vm1387, %v1323, %v1451
    %v1516 = vsel %vm1388, %v1324, %v1452
    %v1517 = vsel %vm1389, %v1325, %v1453
    %v1518 = vsel %vm1390, %v1326, %v1454
    %v1519 = vsel %vm1391, %v1327, %v1455
    %v1520 = vsel %vm1392, %v1328, %v1456
    %v1521 = vsel %vm1393, %v1329, %v1457
    %v1522 = vsel %vm1394, %v1330, %v1458
    %v1523 = vsel %vm1395, %v1331, %v1459
    %v1524 = vsel %vm1396, %v1332, %v1460
    %v1525 = vsel %vm1397, %v1333, %v1461
    %v1526 = vld [vmem:[%s1] sm:$0xff]
    %v1527 = vld [vmem:[%s1 + $0x8] sm:$0xff]
    %v1528 = vld [vmem:[%s1 + $0x10] sm:$0xff]
    %v1529 = vld [vmem:[%s1 + $0x18] sm:$0xff]
    %v1530 = vld [vmem:[%s1 + $0x20] sm:$0xff]
    %v1531 = vld [vmem:[%s1 + $0x28] sm:$0xff]
    %v1532 = vld [vmem:[%s1 + $0x30] sm:$0xff]
    %v1533 = vld [vmem:[%s1 + $0x38] sm:$0xff]
    %v1534 = vld [vmem:[%s1 + $0x40] sm:$0xff]
    %v1535 = vld [vmem:[%s1 + $0x48] sm:$0xff]
    %v1536 = vld [vmem:[%s1 + $0x50] sm:$0xff]
    %v1537 = vld [vmem:[%s1 + $0x58] sm:$0xff]
    %v1538 = vld [vmem:[%s1 + $0x60] sm:$0xff]
    %v1539 = vld [vmem:[%s1 + $0x68] sm:$0xff]
    %v1540 = vld [vmem:[%s1 + $0x70] sm:$0xff]
    %v1541 = vld [vmem:[%s1 + $0x78] sm:$0xff]
    %v1542 = vld [vmem:[%s1 + $0x80] sm:$0xff]
    %v1543 = vld [vmem:[%s1 + $0x88] sm:$0xff]
    %v1544 = vld [vmem:[%s1 + $0x90] sm:$0xff]
    %v1545 = vld [vmem:[%s1 + $0x98] sm:$0xff]
    %v1546 = vld [vmem:[%s1 + $0xa0] sm:$0xff]
    %v1547 = vld [vmem:[%s1 + $0xa8] sm:$0xff]
    %v1548 = vld [vmem:[%s1 + $0xb0] sm:$0xff]
    %v1549 = vld [vmem:[%s1 + $0xb8] sm:$0xff]
    %v1550 = vld [vmem:[%s1 + $0xc0] sm:$0xff]
    %v1551 = vld [vmem:[%s1 + $0xc8] sm:$0xff]
    %v1552 = vld [vmem:[%s1 + $0xd0] sm:$0xff]
    %v1553 = vld [vmem:[%s1 + $0xd8] sm:$0xff]
    %v1554 = vld [vmem:[%s1 + $0xe0] sm:$0xff]
    %v1555 = vld [vmem:[%s1 + $0xe8] sm:$0xff]
    %v1556 = vld [vmem:[%s1 + $0xf0] sm:$0xff]
    %v1557 = vld [vmem:[%s1 + $0xf8] sm:$0xff]
    %v1558 = vld [vmem:[%s1 + $0x100] sm:$0xff]
    %v1559 = vld [vmem:[%s1 + $0x108] sm:$0xff]
    %v1560 = vld [vmem:[%s1 + $0x110] sm:$0xff]
    %v1561 = vld [vmem:[%s1 + $0x118] sm:$0xff]
    %v1562 = vld [vmem:[%s1 + $0x120] sm:$0xff]
    %v1563 = vld [vmem:[%s1 + $0x128] sm:$0xff]
    %v1564 = vld [vmem:[%s1 + $0x130] sm:$0xff]
    %v1565 = vld [vmem:[%s1 + $0x138] sm:$0xff]
    %v1566 = vld [vmem:[%s1 + $0x140] sm:$0xff]
    %v1567 = vld [vmem:[%s1 + $0x148] sm:$0xff]
    %v1568 = vld [vmem:[%s1 + $0x150] sm:$0xff]
    %v1569 = vld [vmem:[%s1 + $0x158] sm:$0xff]
    %v1570 = vld [vmem:[%s1 + $0x160] sm:$0xff]
    %v1571 = vld [vmem:[%s1 + $0x168] sm:$0xff]
    %v1572 = vld [vmem:[%s1 + $0x170] sm:$0xff]
    %v1573 = vld [vmem:[%s1 + $0x178] sm:$0xff]
    %v1574 = vld [vmem:[%s1 + $0x180] sm:$0xff]
    %v1575 = vld [vmem:[%s1 + $0x188] sm:$0xff]
    %v1576 = vld [vmem:[%s1 + $0x190] sm:$0xff]
    %v1577 = vld [vmem:[%s1 + $0x198] sm:$0xff]
    %v1578 = vld [vmem:[%s1 + $0x1a0] sm:$0xff]
    %v1579 = vld [vmem:[%s1 + $0x1a8] sm:$0xff]
    %v1580 = vld [vmem:[%s1 + $0x1b0] sm:$0xff]
    %v1581 = vld [vmem:[%s1 + $0x1b8] sm:$0xff]
    %v1582 = vld [vmem:[%s1 + $0x1c0] sm:$0xff]
    %v1583 = vld [vmem:[%s1 + $0x1c8] sm:$0xff]
    %v1584 = vld [vmem:[%s1 + $0x1d0] sm:$0xff]
    %v1585 = vld [vmem:[%s1 + $0x1d8] sm:$0xff]
    %v1586 = vld [vmem:[%s1 + $0x1e0] sm:$0xff]
    %v1587 = vld [vmem:[%s1 + $0x1e8] sm:$0xff]
    %v1588 = vld [vmem:[%s1 + $0x1f0] sm:$0xff]
    %v1589 = vld [vmem:[%s1 + $0x1f8] sm:$0xff]
    %v1590 = vadd.f32 %v1462, %v1526
    %v1591 = vadd.f32 %v1463, %v1527
    %v1592 = vadd.f32 %v1464, %v1528
    %v1593 = vadd.f32 %v1465, %v1529
    %v1594 = vadd.f32 %v1466, %v1530
    %v1595 = vadd.f32 %v1467, %v1531
    %v1596 = vadd.f32 %v1468, %v1532
    %v1597 = vadd.f32 %v1469, %v1533
    %v1598 = vadd.f32 %v1470, %v1534
    %v1599 = vadd.f32 %v1471, %v1535
    %v1600 = vadd.f32 %v1472, %v1536
    %v1601 = vadd.f32 %v1473, %v1537
    %v1602 = vadd.f32 %v1474, %v1538
    %v1603 = vadd.f32 %v1475, %v1539
    %v1604 = vadd.f32 %v1476, %v1540
    %v1605 = vadd.f32 %v1477, %v1541
    %v1606 = vadd.f32 %v1478, %v1542
    %v1607 = vadd.f32 %v1479, %v1543
    %v1608 = vadd.f32 %v1480, %v1544
    %v1609 = vadd.f32 %v1481, %v1545
    %v1610 = vadd.f32 %v1482, %v1546
    %v1611 = vadd.f32 %v1483, %v1547
    %v1612 = vadd.f32 %v1484, %v1548
    %v1613 = vadd.f32 %v1485, %v1549
    %v1614 = vadd.f32 %v1486, %v1550
    %v1615 = vadd.f32 %v1487, %v1551
    %v1616 = vadd.f32 %v1488, %v1552
    %v1617 = vadd.f32 %v1489, %v1553
    %v1618 = vadd.f32 %v1490, %v1554
    %v1619 = vadd.f32 %v1491, %v1555
    %v1620 = vadd.f32 %v1492, %v1556
    %v1621 = vadd.f32 %v1493, %v1557
    %v1622 = vadd.f32 %v1494, %v1558
    %v1623 = vadd.f32 %v1495, %v1559
    %v1624 = vadd.f32 %v1496, %v1560
    %v1625 = vadd.f32 %v1497, %v1561
    %v1626 = vadd.f32 %v1498, %v1562
    %v1627 = vadd.f32 %v1499, %v1563
    %v1628 = vadd.f32 %v1500, %v1564
    %v1629 = vadd.f32 %v1501, %v1565
    %v1630 = vadd.f32 %v1502, %v1566
    %v1631 = vadd.f32 %v1503, %v1567
    %v1632 = vadd.f32 %v1504, %v1568
    %v1633 = vadd.f32 %v1505, %v1569
    %v1634 = vadd.f32 %v1506, %v1570
    %v1635 = vadd.f32 %v1507, %v1571
    %v1636 = vadd.f32 %v1508, %v1572
    %v1637 = vadd.f32 %v1509, %v1573
    %v1638 = vadd.f32 %v1510, %v1574
    %v1639 = vadd.f32 %v1511, %v1575
    %v1640 = vadd.f32 %v1512, %v1576
    %v1641 = vadd.f32 %v1513, %v1577
    %v1642 = vadd.f32 %v1514, %v1578
    %v1643 = vadd.f32 %v1515, %v1579
    %v1644 = vadd.f32 %v1516, %v1580
    %v1645 = vadd.f32 %v1517, %v1581
    %v1646 = vadd.f32 %v1518, %v1582
    %v1647 = vadd.f32 %v1519, %v1583
    %v1648 = vadd.f32 %v1520, %v1584
    %v1649 = vadd.f32 %v1521, %v1585
    %v1650 = vadd.f32 %v1522, %v1586
    %v1651 = vadd.f32 %v1523, %v1587
    %v1652 = vadd.f32 %v1524, %v1588
    %v1653 = vadd.f32 %v1525, %v1589
    %v1654 = vmax.f32 %v1590, %v1591
    %v1655 = vmax.f32 %v1654, %v1592
    %v1656 = vmax.f32 %v1655, %v1593
    %1657 = vmax.xlane.f32.xlu0 %v1656
    %v1658 = vpop.xlane.xlu0 %1657
    %v1659 = vmax.f32 %v1594, %v1595
    %v1660 = vmax.f32 %v1659, %v1596
    %v1661 = vmax.f32 %v1660, %v1597
    %1662 = vmax.xlane.f32.xlu0 %v1661
    %v1663 = vpop.xlane.xlu0 %1662
    %v1664 = vmax.f32 %v1598, %v1599
    %v1665 = vmax.f32 %v1664, %v1600
    %v1666 = vmax.f32 %v1665, %v1601
    %1667 = vmax.xlane.f32.xlu0 %v1666
    %v1668 = vpop.xlane.xlu0 %1667
    %v1669 = vmax.f32 %v1602, %v1603
    %v1670 = vmax.f32 %v1669, %v1604
    %v1671 = vmax.f32 %v1670, %v1605
    %1672 = vmax.xlane.f32.xlu0 %v1671
    %v1673 = vpop.xlane.xlu0 %1672
    %v1674 = vmax.f32 %v1606, %v1607
    %v1675 = vmax.f32 %v1674, %v1608
    %v1676 = vmax.f32 %v1675, %v1609
    %1677 = vmax.xlane.f32.xlu0 %v1676
    %v1678 = vpop.xlane.xlu0 %1677
    %v1679 = vmax.f32 %v1610, %v1611
    %v1680 = vmax.f32 %v1679, %v1612
    %v1681 = vmax.f32 %v1680, %v1613
    %1682 = vmax.xlane.f32.xlu0 %v1681
    %v1683 = vpop.xlane.xlu0 %1682
    %v1684 = vmax.f32 %v1614, %v1615
    %v1685 = vmax.f32 %v1684, %v1616
    %v1686 = vmax.f32 %v1685, %v1617
    %1687 = vmax.xlane.f32.xlu0 %v1686
    %v1688 = vpop.xlane.xlu0 %1687
    %v1689 = vmax.f32 %v1618, %v1619
    %v1690 = vmax.f32 %v1689, %v1620
    %v1691 = vmax.f32 %v1690, %v1621
    %1692 = vmax.xlane.f32.xlu0 %v1691
    %v1693 = vpop.xlane.xlu0 %1692
    %v1694 = vmax.f32 %v1622, %v1623
    %v1695 = vmax.f32 %v1694, %v1624
    %v1696 = vmax.f32 %v1695, %v1625
    %1697 = vmax.xlane.f32.xlu0 %v1696
    %v1698 = vpop.xlane.xlu0 %1697
    %v1699 = vmax.f32 %v1626, %v1627
    %v1700 = vmax.f32 %v1699, %v1628
    %v1701 = vmax.f32 %v1700, %v1629
    %1702 = vmax.xlane.f32.xlu0 %v1701
    %v1703 = vpop.xlane.xlu0 %1702
    %v1704 = vmax.f32 %v1630, %v1631
    %v1705 = vmax.f32 %v1704, %v1632
    %v1706 = vmax.f32 %v1705, %v1633
    %1707 = vmax.xlane.f32.xlu0 %v1706
    %v1708 = vpop.xlane.xlu0 %1707
    %v1709 = vmax.f32 %v1634, %v1635
    %v1710 = vmax.f32 %v1709, %v1636
    %v1711 = vmax.f32 %v1710, %v1637
    %1712 = vmax.xlane.f32.xlu0 %v1711
    %v1713 = vpop.xlane.xlu0 %1712
    %v1714 = vmax.f32 %v1638, %v1639
    %v1715 = vmax.f32 %v1714, %v1640
    %v1716 = vmax.f32 %v1715, %v1641
    %1717 = vmax.xlane.f32.xlu0 %v1716
    %v1718 = vpop.xlane.xlu0 %1717
    %v1719 = vmax.f32 %v1642, %v1643
    %v1720 = vmax.f32 %v1719, %v1644
    %v1721 = vmax.f32 %v1720, %v1645
    %1722 = vmax.xlane.f32.xlu0 %v1721
    %v1723 = vpop.xlane.xlu0 %1722
    %v1724 = vmax.f32 %v1646, %v1647
    %v1725 = vmax.f32 %v1724, %v1648
    %v1726 = vmax.f32 %v1725, %v1649
    %1727 = vmax.xlane.f32.xlu0 %v1726
    %v1728 = vpop.xlane.xlu0 %1727
    %v1729 = vmax.f32 %v1650, %v1651
    %v1730 = vmax.f32 %v1729, %v1652
    %v1731 = vmax.f32 %v1730, %v1653
    %1732 = vmax.xlane.f32.xlu0 %v1731
    %v1733 = vpop.xlane.xlu0 %1732
    %v1734 = vsub.f32 %v1590, %v1658
    %v1735 = vsub.f32 %v1591, %v1658
    %v1736 = vsub.f32 %v1592, %v1658
    %v1737 = vsub.f32 %v1593, %v1658
    %v1738 = vsub.f32 %v1594, %v1663
    %v1739 = vsub.f32 %v1595, %v1663
    %v1740 = vsub.f32 %v1596, %v1663
    %v1741 = vsub.f32 %v1597, %v1663
    %v1742 = vsub.f32 %v1598, %v1668
    %v1743 = vsub.f32 %v1599, %v1668
    %v1744 = vsub.f32 %v1600, %v1668
    %v1745 = vsub.f32 %v1601, %v1668
    %v1746 = vsub.f32 %v1602, %v1673
    %v1747 = vsub.f32 %v1603, %v1673
    %v1748 = vsub.f32 %v1604, %v1673
    %v1749 = vsub.f32 %v1605, %v1673
    %v1750 = vsub.f32 %v1606, %v1678
    %v1751 = vsub.f32 %v1607, %v1678
    %v1752 = vsub.f32 %v1608, %v1678
    %v1753 = vsub.f32 %v1609, %v1678
    %v1754 = vsub.f32 %v1610, %v1683
    %v1755 = vsub.f32 %v1611, %v1683
    %v1756 = vsub.f32 %v1612, %v1683
    %v1757 = vsub.f32 %v1613, %v1683
    %v1758 = vsub.f32 %v1614, %v1688
    %v1759 = vsub.f32 %v1615, %v1688
    %v1760 = vsub.f32 %v1616, %v1688
    %v1761 = vsub.f32 %v1617, %v1688
    %v1762 = vsub.f32 %v1618, %v1693
    %v1763 = vsub.f32 %v1619, %v1693
    %v1764 = vsub.f32 %v1620, %v1693
    %v1765 = vsub.f32 %v1621, %v1693
    %v1766 = vsub.f32 %v1622, %v1698
    %v1767 = vsub.f32 %v1623, %v1698
    %v1768 = vsub.f32 %v1624, %v1698
    %v1769 = vsub.f32 %v1625, %v1698
    %v1770 = vsub.f32 %v1626, %v1703
    %v1771 = vsub.f32 %v1627, %v1703
    %v1772 = vsub.f32 %v1628, %v1703
    %v1773 = vsub.f32 %v1629, %v1703
    %v1774 = vsub.f32 %v1630, %v1708
    %v1775 = vsub.f32 %v1631, %v1708
    %v1776 = vsub.f32 %v1632, %v1708
    %v1777 = vsub.f32 %v1633, %v1708
    %v1778 = vsub.f32 %v1634, %v1713
    %v1779 = vsub.f32 %v1635, %v1713
    %v1780 = vsub.f32 %v1636, %v1713
    %v1781 = vsub.f32 %v1637, %v1713
    %v1782 = vsub.f32 %v1638, %v1718
    %v1783 = vsub.f32 %v1639, %v1718
    %v1784 = vsub.f32 %v1640, %v1718
    %v1785 = vsub.f32 %v1641, %v1718
    %v1786 = vsub.f32 %v1642, %v1723
    %v1787 = vsub.f32 %v1643, %v1723
    %v1788 = vsub.f32 %v1644, %v1723
    %v1789 = vsub.f32 %v1645, %v1723
    %v1790 = vsub.f32 %v1646, %v1728
    %v1791 = vsub.f32 %v1647, %v1728
    %v1792 = vsub.f32 %v1648, %v1728
    %v1793 = vsub.f32 %v1649, %v1728
    %v1794 = vsub.f32 %v1650, %v1733
    %v1795 = vsub.f32 %v1651, %v1733
    %v1796 = vsub.f32 %v1652, %v1733
    %v1797 = vsub.f32 %v1653, %v1733
    %v1798 = vmul.f32 %v1734, 1.442695
    %v1799 = vpow.pop %v1798
    %v1800 = vmul.f32 %v1735, 1.442695
    %v1801 = vpow.pop %v1800
    %v1802 = vmul.f32 %v1736, 1.442695
    %v1803 = vpow.pop %v1802
    %v1804 = vmul.f32 %v1737, 1.442695
    %v1805 = vpow.pop %v1804
    %v1806 = vmul.f32 %v1738, 1.442695
    %v1807 = vpow.pop %v1806
    %v1808 = vmul.f32 %v1739, 1.442695
    %v1809 = vpow.pop %v1808
    %v1810 = vmul.f32 %v1740, 1.442695
    %v1811 = vpow.pop %v1810
    %v1812 = vmul.f32 %v1741, 1.442695
    %v1813 = vpow.pop %v1812
    %v1814 = vmul.f32 %v1742, 1.442695
    %v1815 = vpow.pop %v1814
    %v1816 = vmul.f32 %v1743, 1.442695
    %v1817 = vpow.pop %v1816
    %v1818 = vmul.f32 %v1744, 1.442695
    %v1819 = vpow.pop %v1818
    %v1820 = vmul.f32 %v1745, 1.442695
    %v1821 = vpow.pop %v1820
    %v1822 = vmul.f32 %v1746, 1.442695
    %v1823 = vpow.pop %v1822
    %v1824 = vmul.f32 %v1747, 1.442695
    %v1825 = vpow.pop %v1824
    %v1826 = vmul.f32 %v1748, 1.442695
    %v1827 = vpow.pop %v1826
    %v1828 = vmul.f32 %v1749, 1.442695
    %v1829 = vpow.pop %v1828
    %v1830 = vmul.f32 %v1750, 1.442695
    %v1831 = vpow.pop %v1830
    %v1832 = vmul.f32 %v1751, 1.442695
    %v1833 = vpow.pop %v1832
    %v1834 = vmul.f32 %v1752, 1.442695
    %v1835 = vpow.pop %v1834
    %v1836 = vmul.f32 %v1753, 1.442695
    %v1837 = vpow.pop %v1836
    %v1838 = vmul.f32 %v1754, 1.442695
    %v1839 = vpow.pop %v1838
    %v1840 = vmul.f32 %v1755, 1.442695
    %v1841 = vpow.pop %v1840
    %v1842 = vmul.f32 %v1756, 1.442695
    %v1843 = vpow.pop %v1842
    %v1844 = vmul.f32 %v1757, 1.442695
    %v1845 = vpow.pop %v1844
    %v1846 = vmul.f32 %v1758, 1.442695
    %v1847 = vpow.pop %v1846
    %v1848 = vmul.f32 %v1759, 1.442695
    %v1849 = vpow.pop %v1848
    %v1850 = vmul.f32 %v1760, 1.442695
    %v1851 = vpow.pop %v1850
    %v1852 = vmul.f32 %v1761, 1.442695
    %v1853 = vpow.pop %v1852
    %v1854 = vmul.f32 %v1762, 1.442695
    %v1855 = vpow.pop %v1854
    %v1856 = vmul.f32 %v1763, 1.442695
    %v1857 = vpow.pop %v1856
    %v1858 = vmul.f32 %v1764, 1.442695
    %v1859 = vpow.pop %v1858
    %v1860 = vmul.f32 %v1765, 1.442695
    %v1861 = vpow.pop %v1860
    %v1862 = vmul.f32 %v1766, 1.442695
    %v1863 = vpow.pop %v1862
    %v1864 = vmul.f32 %v1767, 1.442695
    %v1865 = vpow.pop %v1864
    %v1866 = vmul.f32 %v1768, 1.442695
    %v1867 = vpow.pop %v1866
    %v1868 = vmul.f32 %v1769, 1.442695
    %v1869 = vpow.pop %v1868
    %v1870 = vmul.f32 %v1770, 1.442695
    %v1871 = vpow.pop %v1870
    %v1872 = vmul.f32 %v1771, 1.442695
    %v1873 = vpow.pop %v1872
    %v1874 = vmul.f32 %v1772, 1.442695
    %v1875 = vpow.pop %v1874
    %v1876 = vmul.f32 %v1773, 1.442695
    %v1877 = vpow.pop %v1876
    %v1878 = vmul.f32 %v1774, 1.442695
    %v1879 = vpow.pop %v1878
    %v1880 = vmul.f32 %v1775, 1.442695
    %v1881 = vpow.pop %v1880
    %v1882 = vmul.f32 %v1776, 1.442695
    %v1883 = vpow.pop %v1882
    %v1884 = vmul.f32 %v1777, 1.442695
    %v1885 = vpow.pop %v1884
    %v1886 = vmul.f32 %v1778, 1.442695
    %v1887 = vpow.pop %v1886
    %v1888 = vmul.f32 %v1779, 1.442695
    %v1889 = vpow.pop %v1888
    %v1890 = vmul.f32 %v1780, 1.442695
    %v1891 = vpow.pop %v1890
    %v1892 = vmul.f32 %v1781, 1.442695
    %v1893 = vpow.pop %v1892
    %v1894 = vmul.f32 %v1782, 1.442695
    %v1895 = vpow.pop %v1894
    %v1896 = vmul.f32 %v1783, 1.442695
    %v1897 = vpow.pop %v1896
    %v1898 = vmul.f32 %v1784, 1.442695
    %v1899 = vpow.pop %v1898
    %v1900 = vmul.f32 %v1785, 1.442695
    %v1901 = vpow.pop %v1900
    %v1902 = vmul.f32 %v1786, 1.442695
    %v1903 = vpow.pop %v1902
    %v1904 = vmul.f32 %v1787, 1.442695
    %v1905 = vpow.pop %v1904
    %v1906 = vmul.f32 %v1788, 1.442695
    %v1907 = vpow.pop %v1906
    %v1908 = vmul.f32 %v1789, 1.442695
    %v1909 = vpow.pop %v1908
    %v1910 = vmul.f32 %v1790, 1.442695
    %v1911 = vpow.pop %v1910
    %v1912 = vmul.f32 %v1791, 1.442695
    %v1913 = vpow.pop %v1912
    %v1914 = vmul.f32 %v1792, 1.442695
    %v1915 = vpow.pop %v1914
    %v1916 = vmul.f32 %v1793, 1.442695
    %v1917 = vpow.pop %v1916
    %v1918 = vmul.f32 %v1794, 1.442695
    %v1919 = vpow.pop %v1918
    %v1920 = vmul.f32 %v1795, 1.442695
    %v1921 = vpow.pop %v1920
    %v1922 = vmul.f32 %v1796, 1.442695
    %v1923 = vpow.pop %v1922
    %v1924 = vmul.f32 %v1797, 1.442695
    %v1925 = vpow.pop %v1924
    %1926 = vst [vmem:[#allocation2] sm:$0xff] %v1799
    %1927 = vst [vmem:[#allocation2 + $0x8] sm:$0xff] %v1801
    %1928 = vst [vmem:[#allocation2 + $0x10] sm:$0xff] %v1803
    %1929 = vst [vmem:[#allocation2 + $0x18] sm:$0xff] %v1805
    %1930 = vst [vmem:[#allocation2 + $0x20] sm:$0xff] %v1807
    %1931 = vst [vmem:[#allocation2 + $0x28] sm:$0xff] %v1809
    %1932 = vst [vmem:[#allocation2 + $0x30] sm:$0xff] %v1811
    %1933 = vst [vmem:[#allocation2 + $0x38] sm:$0xff] %v1813
    %1934 = vst [vmem:[#allocation2 + $0x40] sm:$0xff] %v1815
    %1935 = vst [vmem:[#allocation2 + $0x48] sm:$0xff] %v1817
    %1936 = vst [vmem:[#allocation2 + $0x50] sm:$0xff] %v1819
    %1937 = vst [vmem:[#allocation2 + $0x58] sm:$0xff] %v1821
    %1938 = vst [vmem:[#allocation2 + $0x60] sm:$0xff] %v1823
    %1939 = vst [vmem:[#allocation2 + $0x68] sm:$0xff] %v1825
    %1940 = vst [vmem:[#allocation2 + $0x70] sm:$0xff] %v1827
    %1941 = vst [vmem:[#allocation2 + $0x78] sm:$0xff] %v1829
    %1942 = vst [vmem:[#allocation2 + $0x80] sm:$0xff] %v1831
    %1943 = vst [vmem:[#allocation2 + $0x88] sm:$0xff] %v1833
    %1944 = vst [vmem:[#allocation2 + $0x90] sm:$0xff] %v1835
    %1945 = vst [vmem:[#allocation2 + $0x98] sm:$0xff] %v1837
    %1946 = vst [vmem:[#allocation2 + $0xa0] sm:$0xff] %v1839
    %1947 = vst [vmem:[#allocation2 + $0xa8] sm:$0xff] %v1841
    %1948 = vst [vmem:[#allocation2 + $0xb0] sm:$0xff] %v1843
    %1949 = vst [vmem:[#allocation2 + $0xb8] sm:$0xff] %v1845
    %1950 = vst [vmem:[#allocation2 + $0xc0] sm:$0xff] %v1847
    %1951 = vst [vmem:[#allocation2 + $0xc8] sm:$0xff] %v1849
    %1952 = vst [vmem:[#allocation2 + $0xd0] sm:$0xff] %v1851
    %1953 = vst [vmem:[#allocation2 + $0xd8] sm:$0xff] %v1853
    %1954 = vst [vmem:[#allocation2 + $0xe0] sm:$0xff] %v1855
    %1955 = vst [vmem:[#allocation2 + $0xe8] sm:$0xff] %v1857
    %1956 = vst [vmem:[#allocation2 + $0xf0] sm:$0xff] %v1859
    %1957 = vst [vmem:[#allocation2 + $0xf8] sm:$0xff] %v1861
    %1958 = vst [vmem:[#allocation2 + $0x100] sm:$0xff] %v1863
    %1959 = vst [vmem:[#allocation2 + $0x108] sm:$0xff] %v1865
    %1960 = vst [vmem:[#allocation2 + $0x110] sm:$0xff] %v1867
    %1961 = vst [vmem:[#allocation2 + $0x118] sm:$0xff] %v1869
    %1962 = vst [vmem:[#allocation2 + $0x120] sm:$0xff] %v1871
    %1963 = vst [vmem:[#allocation2 + $0x128] sm:$0xff] %v1873
    %1964 = vst [vmem:[#allocation2 + $0x130] sm:$0xff] %v1875
    %1965 = vst [vmem:[#allocation2 + $0x138] sm:$0xff] %v1877
    %1966 = vst [vmem:[#allocation2 + $0x140] sm:$0xff] %v1879
    %1967 = vst [vmem:[#allocation2 + $0x148] sm:$0xff] %v1881
    %1968 = vst [vmem:[#allocation2 + $0x150] sm:$0xff] %v1883
    %1969 = vst [vmem:[#allocation2 + $0x158] sm:$0xff] %v1885
    %1970 = vst [vmem:[#allocation2 + $0x160] sm:$0xff] %v1887
    %1971 = vst [vmem:[#allocation2 + $0x168] sm:$0xff] %v1889
    %1972 = vst [vmem:[#allocation2 + $0x170] sm:$0xff] %v1891
    %1973 = vst [vmem:[#allocation2 + $0x178] sm:$0xff] %v1893
    %1974 = vst [vmem:[#allocation2 + $0x180] sm:$0xff] %v1895
    %1975 = vst [vmem:[#allocation2 + $0x188] sm:$0xff] %v1897
    %1976 = vst [vmem:[#allocation2 + $0x190] sm:$0xff] %v1899
    %1977 = vst [vmem:[#allocation2 + $0x198] sm:$0xff] %v1901
    %1978 = vst [vmem:[#allocation2 + $0x1a0] sm:$0xff] %v1903
    %1979 = vst [vmem:[#allocation2 + $0x1a8] sm:$0xff] %v1905
    %1980 = vst [vmem:[#allocation2 + $0x1b0] sm:$0xff] %v1907
    %1981 = vst [vmem:[#allocation2 + $0x1b8] sm:$0xff] %v1909
    %1982 = vst [vmem:[#allocation2 + $0x1c0] sm:$0xff] %v1911
    %1983 = vst [vmem:[#allocation2 + $0x1c8] sm:$0xff] %v1913
    %1984 = vst [vmem:[#allocation2 + $0x1d0] sm:$0xff] %v1915
    %1985 = vst [vmem:[#allocation2 + $0x1d8] sm:$0xff] %v1917
    %1986 = vst [vmem:[#allocation2 + $0x1e0] sm:$0xff] %v1919
    %1987 = vst [vmem:[#allocation2 + $0x1e8] sm:$0xff] %v1921
    %1988 = vst [vmem:[#allocation2 + $0x1f0] sm:$0xff] %v1923
    %1989 = vst [vmem:[#allocation2 + $0x1f8] sm:$0xff] %v1925
    %v1990 = vld [vmem:[#allocation2] sm:$0xff]
    %v1991 = vld [vmem:[#allocation2 + $0x20] sm:$0xff]
    %v1992 = vld [vmem:[#allocation2 + $0x40] sm:$0xff]
    %v1993 = vld [vmem:[#allocation2 + $0x60] sm:$0xff]
    %v1994 = vld [vmem:[#allocation2 + $0x80] sm:$0xff]
    %v1995 = vld [vmem:[#allocation2 + $0xa0] sm:$0xff]
    %v1996 = vld [vmem:[#allocation2 + $0xc0] sm:$0xff]
    %v1997 = vld [vmem:[#allocation2 + $0xe0] sm:$0xff]
    %v1998 = vld [vmem:[#allocation2 + $0x100] sm:$0xff]
    %v1999 = vld [vmem:[#allocation2 + $0x120] sm:$0xff]
    %v2000 = vld [vmem:[#allocation2 + $0x140] sm:$0xff]
    %v2001 = vld [vmem:[#allocation2 + $0x160] sm:$0xff]
    %v2002 = vld [vmem:[#allocation2 + $0x180] sm:$0xff]
    %v2003 = vld [vmem:[#allocation2 + $0x1a0] sm:$0xff]
    %v2004 = vld [vmem:[#allocation2 + $0x1c0] sm:$0xff]
    %v2005 = vld [vmem:[#allocation2 + $0x1e0] sm:$0xff]
    %2006 = vadd.xlane.f32.xlu0 %v1990
    %v2007 = vpop.xlane.xlu0 %2006
    %2008 = vadd.xlane.f32.xlu0 %v1991
    %v2009 = vpop.xlane.xlu0 %2008
    %2010 = vadd.xlane.f32.xlu0 %v1992
    %v2011 = vpop.xlane.xlu0 %2010
    %2012 = vadd.xlane.f32.xlu0 %v1993
    %v2013 = vpop.xlane.xlu0 %2012
    %2014 = vadd.xlane.f32.xlu0 %v1994
    %v2015 = vpop.xlane.xlu0 %2014
    %2016 = vadd.xlane.f32.xlu0 %v1995
    %v2017 = vpop.xlane.xlu0 %2016
    %2018 = vadd.xlane.f32.xlu0 %v1996
    %v2019 = vpop.xlane.xlu0 %2018
    %2020 = vadd.xlane.f32.xlu0 %v1997
    %v2021 = vpop.xlane.xlu0 %2020
    %2022 = vadd.xlane.f32.xlu0 %v1998
    %v2023 = vpop.xlane.xlu0 %2022
    %2024 = vadd.xlane.f32.xlu0 %v1999
    %v2025 = vpop.xlane.xlu0 %2024
    %2026 = vadd.xlane.f32.xlu0 %v2000
    %v2027 = vpop.xlane.xlu0 %2026
    %2028 = vadd.xlane.f32.xlu0 %v2001
    %v2029 = vpop.xlane.xlu0 %2028
    %2030 = vadd.xlane.f32.xlu0 %v2002
    %v2031 = vpop.xlane.xlu0 %2030
    %2032 = vadd.xlane.f32.xlu0 %v2003
    %v2033 = vpop.xlane.xlu0 %2032
    %2034 = vadd.xlane.f32.xlu0 %v2004
    %v2035 = vpop.xlane.xlu0 %2034
    %2036 = vadd.xlane.f32.xlu0 %v2005
    %v2037 = vpop.xlane.xlu0 %2036
    %v2038 = vrcp.pop %v2007
    %v2039 = vmul.f32 1.0, %v2038
    %v2040 = vrcp.pop %v2009
    %v2041 = vmul.f32 1.0, %v2040
    %v2042 = vrcp.pop %v2011
    %v2043 = vmul.f32 1.0, %v2042
    %v2044 = vrcp.pop %v2013
    %v2045 = vmul.f32 1.0, %v2044
    %v2046 = vrcp.pop %v2015
    %v2047 = vmul.f32 1.0, %v2046
    %v2048 = vrcp.pop %v2017
    %v2049 = vmul.f32 1.0, %v2048
    %v2050 = vrcp.pop %v2019
    %v2051 = vmul.f32 1.0, %v2050
    %v2052 = vrcp.pop %v2021
    %v2053 = vmul.f32 1.0, %v2052
    %v2054 = vrcp.pop %v2023
    %v2055 = vmul.f32 1.0, %v2054
    %v2056 = vrcp.pop %v2025
    %v2057 = vmul.f32 1.0, %v2056
    %v2058 = vrcp.pop %v2027
    %v2059 = vmul.f32 1.0, %v2058
    %v2060 = vrcp.pop %v2029
    %v2061 = vmul.f32 1.0, %v2060
    %v2062 = vrcp.pop %v2031
    %v2063 = vmul.f32 1.0, %v2062
    %v2064 = vrcp.pop %v2033
    %v2065 = vmul.f32 1.0, %v2064
    %v2066 = vrcp.pop %v2035
    %v2067 = vmul.f32 1.0, %v2066
    %v2068 = vrcp.pop %v2037
    %v2069 = vmul.f32 1.0, %v2068
    %v2070 = vmul.f32 %v2039, %v573
    %v2071 = vmul.f32 %v2041, %v573
    %v2072 = vmul.f32 %v2043, %v573
    %v2073 = vmul.f32 %v2045, %v573
    %v2074 = vmul.f32 %v2047, %v573
    %v2075 = vmul.f32 %v2049, %v573
    %v2076 = vmul.f32 %v2051, %v573
    %v2077 = vmul.f32 %v2053, %v573
    %v2078 = vmul.f32 %v2055, %v573
    %v2079 = vmul.f32 %v2057, %v573
    %v2080 = vmul.f32 %v2059, %v573
    %v2081 = vmul.f32 %v2061, %v573
    %v2082 = vmul.f32 %v2063, %v573
    %v2083 = vmul.f32 %v2065, %v573
    %v2084 = vmul.f32 %v2067, %v573
    %v2085 = vmul.f32 %v2069, %v573
    %v2086 = vld [vmem:[#allocation2 + $0x8] sm:$0xff]
    %v2087 = vld [vmem:[#allocation2 + $0x28] sm:$0xff]
    %v2088 = vld [vmem:[#allocation2 + $0x48] sm:$0xff]
    %v2089 = vld [vmem:[#allocation2 + $0x68] sm:$0xff]
    %v2090 = vld [vmem:[#allocation2 + $0x88] sm:$0xff]
    %v2091 = vld [vmem:[#allocation2 + $0xa8] sm:$0xff]
    %v2092 = vld [vmem:[#allocation2 + $0xc8] sm:$0xff]
    %v2093 = vld [vmem:[#allocation2 + $0xe8] sm:$0xff]
    %v2094 = vld [vmem:[#allocation2 + $0x108] sm:$0xff]
    %v2095 = vld [vmem:[#allocation2 + $0x128] sm:$0xff]
    %v2096 = vld [vmem:[#allocation2 + $0x148] sm:$0xff]
    %v2097 = vld [vmem:[#allocation2 + $0x168] sm:$0xff]
    %v2098 = vld [vmem:[#allocation2 + $0x188] sm:$0xff]
    %v2099 = vld [vmem:[#allocation2 + $0x1a8] sm:$0xff]
    %v2100 = vld [vmem:[#allocation2 + $0x1c8] sm:$0xff]
    %v2101 = vld [vmem:[#allocation2 + $0x1e8] sm:$0xff]
    %2102 = vadd.xlane.f32.xlu0 %v2086
    %v2103 = vpop.xlane.xlu0 %2102
    %2104 = vadd.xlane.f32.xlu0 %v2087
    %v2105 = vpop.xlane.xlu0 %2104
    %2106 = vadd.xlane.f32.xlu0 %v2088
    %v2107 = vpop.xlane.xlu0 %2106
    %2108 = vadd.xlane.f32.xlu0 %v2089
    %v2109 = vpop.xlane.xlu0 %2108
    %2110 = vadd.xlane.f32.xlu0 %v2090
    %v2111 = vpop.xlane.xlu0 %2110
    %2112 = vadd.xlane.f32.xlu0 %v2091
    %v2113 = vpop.xlane.xlu0 %2112
    %2114 = vadd.xlane.f32.xlu0 %v2092
    %v2115 = vpop.xlane.xlu0 %2114
    %2116 = vadd.xlane.f32.xlu0 %v2093
    %v2117 = vpop.xlane.xlu0 %2116
    %2118 = vadd.xlane.f32.xlu0 %v2094
    %v2119 = vpop.xlane.xlu0 %2118
    %2120 = vadd.xlane.f32.xlu0 %v2095
    %v2121 = vpop.xlane.xlu0 %2120
    %2122 = vadd.xlane.f32.xlu0 %v2096
    %v2123 = vpop.xlane.xlu0 %2122
    %2124 = vadd.xlane.f32.xlu0 %v2097
    %v2125 = vpop.xlane.xlu0 %2124
    %2126 = vadd.xlane.f32.xlu0 %v2098
    %v2127 = vpop.xlane.xlu0 %2126
    %2128 = vadd.xlane.f32.xlu0 %v2099
    %v2129 = vpop.xlane.xlu0 %2128
    %2130 = vadd.xlane.f32.xlu0 %v2100
    %v2131 = vpop.xlane.xlu0 %2130
    %2132 = vadd.xlane.f32.xlu0 %v2101
    %v2133 = vpop.xlane.xlu0 %2132
    %v2134 = vrcp.pop %v2103
    %v2135 = vmul.f32 1.0, %v2134
    %v2136 = vrcp.pop %v2105
    %v2137 = vmul.f32 1.0, %v2136
    %v2138 = vrcp.pop %v2107
    %v2139 = vmul.f32 1.0, %v2138
    %v2140 = vrcp.pop %v2109
    %v2141 = vmul.f32 1.0, %v2140
    %v2142 = vrcp.pop %v2111
    %v2143 = vmul.f32 1.0, %v2142
    %v2144 = vrcp.pop %v2113
    %v2145 = vmul.f32 1.0, %v2144
    %v2146 = vrcp.pop %v2115
    %v2147 = vmul.f32 1.0, %v2146
    %v2148 = vrcp.pop %v2117
    %v2149 = vmul.f32 1.0, %v2148
    %v2150 = vrcp.pop %v2119
    %v2151 = vmul.f32 1.0, %v2150
    %v2152 = vrcp.pop %v2121
    %v2153 = vmul.f32 1.0, %v2152
    %v2154 = vrcp.pop %v2123
    %v2155 = vmul.f32 1.0, %v2154
    %v2156 = vrcp.pop %v2125
    %v2157 = vmul.f32 1.0, %v2156
    %v2158 = vrcp.pop %v2127
    %v2159 = vmul.f32 1.0, %v2158
    %v2160 = vrcp.pop %v2129
    %v2161 = vmul.f32 1.0, %v2160
    %v2162 = vrcp.pop %v2131
    %v2163 = vmul.f32 1.0, %v2162
    %v2164 = vrcp.pop %v2133
    %v2165 = vmul.f32 1.0, %v2164
    %v2166 = vmul.f32 %v2135, %v773
    %v2167 = vmul.f32 %v2137, %v773
    %v2168 = vmul.f32 %v2139, %v773
    %v2169 = vmul.f32 %v2141, %v773
    %v2170 = vmul.f32 %v2143, %v773
    %v2171 = vmul.f32 %v2145, %v773
    %v2172 = vmul.f32 %v2147, %v773
    %v2173 = vmul.f32 %v2149, %v773
    %v2174 = vmul.f32 %v2151, %v773
    %v2175 = vmul.f32 %v2153, %v773
    %v2176 = vmul.f32 %v2155, %v773
    %v2177 = vmul.f32 %v2157, %v773
    %v2178 = vmul.f32 %v2159, %v773
    %v2179 = vmul.f32 %v2161, %v773
    %v2180 = vmul.f32 %v2163, %v773
    %v2181 = vmul.f32 %v2165, %v773
    %v2182 = vadd.f32 %v2070, %v2166
    %v2183 = vadd.f32 %v2071, %v2167
    %v2184 = vadd.f32 %v2072, %v2168
    %v2185 = vadd.f32 %v2073, %v2169
    %v2186 = vadd.f32 %v2074, %v2170
    %v2187 = vadd.f32 %v2075, %v2171
    %v2188 = vadd.f32 %v2076, %v2172
    %v2189 = vadd.f32 %v2077, %v2173
    %v2190 = vadd.f32 %v2078, %v2174
    %v2191 = vadd.f32 %v2079, %v2175
    %v2192 = vadd.f32 %v2080, %v2176
    %v2193 = vadd.f32 %v2081, %v2177
    %v2194 = vadd.f32 %v2082, %v2178
    %v2195 = vadd.f32 %v2083, %v2179
    %v2196 = vadd.f32 %v2084, %v2180
    %v2197 = vadd.f32 %v2085, %v2181
    %v2198 = vld [vmem:[#allocation2 + $0x10] sm:$0xff]
    %v2199 = vld [vmem:[#allocation2 + $0x30] sm:$0xff]
    %v2200 = vld [vmem:[#allocation2 + $0x50] sm:$0xff]
    %v2201 = vld [vmem:[#allocation2 + $0x70] sm:$0xff]
    %v2202 = vld [vmem:[#allocation2 + $0x90] sm:$0xff]
    %v2203 = vld [vmem:[#allocation2 + $0xb0] sm:$0xff]
    %v2204 = vld [vmem:[#allocation2 + $0xd0] sm:$0xff]
    %v2205 = vld [vmem:[#allocation2 + $0xf0] sm:$0xff]
    %v2206 = vld [vmem:[#allocation2 + $0x110] sm:$0xff]
    %v2207 = vld [vmem:[#allocation2 + $0x130] sm:$0xff]
    %v2208 = vld [vmem:[#allocation2 + $0x150] sm:$0xff]
    %v2209 = vld [vmem:[#allocation2 + $0x170] sm:$0xff]
    %v2210 = vld [vmem:[#allocation2 + $0x190] sm:$0xff]
    %v2211 = vld [vmem:[#allocation2 + $0x1b0] sm:$0xff]
    %v2212 = vld [vmem:[#allocation2 + $0x1d0] sm:$0xff]
    %v2213 = vld [vmem:[#allocation2 + $0x1f0] sm:$0xff]
    %2214 = vadd.xlane.f32.xlu0 %v2198
    %v2215 = vpop.xlane.xlu0 %2214
    %2216 = vadd.xlane.f32.xlu0 %v2199
    %v2217 = vpop.xlane.xlu0 %2216
    %2218 = vadd.xlane.f32.xlu0 %v2200
    %v2219 = vpop.xlane.xlu0 %2218
    %2220 = vadd.xlane.f32.xlu0 %v2201
    %v2221 = vpop.xlane.xlu0 %2220
    %2222 = vadd.xlane.f32.xlu0 %v2202
    %v2223 = vpop.xlane.xlu0 %2222
    %2224 = vadd.xlane.f32.xlu0 %v2203
    %v2225 = vpop.xlane.xlu0 %2224
    %2226 = vadd.xlane.f32.xlu0 %v2204
    %v2227 = vpop.xlane.xlu0 %2226
    %2228 = vadd.xlane.f32.xlu0 %v2205
    %v2229 = vpop.xlane.xlu0 %2228
    %2230 = vadd.xlane.f32.xlu0 %v2206
    %v2231 = vpop.xlane.xlu0 %2230
    %2232 = vadd.xlane.f32.xlu0 %v2207
    %v2233 = vpop.xlane.xlu0 %2232
    %2234 = vadd.xlane.f32.xlu0 %v2208
    %v2235 = vpop.xlane.xlu0 %2234
    %2236 = vadd.xlane.f32.xlu0 %v2209
    %v2237 = vpop.xlane.xlu0 %2236
    %2238 = vadd.xlane.f32.xlu0 %v2210
    %v2239 = vpop.xlane.xlu0 %2238
    %2240 = vadd.xlane.f32.xlu0 %v2211
    %v2241 = vpop.xlane.xlu0 %2240
    %2242 = vadd.xlane.f32.xlu0 %v2212
    %v2243 = vpop.xlane.xlu0 %2242
    %2244 = vadd.xlane.f32.xlu0 %v2213
    %v2245 = vpop.xlane.xlu0 %2244
    %v2246 = vrcp.pop %v2215
    %v2247 = vmul.f32 1.0, %v2246
    %v2248 = vrcp.pop %v2217
    %v2249 = vmul.f32 1.0, %v2248
    %v2250 = vrcp.pop %v2219
    %v2251 = vmul.f32 1.0, %v2250
    %v2252 = vrcp.pop %v2221
    %v2253 = vmul.f32 1.0, %v2252
    %v2254 = vrcp.pop %v2223
    %v2255 = vmul.f32 1.0, %v2254
    %v2256 = vrcp.pop %v2225
    %v2257 = vmul.f32 1.0, %v2256
    %v2258 = vrcp.pop %v2227
    %v2259 = vmul.f32 1.0, %v2258
    %v2260 = vrcp.pop %v2229
    %v2261 = vmul.f32 1.0, %v2260
    %v2262 = vrcp.pop %v2231
    %v2263 = vmul.f32 1.0, %v2262
    %v2264 = vrcp.pop %v2233
    %v2265 = vmul.f32 1.0, %v2264
    %v2266 = vrcp.pop %v2235
    %v2267 = vmul.f32 1.0, %v2266
    %v2268 = vrcp.pop %v2237
    %v2269 = vmul.f32 1.0, %v2268
    %v2270 = vrcp.pop %v2239
    %v2271 = vmul.f32 1.0, %v2270
    %v2272 = vrcp.pop %v2241
    %v2273 = vmul.f32 1.0, %v2272
    %v2274 = vrcp.pop %v2243
    %v2275 = vmul.f32 1.0, %v2274
    %v2276 = vrcp.pop %v2245
    %v2277 = vmul.f32 1.0, %v2276
    %v2278 = vmul.f32 %v2247, %v973
    %v2279 = vmul.f32 %v2249, %v973
    %v2280 = vmul.f32 %v2251, %v973
    %v2281 = vmul.f32 %v2253, %v973
    %v2282 = vmul.f32 %v2255, %v973
    %v2283 = vmul.f32 %v2257, %v973
    %v2284 = vmul.f32 %v2259, %v973
    %v2285 = vmul.f32 %v2261, %v973
    %v2286 = vmul.f32 %v2263, %v973
    %v2287 = vmul.f32 %v2265, %v973
    %v2288 = vmul.f32 %v2267, %v973
    %v2289 = vmul.f32 %v2269, %v973
    %v2290 = vmul.f32 %v2271, %v973
    %v2291 = vmul.f32 %v2273, %v973
    %v2292 = vmul.f32 %v2275, %v973
    %v2293 = vmul.f32 %v2277, %v973
    %v2294 = vadd.f32 %v2182, %v2278
    %v2295 = vadd.f32 %v2183, %v2279
    %v2296 = vadd.f32 %v2184, %v2280
    %v2297 = vadd.f32 %v2185, %v2281
    %v2298 = vadd.f32 %v2186, %v2282
    %v2299 = vadd.f32 %v2187, %v2283
    %v2300 = vadd.f32 %v2188, %v2284
    %v2301 = vadd.f32 %v2189, %v2285
    %v2302 = vadd.f32 %v2190, %v2286
    %v2303 = vadd.f32 %v2191, %v2287
    %v2304 = vadd.f32 %v2192, %v2288
    %v2305 = vadd.f32 %v2193, %v2289
    %v2306 = vadd.f32 %v2194, %v2290
    %v2307 = vadd.f32 %v2195, %v2291
    %v2308 = vadd.f32 %v2196, %v2292
    %v2309 = vadd.f32 %v2197, %v2293
    %v2310 = vld [vmem:[#allocation2 + $0x18] sm:$0xff]
    %v2311 = vld [vmem:[#allocation2 + $0x38] sm:$0xff]
    %v2312 = vld [vmem:[#allocation2 + $0x58] sm:$0xff]
    %v2313 = vld [vmem:[#allocation2 + $0x78] sm:$0xff]
    %v2314 = vld [vmem:[#allocation2 + $0x98] sm:$0xff]
    %v2315 = vld [vmem:[#allocation2 + $0xb8] sm:$0xff]
    %v2316 = vld [vmem:[#allocation2 + $0xd8] sm:$0xff]
    %v2317 = vld [vmem:[#allocation2 + $0xf8] sm:$0xff]
    %v2318 = vld [vmem:[#allocation2 + $0x118] sm:$0xff]
    %v2319 = vld [vmem:[#allocation2 + $0x138] sm:$0xff]
    %v2320 = vld [vmem:[#allocation2 + $0x158] sm:$0xff]
    %v2321 = vld [vmem:[#allocation2 + $0x178] sm:$0xff]
    %v2322 = vld [vmem:[#allocation2 + $0x198] sm:$0xff]
    %v2323 = vld [vmem:[#allocation2 + $0x1b8] sm:$0xff]
    %v2324 = vld [vmem:[#allocation2 + $0x1d8] sm:$0xff]
    %v2325 = vld [vmem:[#allocation2 + $0x1f8] sm:$0xff]
    %2326 = vadd.xlane.f32.xlu0 %v2310
    %v2327 = vpop.xlane.xlu0 %2326
    %2328 = vadd.xlane.f32.xlu0 %v2311
    %v2329 = vpop.xlane.xlu0 %2328
    %2330 = vadd.xlane.f32.xlu0 %v2312
    %v2331 = vpop.xlane.xlu0 %2330
    %2332 = vadd.xlane.f32.xlu0 %v2313
    %v2333 = vpop.xlane.xlu0 %2332
    %2334 = vadd.xlane.f32.xlu0 %v2314
    %v2335 = vpop.xlane.xlu0 %2334
    %2336 = vadd.xlane.f32.xlu0 %v2315
    %v2337 = vpop.xlane.xlu0 %2336
    %2338 = vadd.xlane.f32.xlu0 %v2316
    %v2339 = vpop.xlane.xlu0 %2338
    %2340 = vadd.xlane.f32.xlu0 %v2317
    %v2341 = vpop.xlane.xlu0 %2340
    %2342 = vadd.xlane.f32.xlu0 %v2318
    %v2343 = vpop.xlane.xlu0 %2342
    %2344 = vadd.xlane.f32.xlu0 %v2319
    %v2345 = vpop.xlane.xlu0 %2344
    %2346 = vadd.xlane.f32.xlu0 %v2320
    %v2347 = vpop.xlane.xlu0 %2346
    %2348 = vadd.xlane.f32.xlu0 %v2321
    %v2349 = vpop.xlane.xlu0 %2348
    %2350 = vadd.xlane.f32.xlu0 %v2322
    %v2351 = vpop.xlane.xlu0 %2350
    %2352 = vadd.xlane.f32.xlu0 %v2323
    %v2353 = vpop.xlane.xlu0 %2352
    %2354 = vadd.xlane.f32.xlu0 %v2324
    %v2355 = vpop.xlane.xlu0 %2354
    %2356 = vadd.xlane.f32.xlu0 %v2325
    %v2357 = vpop.xlane.xlu0 %2356
    %v2358 = vrcp.pop %v2327
    %v2359 = vmul.f32 1.0, %v2358
    %v2360 = vrcp.pop %v2329
    %v2361 = vmul.f32 1.0, %v2360
    %v2362 = vrcp.pop %v2331
    %v2363 = vmul.f32 1.0, %v2362
    %v2364 = vrcp.pop %v2333
    %v2365 = vmul.f32 1.0, %v2364
    %v2366 = vrcp.pop %v2335
    %v2367 = vmul.f32 1.0, %v2366
    %v2368 = vrcp.pop %v2337
    %v2369 = vmul.f32 1.0, %v2368
    %v2370 = vrcp.pop %v2339
    %v2371 = vmul.f32 1.0, %v2370
    %v2372 = vrcp.pop %v2341
    %v2373 = vmul.f32 1.0, %v2372
    %v2374 = vrcp.pop %v2343
    %v2375 = vmul.f32 1.0, %v2374
    %v2376 = vrcp.pop %v2345
    %v2377 = vmul.f32 1.0, %v2376
    %v2378 = vrcp.pop %v2347
    %v2379 = vmul.f32 1.0, %v2378
    %v2380 = vrcp.pop %v2349
    %v2381 = vmul.f32 1.0, %v2380
    %v2382 = vrcp.pop %v2351
    %v2383 = vmul.f32 1.0, %v2382
    %v2384 = vrcp.pop %v2353
    %v2385 = vmul.f32 1.0, %v2384
    %v2386 = vrcp.pop %v2355
    %v2387 = vmul.f32 1.0, %v2386
    %v2388 = vrcp.pop %v2357
    %v2389 = vmul.f32 1.0, %v2388
    %v2390 = vmul.f32 %v2359, %v1173
    %v2391 = vmul.f32 %v2361, %v1173
    %v2392 = vmul.f32 %v2363, %v1173
    %v2393 = vmul.f32 %v2365, %v1173
    %v2394 = vmul.f32 %v2367, %v1173
    %v2395 = vmul.f32 %v2369, %v1173
    %v2396 = vmul.f32 %v2371, %v1173
    %v2397 = vmul.f32 %v2373, %v1173
    %v2398 = vmul.f32 %v2375, %v1173
    %v2399 = vmul.f32 %v2377, %v1173
    %v2400 = vmul.f32 %v2379, %v1173
    %v2401 = vmul.f32 %v2381, %v1173
    %v2402 = vmul.f32 %v2383, %v1173
    %v2403 = vmul.f32 %v2385, %v1173
    %v2404 = vmul.f32 %v2387, %v1173
    %v2405 = vmul.f32 %v2389, %v1173
    %v2406 = vadd.f32 %v2294, %v2390
    %v2407 = vadd.f32 %v2295, %v2391
    %v2408 = vadd.f32 %v2296, %v2392
    %v2409 = vadd.f32 %v2297, %v2393
    %v2410 = vadd.f32 %v2298, %v2394
    %v2411 = vadd.f32 %v2299, %v2395
    %v2412 = vadd.f32 %v2300, %v2396
    %v2413 = vadd.f32 %v2301, %v2397
    %v2414 = vadd.f32 %v2302, %v2398
    %v2415 = vadd.f32 %v2303, %v2399
    %v2416 = vadd.f32 %v2304, %v2400
    %v2417 = vadd.f32 %v2305, %v2401
    %v2418 = vadd.f32 %v2306, %v2402
    %v2419 = vadd.f32 %v2307, %v2403
    %v2420 = vadd.f32 %v2308, %v2404
    %v2421 = vadd.f32 %v2309, %v2405
    %v2422 = vld [vmem:[#allocation2] sm:$0xff]
    %v2423 = vld [vmem:[#allocation2 + $0x8] sm:$0xff]
    %v2424 = vld [vmem:[#allocation2 + $0x10] sm:$0xff]
    %v2425 = vld [vmem:[#allocation2 + $0x20] sm:$0xff]
    %v2426 = vld [vmem:[#allocation2 + $0x28] sm:$0xff]
    %v2427 = vld [vmem:[#allocation2 + $0x30] sm:$0xff]
    %v2428 = vld [vmem:[#allocation2 + $0x40] sm:$0xff]
    %v2429 = vld [vmem:[#allocation2 + $0x48] sm:$0xff]
    %v2430 = vld [vmem:[#allocation2 + $0x50] sm:$0xff]
    %v2431 = vld [vmem:[#allocation2 + $0x60] sm:$0xff]
    %v2432 = vld [vmem:[#allocation2 + $0x68] sm:$0xff]
    %v2433 = vld [vmem:[#allocation2 + $0x70] sm:$0xff]
    %v2434 = vld [vmem:[#allocation2 + $0x80] sm:$0xff]
    %v2435 = vld [vmem:[#allocation2 + $0x88] sm:$0xff]
    %v2436 = vld [vmem:[#allocation2 + $0x90] sm:$0xff]
    %v2437 = vld [vmem:[#allocation2 + $0xa0] sm:$0xff]
    %v2438 = vld [vmem:[#allocation2 + $0xa8] sm:$0xff]
    %v2439 = vld [vmem:[#allocation2 + $0xb0] sm:$0xff]
    %v2440 = vld [vmem:[#allocation2 + $0xc0] sm:$0xff]
    %v2441 = vld [vmem:[#allocation2 + $0xc8] sm:$0xff]
    %v2442 = vld [vmem:[#allocation2 + $0xd0] sm:$0xff]
    %v2443 = vld [vmem:[#allocation2 + $0xe0] sm:$0xff]
    %v2444 = vld [vmem:[#allocation2 + $0xe8] sm:$0xff]
    %v2445 = vld [vmem:[#allocation2 + $0xf0] sm:$0xff]
    %v2446 = vld [vmem:[#allocation2 + $0x100] sm:$0xff]
    %v2447 = vld [vmem:[#allocation2 + $0x108] sm:$0xff]
    %v2448 = vld [vmem:[#allocation2 + $0x110] sm:$0xff]
    %v2449 = vld [vmem:[#allocation2 + $0x120] sm:$0xff]
    %v2450 = vld [vmem:[#allocation2 + $0x128] sm:$0xff]
    %v2451 = vld [vmem:[#allocation2 + $0x130] sm:$0xff]
    %v2452 = vld [vmem:[#allocation2 + $0x140] sm:$0xff]
    %v2453 = vld [vmem:[#allocation2 + $0x148] sm:$0xff]
    %v2454 = vld [vmem:[#allocation2 + $0x150] sm:$0xff]
    %v2455 = vld [vmem:[#allocation2 + $0x160] sm:$0xff]
    %v2456 = vld [vmem:[#allocation2 + $0x168] sm:$0xff]
    %v2457 = vld [vmem:[#allocation2 + $0x170] sm:$0xff]
    %v2458 = vld [vmem:[#allocation2 + $0x180] sm:$0xff]
    %v2459 = vld [vmem:[#allocation2 + $0x188] sm:$0xff]
    %v2460 = vld [vmem:[#allocation2 + $0x190] sm:$0xff]
    %v2461 = vld [vmem:[#allocation2 + $0x1a0] sm:$0xff]
    %v2462 = vld [vmem:[#allocation2 + $0x1a8] sm:$0xff]
    %v2463 = vld [vmem:[#allocation2 + $0x1b0] sm:$0xff]
    %v2464 = vld [vmem:[#allocation2 + $0x1c0] sm:$0xff]
    %v2465 = vld [vmem:[#allocation2 + $0x1c8] sm:$0xff]
    %v2466 = vld [vmem:[#allocation2 + $0x1d0] sm:$0xff]
    %v2467 = vld [vmem:[#allocation2 + $0x1e0] sm:$0xff]
    %v2468 = vld [vmem:[#allocation2 + $0x1e8] sm:$0xff]
    %v2469 = vld [vmem:[#allocation2 + $0x1f0] sm:$0xff]
    %v2470 = vpack.c.bf16 %v2425, %v2422
    %v2471 = vpack.c.bf16 %v2426, %v2423
    %v2472 = vpack.c.bf16 %v2427, %v2424
    %v2473 = vpack.c.bf16 %v2311, %v2310
    %v2474 = vpack.c.bf16 %v2431, %v2428
    %v2475 = vpack.c.bf16 %v2432, %v2429
    %v2476 = vpack.c.bf16 %v2433, %v2430
    %v2477 = vpack.c.bf16 %v2313, %v2312
    %v2478 = vpack.c.bf16 %v2437, %v2434
    %v2479 = vpack.c.bf16 %v2438, %v2435
    %v2480 = vpack.c.bf16 %v2439, %v2436
    %v2481 = vpack.c.bf16 %v2315, %v2314
    %v2482 = vpack.c.bf16 %v2443, %v2440
    %v2483 = vpack.c.bf16 %v2444, %v2441
    %v2484 = vpack.c.bf16 %v2445, %v2442
    %v2485 = vpack.c.bf16 %v2317, %v2316
    %v2486 = vpack.c.bf16 %v2449, %v2446
    %v2487 = vpack.c.bf16 %v2450, %v2447
    %v2488 = vpack.c.bf16 %v2451, %v2448
    %v2489 = vpack.c.bf16 %v2319, %v2318
    %v2490 = vpack.c.bf16 %v2455, %v2452
    %v2491 = vpack.c.bf16 %v2456, %v2453
    %v2492 = vpack.c.bf16 %v2457, %v2454
    %v2493 = vpack.c.bf16 %v2321, %v2320
    %v2494 = vpack.c.bf16 %v2461, %v2458
    %v2495 = vpack.c.bf16 %v2462, %v2459
    %v2496 = vpack.c.bf16 %v2463, %v2460
    %v2497 = vpack.c.bf16 %v2323, %v2322
    %v2498 = vpack.c.bf16 %v2467, %v2464
    %v2499 = vpack.c.bf16 %v2468, %v2465
    %v2500 = vpack.c.bf16 %v2469, %v2466
    %v2501 = vpack.c.bf16 %v2325, %v2324
    %v2502 = vld [vmem:[#allocation3] sm:$0xf]
    %v2503 = vld [vmem:[#allocation3 + $0x4] sm:$0xf]
    %v2504 = vld [vmem:[#allocation3 + $0x8] sm:$0xf]
    %v2505 = vld [vmem:[#allocation3 + $0xc] sm:$0xf]
    %v2506 = vld [vmem:[#allocation3 + $0x10] sm:$0xf]
    %v2507 = vld [vmem:[#allocation3 + $0x14] sm:$0xf]
    %v2508 = vld [vmem:[#allocation3 + $0x18] sm:$0xf]
    %v2509 = vld [vmem:[#allocation3 + $0x1c] sm:$0xf]
    %v2510 = vld [vmem:[#allocation3 + $0x20] sm:$0xf]
    %v2511 = vld [vmem:[#allocation3 + $0x24] sm:$0xf]
    %v2512 = vld [vmem:[#allocation3 + $0x28] sm:$0xf]
    %v2513 = vld [vmem:[#allocation3 + $0x2c] sm:$0xf]
    %v2514 = vld [vmem:[#allocation3 + $0x30] sm:$0xf]
    %v2515 = vld [vmem:[#allocation3 + $0x34] sm:$0xf]
    %v2516 = vld [vmem:[#allocation3 + $0x38] sm:$0xf]
    %v2517 = vld [vmem:[#allocation3 + $0x3c] sm:$0xf]
    %v2518 = vld [vmem:[#allocation3 + $0x40] sm:$0xf]
    %v2519 = vld [vmem:[#allocation3 + $0x44] sm:$0xf]
    %v2520 = vld [vmem:[#allocation3 + $0x48] sm:$0xf]
    %v2521 = vld [vmem:[#allocation3 + $0x4c] sm:$0xf]
    %v2522 = vld [vmem:[#allocation3 + $0x50] sm:$0xf]
    %v2523 = vld [vmem:[#allocation3 + $0x54] sm:$0xf]
    %v2524 = vld [vmem:[#allocation3 + $0x58] sm:$0xf]
    %v2525 = vld [vmem:[#allocation3 + $0x5c] sm:$0xf]
    %v2526 = vld [vmem:[#allocation3 + $0x60] sm:$0xf]
    %v2527 = vld [vmem:[#allocation3 + $0x64] sm:$0xf]
    %v2528 = vld [vmem:[#allocation3 + $0x68] sm:$0xf]
    %v2529 = vld [vmem:[#allocation3 + $0x6c] sm:$0xf]
    %v2530 = vld [vmem:[#allocation3 + $0x70] sm:$0xf]
    %v2531 = vld [vmem:[#allocation3 + $0x74] sm:$0xf]
    %v2532 = vld [vmem:[#allocation3 + $0x78] sm:$0xf]
    %v2533 = vld [vmem:[#allocation3 + $0x7c] sm:$0xf]
    %v2534 = vld [vmem:[#allocation3 + $0x80] sm:$0xf]
    %v2535 = vld [vmem:[#allocation3 + $0x84] sm:$0xf]
    %v2536 = vld [vmem:[#allocation3 + $0x88] sm:$0xf]
    %v2537 = vld [vmem:[#allocation3 + $0x8c] sm:$0xf]
    %v2538 = vld [vmem:[#allocation3 + $0x90] sm:$0xf]
    %v2539 = vld [vmem:[#allocation3 + $0x94] sm:$0xf]
    %v2540 = vld [vmem:[#allocation3 + $0x98] sm:$0xf]
    %v2541 = vld [vmem:[#allocation3 + $0x9c] sm:$0xf]
    %v2542 = vld [vmem:[#allocation3 + $0xa0] sm:$0xf]
    %v2543 = vld [vmem:[#allocation3 + $0xa4] sm:$0xf]
    %v2544 = vld [vmem:[#allocation3 + $0xa8] sm:$0xf]
    %v2545 = vld [vmem:[#allocation3 + $0xac] sm:$0xf]
    %v2546 = vld [vmem:[#allocation3 + $0xb0] sm:$0xf]
    %v2547 = vld [vmem:[#allocation3 + $0xb4] sm:$0xf]
    %v2548 = vld [vmem:[#allocation3 + $0xb8] sm:$0xf]
    %v2549 = vld [vmem:[#allocation3 + $0xbc] sm:$0xf]
    %v2550 = vld [vmem:[#allocation3 + $0xc0] sm:$0xf]
    %v2551 = vld [vmem:[#allocation3 + $0xc4] sm:$0xf]
    %v2552 = vld [vmem:[#allocation3 + $0xc8] sm:$0xf]
    %v2553 = vld [vmem:[#allocation3 + $0xcc] sm:$0xf]
    %v2554 = vld [vmem:[#allocation3 + $0xd0] sm:$0xf]
    %v2555 = vld [vmem:[#allocation3 + $0xd4] sm:$0xf]
    %v2556 = vld [vmem:[#allocation3 + $0xd8] sm:$0xf]
    %v2557 = vld [vmem:[#allocation3 + $0xdc] sm:$0xf]
    %v2558 = vld [vmem:[#allocation3 + $0xe0] sm:$0xf]
    %v2559 = vld [vmem:[#allocation3 + $0xe4] sm:$0xf]
    %v2560 = vld [vmem:[#allocation3 + $0xe8] sm:$0xf]
    %v2561 = vld [vmem:[#allocation3 + $0xec] sm:$0xf]
    %v2562 = vld [vmem:[#allocation3 + $0xf0] sm:$0xf]
    %v2563 = vld [vmem:[#allocation3 + $0xf4] sm:$0xf]
    %v2564 = vld [vmem:[#allocation3 + $0xf8] sm:$0xf]
    %v2565 = vld [vmem:[#allocation3 + $0xfc] sm:$0xf]
    %v2630 = vunpack.c.l.b16 %v2502
    %v2631 = vunpack.c.l.b16 %v2503
    %v2632 = vunpack.c.l.b16 %v2504
    %v2633 = vunpack.c.l.b16 %v2505
    %v2634 = vunpack.c.l.b16 %v2506
    %v2635 = vunpack.c.l.b16 %v2507
    %v2636 = vunpack.c.l.b16 %v2508
    %v2637 = vunpack.c.l.b16 %v2509
    %v2638 = vunpack.c.l.b16 %v2510
    %v2639 = vunpack.c.l.b16 %v2511
    %v2640 = vunpack.c.l.b16 %v2512
    %v2641 = vunpack.c.l.b16 %v2513
    %v2642 = vunpack.c.l.b16 %v2514
    %v2643 = vunpack.c.l.b16 %v2515
    %v2644 = vunpack.c.l.b16 %v2516
    %v2645 = vunpack.c.l.b16 %v2517
    %v2646 = vunpack.c.l.b16 %v2518
    %v2647 = vunpack.c.l.b16 %v2519
    %v2648 = vunpack.c.l.b16 %v2520
    %v2649 = vunpack.c.l.b16 %v2521
    %v2650 = vunpack.c.l.b16 %v2522
    %v2651 = vunpack.c.l.b16 %v2523
    %v2652 = vunpack.c.l.b16 %v2524
    %v2653 = vunpack.c.l.b16 %v2525
    %v2654 = vunpack.c.l.b16 %v2526
    %v2655 = vunpack.c.l.b16 %v2527
    %v2656 = vunpack.c.l.b16 %v2528
    %v2657 = vunpack.c.l.b16 %v2529
    %v2658 = vunpack.c.l.b16 %v2530
    %v2659 = vunpack.c.l.b16 %v2531
    %v2660 = vunpack.c.l.b16 %v2532
    %v2661 = vunpack.c.l.b16 %v2533
    %v2662 = vunpack.c.l.b16 %v2534
    %v2663 = vunpack.c.l.b16 %v2535
    %v2664 = vunpack.c.l.b16 %v2536
    %v2665 = vunpack.c.l.b16 %v2537
    %v2666 = vunpack.c.l.b16 %v2538
    %v2667 = vunpack.c.l.b16 %v2539
    %v2668 = vunpack.c.l.b16 %v2540
    %v2669 = vunpack.c.l.b16 %v2541
    %v2670 = vunpack.c.l.b16 %v2542
    %v2671 = vunpack.c.l.b16 %v2543
    %v2672 = vunpack.c.l.b16 %v2544
    %v2673 = vunpack.c.l.b16 %v2545
    %v2674 = vunpack.c.l.b16 %v2546
    %v2675 = vunpack.c.l.b16 %v2547
    %v2676 = vunpack.c.l.b16 %v2548
    %v2677 = vunpack.c.l.b16 %v2549
    %v2678 = vunpack.c.l.b16 %v2550
    %v2679 = vunpack.c.l.b16 %v2551
    %v2680 = vunpack.c.l.b16 %v2552
    %v2681 = vunpack.c.l.b16 %v2553
    %v2682 = vunpack.c.l.b16 %v2554
    %v2683 = vunpack.c.l.b16 %v2555
    %v2684 = vunpack.c.l.b16 %v2556
    %v2685 = vunpack.c.l.b16 %v2557
    %v2686 = vunpack.c.l.b16 %v2558
    %v2687 = vunpack.c.l.b16 %v2559
    %v2688 = vunpack.c.l.b16 %v2560
    %v2689 = vunpack.c.l.b16 %v2561
    %v2690 = vunpack.c.l.b16 %v2562
    %v2691 = vunpack.c.l.b16 %v2563
    %v2692 = vunpack.c.l.b16 %v2564
    %v2693 = vunpack.c.l.b16 %v2565
    %v2694 = vpack.c.b16 %v2631, %v2630
    %v2695 = vpack.c.b16 %v2633, %v2632
    %v2696 = vpack.c.b16 %v2635, %v2634
    %v2697 = vpack.c.b16 %v2637, %v2636
    %v2698 = vpack.c.b16 %v2639, %v2638
    %v2699 = vpack.c.b16 %v2641, %v2640
    %v2700 = vpack.c.b16 %v2643, %v2642
    %v2701 = vpack.c.b16 %v2645, %v2644
    %v2702 = vpack.c.b16 %v2647, %v2646
    %v2703 = vpack.c.b16 %v2649, %v2648
    %v2704 = vpack.c.b16 %v2651, %v2650
    %v2705 = vpack.c.b16 %v2653, %v2652
    %v2706 = vpack.c.b16 %v2655, %v2654
    %v2707 = vpack.c.b16 %v2657, %v2656
    %v2708 = vpack.c.b16 %v2659, %v2658
    %v2709 = vpack.c.b16 %v2661, %v2660
    %v2710 = vpack.c.b16 %v2663, %v2662
    %v2711 = vpack.c.b16 %v2665, %v2664
    %v2712 = vpack.c.b16 %v2667, %v2666
    %v2713 = vpack.c.b16 %v2669, %v2668
    %v2714 = vpack.c.b16 %v2671, %v2670
    %v2715 = vpack.c.b16 %v2673, %v2672
    %v2716 = vpack.c.b16 %v2675, %v2674
    %v2717 = vpack.c.b16 %v2677, %v2676
    %v2718 = vpack.c.b16 %v2679, %v2678
    %v2719 = vpack.c.b16 %v2681, %v2680
    %v2720 = vpack.c.b16 %v2683, %v2682
    %v2721 = vpack.c.b16 %v2685, %v2684
    %v2722 = vpack.c.b16 %v2687, %v2686
    %v2723 = vpack.c.b16 %v2689, %v2688
    %v2724 = vpack.c.b16 %v2691, %v2690
    %v2725 = vpack.c.b16 %v2693, %v2692
    %2758 = vmatprep.subr.bf16.mxu0 0
    %2759 = vmatpush1.bf16.msra.mxu0 %v2701
    %2760 = vmatprep.subr.bf16.mxu0 0
    %2761 = vmatpush1.bf16.msra.mxu0 %v2700
    %2762 = vmatprep.subr.bf16.mxu0 0
    %2763 = vmatpush1.bf16.msra.mxu0 %v2699
    %2764 = vmatprep.subr.bf16.mxu0 0
    %2765 = vmatpush1.bf16.msra.mxu0 %v2698
    %2766 = vmatprep.subr.bf16.mxu0 0
    %2767 = vmatpush1.bf16.msra.mxu0 %v2697
    %2768 = vmatprep.subr.bf16.mxu0 0
    %2769 = vmatpush1.bf16.msra.mxu0 %v2696
    %2770 = vmatprep.subr.bf16.mxu0 0
    %2771 = vmatpush1.bf16.msra.mxu0 %v2695
    %2772 = vmatprep.subr.bf16.mxu0 0
    %2773 = vmatpush1.bf16.msra.mxu0 %v2694
    %2774 = vmatprep.subr.bf16.mxu0 0
    %2775 = vmatpush2.bf16.msra.mxu0 %v2709
    %2776 = vmatprep.subr.bf16.mxu0 0
    %2777 = vmatpush2.bf16.msra.mxu0 %v2708
    %2778 = vmatprep.subr.bf16.mxu0 0
    %2779 = vmatpush2.bf16.msra.mxu0 %v2707
    %2780 = vmatprep.subr.bf16.mxu0 0
    %2781 = vmatpush2.bf16.msra.mxu0 %v2706
    %2782 = vmatprep.subr.bf16.mxu0 0
    %2783 = vmatpush2.bf16.msra.mxu0 %v2705
    %2784 = vmatprep.subr.bf16.mxu0 0
    %2785 = vmatpush2.bf16.msra.mxu0 %v2704
    %2786 = vmatprep.subr.bf16.mxu0 0
    %2787 = vmatpush2.bf16.msra.mxu0 %v2703
    %2788 = vmatprep.subr.bf16.mxu0 0
    %2789 = vmatpush2.bf16.msra.mxu0 %v2702
    %2790 = vmatprep.mubr.bf16.mxu0 %v2471
    %2791 = vmatmul.mubr.bf16.gmra.mxu0 %v2470
    %v2792 = vpop.f32.mrf.mxu0
    %v2793 = vadd.f32 0.0, %v2792
    %v2794 = vpop.f32.mrf.mxu0
    %v2795 = vpop.f32.mrf.mxu0
    %v2796 = vadd.f32 0.0, %v2795
    %v2797 = vpop.f32.mrf.mxu0
    %2798 = vmatprep.mubr.bf16.mxu0 %v2475
    %2799 = vmatmul.mubr.bf16.gmra.mxu0 %v2474
    %v2800 = vpop.f32.mrf.mxu0
    %v2801 = vadd.f32 0.0, %v2800
    %v2802 = vpop.f32.mrf.mxu0
    %v2803 = vpop.f32.mrf.mxu0
    %v2804 = vadd.f32 0.0, %v2803
    %v2805 = vpop.f32.mrf.mxu0
    %2806 = vmatprep.mubr.bf16.mxu0 %v2479
    %2807 = vmatmul.mubr.bf16.gmra.mxu0 %v2478
    %v2808 = vpop.f32.mrf.mxu0
    %v2809 = vadd.f32 0.0, %v2808
    %v2810 = vpop.f32.mrf.mxu0
    %v2811 = vpop.f32.mrf.mxu0
    %v2812 = vadd.f32 0.0, %v2811
    %v2813 = vpop.f32.mrf.mxu0
    %2814 = vmatprep.mubr.bf16.mxu0 %v2483
    %2815 = vmatmul.mubr.bf16.gmra.mxu0 %v2482
    %v2816 = vpop.f32.mrf.mxu0
    %v2817 = vadd.f32 0.0, %v2816
    %v2818 = vpop.f32.mrf.mxu0
    %v2819 = vpop.f32.mrf.mxu0
    %v2820 = vadd.f32 0.0, %v2819
    %v2821 = vpop.f32.mrf.mxu0
    %2822 = vmatprep.mubr.bf16.mxu0 %v2487
    %2823 = vmatmul.mubr.bf16.gmra.mxu0 %v2486
    %v2824 = vpop.f32.mrf.mxu0
    %v2825 = vadd.f32 0.0, %v2824
    %v2826 = vpop.f32.mrf.mxu0
    %v2827 = vpop.f32.mrf.mxu0
    %v2828 = vadd.f32 0.0, %v2827
    %v2829 = vpop.f32.mrf.mxu0
    %2830 = vmatprep.mubr.bf16.mxu0 %v2491
    %2831 = vmatmul.mubr.bf16.gmra.mxu0 %v2490
    %v2832 = vpop.f32.mrf.mxu0
    %v2833 = vadd.f32 0.0, %v2832
    %v2834 = vpop.f32.mrf.mxu0
    %v2835 = vpop.f32.mrf.mxu0
    %v2836 = vadd.f32 0.0, %v2835
    %v2837 = vpop.f32.mrf.mxu0
    %2838 = vmatprep.mubr.bf16.mxu0 %v2495
    %2839 = vmatmul.mubr.bf16.gmra.mxu0 %v2494
    %v2840 = vpop.f32.mrf.mxu0
    %v2841 = vadd.f32 0.0, %v2840
    %v2842 = vpop.f32.mrf.mxu0
    %v2843 = vpop.f32.mrf.mxu0
    %v2844 = vadd.f32 0.0, %v2843
    %v2845 = vpop.f32.mrf.mxu0
    %2846 = vmatprep.mubr.bf16.mxu0 %v2499
    %2847 = vmatmul.mubr.bf16.gmra.mxu0 %v2498
    %v2848 = vpop.f32.mrf.mxu0
    %v2849 = vadd.f32 0.0, %v2848
    %v2850 = vpop.f32.mrf.mxu0
    %v2851 = vpop.f32.mrf.mxu0
    %v2852 = vadd.f32 0.0, %v2851
    %v2853 = vpop.f32.mrf.mxu0
    %2854 = vdwg.mxu0
    %2855 = vmatprep.subr.bf16.mxu0 0
    %2856 = vmatpush1.bf16.msra.mxu0 %v2717
    %2857 = vmatprep.subr.bf16.mxu0 0
    %2858 = vmatpush1.bf16.msra.mxu0 %v2716
    %2859 = vmatprep.subr.bf16.mxu0 0
    %2860 = vmatpush1.bf16.msra.mxu0 %v2715
    %2861 = vmatprep.subr.bf16.mxu0 0
    %2862 = vmatpush1.bf16.msra.mxu0 %v2714
    %2863 = vmatprep.subr.bf16.mxu0 0
    %2864 = vmatpush1.bf16.msra.mxu0 %v2713
    %2865 = vmatprep.subr.bf16.mxu0 0
    %2866 = vmatpush1.bf16.msra.mxu0 %v2712
    %2867 = vmatprep.subr.bf16.mxu0 0
    %2868 = vmatpush1.bf16.msra.mxu0 %v2711
    %2869 = vmatprep.subr.bf16.mxu0 0
    %2870 = vmatpush1.bf16.msra.mxu0 %v2710
    %2871 = vmatprep.subr.bf16.mxu0 0
    %2872 = vmatpush2.bf16.msra.mxu0 %v2725
    %2873 = vmatprep.subr.bf16.mxu0 0
    %2874 = vmatpush2.bf16.msra.mxu0 %v2724
    %2875 = vmatprep.subr.bf16.mxu0 0
    %2876 = vmatpush2.bf16.msra.mxu0 %v2723
    %2877 = vmatprep.subr.bf16.mxu0 0
    %2878 = vmatpush2.bf16.msra.mxu0 %v2722
    %2879 = vmatprep.subr.bf16.mxu0 0
    %2880 = vmatpush2.bf16.msra.mxu0 %v2721
    %2881 = vmatprep.subr.bf16.mxu0 0
    %2882 = vmatpush2.bf16.msra.mxu0 %v2720
    %2883 = vmatprep.subr.bf16.mxu0 0
    %2884 = vmatpush2.bf16.msra.mxu0 %v2719
    %2885 = vmatprep.subr.bf16.mxu0 0
    %2886 = vmatpush2.bf16.msra.mxu0 %v2718
    %2887 = vmatprep.mubr.bf16.mxu0 %v2473
    %2888 = vmatmul.mubr.bf16.gmra.mxu0 %v2472
    %v2889 = vpop.f32.mrf.mxu0
    %v2890 = vadd.f32 %v2793, %v2889
    %v2891 = vpop.f32.mrf.mxu0
    %v2892 = vpop.f32.mrf.mxu0
    %v2893 = vadd.f32 %v2796, %v2892
    %v2894 = vpop.f32.mrf.mxu0
    %2895 = vmatprep.mubr.bf16.mxu0 %v2477
    %2896 = vmatmul.mubr.bf16.gmra.mxu0 %v2476
    %v2897 = vpop.f32.mrf.mxu0
    %v2898 = vadd.f32 %v2801, %v2897
    %v2899 = vpop.f32.mrf.mxu0
    %v2900 = vpop.f32.mrf.mxu0
    %v2901 = vadd.f32 %v2804, %v2900
    %v2902 = vpop.f32.mrf.mxu0
    %2903 = vmatprep.mubr.bf16.mxu0 %v2481
    %2904 = vmatmul.mubr.bf16.gmra.mxu0 %v2480
    %v2905 = vpop.f32.mrf.mxu0
    %v2906 = vadd.f32 %v2809, %v2905
    %v2907 = vpop.f32.mrf.mxu0
    %v2908 = vpop.f32.mrf.mxu0
    %v2909 = vadd.f32 %v2812, %v2908
    %v2910 = vpop.f32.mrf.mxu0
    %2911 = vmatprep.mubr.bf16.mxu0 %v2485
    %2912 = vmatmul.mubr.bf16.gmra.mxu0 %v2484
    %v2913 = vpop.f32.mrf.mxu0
    %v2914 = vadd.f32 %v2817, %v2913
    %v2915 = vpop.f32.mrf.mxu0
    %v2916 = vpop.f32.mrf.mxu0
    %v2917 = vadd.f32 %v2820, %v2916
    %v2918 = vpop.f32.mrf.mxu0
    %2919 = vmatprep.mubr.bf16.mxu0 %v2489
    %2920 = vmatmul.mubr.bf16.gmra.mxu0 %v2488
    %v2921 = vpop.f32.mrf.mxu0
    %v2922 = vadd.f32 %v2825, %v2921
    %v2923 = vpop.f32.mrf.mxu0
    %v2924 = vpop.f32.mrf.mxu0
    %v2925 = vadd.f32 %v2828, %v2924
    %v2926 = vpop.f32.mrf.mxu0
    %2927 = vmatprep.mubr.bf16.mxu0 %v2493
    %2928 = vmatmul.mubr.bf16.gmra.mxu0 %v2492
    %v2929 = vpop.f32.mrf.mxu0
    %v2930 = vadd.f32 %v2833, %v2929
    %v2931 = vpop.f32.mrf.mxu0
    %v2932 = vpop.f32.mrf.mxu0
    %v2933 = vadd.f32 %v2836, %v2932
    %v2934 = vpop.f32.mrf.mxu0
    %2935 = vmatprep.mubr.bf16.mxu0 %v2497
    %2936 = vmatmul.mubr.bf16.gmra.mxu0 %v2496
    %v2937 = vpop.f32.mrf.mxu0
    %v2938 = vadd.f32 %v2841, %v2937
    %v2939 = vpop.f32.mrf.mxu0
    %v2940 = vpop.f32.mrf.mxu0
    %v2941 = vadd.f32 %v2844, %v2940
    %v2942 = vpop.f32.mrf.mxu0
    %2943 = vmatprep.mubr.bf16.mxu0 %v2501
    %2944 = vmatmul.mubr.bf16.gmra.mxu0 %v2500
    %v2945 = vpop.f32.mrf.mxu0
    %v2946 = vadd.f32 %v2849, %v2945
    %v2947 = vpop.f32.mrf.mxu0
    %v2948 = vpop.f32.mrf.mxu0
    %v2949 = vadd.f32 %v2852, %v2948
    %v2950 = vpop.f32.mrf.mxu0
    %2951 = vdwg.mxu0
    %v2952 = vmul.f32 %v2890, %v2406
    %v2953 = vmul.f32 %v2893, %v2407
    %v2954 = vmul.f32 %v2898, %v2408
    %v2955 = vmul.f32 %v2901, %v2409
    %v2956 = vmul.f32 %v2906, %v2410
    %v2957 = vmul.f32 %v2909, %v2411
    %v2958 = vmul.f32 %v2914, %v2412
    %v2959 = vmul.f32 %v2917, %v2413
    %v2960 = vmul.f32 %v2922, %v2414
    %v2961 = vmul.f32 %v2925, %v2415
    %v2962 = vmul.f32 %v2930, %v2416
    %v2963 = vmul.f32 %v2933, %v2417
    %v2964 = vmul.f32 %v2938, %v2418
    %v2965 = vmul.f32 %v2941, %v2419
    %v2966 = vmul.f32 %v2946, %v2420
    %v2967 = vmul.f32 %v2949, %v2421
    %v2968 = vld [vmem:[%s6] sm:$0x1]
    %v2970 = vlaneseq
    %v2971 = vshrl.u32 %v2970, 7
    %v2972 = vsub.s32 0, %v2971
    %v2973 = vrot.slane %v2968, %v2972
    %v2975 = vadd.f32 %v2952, %v2973
    %v2976 = vadd.f32 %v2953, %v2973
    %v2977 = vadd.f32 %v2954, %v2973
    %v2978 = vadd.f32 %v2955, %v2973
    %v2979 = vadd.f32 %v2956, %v2973
    %v2980 = vadd.f32 %v2957, %v2973
    %v2981 = vadd.f32 %v2958, %v2973
    %v2982 = vadd.f32 %v2959, %v2973
    %v2983 = vadd.f32 %v2960, %v2973
    %v2984 = vadd.f32 %v2961, %v2973
    %v2985 = vadd.f32 %v2962, %v2973
    %v2986 = vadd.f32 %v2963, %v2973
    %v2987 = vadd.f32 %v2964, %v2973
    %v2988 = vadd.f32 %v2965, %v2973
    %v2989 = vadd.f32 %v2966, %v2973
    %v2990 = vadd.f32 %v2967, %v2973
    %vm2991 = vcmp.gt.f32.partialorder %v2975, 0.0
    %vm2992 = vcmp.gt.f32.partialorder %v2976, 0.0
    %vm2993 = vcmp.gt.f32.partialorder %v2977, 0.0
    %vm2994 = vcmp.gt.f32.partialorder %v2978, 0.0
    %vm2995 = vcmp.gt.f32.partialorder %v2979, 0.0
    %vm2996 = vcmp.gt.f32.partialorder %v2980, 0.0
    %vm2997 = vcmp.gt.f32.partialorder %v2981, 0.0
    %vm2998 = vcmp.gt.f32.partialorder %v2982, 0.0
    %vm2999 = vcmp.gt.f32.partialorder %v2983, 0.0
    %vm3000 = vcmp.gt.f32.partialorder %v2984, 0.0
    %vm3001 = vcmp.gt.f32.partialorder %v2985, 0.0
    %vm3002 = vcmp.gt.f32.partialorder %v2986, 0.0
    %vm3003 = vcmp.gt.f32.partialorder %v2987, 0.0
    %vm3004 = vcmp.gt.f32.partialorder %v2988, 0.0
    %vm3005 = vcmp.gt.f32.partialorder %v2989, 0.0
    %vm3006 = vcmp.gt.f32.partialorder %v2990, 0.0
    %v3007 = vmul.f32 %v2975, 1.442695
    %v3008 = vpow.pop %v3007
    %v3009 = vmul.f32 %v2976, 1.442695
    %v3010 = vpow.pop %v3009
    %v3011 = vmul.f32 %v2977, 1.442695
    %v3012 = vpow.pop %v3011
    %v3013 = vmul.f32 %v2978, 1.442695
    %v3014 = vpow.pop %v3013
    %v3015 = vmul.f32 %v2979, 1.442695
    %v3016 = vpow.pop %v3015
    %v3017 = vmul.f32 %v2980, 1.442695
    %v3018 = vpow.pop %v3017
    %v3019 = vmul.f32 %v2981, 1.442695
    %v3020 = vpow.pop %v3019
    %v3021 = vmul.f32 %v2982, 1.442695
    %v3022 = vpow.pop %v3021
    %v3023 = vmul.f32 %v2983, 1.442695
    %v3024 = vpow.pop %v3023
    %v3025 = vmul.f32 %v2984, 1.442695
    %v3026 = vpow.pop %v3025
    %v3027 = vmul.f32 %v2985, 1.442695
    %v3028 = vpow.pop %v3027
    %v3029 = vmul.f32 %v2986, 1.442695
    %v3030 = vpow.pop %v3029
    %v3031 = vmul.f32 %v2987, 1.442695
    %v3032 = vpow.pop %v3031
    %v3033 = vmul.f32 %v2988, 1.442695
    %v3034 = vpow.pop %v3033
    %v3035 = vmul.f32 %v2989, 1.442695
    %v3036 = vpow.pop %v3035
    %v3037 = vmul.f32 %v2990, 1.442695
    %v3038 = vpow.pop %v3037
    %v3039 = vsub.f32 %v3008, 1.0
    %v3040 = vsub.f32 %v3010, 1.0
    %v3041 = vsub.f32 %v3012, 1.0
    %v3042 = vsub.f32 %v3014, 1.0
    %v3043 = vsub.f32 %v3016, 1.0
    %v3044 = vsub.f32 %v3018, 1.0
    %v3045 = vsub.f32 %v3020, 1.0
    %v3046 = vsub.f32 %v3022, 1.0
    %v3047 = vsub.f32 %v3024, 1.0
    %v3048 = vsub.f32 %v3026, 1.0
    %v3049 = vsub.f32 %v3028, 1.0
    %v3050 = vsub.f32 %v3030, 1.0
    %v3051 = vsub.f32 %v3032, 1.0
    %v3052 = vsub.f32 %v3034, 1.0
    %v3053 = vsub.f32 %v3036, 1.0
    %v3054 = vsub.f32 %v3038, 1.0
    %v3055 = vsel %vm2991, %v2975, %v3039
    %v3056 = vsel %vm2992, %v2976, %v3040
    %v3057 = vsel %vm2993, %v2977, %v3041
    %v3058 = vsel %vm2994, %v2978, %v3042
    %v3059 = vsel %vm2995, %v2979, %v3043
    %v3060 = vsel %vm2996, %v2980, %v3044
    %v3061 = vsel %vm2997, %v2981, %v3045
    %v3062 = vsel %vm2998, %v2982, %v3046
    %v3063 = vsel %vm2999, %v2983, %v3047
    %v3064 = vsel %vm3000, %v2984, %v3048
    %v3065 = vsel %vm3001, %v2985, %v3049
    %v3066 = vsel %vm3002, %v2986, %v3050
    %v3067 = vsel %vm3003, %v2987, %v3051
    %v3068 = vsel %vm3004, %v2988, %v3052
    %v3069 = vsel %vm3005, %v2989, %v3053
    %v3070 = vsel %vm3006, %v2990, %v3054
    %v3071 = vpack.c.bf16 %v3056, %v3055
    %v3072 = vpack.c.bf16 %v3058, %v3057
    %v3073 = vpack.c.bf16 %v3060, %v3059
    %v3074 = vpack.c.bf16 %v3062, %v3061
    %v3075 = vpack.c.bf16 %v3064, %v3063
    %v3076 = vpack.c.bf16 %v3066, %v3065
    %v3077 = vpack.c.bf16 %v3068, %v3067
    %v3078 = vpack.c.bf16 %v3070, %v3069
    %v3079 = vld [vmem:[%s7] sm:$0xf]
    %v3080 = vld [vmem:[%s7 + $0x4] sm:$0xf]
    %v3081 = vld [vmem:[%s7 + $0x8] sm:$0xf]
    %v3082 = vld [vmem:[%s7 + $0xc] sm:$0xf]
    %v3083 = vld [vmem:[%s7 + $0x10] sm:$0xf]
    %v3084 = vld [vmem:[%s7 + $0x14] sm:$0xf]
    %v3085 = vld [vmem:[%s7 + $0x18] sm:$0xf]
    %v3086 = vld [vmem:[%s7 + $0x1c] sm:$0xf]
    %v3087 = vld [vmem:[%s7 + $0x20] sm:$0xf]
    %v3088 = vld [vmem:[%s7 + $0x24] sm:$0xf]
    %v3089 = vld [vmem:[%s7 + $0x28] sm:$0xf]
    %v3090 = vld [vmem:[%s7 + $0x2c] sm:$0xf]
    %v3091 = vld [vmem:[%s7 + $0x30] sm:$0xf]
    %v3092 = vld [vmem:[%s7 + $0x34] sm:$0xf]
    %v3093 = vld [vmem:[%s7 + $0x38] sm:$0xf]
    %v3094 = vld [vmem:[%s7 + $0x3c] sm:$0xf]
    %v3111 = vunpack.c.l.b16 %v3079
    %v3112 = vunpack.c.l.b16 %v3080
    %v3113 = vunpack.c.l.b16 %v3081
    %v3114 = vunpack.c.l.b16 %v3082
    %v3115 = vunpack.c.l.b16 %v3083
    %v3116 = vunpack.c.l.b16 %v3084
    %v3117 = vunpack.c.l.b16 %v3085
    %v3118 = vunpack.c.l.b16 %v3086
    %v3119 = vunpack.c.l.b16 %v3087
    %v3120 = vunpack.c.l.b16 %v3088
    %v3121 = vunpack.c.l.b16 %v3089
    %v3122 = vunpack.c.l.b16 %v3090
    %v3123 = vunpack.c.l.b16 %v3091
    %v3124 = vunpack.c.l.b16 %v3092
    %v3125 = vunpack.c.l.b16 %v3093
    %v3126 = vunpack.c.l.b16 %v3094
    %v3127 = vpack.c.b16 %v3112, %v3111
    %v3128 = vpack.c.b16 %v3114, %v3113
    %v3129 = vpack.c.b16 %v3116, %v3115
    %v3130 = vpack.c.b16 %v3118, %v3117
    %v3131 = vpack.c.b16 %v3120, %v3119
    %v3132 = vpack.c.b16 %v3122, %v3121
    %v3133 = vpack.c.b16 %v3124, %v3123
    %v3134 = vpack.c.b16 %v3126, %v3125
    %3143 = vmatprep.subr.bf16.mxu0 0
    %3144 = vmatpush1.bf16.msra.mxu0 %v3134
    %3145 = vmatprep.subr.bf16.mxu0 0
    %3146 = vmatpush1.bf16.msra.mxu0 %v3133
    %3147 = vmatprep.subr.bf16.mxu0 0
    %3148 = vmatpush1.bf16.msra.mxu0 %v3132
    %3149 = vmatprep.subr.bf16.mxu0 0
    %3150 = vmatpush1.bf16.msra.mxu0 %v3131
    %3151 = vmatprep.subr.bf16.mxu0 0
    %3152 = vmatpush1.bf16.msra.mxu0 %v3130
    %3153 = vmatprep.subr.bf16.mxu0 0
    %3154 = vmatpush1.bf16.msra.mxu0 %v3129
    %3155 = vmatprep.subr.bf16.mxu0 0
    %3156 = vmatpush1.bf16.msra.mxu0 %v3128
    %3157 = vmatprep.subr.bf16.mxu0 0
    %3158 = vmatpush1.bf16.msra.mxu0 %v3127
    %3159 = vmatprep.subr.bf16.mxu0 0
    %3160 = vmatpush2.bf16.msra.mxu0 0
    %3161 = vmatprep.subr.bf16.mxu0 0
    %3162 = vmatpush2.bf16.msra.mxu0 0
    %3163 = vmatprep.subr.bf16.mxu0 0
    %3164 = vmatpush2.bf16.msra.mxu0 0
    %3165 = vmatprep.subr.bf16.mxu0 0
    %3166 = vmatpush2.bf16.msra.mxu0 0
    %3167 = vmatprep.subr.bf16.mxu0 0
    %3168 = vmatpush2.bf16.msra.mxu0 0
    %3169 = vmatprep.subr.bf16.mxu0 0
    %3170 = vmatpush2.bf16.msra.mxu0 0
    %3171 = vmatprep.subr.bf16.mxu0 0
    %3172 = vmatpush2.bf16.msra.mxu0 0
    %3173 = vmatprep.subr.bf16.mxu0 0
    %3174 = vmatpush2.bf16.msra.mxu0 0
    %3175 = vmatprep.mubr.bf16.mxu0 0
    %3176 = vmatmul.mubr.bf16.gmra.mxu0 %v3071
    %v3177 = vpop.f32.mrf.mxu0
    %v3178 = vadd.f32 0.0, %v3177
    %v3179 = vpop.f32.mrf.mxu0
    %v3180 = vpop.f32.mrf.mxu0
    %v3181 = vadd.f32 0.0, %v3180
    %v3182 = vpop.f32.mrf.mxu0
    %3183 = vmatprep.mubr.bf16.mxu0 0
    %3184 = vmatmul.mubr.bf16.gmra.mxu0 %v3072
    %v3185 = vpop.f32.mrf.mxu0
    %v3186 = vadd.f32 0.0, %v3185
    %v3187 = vpop.f32.mrf.mxu0
    %v3188 = vpop.f32.mrf.mxu0
    %v3189 = vadd.f32 0.0, %v3188
    %v3190 = vpop.f32.mrf.mxu0
    %3191 = vmatprep.mubr.bf16.mxu0 0
    %3192 = vmatmul.mubr.bf16.gmra.mxu0 %v3073
    %v3193 = vpop.f32.mrf.mxu0
    %v3194 = vadd.f32 0.0, %v3193
    %v3195 = vpop.f32.mrf.mxu0
    %v3196 = vpop.f32.mrf.mxu0
    %v3197 = vadd.f32 0.0, %v3196
    %v3198 = vpop.f32.mrf.mxu0
    %3199 = vmatprep.mubr.bf16.mxu0 0
    %3200 = vmatmul.mubr.bf16.gmra.mxu0 %v3074
    %v3201 = vpop.f32.mrf.mxu0
    %v3202 = vadd.f32 0.0, %v3201
    %v3203 = vpop.f32.mrf.mxu0
    %v3204 = vpop.f32.mrf.mxu0
    %v3205 = vadd.f32 0.0, %v3204
    %v3206 = vpop.f32.mrf.mxu0
    %3207 = vmatprep.mubr.bf16.mxu0 0
    %3208 = vmatmul.mubr.bf16.gmra.mxu0 %v3075
    %v3209 = vpop.f32.mrf.mxu0
    %v3210 = vadd.f32 0.0, %v3209
    %v3211 = vpop.f32.mrf.mxu0
    %v3212 = vpop.f32.mrf.mxu0
    %v3213 = vadd.f32 0.0, %v3212
    %v3214 = vpop.f32.mrf.mxu0
    %3215 = vmatprep.mubr.bf16.mxu0 0
    %3216 = vmatmul.mubr.bf16.gmra.mxu0 %v3076
    %v3217 = vpop.f32.mrf.mxu0
    %v3218 = vadd.f32 0.0, %v3217
    %v3219 = vpop.f32.mrf.mxu0
    %v3220 = vpop.f32.mrf.mxu0
    %v3221 = vadd.f32 0.0, %v3220
    %v3222 = vpop.f32.mrf.mxu0
    %3223 = vmatprep.mubr.bf16.mxu0 0
    %3224 = vmatmul.mubr.bf16.gmra.mxu0 %v3077
    %v3225 = vpop.f32.mrf.mxu0
    %v3226 = vadd.f32 0.0, %v3225
    %v3227 = vpop.f32.mrf.mxu0
    %v3228 = vpop.f32.mrf.mxu0
    %v3229 = vadd.f32 0.0, %v3228
    %v3230 = vpop.f32.mrf.mxu0
    %3231 = vmatprep.mubr.bf16.mxu0 0
    %3232 = vmatmul.mubr.bf16.gmra.mxu0 %v3078
    %v3233 = vpop.f32.mrf.mxu0
    %v3234 = vadd.f32 0.0, %v3233
    %v3235 = vpop.f32.mrf.mxu0
    %v3236 = vpop.f32.mrf.mxu0
    %v3237 = vadd.f32 0.0, %v3236
    %v3238 = vpop.f32.mrf.mxu0
    %3239 = vdwg.mxu0
    %v3240 = vld [vmem:[%s8] sm:$0xf]
    %3241 = vmatprep.subr.mxu0 0.0
    %3242 = vmatpush1.xpose.msra.mxu0 %v3237
    %3243 = vmatprep.subr.mxu0 0.0
    %3244 = vmatpush1.xpose.msra.mxu0 %v3234
    %3245 = vmatprep.subr.mxu0 0.0
    %3246 = vmatpush1.xpose.msra.mxu0 %v3229
    %3247 = vmatprep.subr.mxu0 0.0
    %3248 = vmatpush1.xpose.msra.mxu0 %v3226
    %3249 = vmatprep.subr.mxu0 0.0
    %3250 = vmatpush1.xpose.msra.mxu0 %v3221
    %3251 = vmatprep.subr.mxu0 0.0
    %3252 = vmatpush1.xpose.msra.mxu0 %v3218
    %3253 = vmatprep.subr.mxu0 0.0
    %3254 = vmatpush1.xpose.msra.mxu0 %v3213
    %3255 = vmatprep.subr.mxu0 0.0
    %3256 = vmatpush1.xpose.msra.mxu0 %v3210
    %3257 = vmatprep.subr.mxu0 0.0
    %3258 = vmatpush1.xpose.msra.mxu0 %v3205
    %3259 = vmatprep.subr.mxu0 0.0
    %3260 = vmatpush1.xpose.msra.mxu0 %v3202
    %3261 = vmatprep.subr.mxu0 0.0
    %3262 = vmatpush1.xpose.msra.mxu0 %v3197
    %3263 = vmatprep.subr.mxu0 0.0
    %3264 = vmatpush1.xpose.msra.mxu0 %v3194
    %3265 = vmatprep.subr.mxu0 0.0
    %3266 = vmatpush1.xpose.msra.mxu0 %v3189
    %3267 = vmatprep.subr.mxu0 0.0
    %3268 = vmatpush1.xpose.msra.mxu0 %v3186
    %3269 = vmatprep.subr.mxu0 0.0
    %3270 = vmatpush1.xpose.msra.mxu0 %v3181
    %3271 = vmatprep.subr.mxu0 0.0
    %3272 = vmatpush1.xpose.msra.mxu0 %v3178
    %3273 = vmatprep.subr.mxu0 0.0
    %3274 = vmatpush2.xpose.msra.mxu0 0.0
    %3275 = vmatprep.subr.mxu0 0.0
    %3276 = vmatpush2.xpose.msra.mxu0 0.0
    %3277 = vmatprep.subr.mxu0 0.0
    %3278 = vmatpush2.xpose.msra.mxu0 0.0
    %3279 = vmatprep.subr.mxu0 0.0
    %3280 = vmatpush2.xpose.msra.mxu0 0.0
    %3281 = vmatprep.subr.mxu0 0.0
    %3282 = vmatpush2.xpose.msra.mxu0 0.0
    %3283 = vmatprep.subr.mxu0 0.0
    %3284 = vmatpush2.xpose.msra.mxu0 0.0
    %3285 = vmatprep.subr.mxu0 0.0
    %3286 = vmatpush2.xpose.msra.mxu0 0.0
    %3287 = vmatprep.subr.mxu0 0.0
    %3288 = vmatpush2.xpose.msra.mxu0 0.0
    %3289 = vmatprep.subr.mxu0 0.0
    %3290 = vmatpush2.xpose.msra.mxu0 0.0
    %3291 = vmatprep.subr.mxu0 0.0
    %3292 = vmatpush2.xpose.msra.mxu0 0.0
    %3293 = vmatprep.subr.mxu0 0.0
    %3294 = vmatpush2.xpose.msra.mxu0 0.0
    %3295 = vmatprep.subr.mxu0 0.0
    %3296 = vmatpush2.xpose.msra.mxu0 0.0
    %3297 = vmatprep.subr.mxu0 0.0
    %3298 = vmatpush2.xpose.msra.mxu0 0.0
    %3299 = vmatprep.subr.mxu0 0.0
    %3300 = vmatpush2.xpose.msra.mxu0 0.0
    %3301 = vmatprep.subr.mxu0 0.0
    %3302 = vmatpush2.xpose.msra.mxu0 0.0
    %3303 = vmatprep.subr.mxu0 0.0
    %3304 = vmatpush2.xpose.msra.mxu0 0.0
    %3305 = vmatprep.mubr.f32.mxu0 0.0
    %3306 = vmatmul.mubr.f32.gmra.mxu0 %v3240
    %v3307 = vpop.f32.mrf.mxu0
    %v3308 = vadd.f32 0.0, %v3307
    %v3309 = vpop.f32.mrf.mxu0
    %3310 = vdwg.mxu0
    %v3311 = vld [vmem:[%s9] sm:$0xff]
    %v3312 = vld [vmem:[%s9 + $0x8] sm:$0xff]
    %v3313 = vld [vmem:[%s9 + $0x10] sm:$0xff]
    %v3314 = vld [vmem:[%s9 + $0x18] sm:$0xff]
    %v3315 = vld [vmem:[%s9 + $0x20] sm:$0xff]
    %v3316 = vld [vmem:[%s9 + $0x28] sm:$0xff]
    %v3317 = vld [vmem:[%s9 + $0x30] sm:$0xff]
    %v3318 = vld [vmem:[%s9 + $0x38] sm:$0xff]
    %v3319 = vld [vmem:[%s9 + $0x40] sm:$0xff]
    %v3320 = vld [vmem:[%s9 + $0x48] sm:$0xff]
    %v3321 = vld [vmem:[%s9 + $0x50] sm:$0xff]
    %v3322 = vld [vmem:[%s9 + $0x58] sm:$0xff]
    %v3323 = vld [vmem:[%s9 + $0x60] sm:$0xff]
    %v3324 = vld [vmem:[%s9 + $0x68] sm:$0xff]
    %v3325 = vld [vmem:[%s9 + $0x70] sm:$0xff]
    %v3326 = vld [vmem:[%s9 + $0x78] sm:$0xff]
    %3327 = vmatprep.subr.mxu0 0.0
    %3328 = vmatpush1.msra.mxu0 %v3326
    %3329 = vmatprep.subr.mxu0 0.0
    %3330 = vmatpush1.msra.mxu0 %v3325
    %3331 = vmatprep.subr.mxu0 0.0
    %3332 = vmatpush1.msra.mxu0 %v3324
    %3333 = vmatprep.subr.mxu0 0.0
    %3334 = vmatpush1.msra.mxu0 %v3323
    %3335 = vmatprep.subr.mxu0 0.0
    %3336 = vmatpush1.msra.mxu0 %v3322
    %3337 = vmatprep.subr.mxu0 0.0
    %3338 = vmatpush1.msra.mxu0 %v3321
    %3339 = vmatprep.subr.mxu0 0.0
    %3340 = vmatpush1.msra.mxu0 %v3320
    %3341 = vmatprep.subr.mxu0 0.0
    %3342 = vmatpush1.msra.mxu0 %v3319
    %3343 = vmatprep.subr.mxu0 0.0
    %3344 = vmatpush1.msra.mxu0 %v3318
    %3345 = vmatprep.subr.mxu0 0.0
    %3346 = vmatpush1.msra.mxu0 %v3317
    %3347 = vmatprep.subr.mxu0 0.0
    %3348 = vmatpush1.msra.mxu0 %v3316
    %3349 = vmatprep.subr.mxu0 0.0
    %3350 = vmatpush1.msra.mxu0 %v3315
    %3351 = vmatprep.subr.mxu0 0.0
    %3352 = vmatpush1.msra.mxu0 %v3314
    %3353 = vmatprep.subr.mxu0 0.0
    %3354 = vmatpush1.msra.mxu0 %v3313
    %3355 = vmatprep.subr.mxu0 0.0
    %3356 = vmatpush1.msra.mxu0 %v3312
    %3357 = vmatprep.subr.mxu0 0.0
    %3358 = vmatpush1.msra.mxu0 %v3311
    %3359 = vmatprep.subr.mxu0 0.0
    %3360 = vmatpush2.msra.mxu0 0.0
    %3361 = vmatprep.subr.mxu0 0.0
    %3362 = vmatpush2.msra.mxu0 0.0
    %3363 = vmatprep.subr.mxu0 0.0
    %3364 = vmatpush2.msra.mxu0 0.0
    %3365 = vmatprep.subr.mxu0 0.0
    %3366 = vmatpush2.msra.mxu0 0.0
    %3367 = vmatprep.subr.mxu0 0.0
    %3368 = vmatpush2.msra.mxu0 0.0
    %3369 = vmatprep.subr.mxu0 0.0
    %3370 = vmatpush2.msra.mxu0 0.0
    %3371 = vmatprep.subr.mxu0 0.0
    %3372 = vmatpush2.msra.mxu0 0.0
    %3373 = vmatprep.subr.mxu0 0.0
    %3374 = vmatpush2.msra.mxu0 0.0
    %3375 = vmatprep.subr.mxu0 0.0
    %3376 = vmatpush2.msra.mxu0 0.0
    %3377 = vmatprep.subr.mxu0 0.0
    %3378 = vmatpush2.msra.mxu0 0.0
    %3379 = vmatprep.subr.mxu0 0.0
    %3380 = vmatpush2.msra.mxu0 0.0
    %3381 = vmatprep.subr.mxu0 0.0
    %3382 = vmatpush2.msra.mxu0 0.0
    %3383 = vmatprep.subr.mxu0 0.0
    %3384 = vmatpush2.msra.mxu0 0.0
    %3385 = vmatprep.subr.mxu0 0.0
    %3386 = vmatpush2.msra.mxu0 0.0
    %3387 = vmatprep.subr.mxu0 0.0
    %3388 = vmatpush2.msra.mxu0 0.0
    %3389 = vmatprep.subr.mxu0 0.0
    %3390 = vmatpush2.msra.mxu0 0.0
    %3391 = vmatprep.mubr.f32.mxu0 0.0
    %3392 = vmatmul.mubr.f32.gmra.mxu0 %v3178
    %v3393 = vpop.f32.mrf.mxu0
    %v3394 = vadd.f32 0.0, %v3393
    %v3395 = vpop.f32.mrf.mxu0
    %3396 = vmatprep.mubr.f32.mxu0 0.0
    %3397 = vmatmul.mubr.f32.gmra.mxu0 %v3181
    %v3398 = vpop.f32.mrf.mxu0
    %v3399 = vadd.f32 0.0, %v3398
    %v3400 = vpop.f32.mrf.mxu0
    %3401 = vmatprep.mubr.f32.mxu0 0.0
    %3402 = vmatmul.mubr.f32.gmra.mxu0 %v3186
    %v3403 = vpop.f32.mrf.mxu0
    %v3404 = vadd.f32 0.0, %v3403
    %v3405 = vpop.f32.mrf.mxu0
    %3406 = vmatprep.mubr.f32.mxu0 0.0
    %3407 = vmatmul.mubr.f32.gmra.mxu0 %v3189
    %v3408 = vpop.f32.mrf.mxu0
    %v3409 = vadd.f32 0.0, %v3408
    %v3410 = vpop.f32.mrf.mxu0
    %3411 = vmatprep.mubr.f32.mxu0 0.0
    %3412 = vmatmul.mubr.f32.gmra.mxu0 %v3194
    %v3413 = vpop.f32.mrf.mxu0
    %v3414 = vadd.f32 0.0, %v3413
    %v3415 = vpop.f32.mrf.mxu0
    %3416 = vmatprep.mubr.f32.mxu0 0.0
    %3417 = vmatmul.mubr.f32.gmra.mxu0 %v3197
    %v3418 = vpop.f32.mrf.mxu0
    %v3419 = vadd.f32 0.0, %v3418
    %v3420 = vpop.f32.mrf.mxu0
    %3421 = vmatprep.mubr.f32.mxu0 0.0
    %3422 = vmatmul.mubr.f32.gmra.mxu0 %v3202
    %v3423 = vpop.f32.mrf.mxu0
    %v3424 = vadd.f32 0.0, %v3423
    %v3425 = vpop.f32.mrf.mxu0
    %3426 = vmatprep.mubr.f32.mxu0 0.0
    %3427 = vmatmul.mubr.f32.gmra.mxu0 %v3205
    %v3428 = vpop.f32.mrf.mxu0
    %v3429 = vadd.f32 0.0, %v3428
    %v3430 = vpop.f32.mrf.mxu0
    %3431 = vmatprep.mubr.f32.mxu0 0.0
    %3432 = vmatmul.mubr.f32.gmra.mxu0 %v3210
    %v3433 = vpop.f32.mrf.mxu0
    %v3434 = vadd.f32 0.0, %v3433
    %v3435 = vpop.f32.mrf.mxu0
    %3436 = vmatprep.mubr.f32.mxu0 0.0
    %3437 = vmatmul.mubr.f32.gmra.mxu0 %v3213
    %v3438 = vpop.f32.mrf.mxu0
    %v3439 = vadd.f32 0.0, %v3438
    %v3440 = vpop.f32.mrf.mxu0
    %3441 = vmatprep.mubr.f32.mxu0 0.0
    %3442 = vmatmul.mubr.f32.gmra.mxu0 %v3218
    %v3443 = vpop.f32.mrf.mxu0
    %v3444 = vadd.f32 0.0, %v3443
    %v3445 = vpop.f32.mrf.mxu0
    %3446 = vmatprep.mubr.f32.mxu0 0.0
    %3447 = vmatmul.mubr.f32.gmra.mxu0 %v3221
    %v3448 = vpop.f32.mrf.mxu0
    %v3449 = vadd.f32 0.0, %v3448
    %v3450 = vpop.f32.mrf.mxu0
    %3451 = vmatprep.mubr.f32.mxu0 0.0
    %3452 = vmatmul.mubr.f32.gmra.mxu0 %v3226
    %v3453 = vpop.f32.mrf.mxu0
    %v3454 = vadd.f32 0.0, %v3453
    %v3455 = vpop.f32.mrf.mxu0
    %3456 = vmatprep.mubr.f32.mxu0 0.0
    %3457 = vmatmul.mubr.f32.gmra.mxu0 %v3229
    %v3458 = vpop.f32.mrf.mxu0
    %v3459 = vadd.f32 0.0, %v3458
    %v3460 = vpop.f32.mrf.mxu0
    %3461 = vmatprep.mubr.f32.mxu0 0.0
    %3462 = vmatmul.mubr.f32.gmra.mxu0 %v3234
    %v3463 = vpop.f32.mrf.mxu0
    %v3464 = vadd.f32 0.0, %v3463
    %v3465 = vpop.f32.mrf.mxu0
    %3466 = vmatprep.mubr.f32.mxu0 0.0
    %3467 = vmatmul.mubr.f32.gmra.mxu0 %v3237
    %v3468 = vpop.f32.mrf.mxu0
    %v3469 = vadd.f32 0.0, %v3468
    %v3470 = vpop.f32.mrf.mxu0
    %3471 = vdwg.mxu0
    %3473 = vset.pattern.permute.xlu0 0
    %3474 = vperm.xlu0 %3473, %v3394
    %v3475 = vpop.permute.xlu0 %3474
    %3478 = vset.pattern.permute.xlu0 0
    %3479 = vperm.xlu0 %3478, %v3399
    %v3480 = vpop.permute.xlu0 %3479
    %3483 = vset.pattern.permute.xlu0 0
    %3484 = vperm.xlu0 %3483, %v3404
    %v3485 = vpop.permute.xlu0 %3484
    %3488 = vset.pattern.permute.xlu0 0
    %3489 = vperm.xlu0 %3488, %v3409
    %v3490 = vpop.permute.xlu0 %3489
    %3493 = vset.pattern.permute.xlu0 0
    %3494 = vperm.xlu0 %3493, %v3414
    %v3495 = vpop.permute.xlu0 %3494
    %3498 = vset.pattern.permute.xlu0 0
    %3499 = vperm.xlu0 %3498, %v3419
    %v3500 = vpop.permute.xlu0 %3499
    %3503 = vset.pattern.permute.xlu0 0
    %3504 = vperm.xlu0 %3503, %v3424
    %v3505 = vpop.permute.xlu0 %3504
    %3508 = vset.pattern.permute.xlu0 0
    %3509 = vperm.xlu0 %3508, %v3429
    %v3510 = vpop.permute.xlu0 %3509
    %3513 = vset.pattern.permute.xlu0 0
    %3514 = vperm.xlu0 %3513, %v3434
    %v3515 = vpop.permute.xlu0 %3514
    %3518 = vset.pattern.permute.xlu0 0
    %3519 = vperm.xlu0 %3518, %v3439
    %v3520 = vpop.permute.xlu0 %3519
    %3523 = vset.pattern.permute.xlu0 0
    %3524 = vperm.xlu0 %3523, %v3444
    %v3525 = vpop.permute.xlu0 %3524
    %3528 = vset.pattern.permute.xlu0 0
    %3529 = vperm.xlu0 %3528, %v3449
    %v3530 = vpop.permute.xlu0 %3529
    %3533 = vset.pattern.permute.xlu0 0
    %3534 = vperm.xlu0 %3533, %v3454
    %v3535 = vpop.permute.xlu0 %3534
    %3538 = vset.pattern.permute.xlu0 0
    %3539 = vperm.xlu0 %3538, %v3459
    %v3540 = vpop.permute.xlu0 %3539
    %3543 = vset.pattern.permute.xlu0 0
    %3544 = vperm.xlu0 %3543, %v3464
    %v3545 = vpop.permute.xlu0 %3544
    %3548 = vset.pattern.permute.xlu0 0
    %3549 = vperm.xlu0 %3548, %v3469
    %v3550 = vpop.permute.xlu0 %3549
    %v3552 = vlaneseq
    %v3553 = vshrl.u32 %v3552, 7
    %v3554 = vsub.s32 0, %v3553
    %v3555 = vrot.slane %v3308, %v3554
    %v3556 = vadd.f32 %v3475, %v3555
    %v3557 = vadd.f32 %v3480, %v3555
    %v3558 = vadd.f32 %v3485, %v3555
    %v3559 = vadd.f32 %v3490, %v3555
    %v3560 = vadd.f32 %v3495, %v3555
    %v3561 = vadd.f32 %v3500, %v3555
    %v3562 = vadd.f32 %v3505, %v3555
    %v3563 = vadd.f32 %v3510, %v3555
    %v3564 = vadd.f32 %v3515, %v3555
    %v3565 = vadd.f32 %v3520, %v3555
    %v3566 = vadd.f32 %v3525, %v3555
    %v3567 = vadd.f32 %v3530, %v3555
    %v3568 = vadd.f32 %v3535, %v3555
    %v3569 = vadd.f32 %v3540, %v3555
    %v3570 = vadd.f32 %v3545, %v3555
    %v3571 = vadd.f32 %v3550, %v3555
    %3572 = vst [vmem:[#allocation2] sm:$0xff] %v3556
    %3573 = vst [vmem:[#allocation2 + $0x20] sm:$0xff] %v3557
    %3574 = vst [vmem:[#allocation2 + $0x40] sm:$0xff] %v3558
    %3575 = vst [vmem:[#allocation2 + $0x60] sm:$0xff] %v3559
    %3576 = vst [vmem:[#allocation2 + $0x80] sm:$0xff] %v3560
    %3577 = vst [vmem:[#allocation2 + $0xa0] sm:$0xff] %v3561
    %3578 = vst [vmem:[#allocation2 + $0xc0] sm:$0xff] %v3562
    %3579 = vst [vmem:[#allocation2 + $0xe0] sm:$0xff] %v3563
    %3580 = vst [vmem:[#allocation2 + $0x100] sm:$0xff] %v3564
    %3581 = vst [vmem:[#allocation2 + $0x120] sm:$0xff] %v3565
    %3582 = vst [vmem:[#allocation2 + $0x140] sm:$0xff] %v3566
    %3583 = vst [vmem:[#allocation2 + $0x160] sm:$0xff] %v3567
    %3584 = vst [vmem:[#allocation2 + $0x180] sm:$0xff] %v3568
    %3585 = vst [vmem:[#allocation2 + $0x1a0] sm:$0xff] %v3569
    %3586 = vst [vmem:[#allocation2 + $0x1c0] sm:$0xff] %v3570
    %3587 = vst [vmem:[#allocation2 + $0x1e0] sm:$0xff] %v3571
    %v3588 = vmul.f32 %v3178, %v573
    %v3589 = vmul.f32 %v3181, %v573
    %v3590 = vmul.f32 %v3186, %v573
    %v3591 = vmul.f32 %v3189, %v573
    %v3592 = vmul.f32 %v3194, %v573
    %v3593 = vmul.f32 %v3197, %v573
    %v3594 = vmul.f32 %v3202, %v573
    %v3595 = vmul.f32 %v3205, %v573
    %v3596 = vmul.f32 %v3210, %v573
    %v3597 = vmul.f32 %v3213, %v573
    %v3598 = vmul.f32 %v3218, %v573
    %v3599 = vmul.f32 %v3221, %v573
    %v3600 = vmul.f32 %v3226, %v573
    %v3601 = vmul.f32 %v3229, %v573
    %v3602 = vmul.f32 %v3234, %v573
    %v3603 = vmul.f32 %v3237, %v573
    %v3604 = vpack.c.bf16 %v3589, %v3588
    %v3605 = vpack.c.bf16 %v3591, %v3590
    %v3606 = vpack.c.bf16 %v3593, %v3592
    %v3607 = vpack.c.bf16 %v3595, %v3594
    %v3608 = vpack.c.bf16 %v3597, %v3596
    %v3609 = vpack.c.bf16 %v3599, %v3598
    %v3610 = vpack.c.bf16 %v3601, %v3600
    %v3611 = vpack.c.bf16 %v3603, %v3602
    %v3620 = vunpack.c.l.b16 %v3604
    %v3621 = vunpack.c.h.b16 %v3604
    %v3622 = vunpack.c.l.b16 %v3605
    %v3623 = vunpack.c.h.b16 %v3605
    %v3624 = vunpack.c.l.b16 %v3606
    %v3625 = vunpack.c.h.b16 %v3606
    %v3626 = vunpack.c.l.b16 %v3607
    %v3627 = vunpack.c.h.b16 %v3607
    %v3628 = vunpack.c.l.b16 %v3608
    %v3629 = vunpack.c.h.b16 %v3608
    %v3630 = vunpack.c.l.b16 %v3609
    %v3631 = vunpack.c.h.b16 %v3609
    %v3632 = vunpack.c.l.b16 %v3610
    %v3633 = vunpack.c.h.b16 %v3610
    %v3634 = vunpack.c.l.b16 %v3611
    %v3635 = vunpack.c.h.b16 %v3611
    %v3636 = vpack.c.b16 %v3620, %v3620
    %v3637 = vpack.c.b16 %v3621, %v3621
    %v3638 = vpack.c.b16 %v3622, %v3622
    %v3639 = vpack.c.b16 %v3623, %v3623
    %v3640 = vpack.c.b16 %v3624, %v3624
    %v3641 = vpack.c.b16 %v3625, %v3625
    %v3642 = vpack.c.b16 %v3626, %v3626
    %v3643 = vpack.c.b16 %v3627, %v3627
    %v3644 = vpack.c.b16 %v3628, %v3628
    %v3645 = vpack.c.b16 %v3629, %v3629
    %v3646 = vpack.c.b16 %v3630, %v3630
    %v3647 = vpack.c.b16 %v3631, %v3631
    %v3648 = vpack.c.b16 %v3632, %v3632
    %v3649 = vpack.c.b16 %v3633, %v3633
    %v3650 = vpack.c.b16 %v3634, %v3634
    %v3651 = vpack.c.b16 %v3635, %v3635
    %3668 = vst [vmem:[#allocation3] sm:$0xf] %v3636
    %3669 = vst [vmem:[#allocation3 + $0x4] sm:$0xf] %v3637
    %3670 = vst [vmem:[#allocation3 + $0x8] sm:$0xf] %v3638
    %3671 = vst [vmem:[#allocation3 + $0xc] sm:$0xf] %v3639
    %3672 = vst [vmem:[#allocation3 + $0x10] sm:$0xf] %v3640
    %3673 = vst [vmem:[#allocation3 + $0x14] sm:$0xf] %v3641
    %3674 = vst [vmem:[#allocation3 + $0x18] sm:$0xf] %v3642
    %3675 = vst [vmem:[#allocation3 + $0x1c] sm:$0xf] %v3643
    %3676 = vst [vmem:[#allocation3 + $0x20] sm:$0xf] %v3644
    %3677 = vst [vmem:[#allocation3 + $0x24] sm:$0xf] %v3645
    %3678 = vst [vmem:[#allocation3 + $0x28] sm:$0xf] %v3646
    %3679 = vst [vmem:[#allocation3 + $0x2c] sm:$0xf] %v3647
    %3680 = vst [vmem:[#allocation3 + $0x30] sm:$0xf] %v3648
    %3681 = vst [vmem:[#allocation3 + $0x34] sm:$0xf] %v3649
    %3682 = vst [vmem:[#allocation3 + $0x38] sm:$0xf] %v3650
    %3683 = vst [vmem:[#allocation3 + $0x3c] sm:$0xf] %v3651
    %3684 = vset.pattern.permute.xlu0 1
    %3685 = vperm.xlu0 %3684, %v3394
    %v3686 = vpop.permute.xlu0 %3685
    %3688 = vset.pattern.permute.xlu0 1
    %3689 = vperm.xlu0 %3688, %v3399
    %v3690 = vpop.permute.xlu0 %3689
    %3692 = vset.pattern.permute.xlu0 1
    %3693 = vperm.xlu0 %3692, %v3404
    %v3694 = vpop.permute.xlu0 %3693
    %3696 = vset.pattern.permute.xlu0 1
    %3697 = vperm.xlu0 %3696, %v3409
    %v3698 = vpop.permute.xlu0 %3697
    %3700 = vset.pattern.permute.xlu0 1
    %3701 = vperm.xlu0 %3700, %v3414
    %v3702 = vpop.permute.xlu0 %3701
    %3704 = vset.pattern.permute.xlu0 1
    %3705 = vperm.xlu0 %3704, %v3419
    %v3706 = vpop.permute.xlu0 %3705
    %3708 = vset.pattern.permute.xlu0 1
    %3709 = vperm.xlu0 %3708, %v3424
    %v3710 = vpop.permute.xlu0 %3709
    %3712 = vset.pattern.permute.xlu0 1
    %3713 = vperm.xlu0 %3712, %v3429
    %v3714 = vpop.permute.xlu0 %3713
    %3716 = vset.pattern.permute.xlu0 1
    %3717 = vperm.xlu0 %3716, %v3434
    %v3718 = vpop.permute.xlu0 %3717
    %3720 = vset.pattern.permute.xlu0 1
    %3721 = vperm.xlu0 %3720, %v3439
    %v3722 = vpop.permute.xlu0 %3721
    %3724 = vset.pattern.permute.xlu0 1
    %3725 = vperm.xlu0 %3724, %v3444
    %v3726 = vpop.permute.xlu0 %3725
    %3728 = vset.pattern.permute.xlu0 1
    %3729 = vperm.xlu0 %3728, %v3449
    %v3730 = vpop.permute.xlu0 %3729
    %3732 = vset.pattern.permute.xlu0 1
    %3733 = vperm.xlu0 %3732, %v3454
    %v3734 = vpop.permute.xlu0 %3733
    %3736 = vset.pattern.permute.xlu0 1
    %3737 = vperm.xlu0 %3736, %v3459
    %v3738 = vpop.permute.xlu0 %3737
    %3740 = vset.pattern.permute.xlu0 1
    %3741 = vperm.xlu0 %3740, %v3464
    %v3742 = vpop.permute.xlu0 %3741
    %3744 = vset.pattern.permute.xlu0 1
    %3745 = vperm.xlu0 %3744, %v3469
    %v3746 = vpop.permute.xlu0 %3745
    %v3748 = vlaneseq
    %v3749 = vshrl.u32 %v3748, 7
    %v3750 = vsub.s32 1, %v3749
    %v3751 = vrot.slane %v3308, %v3750
    %v3752 = vadd.f32 %v3686, %v3751
    %v3753 = vadd.f32 %v3690, %v3751
    %v3754 = vadd.f32 %v3694, %v3751
    %v3755 = vadd.f32 %v3698, %v3751
    %v3756 = vadd.f32 %v3702, %v3751
    %v3757 = vadd.f32 %v3706, %v3751
    %v3758 = vadd.f32 %v3710, %v3751
    %v3759 = vadd.f32 %v3714, %v3751
    %v3760 = vadd.f32 %v3718, %v3751
    %v3761 = vadd.f32 %v3722, %v3751
    %v3762 = vadd.f32 %v3726, %v3751
    %v3763 = vadd.f32 %v3730, %v3751
    %v3764 = vadd.f32 %v3734, %v3751
    %v3765 = vadd.f32 %v3738, %v3751
    %v3766 = vadd.f32 %v3742, %v3751
    %v3767 = vadd.f32 %v3746, %v3751
    %3768 = vst [vmem:[#allocation2 + $0x8] sm:$0xff] %v3752
    %3769 = vst [vmem:[#allocation2 + $0x28] sm:$0xff] %v3753
    %3770 = vst [vmem:[#allocation2 + $0x48] sm:$0xff] %v3754
    %3771 = vst [vmem:[#allocation2 + $0x68] sm:$0xff] %v3755
    %3772 = vst [vmem:[#allocation2 + $0x88] sm:$0xff] %v3756
    %3773 = vst [vmem:[#allocation2 + $0xa8] sm:$0xff] %v3757
    %3774 = vst [vmem:[#allocation2 + $0xc8] sm:$0xff] %v3758
    %3775 = vst [vmem:[#allocation2 + $0xe8] sm:$0xff] %v3759
    %3776 = vst [vmem:[#allocation2 + $0x108] sm:$0xff] %v3760
    %3777 = vst [vmem:[#allocation2 + $0x128] sm:$0xff] %v3761
    %3778 = vst [vmem:[#allocation2 + $0x148] sm:$0xff] %v3762
    %3779 = vst [vmem:[#allocation2 + $0x168] sm:$0xff] %v3763
    %3780 = vst [vmem:[#allocation2 + $0x188] sm:$0xff] %v3764
    %3781 = vst [vmem:[#allocation2 + $0x1a8] sm:$0xff] %v3765
    %3782 = vst [vmem:[#allocation2 + $0x1c8] sm:$0xff] %v3766
    %3783 = vst [vmem:[#allocation2 + $0x1e8] sm:$0xff] %v3767
    %v3784 = vmul.f32 %v3178, %v773
    %v3785 = vmul.f32 %v3181, %v773
    %v3786 = vmul.f32 %v3186, %v773
    %v3787 = vmul.f32 %v3189, %v773
    %v3788 = vmul.f32 %v3194, %v773
    %v3789 = vmul.f32 %v3197, %v773
    %v3790 = vmul.f32 %v3202, %v773
    %v3791 = vmul.f32 %v3205, %v773
    %v3792 = vmul.f32 %v3210, %v773
    %v3793 = vmul.f32 %v3213, %v773
    %v3794 = vmul.f32 %v3218, %v773
    %v3795 = vmul.f32 %v3221, %v773
    %v3796 = vmul.f32 %v3226, %v773
    %v3797 = vmul.f32 %v3229, %v773
    %v3798 = vmul.f32 %v3234, %v773
    %v3799 = vmul.f32 %v3237, %v773
    %v3800 = vpack.c.bf16 %v3785, %v3784
    %v3801 = vpack.c.bf16 %v3787, %v3786
    %v3802 = vpack.c.bf16 %v3789, %v3788
    %v3803 = vpack.c.bf16 %v3791, %v3790
    %v3804 = vpack.c.bf16 %v3793, %v3792
    %v3805 = vpack.c.bf16 %v3795, %v3794
    %v3806 = vpack.c.bf16 %v3797, %v3796
    %v3807 = vpack.c.bf16 %v3799, %v3798
    %v3816 = vunpack.c.l.b16 %v3800
    %v3817 = vunpack.c.h.b16 %v3800
    %v3818 = vunpack.c.l.b16 %v3801
    %v3819 = vunpack.c.h.b16 %v3801
    %v3820 = vunpack.c.l.b16 %v3802
    %v3821 = vunpack.c.h.b16 %v3802
    %v3822 = vunpack.c.l.b16 %v3803
    %v3823 = vunpack.c.h.b16 %v3803
    %v3824 = vunpack.c.l.b16 %v3804
    %v3825 = vunpack.c.h.b16 %v3804
    %v3826 = vunpack.c.l.b16 %v3805
    %v3827 = vunpack.c.h.b16 %v3805
    %v3828 = vunpack.c.l.b16 %v3806
    %v3829 = vunpack.c.h.b16 %v3806
    %v3830 = vunpack.c.l.b16 %v3807
    %v3831 = vunpack.c.h.b16 %v3807
    %v3832 = vpack.c.b16 %v3816, %v3816
    %v3833 = vpack.c.b16 %v3817, %v3817
    %v3834 = vpack.c.b16 %v3818, %v3818
    %v3835 = vpack.c.b16 %v3819, %v3819
    %v3836 = vpack.c.b16 %v3820, %v3820
    %v3837 = vpack.c.b16 %v3821, %v3821
    %v3838 = vpack.c.b16 %v3822, %v3822
    %v3839 = vpack.c.b16 %v3823, %v3823
    %v3840 = vpack.c.b16 %v3824, %v3824
    %v3841 = vpack.c.b16 %v3825, %v3825
    %v3842 = vpack.c.b16 %v3826, %v3826
    %v3843 = vpack.c.b16 %v3827, %v3827
    %v3844 = vpack.c.b16 %v3828, %v3828
    %v3845 = vpack.c.b16 %v3829, %v3829
    %v3846 = vpack.c.b16 %v3830, %v3830
    %v3847 = vpack.c.b16 %v3831, %v3831
    %3864 = vst [vmem:[#allocation3 + $0x40] sm:$0xf] %v3832
    %3865 = vst [vmem:[#allocation3 + $0x44] sm:$0xf] %v3833
    %3866 = vst [vmem:[#allocation3 + $0x48] sm:$0xf] %v3834
    %3867 = vst [vmem:[#allocation3 + $0x4c] sm:$0xf] %v3835
    %3868 = vst [vmem:[#allocation3 + $0x50] sm:$0xf] %v3836
    %3869 = vst [vmem:[#allocation3 + $0x54] sm:$0xf] %v3837
    %3870 = vst [vmem:[#allocation3 + $0x58] sm:$0xf] %v3838
    %3871 = vst [vmem:[#allocation3 + $0x5c] sm:$0xf] %v3839
    %3872 = vst [vmem:[#allocation3 + $0x60] sm:$0xf] %v3840
    %3873 = vst [vmem:[#allocation3 + $0x64] sm:$0xf] %v3841
    %3874 = vst [vmem:[#allocation3 + $0x68] sm:$0xf] %v3842
    %3875 = vst [vmem:[#allocation3 + $0x6c] sm:$0xf] %v3843
    %3876 = vst [vmem:[#allocation3 + $0x70] sm:$0xf] %v3844
    %3877 = vst [vmem:[#allocation3 + $0x74] sm:$0xf] %v3845
    %3878 = vst [vmem:[#allocation3 + $0x78] sm:$0xf] %v3846
    %3879 = vst [vmem:[#allocation3 + $0x7c] sm:$0xf] %v3847
    %3880 = vset.pattern.permute.xlu0 2
    %3881 = vperm.xlu0 %3880, %v3394
    %v3882 = vpop.permute.xlu0 %3881
    %3884 = vset.pattern.permute.xlu0 2
    %3885 = vperm.xlu0 %3884, %v3399
    %v3886 = vpop.permute.xlu0 %3885
    %3888 = vset.pattern.permute.xlu0 2
    %3889 = vperm.xlu0 %3888, %v3404
    %v3890 = vpop.permute.xlu0 %3889
    %3892 = vset.pattern.permute.xlu0 2
    %3893 = vperm.xlu0 %3892, %v3409
    %v3894 = vpop.permute.xlu0 %3893
    %3896 = vset.pattern.permute.xlu0 2
    %3897 = vperm.xlu0 %3896, %v3414
    %v3898 = vpop.permute.xlu0 %3897
    %3900 = vset.pattern.permute.xlu0 2
    %3901 = vperm.xlu0 %3900, %v3419
    %v3902 = vpop.permute.xlu0 %3901
    %3904 = vset.pattern.permute.xlu0 2
    %3905 = vperm.xlu0 %3904, %v3424
    %v3906 = vpop.permute.xlu0 %3905
    %3908 = vset.pattern.permute.xlu0 2
    %3909 = vperm.xlu0 %3908, %v3429
    %v3910 = vpop.permute.xlu0 %3909
    %3912 = vset.pattern.permute.xlu0 2
    %3913 = vperm.xlu0 %3912, %v3434
    %v3914 = vpop.permute.xlu0 %3913
    %3916 = vset.pattern.permute.xlu0 2
    %3917 = vperm.xlu0 %3916, %v3439
    %v3918 = vpop.permute.xlu0 %3917
    %3920 = vset.pattern.permute.xlu0 2
    %3921 = vperm.xlu0 %3920, %v3444
    %v3922 = vpop.permute.xlu0 %3921
    %3924 = vset.pattern.permute.xlu0 2
    %3925 = vperm.xlu0 %3924, %v3449
    %v3926 = vpop.permute.xlu0 %3925
    %3928 = vset.pattern.permute.xlu0 2
    %3929 = vperm.xlu0 %3928, %v3454
    %v3930 = vpop.permute.xlu0 %3929
    %3932 = vset.pattern.permute.xlu0 2
    %3933 = vperm.xlu0 %3932, %v3459
    %v3934 = vpop.permute.xlu0 %3933
    %3936 = vset.pattern.permute.xlu0 2
    %3937 = vperm.xlu0 %3936, %v3464
    %v3938 = vpop.permute.xlu0 %3937
    %3940 = vset.pattern.permute.xlu0 2
    %3941 = vperm.xlu0 %3940, %v3469
    %v3942 = vpop.permute.xlu0 %3941
    %v3944 = vlaneseq
    %v3945 = vshrl.u32 %v3944, 7
    %v3946 = vsub.s32 2, %v3945
    %v3947 = vrot.slane %v3308, %v3946
    %v3948 = vadd.f32 %v3882, %v3947
    %v3949 = vadd.f32 %v3886, %v3947
    %v3950 = vadd.f32 %v3890, %v3947
    %v3951 = vadd.f32 %v3894, %v3947
    %v3952 = vadd.f32 %v3898, %v3947
    %v3953 = vadd.f32 %v3902, %v3947
    %v3954 = vadd.f32 %v3906, %v3947
    %v3955 = vadd.f32 %v3910, %v3947
    %v3956 = vadd.f32 %v3914, %v3947
    %v3957 = vadd.f32 %v3918, %v3947
    %v3958 = vadd.f32 %v3922, %v3947
    %v3959 = vadd.f32 %v3926, %v3947
    %v3960 = vadd.f32 %v3930, %v3947
    %v3961 = vadd.f32 %v3934, %v3947
    %v3962 = vadd.f32 %v3938, %v3947
    %v3963 = vadd.f32 %v3942, %v3947
    %3964 = vst [vmem:[#allocation2 + $0x10] sm:$0xff] %v3948
    %3965 = vst [vmem:[#allocation2 + $0x30] sm:$0xff] %v3949
    %3966 = vst [vmem:[#allocation2 + $0x50] sm:$0xff] %v3950
    %3967 = vst [vmem:[#allocation2 + $0x70] sm:$0xff] %v3951
    %3968 = vst [vmem:[#allocation2 + $0x90] sm:$0xff] %v3952
    %3969 = vst [vmem:[#allocation2 + $0xb0] sm:$0xff] %v3953
    %3970 = vst [vmem:[#allocation2 + $0xd0] sm:$0xff] %v3954
    %3971 = vst [vmem:[#allocation2 + $0xf0] sm:$0xff] %v3955
    %3972 = vst [vmem:[#allocation2 + $0x110] sm:$0xff] %v3956
    %3973 = vst [vmem:[#allocation2 + $0x130] sm:$0xff] %v3957
    %3974 = vst [vmem:[#allocation2 + $0x150] sm:$0xff] %v3958
    %3975 = vst [vmem:[#allocation2 + $0x170] sm:$0xff] %v3959
    %3976 = vst [vmem:[#allocation2 + $0x190] sm:$0xff] %v3960
    %3977 = vst [vmem:[#allocation2 + $0x1b0] sm:$0xff] %v3961
    %3978 = vst [vmem:[#allocation2 + $0x1d0] sm:$0xff] %v3962
    %3979 = vst [vmem:[#allocation2 + $0x1f0] sm:$0xff] %v3963
    %v3980 = vmul.f32 %v3178, %v973
    %v3981 = vmul.f32 %v3181, %v973
    %v3982 = vmul.f32 %v3186, %v973
    %v3983 = vmul.f32 %v3189, %v973
    %v3984 = vmul.f32 %v3194, %v973
    %v3985 = vmul.f32 %v3197, %v973
    %v3986 = vmul.f32 %v3202, %v973
    %v3987 = vmul.f32 %v3205, %v973
    %v3988 = vmul.f32 %v3210, %v973
    %v3989 = vmul.f32 %v3213, %v973
    %v3990 = vmul.f32 %v3218, %v973
    %v3991 = vmul.f32 %v3221, %v973
    %v3992 = vmul.f32 %v3226, %v973
    %v3993 = vmul.f32 %v3229, %v973
    %v3994 = vmul.f32 %v3234, %v973
    %v3995 = vmul.f32 %v3237, %v973
    %v3996 = vpack.c.bf16 %v3981, %v3980
    %v3997 = vpack.c.bf16 %v3983, %v3982
    %v3998 = vpack.c.bf16 %v3985, %v3984
    %v3999 = vpack.c.bf16 %v3987, %v3986
    %v4000 = vpack.c.bf16 %v3989, %v3988
    %v4001 = vpack.c.bf16 %v3991, %v3990
    %v4002 = vpack.c.bf16 %v3993, %v3992
    %v4003 = vpack.c.bf16 %v3995, %v3994
    %v4012 = vunpack.c.l.b16 %v3996
    %v4013 = vunpack.c.h.b16 %v3996
    %v4014 = vunpack.c.l.b16 %v3997
    %v4015 = vunpack.c.h.b16 %v3997
    %v4016 = vunpack.c.l.b16 %v3998
    %v4017 = vunpack.c.h.b16 %v3998
    %v4018 = vunpack.c.l.b16 %v3999
    %v4019 = vunpack.c.h.b16 %v3999
    %v4020 = vunpack.c.l.b16 %v4000
    %v4021 = vunpack.c.h.b16 %v4000
    %v4022 = vunpack.c.l.b16 %v4001
    %v4023 = vunpack.c.h.b16 %v4001
    %v4024 = vunpack.c.l.b16 %v4002
    %v4025 = vunpack.c.h.b16 %v4002
    %v4026 = vunpack.c.l.b16 %v4003
    %v4027 = vunpack.c.h.b16 %v4003
    %v4028 = vpack.c.b16 %v4012, %v4012
    %v4029 = vpack.c.b16 %v4013, %v4013
    %v4030 = vpack.c.b16 %v4014, %v4014
    %v4031 = vpack.c.b16 %v4015, %v4015
    %v4032 = vpack.c.b16 %v4016, %v4016
    %v4033 = vpack.c.b16 %v4017, %v4017
    %v4034 = vpack.c.b16 %v4018, %v4018
    %v4035 = vpack.c.b16 %v4019, %v4019
    %v4036 = vpack.c.b16 %v4020, %v4020
    %v4037 = vpack.c.b16 %v4021, %v4021
    %v4038 = vpack.c.b16 %v4022, %v4022
    %v4039 = vpack.c.b16 %v4023, %v4023
    %v4040 = vpack.c.b16 %v4024, %v4024
    %v4041 = vpack.c.b16 %v4025, %v4025
    %v4042 = vpack.c.b16 %v4026, %v4026
    %v4043 = vpack.c.b16 %v4027, %v4027
    %4060 = vst [vmem:[#allocation3 + $0x80] sm:$0xf] %v4028
    %4061 = vst [vmem:[#allocation3 + $0x84] sm:$0xf] %v4029
    %4062 = vst [vmem:[#allocation3 + $0x88] sm:$0xf] %v4030
    %4063 = vst [vmem:[#allocation3 + $0x8c] sm:$0xf] %v4031
    %4064 = vst [vmem:[#allocation3 + $0x90] sm:$0xf] %v4032
    %4065 = vst [vmem:[#allocation3 + $0x94] sm:$0xf] %v4033
    %4066 = vst [vmem:[#allocation3 + $0x98] sm:$0xf] %v4034
    %4067 = vst [vmem:[#allocation3 + $0x9c] sm:$0xf] %v4035
    %4068 = vst [vmem:[#allocation3 + $0xa0] sm:$0xf] %v4036
    %4069 = vst [vmem:[#allocation3 + $0xa4] sm:$0xf] %v4037
    %4070 = vst [vmem:[#allocation3 + $0xa8] sm:$0xf] %v4038
    %4071 = vst [vmem:[#allocation3 + $0xac] sm:$0xf] %v4039
    %4072 = vst [vmem:[#allocation3 + $0xb0] sm:$0xf] %v4040
    %4073 = vst [vmem:[#allocation3 + $0xb4] sm:$0xf] %v4041
    %4074 = vst [vmem:[#allocation3 + $0xb8] sm:$0xf] %v4042
    %4075 = vst [vmem:[#allocation3 + $0xbc] sm:$0xf] %v4043
    %4076 = vset.pattern.permute.xlu0 3
    %4077 = vperm.xlu0 %4076, %v3394
    %v4078 = vpop.permute.xlu0 %4077
    %4080 = vset.pattern.permute.xlu0 3
    %4081 = vperm.xlu0 %4080, %v3399
    %v4082 = vpop.permute.xlu0 %4081
    %4084 = vset.pattern.permute.xlu0 3
    %4085 = vperm.xlu0 %4084, %v3404
    %v4086 = vpop.permute.xlu0 %4085
    %4088 = vset.pattern.permute.xlu0 3
    %4089 = vperm.xlu0 %4088, %v3409
    %v4090 = vpop.permute.xlu0 %4089
    %4092 = vset.pattern.permute.xlu0 3
    %4093 = vperm.xlu0 %4092, %v3414
    %v4094 = vpop.permute.xlu0 %4093
    %4096 = vset.pattern.permute.xlu0 3
    %4097 = vperm.xlu0 %4096, %v3419
    %v4098 = vpop.permute.xlu0 %4097
    %4100 = vset.pattern.permute.xlu0 3
    %4101 = vperm.xlu0 %4100, %v3424
    %v4102 = vpop.permute.xlu0 %4101
    %4104 = vset.pattern.permute.xlu0 3
    %4105 = vperm.xlu0 %4104, %v3429
    %v4106 = vpop.permute.xlu0 %4105
    %4108 = vset.pattern.permute.xlu0 3
    %4109 = vperm.xlu0 %4108, %v3434
    %v4110 = vpop.permute.xlu0 %4109
    %4112 = vset.pattern.permute.xlu0 3
    %4113 = vperm.xlu0 %4112, %v3439
    %v4114 = vpop.permute.xlu0 %4113
    %4116 = vset.pattern.permute.xlu0 3
    %4117 = vperm.xlu0 %4116, %v3444
    %v4118 = vpop.permute.xlu0 %4117
    %4120 = vset.pattern.permute.xlu0 3
    %4121 = vperm.xlu0 %4120, %v3449
    %v4122 = vpop.permute.xlu0 %4121
    %4124 = vset.pattern.permute.xlu0 3
    %4125 = vperm.xlu0 %4124, %v3454
    %v4126 = vpop.permute.xlu0 %4125
    %4128 = vset.pattern.permute.xlu0 3
    %4129 = vperm.xlu0 %4128, %v3459
    %v4130 = vpop.permute.xlu0 %4129
    %4132 = vset.pattern.permute.xlu0 3
    %4133 = vperm.xlu0 %4132, %v3464
    %v4134 = vpop.permute.xlu0 %4133
    %4136 = vset.pattern.permute.xlu0 3
    %4137 = vperm.xlu0 %4136, %v3469
    %v4138 = vpop.permute.xlu0 %4137
    %v4140 = vlaneseq
    %v4141 = vshrl.u32 %v4140, 7
    %v4142 = vsub.s32 3, %v4141
    %v4143 = vrot.slane %v3308, %v4142
    %v4144 = vadd.f32 %v4078, %v4143
    %v4145 = vadd.f32 %v4082, %v4143
    %v4146 = vadd.f32 %v4086, %v4143
    %v4147 = vadd.f32 %v4090, %v4143
    %v4148 = vadd.f32 %v4094, %v4143
    %v4149 = vadd.f32 %v4098, %v4143
    %v4150 = vadd.f32 %v4102, %v4143
    %v4151 = vadd.f32 %v4106, %v4143
    %v4152 = vadd.f32 %v4110, %v4143
    %v4153 = vadd.f32 %v4114, %v4143
    %v4154 = vadd.f32 %v4118, %v4143
    %v4155 = vadd.f32 %v4122, %v4143
    %v4156 = vadd.f32 %v4126, %v4143
    %v4157 = vadd.f32 %v4130, %v4143
    %v4158 = vadd.f32 %v4134, %v4143
    %v4159 = vadd.f32 %v4138, %v4143
    %4160 = vst [vmem:[#allocation2 + $0x18] sm:$0xff] %v4144
    %4161 = vst [vmem:[#allocation2 + $0x38] sm:$0xff] %v4145
    %4162 = vst [vmem:[#allocation2 + $0x58] sm:$0xff] %v4146
    %4163 = vst [vmem:[#allocation2 + $0x78] sm:$0xff] %v4147
    %4164 = vst [vmem:[#allocation2 + $0x98] sm:$0xff] %v4148
    %4165 = vst [vmem:[#allocation2 + $0xb8] sm:$0xff] %v4149
    %4166 = vst [vmem:[#allocation2 + $0xd8] sm:$0xff] %v4150
    %4167 = vst [vmem:[#allocation2 + $0xf8] sm:$0xff] %v4151
    %4168 = vst [vmem:[#allocation2 + $0x118] sm:$0xff] %v4152
    %4169 = vst [vmem:[#allocation2 + $0x138] sm:$0xff] %v4153
    %4170 = vst [vmem:[#allocation2 + $0x158] sm:$0xff] %v4154
    %4171 = vst [vmem:[#allocation2 + $0x178] sm:$0xff] %v4155
    %4172 = vst [vmem:[#allocation2 + $0x198] sm:$0xff] %v4156
    %4173 = vst [vmem:[#allocation2 + $0x1b8] sm:$0xff] %v4157
    %4174 = vst [vmem:[#allocation2 + $0x1d8] sm:$0xff] %v4158
    %4175 = vst [vmem:[#allocation2 + $0x1f8] sm:$0xff] %v4159
    %v4176 = vmul.f32 %v3178, %v1173
    %v4177 = vmul.f32 %v3181, %v1173
    %v4178 = vmul.f32 %v3186, %v1173
    %v4179 = vmul.f32 %v3189, %v1173
    %v4180 = vmul.f32 %v3194, %v1173
    %v4181 = vmul.f32 %v3197, %v1173
    %v4182 = vmul.f32 %v3202, %v1173
    %v4183 = vmul.f32 %v3205, %v1173
    %v4184 = vmul.f32 %v3210, %v1173
    %v4185 = vmul.f32 %v3213, %v1173
    %v4186 = vmul.f32 %v3218, %v1173
    %v4187 = vmul.f32 %v3221, %v1173
    %v4188 = vmul.f32 %v3226, %v1173
    %v4189 = vmul.f32 %v3229, %v1173
    %v4190 = vmul.f32 %v3234, %v1173
    %v4191 = vmul.f32 %v3237, %v1173
    %v4192 = vpack.c.bf16 %v4177, %v4176
    %v4193 = vpack.c.bf16 %v4179, %v4178
    %v4194 = vpack.c.bf16 %v4181, %v4180
    %v4195 = vpack.c.bf16 %v4183, %v4182
    %v4196 = vpack.c.bf16 %v4185, %v4184
    %v4197 = vpack.c.bf16 %v4187, %v4186
    %v4198 = vpack.c.bf16 %v4189, %v4188
    %v4199 = vpack.c.bf16 %v4191, %v4190
    %v4208 = vunpack.c.l.b16 %v4192
    %v4209 = vunpack.c.h.b16 %v4192
    %v4210 = vunpack.c.l.b16 %v4193
    %v4211 = vunpack.c.h.b16 %v4193
    %v4212 = vunpack.c.l.b16 %v4194
    %v4213 = vunpack.c.h.b16 %v4194
    %v4214 = vunpack.c.l.b16 %v4195
    %v4215 = vunpack.c.h.b16 %v4195
    %v4216 = vunpack.c.l.b16 %v4196
    %v4217 = vunpack.c.h.b16 %v4196
    %v4218 = vunpack.c.l.b16 %v4197
    %v4219 = vunpack.c.h.b16 %v4197
    %v4220 = vunpack.c.l.b16 %v4198
    %v4221 = vunpack.c.h.b16 %v4198
    %v4222 = vunpack.c.l.b16 %v4199
    %v4223 = vunpack.c.h.b16 %v4199
    %v4224 = vpack.c.b16 %v4208, %v4208
    %v4225 = vpack.c.b16 %v4209, %v4209
    %v4226 = vpack.c.b16 %v4210, %v4210
    %v4227 = vpack.c.b16 %v4211, %v4211
    %v4228 = vpack.c.b16 %v4212, %v4212
    %v4229 = vpack.c.b16 %v4213, %v4213
    %v4230 = vpack.c.b16 %v4214, %v4214
    %v4231 = vpack.c.b16 %v4215, %v4215
    %v4232 = vpack.c.b16 %v4216, %v4216
    %v4233 = vpack.c.b16 %v4217, %v4217
    %v4234 = vpack.c.b16 %v4218, %v4218
    %v4235 = vpack.c.b16 %v4219, %v4219
    %v4236 = vpack.c.b16 %v4220, %v4220
    %v4237 = vpack.c.b16 %v4221, %v4221
    %v4238 = vpack.c.b16 %v4222, %v4222
    %v4239 = vpack.c.b16 %v4223, %v4223
    %4256 = vst [vmem:[#allocation3 + $0xc0] sm:$0xf] %v4224
    %4257 = vst [vmem:[#allocation3 + $0xc4] sm:$0xf] %v4225
    %4258 = vst [vmem:[#allocation3 + $0xc8] sm:$0xf] %v4226
    %4259 = vst [vmem:[#allocation3 + $0xcc] sm:$0xf] %v4227
    %4260 = vst [vmem:[#allocation3 + $0xd0] sm:$0xf] %v4228
    %4261 = vst [vmem:[#allocation3 + $0xd4] sm:$0xf] %v4229
    %4262 = vst [vmem:[#allocation3 + $0xd8] sm:$0xf] %v4230
    %4263 = vst [vmem:[#allocation3 + $0xdc] sm:$0xf] %v4231
    %4264 = vst [vmem:[#allocation3 + $0xe0] sm:$0xf] %v4232
    %4265 = vst [vmem:[#allocation3 + $0xe4] sm:$0xf] %v4233
    %4266 = vst [vmem:[#allocation3 + $0xe8] sm:$0xf] %v4234
    %4267 = vst [vmem:[#allocation3 + $0xec] sm:$0xf] %v4235
    %4268 = vst [vmem:[#allocation3 + $0xf0] sm:$0xf] %v4236
    %4269 = vst [vmem:[#allocation3 + $0xf4] sm:$0xf] %v4237
    %4270 = vst [vmem:[#allocation3 + $0xf8] sm:$0xf] %v4238
    %4271 = vst [vmem:[#allocation3 + $0xfc] sm:$0xf] %v4239
    %v4272 = vld [vmem:[#allocation2] sm:$0xff]
    %v4273 = vld [vmem:[#allocation2 + $0x8] sm:$0xff]
    %v4274 = vld [vmem:[#allocation2 + $0x10] sm:$0xff]
    %v4275 = vld [vmem:[#allocation2 + $0x18] sm:$0xff]
    %v4276 = vld [vmem:[#allocation2 + $0x20] sm:$0xff]
    %v4277 = vld [vmem:[#allocation2 + $0x28] sm:$0xff]
    %v4278 = vld [vmem:[#allocation2 + $0x30] sm:$0xff]
    %v4279 = vld [vmem:[#allocation2 + $0x38] sm:$0xff]
    %v4280 = vld [vmem:[#allocation2 + $0x40] sm:$0xff]
    %v4281 = vld [vmem:[#allocation2 + $0x48] sm:$0xff]
    %v4282 = vld [vmem:[#allocation2 + $0x50] sm:$0xff]
    %v4283 = vld [vmem:[#allocation2 + $0x58] sm:$0xff]
    %v4284 = vld [vmem:[#allocation2 + $0x60] sm:$0xff]
    %v4285 = vld [vmem:[#allocation2 + $0x68] sm:$0xff]
    %v4286 = vld [vmem:[#allocation2 + $0x70] sm:$0xff]
    %v4287 = vld [vmem:[#allocation2 + $0x78] sm:$0xff]
    %v4288 = vld [vmem:[#allocation2 + $0x80] sm:$0xff]
    %v4289 = vld [vmem:[#allocation2 + $0x88] sm:$0xff]
    %v4290 = vld [vmem:[#allocation2 + $0x90] sm:$0xff]
    %v4291 = vld [vmem:[#allocation2 + $0x98] sm:$0xff]
    %v4292 = vld [vmem:[#allocation2 + $0xa0] sm:$0xff]
    %v4293 = vld [vmem:[#allocation2 + $0xa8] sm:$0xff]
    %v4294 = vld [vmem:[#allocation2 + $0xb0] sm:$0xff]
    %v4295 = vld [vmem:[#allocation2 + $0xb8] sm:$0xff]
    %v4296 = vld [vmem:[#allocation2 + $0xc0] sm:$0xff]
    %v4297 = vld [vmem:[#allocation2 + $0xc8] sm:$0xff]
    %v4298 = vld [vmem:[#allocation2 + $0xd0] sm:$0xff]
    %v4299 = vld [vmem:[#allocation2 + $0xd8] sm:$0xff]
    %v4300 = vld [vmem:[#allocation2 + $0xe0] sm:$0xff]
    %v4301 = vld [vmem:[#allocation2 + $0xe8] sm:$0xff]
    %v4302 = vld [vmem:[#allocation2 + $0xf0] sm:$0xff]
    %v4303 = vld [vmem:[#allocation2 + $0xf8] sm:$0xff]
    %v4304 = vld [vmem:[#allocation2 + $0x100] sm:$0xff]
    %v4305 = vld [vmem:[#allocation2 + $0x108] sm:$0xff]
    %v4306 = vld [vmem:[#allocation2 + $0x110] sm:$0xff]
    %v4307 = vld [vmem:[#allocation2 + $0x118] sm:$0xff]
    %v4308 = vld [vmem:[#allocation2 + $0x120] sm:$0xff]
    %v4309 = vld [vmem:[#allocation2 + $0x128] sm:$0xff]
    %v4310 = vld [vmem:[#allocation2 + $0x130] sm:$0xff]
    %v4311 = vld [vmem:[#allocation2 + $0x138] sm:$0xff]
    %v4312 = vld [vmem:[#allocation2 + $0x140] sm:$0xff]
    %v4313 = vld [vmem:[#allocation2 + $0x148] sm:$0xff]
    %v4314 = vld [vmem:[#allocation2 + $0x150] sm:$0xff]
    %v4315 = vld [vmem:[#allocation2 + $0x158] sm:$0xff]
    %v4316 = vld [vmem:[#allocation2 + $0x160] sm:$0xff]
    %v4317 = vld [vmem:[#allocation2 + $0x168] sm:$0xff]
    %v4318 = vld [vmem:[#allocation2 + $0x170] sm:$0xff]
    %v4319 = vld [vmem:[#allocation2 + $0x178] sm:$0xff]
    %v4320 = vld [vmem:[#allocation2 + $0x180] sm:$0xff]
    %v4321 = vld [vmem:[#allocation2 + $0x188] sm:$0xff]
    %v4322 = vld [vmem:[#allocation2 + $0x190] sm:$0xff]
    %v4323 = vld [vmem:[#allocation2 + $0x198] sm:$0xff]
    %v4324 = vld [vmem:[#allocation2 + $0x1a0] sm:$0xff]
    %v4325 = vld [vmem:[#allocation2 + $0x1a8] sm:$0xff]
    %v4326 = vld [vmem:[#allocation2 + $0x1b0] sm:$0xff]
    %v4327 = vld [vmem:[#allocation2 + $0x1b8] sm:$0xff]
    %v4328 = vld [vmem:[#allocation2 + $0x1c0] sm:$0xff]
    %v4329 = vld [vmem:[#allocation2 + $0x1c8] sm:$0xff]
    %v4330 = vld [vmem:[#allocation2 + $0x1d0] sm:$0xff]
    %v4331 = vld [vmem:[#allocation2 + $0x1d8] sm:$0xff]
    %v4332 = vld [vmem:[#allocation2 + $0x1e0] sm:$0xff]
    %v4333 = vld [vmem:[#allocation2 + $0x1e8] sm:$0xff]
    %v4334 = vld [vmem:[#allocation2 + $0x1f0] sm:$0xff]
    %v4335 = vld [vmem:[#allocation2 + $0x1f8] sm:$0xff]
    %vm4336 = vcmp.gt.f32.partialorder %v4272, 0.0
    %vm4337 = vcmp.gt.f32.partialorder %v4273, 0.0
    %vm4338 = vcmp.gt.f32.partialorder %v4274, 0.0
    %vm4339 = vcmp.gt.f32.partialorder %v4275, 0.0
    %vm4340 = vcmp.gt.f32.partialorder %v4276, 0.0
    %vm4341 = vcmp.gt.f32.partialorder %v4277, 0.0
    %vm4342 = vcmp.gt.f32.partialorder %v4278, 0.0
    %vm4343 = vcmp.gt.f32.partialorder %v4279, 0.0
    %vm4344 = vcmp.gt.f32.partialorder %v4280, 0.0
    %vm4345 = vcmp.gt.f32.partialorder %v4281, 0.0
    %vm4346 = vcmp.gt.f32.partialorder %v4282, 0.0
    %vm4347 = vcmp.gt.f32.partialorder %v4283, 0.0
    %vm4348 = vcmp.gt.f32.partialorder %v4284, 0.0
    %vm4349 = vcmp.gt.f32.partialorder %v4285, 0.0
    %vm4350 = vcmp.gt.f32.partialorder %v4286, 0.0
    %vm4351 = vcmp.gt.f32.partialorder %v4287, 0.0
    %vm4352 = vcmp.gt.f32.partialorder %v4288, 0.0
    %vm4353 = vcmp.gt.f32.partialorder %v4289, 0.0
    %vm4354 = vcmp.gt.f32.partialorder %v4290, 0.0
    %vm4355 = vcmp.gt.f32.partialorder %v4291, 0.0
    %vm4356 = vcmp.gt.f32.partialorder %v4292, 0.0
    %vm4357 = vcmp.gt.f32.partialorder %v4293, 0.0
    %vm4358 = vcmp.gt.f32.partialorder %v4294, 0.0
    %vm4359 = vcmp.gt.f32.partialorder %v4295, 0.0
    %vm4360 = vcmp.gt.f32.partialorder %v4296, 0.0
    %vm4361 = vcmp.gt.f32.partialorder %v4297, 0.0
    %vm4362 = vcmp.gt.f32.partialorder %v4298, 0.0
    %vm4363 = vcmp.gt.f32.partialorder %v4299, 0.0
    %vm4364 = vcmp.gt.f32.partialorder %v4300, 0.0
    %vm4365 = vcmp.gt.f32.partialorder %v4301, 0.0
    %vm4366 = vcmp.gt.f32.partialorder %v4302, 0.0
    %vm4367 = vcmp.gt.f32.partialorder %v4303, 0.0
    %vm4368 = vcmp.gt.f32.partialorder %v4304, 0.0
    %vm4369 = vcmp.gt.f32.partialorder %v4305, 0.0
    %vm4370 = vcmp.gt.f32.partialorder %v4306, 0.0
    %vm4371 = vcmp.gt.f32.partialorder %v4307, 0.0
    %vm4372 = vcmp.gt.f32.partialorder %v4308, 0.0
    %vm4373 = vcmp.gt.f32.partialorder %v4309, 0.0
    %vm4374 = vcmp.gt.f32.partialorder %v4310, 0.0
    %vm4375 = vcmp.gt.f32.partialorder %v4311, 0.0
    %vm4376 = vcmp.gt.f32.partialorder %v4312, 0.0
    %vm4377 = vcmp.gt.f32.partialorder %v4313, 0.0
    %vm4378 = vcmp.gt.f32.partialorder %v4314, 0.0
    %vm4379 = vcmp.gt.f32.partialorder %v4315, 0.0
    %vm4380 = vcmp.gt.f32.partialorder %v4316, 0.0
    %vm4381 = vcmp.gt.f32.partialorder %v4317, 0.0
    %vm4382 = vcmp.gt.f32.partialorder %v4318, 0.0
    %vm4383 = vcmp.gt.f32.partialorder %v4319, 0.0
    %vm4384 = vcmp.gt.f32.partialorder %v4320, 0.0
    %vm4385 = vcmp.gt.f32.partialorder %v4321, 0.0
    %vm4386 = vcmp.gt.f32.partialorder %v4322, 0.0
    %vm4387 = vcmp.gt.f32.partialorder %v4323, 0.0
    %vm4388 = vcmp.gt.f32.partialorder %v4324, 0.0
    %vm4389 = vcmp.gt.f32.partialorder %v4325, 0.0
    %vm4390 = vcmp.gt.f32.partialorder %v4326, 0.0
    %vm4391 = vcmp.gt.f32.partialorder %v4327, 0.0
    %vm4392 = vcmp.gt.f32.partialorder %v4328, 0.0
    %vm4393 = vcmp.gt.f32.partialorder %v4329, 0.0
    %vm4394 = vcmp.gt.f32.partialorder %v4330, 0.0
    %vm4395 = vcmp.gt.f32.partialorder %v4331, 0.0
    %vm4396 = vcmp.gt.f32.partialorder %v4332, 0.0
    %vm4397 = vcmp.gt.f32.partialorder %v4333, 0.0
    %vm4398 = vcmp.gt.f32.partialorder %v4334, 0.0
    %vm4399 = vcmp.gt.f32.partialorder %v4335, 0.0
    %v4400 = vmul.f32 %v4272, 0.2
    %v4401 = vmul.f32 %v4273, 0.2
    %v4402 = vmul.f32 %v4274, 0.2
    %v4403 = vmul.f32 %v4275, 0.2
    %v4404 = vmul.f32 %v4276, 0.2
    %v4405 = vmul.f32 %v4277, 0.2
    %v4406 = vmul.f32 %v4278, 0.2
    %v4407 = vmul.f32 %v4279, 0.2
    %v4408 = vmul.f32 %v4280, 0.2
    %v4409 = vmul.f32 %v4281, 0.2
    %v4410 = vmul.f32 %v4282, 0.2
    %v4411 = vmul.f32 %v4283, 0.2
    %v4412 = vmul.f32 %v4284, 0.2
    %v4413 = vmul.f32 %v4285, 0.2
    %v4414 = vmul.f32 %v4286, 0.2
    %v4415 = vmul.f32 %v4287, 0.2
    %v4416 = vmul.f32 %v4288, 0.2
    %v4417 = vmul.f32 %v4289, 0.2
    %v4418 = vmul.f32 %v4290, 0.2
    %v4419 = vmul.f32 %v4291, 0.2
    %v4420 = vmul.f32 %v4292, 0.2
    %v4421 = vmul.f32 %v4293, 0.2
    %v4422 = vmul.f32 %v4294, 0.2
    %v4423 = vmul.f32 %v4295, 0.2
    %v4424 = vmul.f32 %v4296, 0.2
    %v4425 = vmul.f32 %v4297, 0.2
    %v4426 = vmul.f32 %v4298, 0.2
    %v4427 = vmul.f32 %v4299, 0.2
    %v4428 = vmul.f32 %v4300, 0.2
    %v4429 = vmul.f32 %v4301, 0.2
    %v4430 = vmul.f32 %v4302, 0.2
    %v4431 = vmul.f32 %v4303, 0.2
    %v4432 = vmul.f32 %v4304, 0.2
    %v4433 = vmul.f32 %v4305, 0.2
    %v4434 = vmul.f32 %v4306, 0.2
    %v4435 = vmul.f32 %v4307, 0.2
    %v4436 = vmul.f32 %v4308, 0.2
    %v4437 = vmul.f32 %v4309, 0.2
    %v4438 = vmul.f32 %v4310, 0.2
    %v4439 = vmul.f32 %v4311, 0.2
    %v4440 = vmul.f32 %v4312, 0.2
    %v4441 = vmul.f32 %v4313, 0.2
    %v4442 = vmul.f32 %v4314, 0.2
    %v4443 = vmul.f32 %v4315, 0.2
    %v4444 = vmul.f32 %v4316, 0.2
    %v4445 = vmul.f32 %v4317, 0.2
    %v4446 = vmul.f32 %v4318, 0.2
    %v4447 = vmul.f32 %v4319, 0.2
    %v4448 = vmul.f32 %v4320, 0.2
    %v4449 = vmul.f32 %v4321, 0.2
    %v4450 = vmul.f32 %v4322, 0.2
    %v4451 = vmul.f32 %v4323, 0.2
    %v4452 = vmul.f32 %v4324, 0.2
    %v4453 = vmul.f32 %v4325, 0.2
    %v4454 = vmul.f32 %v4326, 0.2
    %v4455 = vmul.f32 %v4327, 0.2
    %v4456 = vmul.f32 %v4328, 0.2
    %v4457 = vmul.f32 %v4329, 0.2
    %v4458 = vmul.f32 %v4330, 0.2
    %v4459 = vmul.f32 %v4331, 0.2
    %v4460 = vmul.f32 %v4332, 0.2
    %v4461 = vmul.f32 %v4333, 0.2
    %v4462 = vmul.f32 %v4334, 0.2
    %v4463 = vmul.f32 %v4335, 0.2
    %v4464 = vsel %vm4336, %v4272, %v4400
    %v4465 = vsel %vm4337, %v4273, %v4401
    %v4466 = vsel %vm4338, %v4274, %v4402
    %v4467 = vsel %vm4339, %v4275, %v4403
    %v4468 = vsel %vm4340, %v4276, %v4404
    %v4469 = vsel %vm4341, %v4277, %v4405
    %v4470 = vsel %vm4342, %v4278, %v4406
    %v4471 = vsel %vm4343, %v4279, %v4407
    %v4472 = vsel %vm4344, %v4280, %v4408
    %v4473 = vsel %vm4345, %v4281, %v4409
    %v4474 = vsel %vm4346, %v4282, %v4410
    %v4475 = vsel %vm4347, %v4283, %v4411
    %v4476 = vsel %vm4348, %v4284, %v4412
    %v4477 = vsel %vm4349, %v4285, %v4413
    %v4478 = vsel %vm4350, %v4286, %v4414
    %v4479 = vsel %vm4351, %v4287, %v4415
    %v4480 = vsel %vm4352, %v4288, %v4416
    %v4481 = vsel %vm4353, %v4289, %v4417
    %v4482 = vsel %vm4354, %v4290, %v4418
    %v4483 = vsel %vm4355, %v4291, %v4419
    %v4484 = vsel %vm4356, %v4292, %v4420
    %v4485 = vsel %vm4357, %v4293, %v4421
    %v4486 = vsel %vm4358, %v4294, %v4422
    %v4487 = vsel %vm4359, %v4295, %v4423
    %v4488 = vsel %vm4360, %v4296, %v4424
    %v4489 = vsel %vm4361, %v4297, %v4425
    %v4490 = vsel %vm4362, %v4298, %v4426
    %v4491 = vsel %vm4363, %v4299, %v4427
    %v4492 = vsel %vm4364, %v4300, %v4428
    %v4493 = vsel %vm4365, %v4301, %v4429
    %v4494 = vsel %vm4366, %v4302, %v4430
    %v4495 = vsel %vm4367, %v4303, %v4431
    %v4496 = vsel %vm4368, %v4304, %v4432
    %v4497 = vsel %vm4369, %v4305, %v4433
    %v4498 = vsel %vm4370, %v4306, %v4434
    %v4499 = vsel %vm4371, %v4307, %v4435
    %v4500 = vsel %vm4372, %v4308, %v4436
    %v4501 = vsel %vm4373, %v4309, %v4437
    %v4502 = vsel %vm4374, %v4310, %v4438
    %v4503 = vsel %vm4375, %v4311, %v4439
    %v4504 = vsel %vm4376, %v4312, %v4440
    %v4505 = vsel %vm4377, %v4313, %v4441
    %v4506 = vsel %vm4378, %v4314, %v4442
    %v4507 = vsel %vm4379, %v4315, %v4443
    %v4508 = vsel %vm4380, %v4316, %v4444
    %v4509 = vsel %vm4381, %v4317, %v4445
    %v4510 = vsel %vm4382, %v4318, %v4446
    %v4511 = vsel %vm4383, %v4319, %v4447
    %v4512 = vsel %vm4384, %v4320, %v4448
    %v4513 = vsel %vm4385, %v4321, %v4449
    %v4514 = vsel %vm4386, %v4322, %v4450
    %v4515 = vsel %vm4387, %v4323, %v4451
    %v4516 = vsel %vm4388, %v4324, %v4452
    %v4517 = vsel %vm4389, %v4325, %v4453
    %v4518 = vsel %vm4390, %v4326, %v4454
    %v4519 = vsel %vm4391, %v4327, %v4455
    %v4520 = vsel %vm4392, %v4328, %v4456
    %v4521 = vsel %vm4393, %v4329, %v4457
    %v4522 = vsel %vm4394, %v4330, %v4458
    %v4523 = vsel %vm4395, %v4331, %v4459
    %v4524 = vsel %vm4396, %v4332, %v4460
    %v4525 = vsel %vm4397, %v4333, %v4461
    %v4526 = vsel %vm4398, %v4334, %v4462
    %v4527 = vsel %vm4399, %v4335, %v4463
    %v4528 = vld [vmem:[%s1] sm:$0xff]
    %v4529 = vld [vmem:[%s1 + $0x8] sm:$0xff]
    %v4530 = vld [vmem:[%s1 + $0x10] sm:$0xff]
    %v4531 = vld [vmem:[%s1 + $0x18] sm:$0xff]
    %v4532 = vld [vmem:[%s1 + $0x20] sm:$0xff]
    %v4533 = vld [vmem:[%s1 + $0x28] sm:$0xff]
    %v4534 = vld [vmem:[%s1 + $0x30] sm:$0xff]
    %v4535 = vld [vmem:[%s1 + $0x38] sm:$0xff]
    %v4536 = vld [vmem:[%s1 + $0x40] sm:$0xff]
    %v4537 = vld [vmem:[%s1 + $0x48] sm:$0xff]
    %v4538 = vld [vmem:[%s1 + $0x50] sm:$0xff]
    %v4539 = vld [vmem:[%s1 + $0x58] sm:$0xff]
    %v4540 = vld [vmem:[%s1 + $0x60] sm:$0xff]
    %v4541 = vld [vmem:[%s1 + $0x68] sm:$0xff]
    %v4542 = vld [vmem:[%s1 + $0x70] sm:$0xff]
    %v4543 = vld [vmem:[%s1 + $0x78] sm:$0xff]
    %v4544 = vld [vmem:[%s1 + $0x80] sm:$0xff]
    %v4545 = vld [vmem:[%s1 + $0x88] sm:$0xff]
    %v4546 = vld [vmem:[%s1 + $0x90] sm:$0xff]
    %v4547 = vld [vmem:[%s1 + $0x98] sm:$0xff]
    %v4548 = vld [vmem:[%s1 + $0xa0] sm:$0xff]
    %v4549 = vld [vmem:[%s1 + $0xa8] sm:$0xff]
    %v4550 = vld [vmem:[%s1 + $0xb0] sm:$0xff]
    %v4551 = vld [vmem:[%s1 + $0xb8] sm:$0xff]
    %v4552 = vld [vmem:[%s1 + $0xc0] sm:$0xff]
    %v4553 = vld [vmem:[%s1 + $0xc8] sm:$0xff]
    %v4554 = vld [vmem:[%s1 + $0xd0] sm:$0xff]
    %v4555 = vld [vmem:[%s1 + $0xd8] sm:$0xff]
    %v4556 = vld [vmem:[%s1 + $0xe0] sm:$0xff]
    %v4557 = vld [vmem:[%s1 + $0xe8] sm:$0xff]
    %v4558 = vld [vmem:[%s1 + $0xf0] sm:$0xff]
    %v4559 = vld [vmem:[%s1 + $0xf8] sm:$0xff]
    %v4560 = vld [vmem:[%s1 + $0x100] sm:$0xff]
    %v4561 = vld [vmem:[%s1 + $0x108] sm:$0xff]
    %v4562 = vld [vmem:[%s1 + $0x110] sm:$0xff]
    %v4563 = vld [vmem:[%s1 + $0x118] sm:$0xff]
    %v4564 = vld [vmem:[%s1 + $0x120] sm:$0xff]
    %v4565 = vld [vmem:[%s1 + $0x128] sm:$0xff]
    %v4566 = vld [vmem:[%s1 + $0x130] sm:$0xff]
    %v4567 = vld [vmem:[%s1 + $0x138] sm:$0xff]
    %v4568 = vld [vmem:[%s1 + $0x140] sm:$0xff]
    %v4569 = vld [vmem:[%s1 + $0x148] sm:$0xff]
    %v4570 = vld [vmem:[%s1 + $0x150] sm:$0xff]
    %v4571 = vld [vmem:[%s1 + $0x158] sm:$0xff]
    %v4572 = vld [vmem:[%s1 + $0x160] sm:$0xff]
    %v4573 = vld [vmem:[%s1 + $0x168] sm:$0xff]
    %v4574 = vld [vmem:[%s1 + $0x170] sm:$0xff]
    %v4575 = vld [vmem:[%s1 + $0x178] sm:$0xff]
    %v4576 = vld [vmem:[%s1 + $0x180] sm:$0xff]
    %v4577 = vld [vmem:[%s1 + $0x188] sm:$0xff]
    %v4578 = vld [vmem:[%s1 + $0x190] sm:$0xff]
    %v4579 = vld [vmem:[%s1 + $0x198] sm:$0xff]
    %v4580 = vld [vmem:[%s1 + $0x1a0] sm:$0xff]
    %v4581 = vld [vmem:[%s1 + $0x1a8] sm:$0xff]
    %v4582 = vld [vmem:[%s1 + $0x1b0] sm:$0xff]
    %v4583 = vld [vmem:[%s1 + $0x1b8] sm:$0xff]
    %v4584 = vld [vmem:[%s1 + $0x1c0] sm:$0xff]
    %v4585 = vld [vmem:[%s1 + $0x1c8] sm:$0xff]
    %v4586 = vld [vmem:[%s1 + $0x1d0] sm:$0xff]
    %v4587 = vld [vmem:[%s1 + $0x1d8] sm:$0xff]
    %v4588 = vld [vmem:[%s1 + $0x1e0] sm:$0xff]
    %v4589 = vld [vmem:[%s1 + $0x1e8] sm:$0xff]
    %v4590 = vld [vmem:[%s1 + $0x1f0] sm:$0xff]
    %v4591 = vld [vmem:[%s1 + $0x1f8] sm:$0xff]
    %v4592 = vadd.f32 %v4464, %v4528
    %v4593 = vadd.f32 %v4465, %v4529
    %v4594 = vadd.f32 %v4466, %v4530
    %v4595 = vadd.f32 %v4467, %v4531
    %v4596 = vadd.f32 %v4468, %v4532
    %v4597 = vadd.f32 %v4469, %v4533
    %v4598 = vadd.f32 %v4470, %v4534
    %v4599 = vadd.f32 %v4471, %v4535
    %v4600 = vadd.f32 %v4472, %v4536
    %v4601 = vadd.f32 %v4473, %v4537
    %v4602 = vadd.f32 %v4474, %v4538
    %v4603 = vadd.f32 %v4475, %v4539
    %v4604 = vadd.f32 %v4476, %v4540
    %v4605 = vadd.f32 %v4477, %v4541
    %v4606 = vadd.f32 %v4478, %v4542
    %v4607 = vadd.f32 %v4479, %v4543
    %v4608 = vadd.f32 %v4480, %v4544
    %v4609 = vadd.f32 %v4481, %v4545
    %v4610 = vadd.f32 %v4482, %v4546
    %v4611 = vadd.f32 %v4483, %v4547
    %v4612 = vadd.f32 %v4484, %v4548
    %v4613 = vadd.f32 %v4485, %v4549
    %v4614 = vadd.f32 %v4486, %v4550
    %v4615 = vadd.f32 %v4487, %v4551
    %v4616 = vadd.f32 %v4488, %v4552
    %v4617 = vadd.f32 %v4489, %v4553
    %v4618 = vadd.f32 %v4490, %v4554
    %v4619 = vadd.f32 %v4491, %v4555
    %v4620 = vadd.f32 %v4492, %v4556
    %v4621 = vadd.f32 %v4493, %v4557
    %v4622 = vadd.f32 %v4494, %v4558
    %v4623 = vadd.f32 %v4495, %v4559
    %v4624 = vadd.f32 %v4496, %v4560
    %v4625 = vadd.f32 %v4497, %v4561
    %v4626 = vadd.f32 %v4498, %v4562
    %v4627 = vadd.f32 %v4499, %v4563
    %v4628 = vadd.f32 %v4500, %v4564
    %v4629 = vadd.f32 %v4501, %v4565
    %v4630 = vadd.f32 %v4502, %v4566
    %v4631 = vadd.f32 %v4503, %v4567
    %v4632 = vadd.f32 %v4504, %v4568
    %v4633 = vadd.f32 %v4505, %v4569
    %v4634 = vadd.f32 %v4506, %v4570
    %v4635 = vadd.f32 %v4507, %v4571
    %v4636 = vadd.f32 %v4508, %v4572
    %v4637 = vadd.f32 %v4509, %v4573
    %v4638 = vadd.f32 %v4510, %v4574
    %v4639 = vadd.f32 %v4511, %v4575
    %v4640 = vadd.f32 %v4512, %v4576
    %v4641 = vadd.f32 %v4513, %v4577
    %v4642 = vadd.f32 %v4514, %v4578
    %v4643 = vadd.f32 %v4515, %v4579
    %v4644 = vadd.f32 %v4516, %v4580
    %v4645 = vadd.f32 %v4517, %v4581
    %v4646 = vadd.f32 %v4518, %v4582
    %v4647 = vadd.f32 %v4519, %v4583
    %v4648 = vadd.f32 %v4520, %v4584
    %v4649 = vadd.f32 %v4521, %v4585
    %v4650 = vadd.f32 %v4522, %v4586
    %v4651 = vadd.f32 %v4523, %v4587
    %v4652 = vadd.f32 %v4524, %v4588
    %v4653 = vadd.f32 %v4525, %v4589
    %v4654 = vadd.f32 %v4526, %v4590
    %v4655 = vadd.f32 %v4527, %v4591
    %v4656 = vmax.f32 %v4592, %v4593
    %v4657 = vmax.f32 %v4656, %v4594
    %v4658 = vmax.f32 %v4657, %v4595
    %4659 = vmax.xlane.f32.xlu0 %v4658
    %v4660 = vpop.xlane.xlu0 %4659
    %v4661 = vmax.f32 %v4596, %v4597
    %v4662 = vmax.f32 %v4661, %v4598
    %v4663 = vmax.f32 %v4662, %v4599
    %4664 = vmax.xlane.f32.xlu0 %v4663
    %v4665 = vpop.xlane.xlu0 %4664
    %v4666 = vmax.f32 %v4600, %v4601
    %v4667 = vmax.f32 %v4666, %v4602
    %v4668 = vmax.f32 %v4667, %v4603
    %4669 = vmax.xlane.f32.xlu0 %v4668
    %v4670 = vpop.xlane.xlu0 %4669
    %v4671 = vmax.f32 %v4604, %v4605
    %v4672 = vmax.f32 %v4671, %v4606
    %v4673 = vmax.f32 %v4672, %v4607
    %4674 = vmax.xlane.f32.xlu0 %v4673
    %v4675 = vpop.xlane.xlu0 %4674
    %v4676 = vmax.f32 %v4608, %v4609
    %v4677 = vmax.f32 %v4676, %v4610
    %v4678 = vmax.f32 %v4677, %v4611
    %4679 = vmax.xlane.f32.xlu0 %v4678
    %v4680 = vpop.xlane.xlu0 %4679
    %v4681 = vmax.f32 %v4612, %v4613
    %v4682 = vmax.f32 %v4681, %v4614
    %v4683 = vmax.f32 %v4682, %v4615
    %4684 = vmax.xlane.f32.xlu0 %v4683
    %v4685 = vpop.xlane.xlu0 %4684
    %v4686 = vmax.f32 %v4616, %v4617
    %v4687 = vmax.f32 %v4686, %v4618
    %v4688 = vmax.f32 %v4687, %v4619
    %4689 = vmax.xlane.f32.xlu0 %v4688
    %v4690 = vpop.xlane.xlu0 %4689
    %v4691 = vmax.f32 %v4620, %v4621
    %v4692 = vmax.f32 %v4691, %v4622
    %v4693 = vmax.f32 %v4692, %v4623
    %4694 = vmax.xlane.f32.xlu0 %v4693
    %v4695 = vpop.xlane.xlu0 %4694
    %v4696 = vmax.f32 %v4624, %v4625
    %v4697 = vmax.f32 %v4696, %v4626
    %v4698 = vmax.f32 %v4697, %v4627
    %4699 = vmax.xlane.f32.xlu0 %v4698
    %v4700 = vpop.xlane.xlu0 %4699
    %v4701 = vmax.f32 %v4628, %v4629
    %v4702 = vmax.f32 %v4701, %v4630
    %v4703 = vmax.f32 %v4702, %v4631
    %4704 = vmax.xlane.f32.xlu0 %v4703
    %v4705 = vpop.xlane.xlu0 %4704
    %v4706 = vmax.f32 %v4632, %v4633
    %v4707 = vmax.f32 %v4706, %v4634
    %v4708 = vmax.f32 %v4707, %v4635
    %4709 = vmax.xlane.f32.xlu0 %v4708
    %v4710 = vpop.xlane.xlu0 %4709
    %v4711 = vmax.f32 %v4636, %v4637
    %v4712 = vmax.f32 %v4711, %v4638
    %v4713 = vmax.f32 %v4712, %v4639
    %4714 = vmax.xlane.f32.xlu0 %v4713
    %v4715 = vpop.xlane.xlu0 %4714
    %v4716 = vmax.f32 %v4640, %v4641
    %v4717 = vmax.f32 %v4716, %v4642
    %v4718 = vmax.f32 %v4717, %v4643
    %4719 = vmax.xlane.f32.xlu0 %v4718
    %v4720 = vpop.xlane.xlu0 %4719
    %v4721 = vmax.f32 %v4644, %v4645
    %v4722 = vmax.f32 %v4721, %v4646
    %v4723 = vmax.f32 %v4722, %v4647
    %4724 = vmax.xlane.f32.xlu0 %v4723
    %v4725 = vpop.xlane.xlu0 %4724
    %v4726 = vmax.f32 %v4648, %v4649
    %v4727 = vmax.f32 %v4726, %v4650
    %v4728 = vmax.f32 %v4727, %v4651
    %4729 = vmax.xlane.f32.xlu0 %v4728
    %v4730 = vpop.xlane.xlu0 %4729
    %v4731 = vmax.f32 %v4652, %v4653
    %v4732 = vmax.f32 %v4731, %v4654
    %v4733 = vmax.f32 %v4732, %v4655
    %4734 = vmax.xlane.f32.xlu0 %v4733
    %v4735 = vpop.xlane.xlu0 %4734
    %v4736 = vsub.f32 %v4592, %v4660
    %v4737 = vsub.f32 %v4593, %v4660
    %v4738 = vsub.f32 %v4594, %v4660
    %v4739 = vsub.f32 %v4595, %v4660
    %v4740 = vsub.f32 %v4596, %v4665
    %v4741 = vsub.f32 %v4597, %v4665
    %v4742 = vsub.f32 %v4598, %v4665
    %v4743 = vsub.f32 %v4599, %v4665
    %v4744 = vsub.f32 %v4600, %v4670
    %v4745 = vsub.f32 %v4601, %v4670
    %v4746 = vsub.f32 %v4602, %v4670
    %v4747 = vsub.f32 %v4603, %v4670
    %v4748 = vsub.f32 %v4604, %v4675
    %v4749 = vsub.f32 %v4605, %v4675
    %v4750 = vsub.f32 %v4606, %v4675
    %v4751 = vsub.f32 %v4607, %v4675
    %v4752 = vsub.f32 %v4608, %v4680
    %v4753 = vsub.f32 %v4609, %v4680
    %v4754 = vsub.f32 %v4610, %v4680
    %v4755 = vsub.f32 %v4611, %v4680
    %v4756 = vsub.f32 %v4612, %v4685
    %v4757 = vsub.f32 %v4613, %v4685
    %v4758 = vsub.f32 %v4614, %v4685
    %v4759 = vsub.f32 %v4615, %v4685
    %v4760 = vsub.f32 %v4616, %v4690
    %v4761 = vsub.f32 %v4617, %v4690
    %v4762 = vsub.f32 %v4618, %v4690
    %v4763 = vsub.f32 %v4619, %v4690
    %v4764 = vsub.f32 %v4620, %v4695
    %v4765 = vsub.f32 %v4621, %v4695
    %v4766 = vsub.f32 %v4622, %v4695
    %v4767 = vsub.f32 %v4623, %v4695
    %v4768 = vsub.f32 %v4624, %v4700
    %v4769 = vsub.f32 %v4625, %v4700
    %v4770 = vsub.f32 %v4626, %v4700
    %v4771 = vsub.f32 %v4627, %v4700
    %v4772 = vsub.f32 %v4628, %v4705
    %v4773 = vsub.f32 %v4629, %v4705
    %v4774 = vsub.f32 %v4630, %v4705
    %v4775 = vsub.f32 %v4631, %v4705
    %v4776 = vsub.f32 %v4632, %v4710
    %v4777 = vsub.f32 %v4633, %v4710
    %v4778 = vsub.f32 %v4634, %v4710
    %v4779 = vsub.f32 %v4635, %v4710
    %v4780 = vsub.f32 %v4636, %v4715
    %v4781 = vsub.f32 %v4637, %v4715
    %v4782 = vsub.f32 %v4638, %v4715
    %v4783 = vsub.f32 %v4639, %v4715
    %v4784 = vsub.f32 %v4640, %v4720
    %v4785 = vsub.f32 %v4641, %v4720
    %v4786 = vsub.f32 %v4642, %v4720
    %v4787 = vsub.f32 %v4643, %v4720
    %v4788 = vsub.f32 %v4644, %v4725
    %v4789 = vsub.f32 %v4645, %v4725
    %v4790 = vsub.f32 %v4646, %v4725
    %v4791 = vsub.f32 %v4647, %v4725
    %v4792 = vsub.f32 %v4648, %v4730
    %v4793 = vsub.f32 %v4649, %v4730
    %v4794 = vsub.f32 %v4650, %v4730
    %v4795 = vsub.f32 %v4651, %v4730
    %v4796 = vsub.f32 %v4652, %v4735
    %v4797 = vsub.f32 %v4653, %v4735
    %v4798 = vsub.f32 %v4654, %v4735
    %v4799 = vsub.f32 %v4655, %v4735
    %v4800 = vmul.f32 %v4736, 1.442695
    %v4801 = vpow.pop %v4800
    %v4802 = vmul.f32 %v4737, 1.442695
    %v4803 = vpow.pop %v4802
    %v4804 = vmul.f32 %v4738, 1.442695
    %v4805 = vpow.pop %v4804
    %v4806 = vmul.f32 %v4739, 1.442695
    %v4807 = vpow.pop %v4806
    %v4808 = vmul.f32 %v4740, 1.442695
    %v4809 = vpow.pop %v4808
    %v4810 = vmul.f32 %v4741, 1.442695
    %v4811 = vpow.pop %v4810
    %v4812 = vmul.f32 %v4742, 1.442695
    %v4813 = vpow.pop %v4812
    %v4814 = vmul.f32 %v4743, 1.442695
    %v4815 = vpow.pop %v4814
    %v4816 = vmul.f32 %v4744, 1.442695
    %v4817 = vpow.pop %v4816
    %v4818 = vmul.f32 %v4745, 1.442695
    %v4819 = vpow.pop %v4818
    %v4820 = vmul.f32 %v4746, 1.442695
    %v4821 = vpow.pop %v4820
    %v4822 = vmul.f32 %v4747, 1.442695
    %v4823 = vpow.pop %v4822
    %v4824 = vmul.f32 %v4748, 1.442695
    %v4825 = vpow.pop %v4824
    %v4826 = vmul.f32 %v4749, 1.442695
    %v4827 = vpow.pop %v4826
    %v4828 = vmul.f32 %v4750, 1.442695
    %v4829 = vpow.pop %v4828
    %v4830 = vmul.f32 %v4751, 1.442695
    %v4831 = vpow.pop %v4830
    %v4832 = vmul.f32 %v4752, 1.442695
    %v4833 = vpow.pop %v4832
    %v4834 = vmul.f32 %v4753, 1.442695
    %v4835 = vpow.pop %v4834
    %v4836 = vmul.f32 %v4754, 1.442695
    %v4837 = vpow.pop %v4836
    %v4838 = vmul.f32 %v4755, 1.442695
    %v4839 = vpow.pop %v4838
    %v4840 = vmul.f32 %v4756, 1.442695
    %v4841 = vpow.pop %v4840
    %v4842 = vmul.f32 %v4757, 1.442695
    %v4843 = vpow.pop %v4842
    %v4844 = vmul.f32 %v4758, 1.442695
    %v4845 = vpow.pop %v4844
    %v4846 = vmul.f32 %v4759, 1.442695
    %v4847 = vpow.pop %v4846
    %v4848 = vmul.f32 %v4760, 1.442695
    %v4849 = vpow.pop %v4848
    %v4850 = vmul.f32 %v4761, 1.442695
    %v4851 = vpow.pop %v4850
    %v4852 = vmul.f32 %v4762, 1.442695
    %v4853 = vpow.pop %v4852
    %v4854 = vmul.f32 %v4763, 1.442695
    %v4855 = vpow.pop %v4854
    %v4856 = vmul.f32 %v4764, 1.442695
    %v4857 = vpow.pop %v4856
    %v4858 = vmul.f32 %v4765, 1.442695
    %v4859 = vpow.pop %v4858
    %v4860 = vmul.f32 %v4766, 1.442695
    %v4861 = vpow.pop %v4860
    %v4862 = vmul.f32 %v4767, 1.442695
    %v4863 = vpow.pop %v4862
    %v4864 = vmul.f32 %v4768, 1.442695
    %v4865 = vpow.pop %v4864
    %v4866 = vmul.f32 %v4769, 1.442695
    %v4867 = vpow.pop %v4866
    %v4868 = vmul.f32 %v4770, 1.442695
    %v4869 = vpow.pop %v4868
    %v4870 = vmul.f32 %v4771, 1.442695
    %v4871 = vpow.pop %v4870
    %v4872 = vmul.f32 %v4772, 1.442695
    %v4873 = vpow.pop %v4872
    %v4874 = vmul.f32 %v4773, 1.442695
    %v4875 = vpow.pop %v4874
    %v4876 = vmul.f32 %v4774, 1.442695
    %v4877 = vpow.pop %v4876
    %v4878 = vmul.f32 %v4775, 1.442695
    %v4879 = vpow.pop %v4878
    %v4880 = vmul.f32 %v4776, 1.442695
    %v4881 = vpow.pop %v4880
    %v4882 = vmul.f32 %v4777, 1.442695
    %v4883 = vpow.pop %v4882
    %v4884 = vmul.f32 %v4778, 1.442695
    %v4885 = vpow.pop %v4884
    %v4886 = vmul.f32 %v4779, 1.442695
    %v4887 = vpow.pop %v4886
    %v4888 = vmul.f32 %v4780, 1.442695
    %v4889 = vpow.pop %v4888
    %v4890 = vmul.f32 %v4781, 1.442695
    %v4891 = vpow.pop %v4890
    %v4892 = vmul.f32 %v4782, 1.442695
    %v4893 = vpow.pop %v4892
    %v4894 = vmul.f32 %v4783, 1.442695
    %v4895 = vpow.pop %v4894
    %v4896 = vmul.f32 %v4784, 1.442695
    %v4897 = vpow.pop %v4896
    %v4898 = vmul.f32 %v4785, 1.442695
    %v4899 = vpow.pop %v4898
    %v4900 = vmul.f32 %v4786, 1.442695
    %v4901 = vpow.pop %v4900
    %v4902 = vmul.f32 %v4787, 1.442695
    %v4903 = vpow.pop %v4902
    %v4904 = vmul.f32 %v4788, 1.442695
    %v4905 = vpow.pop %v4904
    %v4906 = vmul.f32 %v4789, 1.442695
    %v4907 = vpow.pop %v4906
    %v4908 = vmul.f32 %v4790, 1.442695
    %v4909 = vpow.pop %v4908
    %v4910 = vmul.f32 %v4791, 1.442695
    %v4911 = vpow.pop %v4910
    %v4912 = vmul.f32 %v4792, 1.442695
    %v4913 = vpow.pop %v4912
    %v4914 = vmul.f32 %v4793, 1.442695
    %v4915 = vpow.pop %v4914
    %v4916 = vmul.f32 %v4794, 1.442695
    %v4917 = vpow.pop %v4916
    %v4918 = vmul.f32 %v4795, 1.442695
    %v4919 = vpow.pop %v4918
    %v4920 = vmul.f32 %v4796, 1.442695
    %v4921 = vpow.pop %v4920
    %v4922 = vmul.f32 %v4797, 1.442695
    %v4923 = vpow.pop %v4922
    %v4924 = vmul.f32 %v4798, 1.442695
    %v4925 = vpow.pop %v4924
    %v4926 = vmul.f32 %v4799, 1.442695
    %v4927 = vpow.pop %v4926
    %4928 = vst [vmem:[#allocation2] sm:$0xff] %v4801
    %4929 = vst [vmem:[#allocation2 + $0x8] sm:$0xff] %v4803
    %4930 = vst [vmem:[#allocation2 + $0x10] sm:$0xff] %v4805
    %4931 = vst [vmem:[#allocation2 + $0x18] sm:$0xff] %v4807
    %4932 = vst [vmem:[#allocation2 + $0x20] sm:$0xff] %v4809
    %4933 = vst [vmem:[#allocation2 + $0x28] sm:$0xff] %v4811
    %4934 = vst [vmem:[#allocation2 + $0x30] sm:$0xff] %v4813
    %4935 = vst [vmem:[#allocation2 + $0x38] sm:$0xff] %v4815
    %4936 = vst [vmem:[#allocation2 + $0x40] sm:$0xff] %v4817
    %4937 = vst [vmem:[#allocation2 + $0x48] sm:$0xff] %v4819
    %4938 = vst [vmem:[#allocation2 + $0x50] sm:$0xff] %v4821
    %4939 = vst [vmem:[#allocation2 + $0x58] sm:$0xff] %v4823
    %4940 = vst [vmem:[#allocation2 + $0x60] sm:$0xff] %v4825
    %4941 = vst [vmem:[#allocation2 + $0x68] sm:$0xff] %v4827
    %4942 = vst [vmem:[#allocation2 + $0x70] sm:$0xff] %v4829
    %4943 = vst [vmem:[#allocation2 + $0x78] sm:$0xff] %v4831
    %4944 = vst [vmem:[#allocation2 + $0x80] sm:$0xff] %v4833
    %4945 = vst [vmem:[#allocation2 + $0x88] sm:$0xff] %v4835
    %4946 = vst [vmem:[#allocation2 + $0x90] sm:$0xff] %v4837
    %4947 = vst [vmem:[#allocation2 + $0x98] sm:$0xff] %v4839
    %4948 = vst [vmem:[#allocation2 + $0xa0] sm:$0xff] %v4841
    %4949 = vst [vmem:[#allocation2 + $0xa8] sm:$0xff] %v4843
    %4950 = vst [vmem:[#allocation2 + $0xb0] sm:$0xff] %v4845
    %4951 = vst [vmem:[#allocation2 + $0xb8] sm:$0xff] %v4847
    %4952 = vst [vmem:[#allocation2 + $0xc0] sm:$0xff] %v4849
    %4953 = vst [vmem:[#allocation2 + $0xc8] sm:$0xff] %v4851
    %4954 = vst [vmem:[#allocation2 + $0xd0] sm:$0xff] %v4853
    %4955 = vst [vmem:[#allocation2 + $0xd8] sm:$0xff] %v4855
    %4956 = vst [vmem:[#allocation2 + $0xe0] sm:$0xff] %v4857
    %4957 = vst [vmem:[#allocation2 + $0xe8] sm:$0xff] %v4859
    %4958 = vst [vmem:[#allocation2 + $0xf0] sm:$0xff] %v4861
    %4959 = vst [vmem:[#allocation2 + $0xf8] sm:$0xff] %v4863
    %4960 = vst [vmem:[#allocation2 + $0x100] sm:$0xff] %v4865
    %4961 = vst [vmem:[#allocation2 + $0x108] sm:$0xff] %v4867
    %4962 = vst [vmem:[#allocation2 + $0x110] sm:$0xff] %v4869
    %4963 = vst [vmem:[#allocation2 + $0x118] sm:$0xff] %v4871
    %4964 = vst [vmem:[#allocation2 + $0x120] sm:$0xff] %v4873
    %4965 = vst [vmem:[#allocation2 + $0x128] sm:$0xff] %v4875
    %4966 = vst [vmem:[#allocation2 + $0x130] sm:$0xff] %v4877
    %4967 = vst [vmem:[#allocation2 + $0x138] sm:$0xff] %v4879
    %4968 = vst [vmem:[#allocation2 + $0x140] sm:$0xff] %v4881
    %4969 = vst [vmem:[#allocation2 + $0x148] sm:$0xff] %v4883
    %4970 = vst [vmem:[#allocation2 + $0x150] sm:$0xff] %v4885
    %4971 = vst [vmem:[#allocation2 + $0x158] sm:$0xff] %v4887
    %4972 = vst [vmem:[#allocation2 + $0x160] sm:$0xff] %v4889
    %4973 = vst [vmem:[#allocation2 + $0x168] sm:$0xff] %v4891
    %4974 = vst [vmem:[#allocation2 + $0x170] sm:$0xff] %v4893
    %4975 = vst [vmem:[#allocation2 + $0x178] sm:$0xff] %v4895
    %4976 = vst [vmem:[#allocation2 + $0x180] sm:$0xff] %v4897
    %4977 = vst [vmem:[#allocation2 + $0x188] sm:$0xff] %v4899
    %4978 = vst [vmem:[#allocation2 + $0x190] sm:$0xff] %v4901
    %4979 = vst [vmem:[#allocation2 + $0x198] sm:$0xff] %v4903
    %4980 = vst [vmem:[#allocation2 + $0x1a0] sm:$0xff] %v4905
    %4981 = vst [vmem:[#allocation2 + $0x1a8] sm:$0xff] %v4907
    %4982 = vst [vmem:[#allocation2 + $0x1b0] sm:$0xff] %v4909
    %4983 = vst [vmem:[#allocation2 + $0x1b8] sm:$0xff] %v4911
    %4984 = vst [vmem:[#allocation2 + $0x1c0] sm:$0xff] %v4913
    %4985 = vst [vmem:[#allocation2 + $0x1c8] sm:$0xff] %v4915
    %4986 = vst [vmem:[#allocation2 + $0x1d0] sm:$0xff] %v4917
    %4987 = vst [vmem:[#allocation2 + $0x1d8] sm:$0xff] %v4919
    %4988 = vst [vmem:[#allocation2 + $0x1e0] sm:$0xff] %v4921
    %4989 = vst [vmem:[#allocation2 + $0x1e8] sm:$0xff] %v4923
    %4990 = vst [vmem:[#allocation2 + $0x1f0] sm:$0xff] %v4925
    %4991 = vst [vmem:[#allocation2 + $0x1f8] sm:$0xff] %v4927
    %v4992 = vld [vmem:[#allocation2] sm:$0xff]
    %v4993 = vld [vmem:[#allocation2 + $0x20] sm:$0xff]
    %v4994 = vld [vmem:[#allocation2 + $0x40] sm:$0xff]
    %v4995 = vld [vmem:[#allocation2 + $0x60] sm:$0xff]
    %v4996 = vld [vmem:[#allocation2 + $0x80] sm:$0xff]
    %v4997 = vld [vmem:[#allocation2 + $0xa0] sm:$0xff]
    %v4998 = vld [vmem:[#allocation2 + $0xc0] sm:$0xff]
    %v4999 = vld [vmem:[#allocation2 + $0xe0] sm:$0xff]
    %v5000 = vld [vmem:[#allocation2 + $0x100] sm:$0xff]
    %v5001 = vld [vmem:[#allocation2 + $0x120] sm:$0xff]
    %v5002 = vld [vmem:[#allocation2 + $0x140] sm:$0xff]
    %v5003 = vld [vmem:[#allocation2 + $0x160] sm:$0xff]
    %v5004 = vld [vmem:[#allocation2 + $0x180] sm:$0xff]
    %v5005 = vld [vmem:[#allocation2 + $0x1a0] sm:$0xff]
    %v5006 = vld [vmem:[#allocation2 + $0x1c0] sm:$0xff]
    %v5007 = vld [vmem:[#allocation2 + $0x1e0] sm:$0xff]
    %5008 = vadd.xlane.f32.xlu0 %v4992
    %v5009 = vpop.xlane.xlu0 %5008
    %5010 = vadd.xlane.f32.xlu0 %v4993
    %v5011 = vpop.xlane.xlu0 %5010
    %5012 = vadd.xlane.f32.xlu0 %v4994
    %v5013 = vpop.xlane.xlu0 %5012
    %5014 = vadd.xlane.f32.xlu0 %v4995
    %v5015 = vpop.xlane.xlu0 %5014
    %5016 = vadd.xlane.f32.xlu0 %v4996
    %v5017 = vpop.xlane.xlu0 %5016
    %5018 = vadd.xlane.f32.xlu0 %v4997
    %v5019 = vpop.xlane.xlu0 %5018
    %5020 = vadd.xlane.f32.xlu0 %v4998
    %v5021 = vpop.xlane.xlu0 %5020
    %5022 = vadd.xlane.f32.xlu0 %v4999
    %v5023 = vpop.xlane.xlu0 %5022
    %5024 = vadd.xlane.f32.xlu0 %v5000
    %v5025 = vpop.xlane.xlu0 %5024
    %5026 = vadd.xlane.f32.xlu0 %v5001
    %v5027 = vpop.xlane.xlu0 %5026
    %5028 = vadd.xlane.f32.xlu0 %v5002
    %v5029 = vpop.xlane.xlu0 %5028
    %5030 = vadd.xlane.f32.xlu0 %v5003
    %v5031 = vpop.xlane.xlu0 %5030
    %5032 = vadd.xlane.f32.xlu0 %v5004
    %v5033 = vpop.xlane.xlu0 %5032
    %5034 = vadd.xlane.f32.xlu0 %v5005
    %v5035 = vpop.xlane.xlu0 %5034
    %5036 = vadd.xlane.f32.xlu0 %v5006
    %v5037 = vpop.xlane.xlu0 %5036
    %5038 = vadd.xlane.f32.xlu0 %v5007
    %v5039 = vpop.xlane.xlu0 %5038
    %v5040 = vrcp.pop %v5009
    %v5041 = vmul.f32 1.0, %v5040
    %v5042 = vrcp.pop %v5011
    %v5043 = vmul.f32 1.0, %v5042
    %v5044 = vrcp.pop %v5013
    %v5045 = vmul.f32 1.0, %v5044
    %v5046 = vrcp.pop %v5015
    %v5047 = vmul.f32 1.0, %v5046
    %v5048 = vrcp.pop %v5017
    %v5049 = vmul.f32 1.0, %v5048
    %v5050 = vrcp.pop %v5019
    %v5051 = vmul.f32 1.0, %v5050
    %v5052 = vrcp.pop %v5021
    %v5053 = vmul.f32 1.0, %v5052
    %v5054 = vrcp.pop %v5023
    %v5055 = vmul.f32 1.0, %v5054
    %v5056 = vrcp.pop %v5025
    %v5057 = vmul.f32 1.0, %v5056
    %v5058 = vrcp.pop %v5027
    %v5059 = vmul.f32 1.0, %v5058
    %v5060 = vrcp.pop %v5029
    %v5061 = vmul.f32 1.0, %v5060
    %v5062 = vrcp.pop %v5031
    %v5063 = vmul.f32 1.0, %v5062
    %v5064 = vrcp.pop %v5033
    %v5065 = vmul.f32 1.0, %v5064
    %v5066 = vrcp.pop %v5035
    %v5067 = vmul.f32 1.0, %v5066
    %v5068 = vrcp.pop %v5037
    %v5069 = vmul.f32 1.0, %v5068
    %v5070 = vrcp.pop %v5039
    %v5071 = vmul.f32 1.0, %v5070
    %v5072 = vmul.f32 %v5041, %v573
    %v5073 = vmul.f32 %v5043, %v573
    %v5074 = vmul.f32 %v5045, %v573
    %v5075 = vmul.f32 %v5047, %v573
    %v5076 = vmul.f32 %v5049, %v573
    %v5077 = vmul.f32 %v5051, %v573
    %v5078 = vmul.f32 %v5053, %v573
    %v5079 = vmul.f32 %v5055, %v573
    %v5080 = vmul.f32 %v5057, %v573
    %v5081 = vmul.f32 %v5059, %v573
    %v5082 = vmul.f32 %v5061, %v573
    %v5083 = vmul.f32 %v5063, %v573
    %v5084 = vmul.f32 %v5065, %v573
    %v5085 = vmul.f32 %v5067, %v573
    %v5086 = vmul.f32 %v5069, %v573
    %v5087 = vmul.f32 %v5071, %v573
    %v5088 = vld [vmem:[#allocation2 + $0x8] sm:$0xff]
    %v5089 = vld [vmem:[#allocation2 + $0x28] sm:$0xff]
    %v5090 = vld [vmem:[#allocation2 + $0x48] sm:$0xff]
    %v5091 = vld [vmem:[#allocation2 + $0x68] sm:$0xff]
    %v5092 = vld [vmem:[#allocation2 + $0x88] sm:$0xff]
    %v5093 = vld [vmem:[#allocation2 + $0xa8] sm:$0xff]
    %v5094 = vld [vmem:[#allocation2 + $0xc8] sm:$0xff]
    %v5095 = vld [vmem:[#allocation2 + $0xe8] sm:$0xff]
    %v5096 = vld [vmem:[#allocation2 + $0x108] sm:$0xff]
    %v5097 = vld [vmem:[#allocation2 + $0x128] sm:$0xff]
    %v5098 = vld [vmem:[#allocation2 + $0x148] sm:$0xff]
    %v5099 = vld [vmem:[#allocation2 + $0x168] sm:$0xff]
    %v5100 = vld [vmem:[#allocation2 + $0x188] sm:$0xff]
    %v5101 = vld [vmem:[#allocation2 + $0x1a8] sm:$0xff]
    %v5102 = vld [vmem:[#allocation2 + $0x1c8] sm:$0xff]
    %v5103 = vld [vmem:[#allocation2 + $0x1e8] sm:$0xff]
    %5104 = vadd.xlane.f32.xlu0 %v5088
    %v5105 = vpop.xlane.xlu0 %5104
    %5106 = vadd.xlane.f32.xlu0 %v5089
    %v5107 = vpop.xlane.xlu0 %5106
    %5108 = vadd.xlane.f32.xlu0 %v5090
    %v5109 = vpop.xlane.xlu0 %5108
    %5110 = vadd.xlane.f32.xlu0 %v5091
    %v5111 = vpop.xlane.xlu0 %5110
    %5112 = vadd.xlane.f32.xlu0 %v5092
    %v5113 = vpop.xlane.xlu0 %5112
    %5114 = vadd.xlane.f32.xlu0 %v5093
    %v5115 = vpop.xlane.xlu0 %5114
    %5116 = vadd.xlane.f32.xlu0 %v5094
    %v5117 = vpop.xlane.xlu0 %5116
    %5118 = vadd.xlane.f32.xlu0 %v5095
    %v5119 = vpop.xlane.xlu0 %5118
    %5120 = vadd.xlane.f32.xlu0 %v5096
    %v5121 = vpop.xlane.xlu0 %5120
    %5122 = vadd.xlane.f32.xlu0 %v5097
    %v5123 = vpop.xlane.xlu0 %5122
    %5124 = vadd.xlane.f32.xlu0 %v5098
    %v5125 = vpop.xlane.xlu0 %5124
    %5126 = vadd.xlane.f32.xlu0 %v5099
    %v5127 = vpop.xlane.xlu0 %5126
    %5128 = vadd.xlane.f32.xlu0 %v5100
    %v5129 = vpop.xlane.xlu0 %5128
    %5130 = vadd.xlane.f32.xlu0 %v5101
    %v5131 = vpop.xlane.xlu0 %5130
    %5132 = vadd.xlane.f32.xlu0 %v5102
    %v5133 = vpop.xlane.xlu0 %5132
    %5134 = vadd.xlane.f32.xlu0 %v5103
    %v5135 = vpop.xlane.xlu0 %5134
    %v5136 = vrcp.pop %v5105
    %v5137 = vmul.f32 1.0, %v5136
    %v5138 = vrcp.pop %v5107
    %v5139 = vmul.f32 1.0, %v5138
    %v5140 = vrcp.pop %v5109
    %v5141 = vmul.f32 1.0, %v5140
    %v5142 = vrcp.pop %v5111
    %v5143 = vmul.f32 1.0, %v5142
    %v5144 = vrcp.pop %v5113
    %v5145 = vmul.f32 1.0, %v5144
    %v5146 = vrcp.pop %v5115
    %v5147 = vmul.f32 1.0, %v5146
    %v5148 = vrcp.pop %v5117
    %v5149 = vmul.f32 1.0, %v5148
    %v5150 = vrcp.pop %v5119
    %v5151 = vmul.f32 1.0, %v5150
    %v5152 = vrcp.pop %v5121
    %v5153 = vmul.f32 1.0, %v5152
    %v5154 = vrcp.pop %v5123
    %v5155 = vmul.f32 1.0, %v5154
    %v5156 = vrcp.pop %v5125
    %v5157 = vmul.f32 1.0, %v5156
    %v5158 = vrcp.pop %v5127
    %v5159 = vmul.f32 1.0, %v5158
    %v5160 = vrcp.pop %v5129
    %v5161 = vmul.f32 1.0, %v5160
    %v5162 = vrcp.pop %v5131
    %v5163 = vmul.f32 1.0, %v5162
    %v5164 = vrcp.pop %v5133
    %v5165 = vmul.f32 1.0, %v5164
    %v5166 = vrcp.pop %v5135
    %v5167 = vmul.f32 1.0, %v5166
    %v5168 = vmul.f32 %v5137, %v773
    %v5169 = vmul.f32 %v5139, %v773
    %v5170 = vmul.f32 %v5141, %v773
    %v5171 = vmul.f32 %v5143, %v773
    %v5172 = vmul.f32 %v5145, %v773
    %v5173 = vmul.f32 %v5147, %v773
    %v5174 = vmul.f32 %v5149, %v773
    %v5175 = vmul.f32 %v5151, %v773
    %v5176 = vmul.f32 %v5153, %v773
    %v5177 = vmul.f32 %v5155, %v773
    %v5178 = vmul.f32 %v5157, %v773
    %v5179 = vmul.f32 %v5159, %v773
    %v5180 = vmul.f32 %v5161, %v773
    %v5181 = vmul.f32 %v5163, %v773
    %v5182 = vmul.f32 %v5165, %v773
    %v5183 = vmul.f32 %v5167, %v773
    %v5184 = vadd.f32 %v5072, %v5168
    %v5185 = vadd.f32 %v5073, %v5169
    %v5186 = vadd.f32 %v5074, %v5170
    %v5187 = vadd.f32 %v5075, %v5171
    %v5188 = vadd.f32 %v5076, %v5172
    %v5189 = vadd.f32 %v5077, %v5173
    %v5190 = vadd.f32 %v5078, %v5174
    %v5191 = vadd.f32 %v5079, %v5175
    %v5192 = vadd.f32 %v5080, %v5176
    %v5193 = vadd.f32 %v5081, %v5177
    %v5194 = vadd.f32 %v5082, %v5178
    %v5195 = vadd.f32 %v5083, %v5179
    %v5196 = vadd.f32 %v5084, %v5180
    %v5197 = vadd.f32 %v5085, %v5181
    %v5198 = vadd.f32 %v5086, %v5182
    %v5199 = vadd.f32 %v5087, %v5183
    %v5200 = vld [vmem:[#allocation2 + $0x10] sm:$0xff]
    %v5201 = vld [vmem:[#allocation2 + $0x30] sm:$0xff]
    %v5202 = vld [vmem:[#allocation2 + $0x50] sm:$0xff]
    %v5203 = vld [vmem:[#allocation2 + $0x70] sm:$0xff]
    %v5204 = vld [vmem:[#allocation2 + $0x90] sm:$0xff]
    %v5205 = vld [vmem:[#allocation2 + $0xb0] sm:$0xff]
    %v5206 = vld [vmem:[#allocation2 + $0xd0] sm:$0xff]
    %v5207 = vld [vmem:[#allocation2 + $0xf0] sm:$0xff]
    %v5208 = vld [vmem:[#allocation2 + $0x110] sm:$0xff]
    %v5209 = vld [vmem:[#allocation2 + $0x130] sm:$0xff]
    %v5210 = vld [vmem:[#allocation2 + $0x150] sm:$0xff]
    %v5211 = vld [vmem:[#allocation2 + $0x170] sm:$0xff]
    %v5212 = vld [vmem:[#allocation2 + $0x190] sm:$0xff]
    %v5213 = vld [vmem:[#allocation2 + $0x1b0] sm:$0xff]
    %v5214 = vld [vmem:[#allocation2 + $0x1d0] sm:$0xff]
    %v5215 = vld [vmem:[#allocation2 + $0x1f0] sm:$0xff]
    %5216 = vadd.xlane.f32.xlu0 %v5200
    %v5217 = vpop.xlane.xlu0 %5216
    %5218 = vadd.xlane.f32.xlu0 %v5201
    %v5219 = vpop.xlane.xlu0 %5218
    %5220 = vadd.xlane.f32.xlu0 %v5202
    %v5221 = vpop.xlane.xlu0 %5220
    %5222 = vadd.xlane.f32.xlu0 %v5203
    %v5223 = vpop.xlane.xlu0 %5222
    %5224 = vadd.xlane.f32.xlu0 %v5204
    %v5225 = vpop.xlane.xlu0 %5224
    %5226 = vadd.xlane.f32.xlu0 %v5205
    %v5227 = vpop.xlane.xlu0 %5226
    %5228 = vadd.xlane.f32.xlu0 %v5206
    %v5229 = vpop.xlane.xlu0 %5228
    %5230 = vadd.xlane.f32.xlu0 %v5207
    %v5231 = vpop.xlane.xlu0 %5230
    %5232 = vadd.xlane.f32.xlu0 %v5208
    %v5233 = vpop.xlane.xlu0 %5232
    %5234 = vadd.xlane.f32.xlu0 %v5209
    %v5235 = vpop.xlane.xlu0 %5234
    %5236 = vadd.xlane.f32.xlu0 %v5210
    %v5237 = vpop.xlane.xlu0 %5236
    %5238 = vadd.xlane.f32.xlu0 %v5211
    %v5239 = vpop.xlane.xlu0 %5238
    %5240 = vadd.xlane.f32.xlu0 %v5212
    %v5241 = vpop.xlane.xlu0 %5240
    %5242 = vadd.xlane.f32.xlu0 %v5213
    %v5243 = vpop.xlane.xlu0 %5242
    %5244 = vadd.xlane.f32.xlu0 %v5214
    %v5245 = vpop.xlane.xlu0 %5244
    %5246 = vadd.xlane.f32.xlu0 %v5215
    %v5247 = vpop.xlane.xlu0 %5246
    %v5248 = vrcp.pop %v5217
    %v5249 = vmul.f32 1.0, %v5248
    %v5250 = vrcp.pop %v5219
    %v5251 = vmul.f32 1.0, %v5250
    %v5252 = vrcp.pop %v5221
    %v5253 = vmul.f32 1.0, %v5252
    %v5254 = vrcp.pop %v5223
    %v5255 = vmul.f32 1.0, %v5254
    %v5256 = vrcp.pop %v5225
    %v5257 = vmul.f32 1.0, %v5256
    %v5258 = vrcp.pop %v5227
    %v5259 = vmul.f32 1.0, %v5258
    %v5260 = vrcp.pop %v5229
    %v5261 = vmul.f32 1.0, %v5260
    %v5262 = vrcp.pop %v5231
    %v5263 = vmul.f32 1.0, %v5262
    %v5264 = vrcp.pop %v5233
    %v5265 = vmul.f32 1.0, %v5264
    %v5266 = vrcp.pop %v5235
    %v5267 = vmul.f32 1.0, %v5266
    %v5268 = vrcp.pop %v5237
    %v5269 = vmul.f32 1.0, %v5268
    %v5270 = vrcp.pop %v5239
    %v5271 = vmul.f32 1.0, %v5270
    %v5272 = vrcp.pop %v5241
    %v5273 = vmul.f32 1.0, %v5272
    %v5274 = vrcp.pop %v5243
    %v5275 = vmul.f32 1.0, %v5274
    %v5276 = vrcp.pop %v5245
    %v5277 = vmul.f32 1.0, %v5276
    %v5278 = vrcp.pop %v5247
    %v5279 = vmul.f32 1.0, %v5278
    %v5280 = vmul.f32 %v5249, %v973
    %v5281 = vmul.f32 %v5251, %v973
    %v5282 = vmul.f32 %v5253, %v973
    %v5283 = vmul.f32 %v5255, %v973
    %v5284 = vmul.f32 %v5257, %v973
    %v5285 = vmul.f32 %v5259, %v973
    %v5286 = vmul.f32 %v5261, %v973
    %v5287 = vmul.f32 %v5263, %v973
    %v5288 = vmul.f32 %v5265, %v973
    %v5289 = vmul.f32 %v5267, %v973
    %v5290 = vmul.f32 %v5269, %v973
    %v5291 = vmul.f32 %v5271, %v973
    %v5292 = vmul.f32 %v5273, %v973
    %v5293 = vmul.f32 %v5275, %v973
    %v5294 = vmul.f32 %v5277, %v973
    %v5295 = vmul.f32 %v5279, %v973
    %v5296 = vadd.f32 %v5184, %v5280
    %v5297 = vadd.f32 %v5185, %v5281
    %v5298 = vadd.f32 %v5186, %v5282
    %v5299 = vadd.f32 %v5187, %v5283
    %v5300 = vadd.f32 %v5188, %v5284
    %v5301 = vadd.f32 %v5189, %v5285
    %v5302 = vadd.f32 %v5190, %v5286
    %v5303 = vadd.f32 %v5191, %v5287
    %v5304 = vadd.f32 %v5192, %v5288
    %v5305 = vadd.f32 %v5193, %v5289
    %v5306 = vadd.f32 %v5194, %v5290
    %v5307 = vadd.f32 %v5195, %v5291
    %v5308 = vadd.f32 %v5196, %v5292
    %v5309 = vadd.f32 %v5197, %v5293
    %v5310 = vadd.f32 %v5198, %v5294
    %v5311 = vadd.f32 %v5199, %v5295
    %v5312 = vld [vmem:[#allocation2 + $0x18] sm:$0xff]
    %v5313 = vld [vmem:[#allocation2 + $0x38] sm:$0xff]
    %v5314 = vld [vmem:[#allocation2 + $0x58] sm:$0xff]
    %v5315 = vld [vmem:[#allocation2 + $0x78] sm:$0xff]
    %v5316 = vld [vmem:[#allocation2 + $0x98] sm:$0xff]
    %v5317 = vld [vmem:[#allocation2 + $0xb8] sm:$0xff]
    %v5318 = vld [vmem:[#allocation2 + $0xd8] sm:$0xff]
    %v5319 = vld [vmem:[#allocation2 + $0xf8] sm:$0xff]
    %v5320 = vld [vmem:[#allocation2 + $0x118] sm:$0xff]
    %v5321 = vld [vmem:[#allocation2 + $0x138] sm:$0xff]
    %v5322 = vld [vmem:[#allocation2 + $0x158] sm:$0xff]
    %v5323 = vld [vmem:[#allocation2 + $0x178] sm:$0xff]
    %v5324 = vld [vmem:[#allocation2 + $0x198] sm:$0xff]
    %v5325 = vld [vmem:[#allocation2 + $0x1b8] sm:$0xff]
    %v5326 = vld [vmem:[#allocation2 + $0x1d8] sm:$0xff]
    %v5327 = vld [vmem:[#allocation2 + $0x1f8] sm:$0xff]
    %5328 = vadd.xlane.f32.xlu0 %v5312
    %v5329 = vpop.xlane.xlu0 %5328
    %5330 = vadd.xlane.f32.xlu0 %v5313
    %v5331 = vpop.xlane.xlu0 %5330
    %5332 = vadd.xlane.f32.xlu0 %v5314
    %v5333 = vpop.xlane.xlu0 %5332
    %5334 = vadd.xlane.f32.xlu0 %v5315
    %v5335 = vpop.xlane.xlu0 %5334
    %5336 = vadd.xlane.f32.xlu0 %v5316
    %v5337 = vpop.xlane.xlu0 %5336
    %5338 = vadd.xlane.f32.xlu0 %v5317
    %v5339 = vpop.xlane.xlu0 %5338
    %5340 = vadd.xlane.f32.xlu0 %v5318
    %v5341 = vpop.xlane.xlu0 %5340
    %5342 = vadd.xlane.f32.xlu0 %v5319
    %v5343 = vpop.xlane.xlu0 %5342
    %5344 = vadd.xlane.f32.xlu0 %v5320
    %v5345 = vpop.xlane.xlu0 %5344
    %5346 = vadd.xlane.f32.xlu0 %v5321
    %v5347 = vpop.xlane.xlu0 %5346
    %5348 = vadd.xlane.f32.xlu0 %v5322
    %v5349 = vpop.xlane.xlu0 %5348
    %5350 = vadd.xlane.f32.xlu0 %v5323
    %v5351 = vpop.xlane.xlu0 %5350
    %5352 = vadd.xlane.f32.xlu0 %v5324
    %v5353 = vpop.xlane.xlu0 %5352
    %5354 = vadd.xlane.f32.xlu0 %v5325
    %v5355 = vpop.xlane.xlu0 %5354
    %5356 = vadd.xlane.f32.xlu0 %v5326
    %v5357 = vpop.xlane.xlu0 %5356
    %5358 = vadd.xlane.f32.xlu0 %v5327
    %v5359 = vpop.xlane.xlu0 %5358
    %v5360 = vrcp.pop %v5329
    %v5361 = vmul.f32 1.0, %v5360
    %v5362 = vrcp.pop %v5331
    %v5363 = vmul.f32 1.0, %v5362
    %v5364 = vrcp.pop %v5333
    %v5365 = vmul.f32 1.0, %v5364
    %v5366 = vrcp.pop %v5335
    %v5367 = vmul.f32 1.0, %v5366
    %v5368 = vrcp.pop %v5337
    %v5369 = vmul.f32 1.0, %v5368
    %v5370 = vrcp.pop %v5339
    %v5371 = vmul.f32 1.0, %v5370
    %v5372 = vrcp.pop %v5341
    %v5373 = vmul.f32 1.0, %v5372
    %v5374 = vrcp.pop %v5343
    %v5375 = vmul.f32 1.0, %v5374
    %v5376 = vrcp.pop %v5345
    %v5377 = vmul.f32 1.0, %v5376
    %v5378 = vrcp.pop %v5347
    %v5379 = vmul.f32 1.0, %v5378
    %v5380 = vrcp.pop %v5349
    %v5381 = vmul.f32 1.0, %v5380
    %v5382 = vrcp.pop %v5351
    %v5383 = vmul.f32 1.0, %v5382
    %v5384 = vrcp.pop %v5353
    %v5385 = vmul.f32 1.0, %v5384
    %v5386 = vrcp.pop %v5355
    %v5387 = vmul.f32 1.0, %v5386
    %v5388 = vrcp.pop %v5357
    %v5389 = vmul.f32 1.0, %v5388
    %v5390 = vrcp.pop %v5359
    %v5391 = vmul.f32 1.0, %v5390
    %v5392 = vmul.f32 %v5361, %v1173
    %v5393 = vmul.f32 %v5363, %v1173
    %v5394 = vmul.f32 %v5365, %v1173
    %v5395 = vmul.f32 %v5367, %v1173
    %v5396 = vmul.f32 %v5369, %v1173
    %v5397 = vmul.f32 %v5371, %v1173
    %v5398 = vmul.f32 %v5373, %v1173
    %v5399 = vmul.f32 %v5375, %v1173
    %v5400 = vmul.f32 %v5377, %v1173
    %v5401 = vmul.f32 %v5379, %v1173
    %v5402 = vmul.f32 %v5381, %v1173
    %v5403 = vmul.f32 %v5383, %v1173
    %v5404 = vmul.f32 %v5385, %v1173
    %v5405 = vmul.f32 %v5387, %v1173
    %v5406 = vmul.f32 %v5389, %v1173
    %v5407 = vmul.f32 %v5391, %v1173
    %v5408 = vadd.f32 %v5296, %v5392
    %v5409 = vadd.f32 %v5297, %v5393
    %v5410 = vadd.f32 %v5298, %v5394
    %v5411 = vadd.f32 %v5299, %v5395
    %v5412 = vadd.f32 %v5300, %v5396
    %v5413 = vadd.f32 %v5301, %v5397
    %v5414 = vadd.f32 %v5302, %v5398
    %v5415 = vadd.f32 %v5303, %v5399
    %v5416 = vadd.f32 %v5304, %v5400
    %v5417 = vadd.f32 %v5305, %v5401
    %v5418 = vadd.f32 %v5306, %v5402
    %v5419 = vadd.f32 %v5307, %v5403
    %v5420 = vadd.f32 %v5308, %v5404
    %v5421 = vadd.f32 %v5309, %v5405
    %v5422 = vadd.f32 %v5310, %v5406
    %v5423 = vadd.f32 %v5311, %v5407
    %v5424 = vld [vmem:[#allocation2] sm:$0xff]
    %v5425 = vld [vmem:[#allocation2 + $0x8] sm:$0xff]
    %v5426 = vld [vmem:[#allocation2 + $0x10] sm:$0xff]
    %v5427 = vld [vmem:[#allocation2 + $0x20] sm:$0xff]
    %v5428 = vld [vmem:[#allocation2 + $0x28] sm:$0xff]
    %v5429 = vld [vmem:[#allocation2 + $0x30] sm:$0xff]
    %v5430 = vld [vmem:[#allocation2 + $0x40] sm:$0xff]
    %v5431 = vld [vmem:[#allocation2 + $0x48] sm:$0xff]
    %v5432 = vld [vmem:[#allocation2 + $0x50] sm:$0xff]
    %v5433 = vld [vmem:[#allocation2 + $0x60] sm:$0xff]
    %v5434 = vld [vmem:[#allocation2 + $0x68] sm:$0xff]
    %v5435 = vld [vmem:[#allocation2 + $0x70] sm:$0xff]
    %v5436 = vld [vmem:[#allocation2 + $0x80] sm:$0xff]
    %v5437 = vld [vmem:[#allocation2 + $0x88] sm:$0xff]
    %v5438 = vld [vmem:[#allocation2 + $0x90] sm:$0xff]
    %v5439 = vld [vmem:[#allocation2 + $0xa0] sm:$0xff]
    %v5440 = vld [vmem:[#allocation2 + $0xa8] sm:$0xff]
    %v5441 = vld [vmem:[#allocation2 + $0xb0] sm:$0xff]
    %v5442 = vld [vmem:[#allocation2 + $0xc0] sm:$0xff]
    %v5443 = vld [vmem:[#allocation2 + $0xc8] sm:$0xff]
    %v5444 = vld [vmem:[#allocation2 + $0xd0] sm:$0xff]
    %v5445 = vld [vmem:[#allocation2 + $0xe0] sm:$0xff]
    %v5446 = vld [vmem:[#allocation2 + $0xe8] sm:$0xff]
    %v5447 = vld [vmem:[#allocation2 + $0xf0] sm:$0xff]
    %v5448 = vld [vmem:[#allocation2 + $0x100] sm:$0xff]
    %v5449 = vld [vmem:[#allocation2 + $0x108] sm:$0xff]
    %v5450 = vld [vmem:[#allocation2 + $0x110] sm:$0xff]
    %v5451 = vld [vmem:[#allocation2 + $0x120] sm:$0xff]
    %v5452 = vld [vmem:[#allocation2 + $0x128] sm:$0xff]
    %v5453 = vld [vmem:[#allocation2 + $0x130] sm:$0xff]
    %v5454 = vld [vmem:[#allocation2 + $0x140] sm:$0xff]
    %v5455 = vld [vmem:[#allocation2 + $0x148] sm:$0xff]
    %v5456 = vld [vmem:[#allocation2 + $0x150] sm:$0xff]
    %v5457 = vld [vmem:[#allocation2 + $0x160] sm:$0xff]
    %v5458 = vld [vmem:[#allocation2 + $0x168] sm:$0xff]
    %v5459 = vld [vmem:[#allocation2 + $0x170] sm:$0xff]
    %v5460 = vld [vmem:[#allocation2 + $0x180] sm:$0xff]
    %v5461 = vld [vmem:[#allocation2 + $0x188] sm:$0xff]
    %v5462 = vld [vmem:[#allocation2 + $0x190] sm:$0xff]
    %v5463 = vld [vmem:[#allocation2 + $0x1a0] sm:$0xff]
    %v5464 = vld [vmem:[#allocation2 + $0x1a8] sm:$0xff]
    %v5465 = vld [vmem:[#allocation2 + $0x1b0] sm:$0xff]
    %v5466 = vld [vmem:[#allocation2 + $0x1c0] sm:$0xff]
    %v5467 = vld [vmem:[#allocation2 + $0x1c8] sm:$0xff]
    %v5468 = vld [vmem:[#allocation2 + $0x1d0] sm:$0xff]
    %v5469 = vld [vmem:[#allocation2 + $0x1e0] sm:$0xff]
    %v5470 = vld [vmem:[#allocation2 + $0x1e8] sm:$0xff]
    %v5471 = vld [vmem:[#allocation2 + $0x1f0] sm:$0xff]
    %v5472 = vpack.c.bf16 %v5427, %v5424
    %v5473 = vpack.c.bf16 %v5428, %v5425
    %v5474 = vpack.c.bf16 %v5429, %v5426
    %v5475 = vpack.c.bf16 %v5313, %v5312
    %v5476 = vpack.c.bf16 %v5433, %v5430
    %v5477 = vpack.c.bf16 %v5434, %v5431
    %v5478 = vpack.c.bf16 %v5435, %v5432
    %v5479 = vpack.c.bf16 %v5315, %v5314
    %v5480 = vpack.c.bf16 %v5439, %v5436
    %v5481 = vpack.c.bf16 %v5440, %v5437
    %v5482 = vpack.c.bf16 %v5441, %v5438
    %v5483 = vpack.c.bf16 %v5317, %v5316
    %v5484 = vpack.c.bf16 %v5445, %v5442
    %v5485 = vpack.c.bf16 %v5446, %v5443
    %v5486 = vpack.c.bf16 %v5447, %v5444
    %v5487 = vpack.c.bf16 %v5319, %v5318
    %v5488 = vpack.c.bf16 %v5451, %v5448
    %v5489 = vpack.c.bf16 %v5452, %v5449
    %v5490 = vpack.c.bf16 %v5453, %v5450
    %v5491 = vpack.c.bf16 %v5321, %v5320
    %v5492 = vpack.c.bf16 %v5457, %v5454
    %v5493 = vpack.c.bf16 %v5458, %v5455
    %v5494 = vpack.c.bf16 %v5459, %v5456
    %v5495 = vpack.c.bf16 %v5323, %v5322
    %v5496 = vpack.c.bf16 %v5463, %v5460
    %v5497 = vpack.c.bf16 %v5464, %v5461
    %v5498 = vpack.c.bf16 %v5465, %v5462
    %v5499 = vpack.c.bf16 %v5325, %v5324
    %v5500 = vpack.c.bf16 %v5469, %v5466
    %v5501 = vpack.c.bf16 %v5470, %v5467
    %v5502 = vpack.c.bf16 %v5471, %v5468
    %v5503 = vpack.c.bf16 %v5327, %v5326
    %v5504 = vld [vmem:[#allocation3] sm:$0xf]
    %v5505 = vld [vmem:[#allocation3 + $0x4] sm:$0xf]
    %v5506 = vld [vmem:[#allocation3 + $0x8] sm:$0xf]
    %v5507 = vld [vmem:[#allocation3 + $0xc] sm:$0xf]
    %v5508 = vld [vmem:[#allocation3 + $0x10] sm:$0xf]
    %v5509 = vld [vmem:[#allocation3 + $0x14] sm:$0xf]
    %v5510 = vld [vmem:[#allocation3 + $0x18] sm:$0xf]
    %v5511 = vld [vmem:[#allocation3 + $0x1c] sm:$0xf]
    %v5512 = vld [vmem:[#allocation3 + $0x20] sm:$0xf]
    %v5513 = vld [vmem:[#allocation3 + $0x24] sm:$0xf]
    %v5514 = vld [vmem:[#allocation3 + $0x28] sm:$0xf]
    %v5515 = vld [vmem:[#allocation3 + $0x2c] sm:$0xf]
    %v5516 = vld [vmem:[#allocation3 + $0x30] sm:$0xf]
    %v5517 = vld [vmem:[#allocation3 + $0x34] sm:$0xf]
    %v5518 = vld [vmem:[#allocation3 + $0x38] sm:$0xf]
    %v5519 = vld [vmem:[#allocation3 + $0x3c] sm:$0xf]
    %v5520 = vld [vmem:[#allocation3 + $0x40] sm:$0xf]
    %v5521 = vld [vmem:[#allocation3 + $0x44] sm:$0xf]
    %v5522 = vld [vmem:[#allocation3 + $0x48] sm:$0xf]
    %v5523 = vld [vmem:[#allocation3 + $0x4c] sm:$0xf]
    %v5524 = vld [vmem:[#allocation3 + $0x50] sm:$0xf]
    %v5525 = vld [vmem:[#allocation3 + $0x54] sm:$0xf]
    %v5526 = vld [vmem:[#allocation3 + $0x58] sm:$0xf]
    %v5527 = vld [vmem:[#allocation3 + $0x5c] sm:$0xf]
    %v5528 = vld [vmem:[#allocation3 + $0x60] sm:$0xf]
    %v5529 = vld [vmem:[#allocation3 + $0x64] sm:$0xf]
    %v5530 = vld [vmem:[#allocation3 + $0x68] sm:$0xf]
    %v5531 = vld [vmem:[#allocation3 + $0x6c] sm:$0xf]
    %v5532 = vld [vmem:[#allocation3 + $0x70] sm:$0xf]
    %v5533 = vld [vmem:[#allocation3 + $0x74] sm:$0xf]
    %v5534 = vld [vmem:[#allocation3 + $0x78] sm:$0xf]
    %v5535 = vld [vmem:[#allocation3 + $0x7c] sm:$0xf]
    %v5536 = vld [vmem:[#allocation3 + $0x80] sm:$0xf]
    %v5537 = vld [vmem:[#allocation3 + $0x84] sm:$0xf]
    %v5538 = vld [vmem:[#allocation3 + $0x88] sm:$0xf]
    %v5539 = vld [vmem:[#allocation3 + $0x8c] sm:$0xf]
    %v5540 = vld [vmem:[#allocation3 + $0x90] sm:$0xf]
    %v5541 = vld [vmem:[#allocation3 + $0x94] sm:$0xf]
    %v5542 = vld [vmem:[#allocation3 + $0x98] sm:$0xf]
    %v5543 = vld [vmem:[#allocation3 + $0x9c] sm:$0xf]
    %v5544 = vld [vmem:[#allocation3 + $0xa0] sm:$0xf]
    %v5545 = vld [vmem:[#allocation3 + $0xa4] sm:$0xf]
    %v5546 = vld [vmem:[#allocation3 + $0xa8] sm:$0xf]
    %v5547 = vld [vmem:[#allocation3 + $0xac] sm:$0xf]
    %v5548 = vld [vmem:[#allocation3 + $0xb0] sm:$0xf]
    %v5549 = vld [vmem:[#allocation3 + $0xb4] sm:$0xf]
    %v5550 = vld [vmem:[#allocation3 + $0xb8] sm:$0xf]
    %v5551 = vld [vmem:[#allocation3 + $0xbc] sm:$0xf]
    %v5552 = vld [vmem:[#allocation3 + $0xc0] sm:$0xf]
    %v5553 = vld [vmem:[#allocation3 + $0xc4] sm:$0xf]
    %v5554 = vld [vmem:[#allocation3 + $0xc8] sm:$0xf]
    %v5555 = vld [vmem:[#allocation3 + $0xcc] sm:$0xf]
    %v5556 = vld [vmem:[#allocation3 + $0xd0] sm:$0xf]
    %v5557 = vld [vmem:[#allocation3 + $0xd4] sm:$0xf]
    %v5558 = vld [vmem:[#allocation3 + $0xd8] sm:$0xf]
    %v5559 = vld [vmem:[#allocation3 + $0xdc] sm:$0xf]
    %v5560 = vld [vmem:[#allocation3 + $0xe0] sm:$0xf]
    %v5561 = vld [vmem:[#allocation3 + $0xe4] sm:$0xf]
    %v5562 = vld [vmem:[#allocation3 + $0xe8] sm:$0xf]
    %v5563 = vld [vmem:[#allocation3 + $0xec] sm:$0xf]
    %v5564 = vld [vmem:[#allocation3 + $0xf0] sm:$0xf]
    %v5565 = vld [vmem:[#allocation3 + $0xf4] sm:$0xf]
    %v5566 = vld [vmem:[#allocation3 + $0xf8] sm:$0xf]
    %v5567 = vld [vmem:[#allocation3 + $0xfc] sm:$0xf]
    %v5632 = vunpack.c.l.b16 %v5504
    %v5633 = vunpack.c.l.b16 %v5505
    %v5634 = vunpack.c.l.b16 %v5506
    %v5635 = vunpack.c.l.b16 %v5507
    %v5636 = vunpack.c.l.b16 %v5508
    %v5637 = vunpack.c.l.b16 %v5509
    %v5638 = vunpack.c.l.b16 %v5510
    %v5639 = vunpack.c.l.b16 %v5511
    %v5640 = vunpack.c.l.b16 %v5512
    %v5641 = vunpack.c.l.b16 %v5513
    %v5642 = vunpack.c.l.b16 %v5514
    %v5643 = vunpack.c.l.b16 %v5515
    %v5644 = vunpack.c.l.b16 %v5516
    %v5645 = vunpack.c.l.b16 %v5517
    %v5646 = vunpack.c.l.b16 %v5518
    %v5647 = vunpack.c.l.b16 %v5519
    %v5648 = vunpack.c.l.b16 %v5520
    %v5649 = vunpack.c.l.b16 %v5521
    %v5650 = vunpack.c.l.b16 %v5522
    %v5651 = vunpack.c.l.b16 %v5523
    %v5652 = vunpack.c.l.b16 %v5524
    %v5653 = vunpack.c.l.b16 %v5525
    %v5654 = vunpack.c.l.b16 %v5526
    %v5655 = vunpack.c.l.b16 %v5527
    %v5656 = vunpack.c.l.b16 %v5528
    %v5657 = vunpack.c.l.b16 %v5529
    %v5658 = vunpack.c.l.b16 %v5530
    %v5659 = vunpack.c.l.b16 %v5531
    %v5660 = vunpack.c.l.b16 %v5532
    %v5661 = vunpack.c.l.b16 %v5533
    %v5662 = vunpack.c.l.b16 %v5534
    %v5663 = vunpack.c.l.b16 %v5535
    %v5664 = vunpack.c.l.b16 %v5536
    %v5665 = vunpack.c.l.b16 %v5537
    %v5666 = vunpack.c.l.b16 %v5538
    %v5667 = vunpack.c.l.b16 %v5539
    %v5668 = vunpack.c.l.b16 %v5540
    %v5669 = vunpack.c.l.b16 %v5541
    %v5670 = vunpack.c.l.b16 %v5542
    %v5671 = vunpack.c.l.b16 %v5543
    %v5672 = vunpack.c.l.b16 %v5544
    %v5673 = vunpack.c.l.b16 %v5545
    %v5674 = vunpack.c.l.b16 %v5546
    %v5675 = vunpack.c.l.b16 %v5547
    %v5676 = vunpack.c.l.b16 %v5548
    %v5677 = vunpack.c.l.b16 %v5549
    %v5678 = vunpack.c.l.b16 %v5550
    %v5679 = vunpack.c.l.b16 %v5551
    %v5680 = vunpack.c.l.b16 %v5552
    %v5681 = vunpack.c.l.b16 %v5553
    %v5682 = vunpack.c.l.b16 %v5554
    %v5683 = vunpack.c.l.b16 %v5555
    %v5684 = vunpack.c.l.b16 %v5556
    %v5685 = vunpack.c.l.b16 %v5557
    %v5686 = vunpack.c.l.b16 %v5558
    %v5687 = vunpack.c.l.b16 %v5559
    %v5688 = vunpack.c.l.b16 %v5560
    %v5689 = vunpack.c.l.b16 %v5561
    %v5690 = vunpack.c.l.b16 %v5562
    %v5691 = vunpack.c.l.b16 %v5563
    %v5692 = vunpack.c.l.b16 %v5564
    %v5693 = vunpack.c.l.b16 %v5565
    %v5694 = vunpack.c.l.b16 %v5566
    %v5695 = vunpack.c.l.b16 %v5567
    %v5696 = vpack.c.b16 %v5633, %v5632
    %v5697 = vpack.c.b16 %v5635, %v5634
    %v5698 = vpack.c.b16 %v5637, %v5636
    %v5699 = vpack.c.b16 %v5639, %v5638
    %v5700 = vpack.c.b16 %v5641, %v5640
    %v5701 = vpack.c.b16 %v5643, %v5642
    %v5702 = vpack.c.b16 %v5645, %v5644
    %v5703 = vpack.c.b16 %v5647, %v5646
    %v5704 = vpack.c.b16 %v5649, %v5648
    %v5705 = vpack.c.b16 %v5651, %v5650
    %v5706 = vpack.c.b16 %v5653, %v5652
    %v5707 = vpack.c.b16 %v5655, %v5654
    %v5708 = vpack.c.b16 %v5657, %v5656
    %v5709 = vpack.c.b16 %v5659, %v5658
    %v5710 = vpack.c.b16 %v5661, %v5660
    %v5711 = vpack.c.b16 %v5663, %v5662
    %v5712 = vpack.c.b16 %v5665, %v5664
    %v5713 = vpack.c.b16 %v5667, %v5666
    %v5714 = vpack.c.b16 %v5669, %v5668
    %v5715 = vpack.c.b16 %v5671, %v5670
    %v5716 = vpack.c.b16 %v5673, %v5672
    %v5717 = vpack.c.b16 %v5675, %v5674
    %v5718 = vpack.c.b16 %v5677, %v5676
    %v5719 = vpack.c.b16 %v5679, %v5678
    %v5720 = vpack.c.b16 %v5681, %v5680
    %v5721 = vpack.c.b16 %v5683, %v5682
    %v5722 = vpack.c.b16 %v5685, %v5684
    %v5723 = vpack.c.b16 %v5687, %v5686
    %v5724 = vpack.c.b16 %v5689, %v5688
    %v5725 = vpack.c.b16 %v5691, %v5690
    %v5726 = vpack.c.b16 %v5693, %v5692
    %v5727 = vpack.c.b16 %v5695, %v5694
    %5760 = vmatprep.subr.bf16.mxu0 0
    %5761 = vmatpush1.bf16.msra.mxu0 %v5703
    %5762 = vmatprep.subr.bf16.mxu0 0
    %5763 = vmatpush1.bf16.msra.mxu0 %v5702
    %5764 = vmatprep.subr.bf16.mxu0 0
    %5765 = vmatpush1.bf16.msra.mxu0 %v5701
    %5766 = vmatprep.subr.bf16.mxu0 0
    %5767 = vmatpush1.bf16.msra.mxu0 %v5700
    %5768 = vmatprep.subr.bf16.mxu0 0
    %5769 = vmatpush1.bf16.msra.mxu0 %v5699
    %5770 = vmatprep.subr.bf16.mxu0 0
    %5771 = vmatpush1.bf16.msra.mxu0 %v5698
    %5772 = vmatprep.subr.bf16.mxu0 0
    %5773 = vmatpush1.bf16.msra.mxu0 %v5697
    %5774 = vmatprep.subr.bf16.mxu0 0
    %5775 = vmatpush1.bf16.msra.mxu0 %v5696
    %5776 = vmatprep.subr.bf16.mxu0 0
    %5777 = vmatpush2.bf16.msra.mxu0 %v5711
    %5778 = vmatprep.subr.bf16.mxu0 0
    %5779 = vmatpush2.bf16.msra.mxu0 %v5710
    %5780 = vmatprep.subr.bf16.mxu0 0
    %5781 = vmatpush2.bf16.msra.mxu0 %v5709
    %5782 = vmatprep.subr.bf16.mxu0 0
    %5783 = vmatpush2.bf16.msra.mxu0 %v5708
    %5784 = vmatprep.subr.bf16.mxu0 0
    %5785 = vmatpush2.bf16.msra.mxu0 %v5707
    %5786 = vmatprep.subr.bf16.mxu0 0
    %5787 = vmatpush2.bf16.msra.mxu0 %v5706
    %5788 = vmatprep.subr.bf16.mxu0 0
    %5789 = vmatpush2.bf16.msra.mxu0 %v5705
    %5790 = vmatprep.subr.bf16.mxu0 0
    %5791 = vmatpush2.bf16.msra.mxu0 %v5704
    %5792 = vmatprep.mubr.bf16.mxu0 %v5473
    %5793 = vmatmul.mubr.bf16.gmra.mxu0 %v5472
    %v5794 = vpop.f32.mrf.mxu0
    %v5795 = vadd.f32 0.0, %v5794
    %v5796 = vpop.f32.mrf.mxu0
    %v5797 = vpop.f32.mrf.mxu0
    %v5798 = vadd.f32 0.0, %v5797
    %v5799 = vpop.f32.mrf.mxu0
    %5800 = vmatprep.mubr.bf16.mxu0 %v5477
    %5801 = vmatmul.mubr.bf16.gmra.mxu0 %v5476
    %v5802 = vpop.f32.mrf.mxu0
    %v5803 = vadd.f32 0.0, %v5802
    %v5804 = vpop.f32.mrf.mxu0
    %v5805 = vpop.f32.mrf.mxu0
    %v5806 = vadd.f32 0.0, %v5805
    %v5807 = vpop.f32.mrf.mxu0
    %5808 = vmatprep.mubr.bf16.mxu0 %v5481
    %5809 = vmatmul.mubr.bf16.gmra.mxu0 %v5480
    %v5810 = vpop.f32.mrf.mxu0
    %v5811 = vadd.f32 0.0, %v5810
    %v5812 = vpop.f32.mrf.mxu0
    %v5813 = vpop.f32.mrf.mxu0
    %v5814 = vadd.f32 0.0, %v5813
    %v5815 = vpop.f32.mrf.mxu0
    %5816 = vmatprep.mubr.bf16.mxu0 %v5485
    %5817 = vmatmul.mubr.bf16.gmra.mxu0 %v5484
    %v5818 = vpop.f32.mrf.mxu0
    %v5819 = vadd.f32 0.0, %v5818
    %v5820 = vpop.f32.mrf.mxu0
    %v5821 = vpop.f32.mrf.mxu0
    %v5822 = vadd.f32 0.0, %v5821
    %v5823 = vpop.f32.mrf.mxu0
    %5824 = vmatprep.mubr.bf16.mxu0 %v5489
    %5825 = vmatmul.mubr.bf16.gmra.mxu0 %v5488
    %v5826 = vpop.f32.mrf.mxu0
    %v5827 = vadd.f32 0.0, %v5826
    %v5828 = vpop.f32.mrf.mxu0
    %v5829 = vpop.f32.mrf.mxu0
    %v5830 = vadd.f32 0.0, %v5829
    %v5831 = vpop.f32.mrf.mxu0
    %5832 = vmatprep.mubr.bf16.mxu0 %v5493
    %5833 = vmatmul.mubr.bf16.gmra.mxu0 %v5492
    %v5834 = vpop.f32.mrf.mxu0
    %v5835 = vadd.f32 0.0, %v5834
    %v5836 = vpop.f32.mrf.mxu0
    %v5837 = vpop.f32.mrf.mxu0
    %v5838 = vadd.f32 0.0, %v5837
    %v5839 = vpop.f32.mrf.mxu0
    %5840 = vmatprep.mubr.bf16.mxu0 %v5497
    %5841 = vmatmul.mubr.bf16.gmra.mxu0 %v5496
    %v5842 = vpop.f32.mrf.mxu0
    %v5843 = vadd.f32 0.0, %v5842
    %v5844 = vpop.f32.mrf.mxu0
    %v5845 = vpop.f32.mrf.mxu0
    %v5846 = vadd.f32 0.0, %v5845
    %v5847 = vpop.f32.mrf.mxu0
    %5848 = vmatprep.mubr.bf16.mxu0 %v5501
    %5849 = vmatmul.mubr.bf16.gmra.mxu0 %v5500
    %v5850 = vpop.f32.mrf.mxu0
    %v5851 = vadd.f32 0.0, %v5850
    %v5852 = vpop.f32.mrf.mxu0
    %v5853 = vpop.f32.mrf.mxu0
    %v5854 = vadd.f32 0.0, %v5853
    %v5855 = vpop.f32.mrf.mxu0
    %5856 = vdwg.mxu0
    %5857 = vmatprep.subr.bf16.mxu0 0
    %5858 = vmatpush1.bf16.msra.mxu0 %v5719
    %5859 = vmatprep.subr.bf16.mxu0 0
    %5860 = vmatpush1.bf16.msra.mxu0 %v5718
    %5861 = vmatprep.subr.bf16.mxu0 0
    %5862 = vmatpush1.bf16.msra.mxu0 %v5717
    %5863 = vmatprep.subr.bf16.mxu0 0
    %5864 = vmatpush1.bf16.msra.mxu0 %v5716
    %5865 = vmatprep.subr.bf16.mxu0 0
    %5866 = vmatpush1.bf16.msra.mxu0 %v5715
    %5867 = vmatprep.subr.bf16.mxu0 0
    %5868 = vmatpush1.bf16.msra.mxu0 %v5714
    %5869 = vmatprep.subr.bf16.mxu0 0
    %5870 = vmatpush1.bf16.msra.mxu0 %v5713
    %5871 = vmatprep.subr.bf16.mxu0 0
    %5872 = vmatpush1.bf16.msra.mxu0 %v5712
    %5873 = vmatprep.subr.bf16.mxu0 0
    %5874 = vmatpush2.bf16.msra.mxu0 %v5727
    %5875 = vmatprep.subr.bf16.mxu0 0
    %5876 = vmatpush2.bf16.msra.mxu0 %v5726
    %5877 = vmatprep.subr.bf16.mxu0 0
    %5878 = vmatpush2.bf16.msra.mxu0 %v5725
    %5879 = vmatprep.subr.bf16.mxu0 0
    %5880 = vmatpush2.bf16.msra.mxu0 %v5724
    %5881 = vmatprep.subr.bf16.mxu0 0
    %5882 = vmatpush2.bf16.msra.mxu0 %v5723
    %5883 = vmatprep.subr.bf16.mxu0 0
    %5884 = vmatpush2.bf16.msra.mxu0 %v5722
    %5885 = vmatprep.subr.bf16.mxu0 0
    %5886 = vmatpush2.bf16.msra.mxu0 %v5721
    %5887 = vmatprep.subr.bf16.mxu0 0
    %5888 = vmatpush2.bf16.msra.mxu0 %v5720
    %5889 = vmatprep.mubr.bf16.mxu0 %v5475
    %5890 = vmatmul.mubr.bf16.gmra.mxu0 %v5474
    %v5891 = vpop.f32.mrf.mxu0
    %v5892 = vadd.f32 %v5795, %v5891
    %v5893 = vpop.f32.mrf.mxu0
    %v5894 = vpop.f32.mrf.mxu0
    %v5895 = vadd.f32 %v5798, %v5894
    %v5896 = vpop.f32.mrf.mxu0
    %5897 = vmatprep.mubr.bf16.mxu0 %v5479
    %5898 = vmatmul.mubr.bf16.gmra.mxu0 %v5478
    %v5899 = vpop.f32.mrf.mxu0
    %v5900 = vadd.f32 %v5803, %v5899
    %v5901 = vpop.f32.mrf.mxu0
    %v5902 = vpop.f32.mrf.mxu0
    %v5903 = vadd.f32 %v5806, %v5902
    %v5904 = vpop.f32.mrf.mxu0
    %5905 = vmatprep.mubr.bf16.mxu0 %v5483
    %5906 = vmatmul.mubr.bf16.gmra.mxu0 %v5482
    %v5907 = vpop.f32.mrf.mxu0
    %v5908 = vadd.f32 %v5811, %v5907
    %v5909 = vpop.f32.mrf.mxu0
    %v5910 = vpop.f32.mrf.mxu0
    %v5911 = vadd.f32 %v5814, %v5910
    %v5912 = vpop.f32.mrf.mxu0
    %5913 = vmatprep.mubr.bf16.mxu0 %v5487
    %5914 = vmatmul.mubr.bf16.gmra.mxu0 %v5486
    %v5915 = vpop.f32.mrf.mxu0
    %v5916 = vadd.f32 %v5819, %v5915
    %v5917 = vpop.f32.mrf.mxu0
    %v5918 = vpop.f32.mrf.mxu0
    %v5919 = vadd.f32 %v5822, %v5918
    %v5920 = vpop.f32.mrf.mxu0
    %5921 = vmatprep.mubr.bf16.mxu0 %v5491
    %5922 = vmatmul.mubr.bf16.gmra.mxu0 %v5490
    %v5923 = vpop.f32.mrf.mxu0
    %v5924 = vadd.f32 %v5827, %v5923
    %v5925 = vpop.f32.mrf.mxu0
    %v5926 = vpop.f32.mrf.mxu0
    %v5927 = vadd.f32 %v5830, %v5926
    %v5928 = vpop.f32.mrf.mxu0
    %5929 = vmatprep.mubr.bf16.mxu0 %v5495
    %5930 = vmatmul.mubr.bf16.gmra.mxu0 %v5494
    %v5931 = vpop.f32.mrf.mxu0
    %v5932 = vadd.f32 %v5835, %v5931
    %v5933 = vpop.f32.mrf.mxu0
    %v5934 = vpop.f32.mrf.mxu0
    %v5935 = vadd.f32 %v5838, %v5934
    %v5936 = vpop.f32.mrf.mxu0
    %5937 = vmatprep.mubr.bf16.mxu0 %v5499
    %5938 = vmatmul.mubr.bf16.gmra.mxu0 %v5498
    %v5939 = vpop.f32.mrf.mxu0
    %v5940 = vadd.f32 %v5843, %v5939
    %v5941 = vpop.f32.mrf.mxu0
    %v5942 = vpop.f32.mrf.mxu0
    %v5943 = vadd.f32 %v5846, %v5942
    %v5944 = vpop.f32.mrf.mxu0
    %5945 = vmatprep.mubr.bf16.mxu0 %v5503
    %5946 = vmatmul.mubr.bf16.gmra.mxu0 %v5502
    %v5947 = vpop.f32.mrf.mxu0
    %v5948 = vadd.f32 %v5851, %v5947
    %v5949 = vpop.f32.mrf.mxu0
    %v5950 = vpop.f32.mrf.mxu0
    %v5951 = vadd.f32 %v5854, %v5950
    %v5952 = vpop.f32.mrf.mxu0
    %5953 = vdwg.mxu0
    %v5954 = vmul.f32 %v5892, %v5408
    %v5955 = vmul.f32 %v5895, %v5409
    %v5956 = vmul.f32 %v5900, %v5410
    %v5957 = vmul.f32 %v5903, %v5411
    %v5958 = vmul.f32 %v5908, %v5412
    %v5959 = vmul.f32 %v5911, %v5413
    %v5960 = vmul.f32 %v5916, %v5414
    %v5961 = vmul.f32 %v5919, %v5415
    %v5962 = vmul.f32 %v5924, %v5416
    %v5963 = vmul.f32 %v5927, %v5417
    %v5964 = vmul.f32 %v5932, %v5418
    %v5965 = vmul.f32 %v5935, %v5419
    %v5966 = vmul.f32 %v5940, %v5420
    %v5967 = vmul.f32 %v5943, %v5421
    %v5968 = vmul.f32 %v5948, %v5422
    %v5969 = vmul.f32 %v5951, %v5423
    %v5970 = vld [vmem:[%s10] sm:$0x1]
    %v5972 = vlaneseq
    %v5973 = vshrl.u32 %v5972, 7
    %v5974 = vsub.s32 0, %v5973
    %v5975 = vrot.slane %v5970, %v5974
    %v5977 = vadd.f32 %v5954, %v5975
    %v5978 = vadd.f32 %v5955, %v5975
    %v5979 = vadd.f32 %v5956, %v5975
    %v5980 = vadd.f32 %v5957, %v5975
    %v5981 = vadd.f32 %v5958, %v5975
    %v5982 = vadd.f32 %v5959, %v5975
    %v5983 = vadd.f32 %v5960, %v5975
    %v5984 = vadd.f32 %v5961, %v5975
    %v5985 = vadd.f32 %v5962, %v5975
    %v5986 = vadd.f32 %v5963, %v5975
    %v5987 = vadd.f32 %v5964, %v5975
    %v5988 = vadd.f32 %v5965, %v5975
    %v5989 = vadd.f32 %v5966, %v5975
    %v5990 = vadd.f32 %v5967, %v5975
    %v5991 = vadd.f32 %v5968, %v5975
    %v5992 = vadd.f32 %v5969, %v5975
    %vm5993 = vcmp.gt.f32.partialorder %v5977, 0.0
    %vm5994 = vcmp.gt.f32.partialorder %v5978, 0.0
    %vm5995 = vcmp.gt.f32.partialorder %v5979, 0.0
    %vm5996 = vcmp.gt.f32.partialorder %v5980, 0.0
    %vm5997 = vcmp.gt.f32.partialorder %v5981, 0.0
    %vm5998 = vcmp.gt.f32.partialorder %v5982, 0.0
    %vm5999 = vcmp.gt.f32.partialorder %v5983, 0.0
    %vm6000 = vcmp.gt.f32.partialorder %v5984, 0.0
    %vm6001 = vcmp.gt.f32.partialorder %v5985, 0.0
    %vm6002 = vcmp.gt.f32.partialorder %v5986, 0.0
    %vm6003 = vcmp.gt.f32.partialorder %v5987, 0.0
    %vm6004 = vcmp.gt.f32.partialorder %v5988, 0.0
    %vm6005 = vcmp.gt.f32.partialorder %v5989, 0.0
    %vm6006 = vcmp.gt.f32.partialorder %v5990, 0.0
    %vm6007 = vcmp.gt.f32.partialorder %v5991, 0.0
    %vm6008 = vcmp.gt.f32.partialorder %v5992, 0.0
    %v6009 = vmul.f32 %v5977, 1.442695
    %v6010 = vpow.pop %v6009
    %v6011 = vmul.f32 %v5978, 1.442695
    %v6012 = vpow.pop %v6011
    %v6013 = vmul.f32 %v5979, 1.442695
    %v6014 = vpow.pop %v6013
    %v6015 = vmul.f32 %v5980, 1.442695
    %v6016 = vpow.pop %v6015
    %v6017 = vmul.f32 %v5981, 1.442695
    %v6018 = vpow.pop %v6017
    %v6019 = vmul.f32 %v5982, 1.442695
    %v6020 = vpow.pop %v6019
    %v6021 = vmul.f32 %v5983, 1.442695
    %v6022 = vpow.pop %v6021
    %v6023 = vmul.f32 %v5984, 1.442695
    %v6024 = vpow.pop %v6023
    %v6025 = vmul.f32 %v5985, 1.442695
    %v6026 = vpow.pop %v6025
    %v6027 = vmul.f32 %v5986, 1.442695
    %v6028 = vpow.pop %v6027
    %v6029 = vmul.f32 %v5987, 1.442695
    %v6030 = vpow.pop %v6029
    %v6031 = vmul.f32 %v5988, 1.442695
    %v6032 = vpow.pop %v6031
    %v6033 = vmul.f32 %v5989, 1.442695
    %v6034 = vpow.pop %v6033
    %v6035 = vmul.f32 %v5990, 1.442695
    %v6036 = vpow.pop %v6035
    %v6037 = vmul.f32 %v5991, 1.442695
    %v6038 = vpow.pop %v6037
    %v6039 = vmul.f32 %v5992, 1.442695
    %v6040 = vpow.pop %v6039
    %v6041 = vsub.f32 %v6010, 1.0
    %v6042 = vsub.f32 %v6012, 1.0
    %v6043 = vsub.f32 %v6014, 1.0
    %v6044 = vsub.f32 %v6016, 1.0
    %v6045 = vsub.f32 %v6018, 1.0
    %v6046 = vsub.f32 %v6020, 1.0
    %v6047 = vsub.f32 %v6022, 1.0
    %v6048 = vsub.f32 %v6024, 1.0
    %v6049 = vsub.f32 %v6026, 1.0
    %v6050 = vsub.f32 %v6028, 1.0
    %v6051 = vsub.f32 %v6030, 1.0
    %v6052 = vsub.f32 %v6032, 1.0
    %v6053 = vsub.f32 %v6034, 1.0
    %v6054 = vsub.f32 %v6036, 1.0
    %v6055 = vsub.f32 %v6038, 1.0
    %v6056 = vsub.f32 %v6040, 1.0
    %v6057 = vsel %vm5993, %v5977, %v6041
    %v6058 = vsel %vm5994, %v5978, %v6042
    %v6059 = vsel %vm5995, %v5979, %v6043
    %v6060 = vsel %vm5996, %v5980, %v6044
    %v6061 = vsel %vm5997, %v5981, %v6045
    %v6062 = vsel %vm5998, %v5982, %v6046
    %v6063 = vsel %vm5999, %v5983, %v6047
    %v6064 = vsel %vm6000, %v5984, %v6048
    %v6065 = vsel %vm6001, %v5985, %v6049
    %v6066 = vsel %vm6002, %v5986, %v6050
    %v6067 = vsel %vm6003, %v5987, %v6051
    %v6068 = vsel %vm6004, %v5988, %v6052
    %v6069 = vsel %vm6005, %v5989, %v6053
    %v6070 = vsel %vm6006, %v5990, %v6054
    %v6071 = vsel %vm6007, %v5991, %v6055
    %v6072 = vsel %vm6008, %v5992, %v6056
    %v6073 = vpack.c.bf16 %v6058, %v6057
    %v6074 = vpack.c.bf16 %v6060, %v6059
    %v6075 = vpack.c.bf16 %v6062, %v6061
    %v6076 = vpack.c.bf16 %v6064, %v6063
    %v6077 = vpack.c.bf16 %v6066, %v6065
    %v6078 = vpack.c.bf16 %v6068, %v6067
    %v6079 = vpack.c.bf16 %v6070, %v6069
    %v6080 = vpack.c.bf16 %v6072, %v6071
    %v6081 = vld [vmem:[%s11] sm:$0xf]
    %v6082 = vld [vmem:[%s11 + $0x4] sm:$0xf]
    %v6083 = vld [vmem:[%s11 + $0x8] sm:$0xf]
    %v6084 = vld [vmem:[%s11 + $0xc] sm:$0xf]
    %v6085 = vld [vmem:[%s11 + $0x10] sm:$0xf]
    %v6086 = vld [vmem:[%s11 + $0x14] sm:$0xf]
    %v6087 = vld [vmem:[%s11 + $0x18] sm:$0xf]
    %v6088 = vld [vmem:[%s11 + $0x1c] sm:$0xf]
    %v6089 = vld [vmem:[%s11 + $0x20] sm:$0xf]
    %v6090 = vld [vmem:[%s11 + $0x24] sm:$0xf]
    %v6091 = vld [vmem:[%s11 + $0x28] sm:$0xf]
    %v6092 = vld [vmem:[%s11 + $0x2c] sm:$0xf]
    %v6093 = vld [vmem:[%s11 + $0x30] sm:$0xf]
    %v6094 = vld [vmem:[%s11 + $0x34] sm:$0xf]
    %v6095 = vld [vmem:[%s11 + $0x38] sm:$0xf]
    %v6096 = vld [vmem:[%s11 + $0x3c] sm:$0xf]
    %v6113 = vunpack.c.l.b16 %v6081
    %v6114 = vunpack.c.l.b16 %v6082
    %v6115 = vunpack.c.l.b16 %v6083
    %v6116 = vunpack.c.l.b16 %v6084
    %v6117 = vunpack.c.l.b16 %v6085
    %v6118 = vunpack.c.l.b16 %v6086
    %v6119 = vunpack.c.l.b16 %v6087
    %v6120 = vunpack.c.l.b16 %v6088
    %v6121 = vunpack.c.l.b16 %v6089
    %v6122 = vunpack.c.l.b16 %v6090
    %v6123 = vunpack.c.l.b16 %v6091
    %v6124 = vunpack.c.l.b16 %v6092
    %v6125 = vunpack.c.l.b16 %v6093
    %v6126 = vunpack.c.l.b16 %v6094
    %v6127 = vunpack.c.l.b16 %v6095
    %v6128 = vunpack.c.l.b16 %v6096
    %v6129 = vpack.c.b16 %v6114, %v6113
    %v6130 = vpack.c.b16 %v6116, %v6115
    %v6131 = vpack.c.b16 %v6118, %v6117
    %v6132 = vpack.c.b16 %v6120, %v6119
    %v6133 = vpack.c.b16 %v6122, %v6121
    %v6134 = vpack.c.b16 %v6124, %v6123
    %v6135 = vpack.c.b16 %v6126, %v6125
    %v6136 = vpack.c.b16 %v6128, %v6127
    %6145 = vmatprep.subr.bf16.mxu0 0
    %6146 = vmatpush1.bf16.msra.mxu0 %v6136
    %6147 = vmatprep.subr.bf16.mxu0 0
    %6148 = vmatpush1.bf16.msra.mxu0 %v6135
    %6149 = vmatprep.subr.bf16.mxu0 0
    %6150 = vmatpush1.bf16.msra.mxu0 %v6134
    %6151 = vmatprep.subr.bf16.mxu0 0
    %6152 = vmatpush1.bf16.msra.mxu0 %v6133
    %6153 = vmatprep.subr.bf16.mxu0 0
    %6154 = vmatpush1.bf16.msra.mxu0 %v6132
    %6155 = vmatprep.subr.bf16.mxu0 0
    %6156 = vmatpush1.bf16.msra.mxu0 %v6131
    %6157 = vmatprep.subr.bf16.mxu0 0
    %6158 = vmatpush1.bf16.msra.mxu0 %v6130
    %6159 = vmatprep.subr.bf16.mxu0 0
    %6160 = vmatpush1.bf16.msra.mxu0 %v6129
    %6161 = vmatprep.subr.bf16.mxu0 0
    %6162 = vmatpush2.bf16.msra.mxu0 0
    %6163 = vmatprep.subr.bf16.mxu0 0
    %6164 = vmatpush2.bf16.msra.mxu0 0
    %6165 = vmatprep.subr.bf16.mxu0 0
    %6166 = vmatpush2.bf16.msra.mxu0 0
    %6167 = vmatprep.subr.bf16.mxu0 0
    %6168 = vmatpush2.bf16.msra.mxu0 0
    %6169 = vmatprep.subr.bf16.mxu0 0
    %6170 = vmatpush2.bf16.msra.mxu0 0
    %6171 = vmatprep.subr.bf16.mxu0 0
    %6172 = vmatpush2.bf16.msra.mxu0 0
    %6173 = vmatprep.subr.bf16.mxu0 0
    %6174 = vmatpush2.bf16.msra.mxu0 0
    %6175 = vmatprep.subr.bf16.mxu0 0
    %6176 = vmatpush2.bf16.msra.mxu0 0
    %6177 = vmatprep.mubr.bf16.mxu0 0
    %6178 = vmatmul.mubr.bf16.gmra.mxu0 %v6073
    %v6179 = vpop.f32.mrf.mxu0
    %v6180 = vadd.f32 0.0, %v6179
    %v6181 = vpop.f32.mrf.mxu0
    %v6182 = vpop.f32.mrf.mxu0
    %v6183 = vadd.f32 0.0, %v6182
    %v6184 = vpop.f32.mrf.mxu0
    %6185 = vmatprep.mubr.bf16.mxu0 0
    %6186 = vmatmul.mubr.bf16.gmra.mxu0 %v6074
    %v6187 = vpop.f32.mrf.mxu0
    %v6188 = vadd.f32 0.0, %v6187
    %v6189 = vpop.f32.mrf.mxu0
    %v6190 = vpop.f32.mrf.mxu0
    %v6191 = vadd.f32 0.0, %v6190
    %v6192 = vpop.f32.mrf.mxu0
    %6193 = vmatprep.mubr.bf16.mxu0 0
    %6194 = vmatmul.mubr.bf16.gmra.mxu0 %v6075
    %v6195 = vpop.f32.mrf.mxu0
    %v6196 = vadd.f32 0.0, %v6195
    %v6197 = vpop.f32.mrf.mxu0
    %v6198 = vpop.f32.mrf.mxu0
    %v6199 = vadd.f32 0.0, %v6198
    %v6200 = vpop.f32.mrf.mxu0
    %6201 = vmatprep.mubr.bf16.mxu0 0
    %6202 = vmatmul.mubr.bf16.gmra.mxu0 %v6076
    %v6203 = vpop.f32.mrf.mxu0
    %v6204 = vadd.f32 0.0, %v6203
    %v6205 = vpop.f32.mrf.mxu0
    %v6206 = vpop.f32.mrf.mxu0
    %v6207 = vadd.f32 0.0, %v6206
    %v6208 = vpop.f32.mrf.mxu0
    %6209 = vmatprep.mubr.bf16.mxu0 0
    %6210 = vmatmul.mubr.bf16.gmra.mxu0 %v6077
    %v6211 = vpop.f32.mrf.mxu0
    %v6212 = vadd.f32 0.0, %v6211
    %v6213 = vpop.f32.mrf.mxu0
    %v6214 = vpop.f32.mrf.mxu0
    %v6215 = vadd.f32 0.0, %v6214
    %v6216 = vpop.f32.mrf.mxu0
    %6217 = vmatprep.mubr.bf16.mxu0 0
    %6218 = vmatmul.mubr.bf16.gmra.mxu0 %v6078
    %v6219 = vpop.f32.mrf.mxu0
    %v6220 = vadd.f32 0.0, %v6219
    %v6221 = vpop.f32.mrf.mxu0
    %v6222 = vpop.f32.mrf.mxu0
    %v6223 = vadd.f32 0.0, %v6222
    %v6224 = vpop.f32.mrf.mxu0
    %6225 = vmatprep.mubr.bf16.mxu0 0
    %6226 = vmatmul.mubr.bf16.gmra.mxu0 %v6079
    %v6227 = vpop.f32.mrf.mxu0
    %v6228 = vadd.f32 0.0, %v6227
    %v6229 = vpop.f32.mrf.mxu0
    %v6230 = vpop.f32.mrf.mxu0
    %v6231 = vadd.f32 0.0, %v6230
    %v6232 = vpop.f32.mrf.mxu0
    %6233 = vmatprep.mubr.bf16.mxu0 0
    %6234 = vmatmul.mubr.bf16.gmra.mxu0 %v6080
    %v6235 = vpop.f32.mrf.mxu0
    %v6236 = vadd.f32 0.0, %v6235
    %v6237 = vpop.f32.mrf.mxu0
    %v6238 = vpop.f32.mrf.mxu0
    %v6239 = vadd.f32 0.0, %v6238
    %v6240 = vpop.f32.mrf.mxu0
    %6241 = vdwg.mxu0
    %v6242 = vld [vmem:[%s12] sm:$0x1]
    %6243 = vmatprep.subr.mxu0 0.0
    %6244 = vmatpush1.xpose.msra.mxu0 %v6239
    %6245 = vmatprep.subr.mxu0 0.0
    %6246 = vmatpush1.xpose.msra.mxu0 %v6236
    %6247 = vmatprep.subr.mxu0 0.0
    %6248 = vmatpush1.xpose.msra.mxu0 %v6231
    %6249 = vmatprep.subr.mxu0 0.0
    %6250 = vmatpush1.xpose.msra.mxu0 %v6228
    %6251 = vmatprep.subr.mxu0 0.0
    %6252 = vmatpush1.xpose.msra.mxu0 %v6223
    %6253 = vmatprep.subr.mxu0 0.0
    %6254 = vmatpush1.xpose.msra.mxu0 %v6220
    %6255 = vmatprep.subr.mxu0 0.0
    %6256 = vmatpush1.xpose.msra.mxu0 %v6215
    %6257 = vmatprep.subr.mxu0 0.0
    %6258 = vmatpush1.xpose.msra.mxu0 %v6212
    %6259 = vmatprep.subr.mxu0 0.0
    %6260 = vmatpush1.xpose.msra.mxu0 %v6207
    %6261 = vmatprep.subr.mxu0 0.0
    %6262 = vmatpush1.xpose.msra.mxu0 %v6204
    %6263 = vmatprep.subr.mxu0 0.0
    %6264 = vmatpush1.xpose.msra.mxu0 %v6199
    %6265 = vmatprep.subr.mxu0 0.0
    %6266 = vmatpush1.xpose.msra.mxu0 %v6196
    %6267 = vmatprep.subr.mxu0 0.0
    %6268 = vmatpush1.xpose.msra.mxu0 %v6191
    %6269 = vmatprep.subr.mxu0 0.0
    %6270 = vmatpush1.xpose.msra.mxu0 %v6188
    %6271 = vmatprep.subr.mxu0 0.0
    %6272 = vmatpush1.xpose.msra.mxu0 %v6183
    %6273 = vmatprep.subr.mxu0 0.0
    %6274 = vmatpush1.xpose.msra.mxu0 %v6180
    %6275 = vmatprep.subr.mxu0 0.0
    %6276 = vmatpush2.xpose.msra.mxu0 0.0
    %6277 = vmatprep.subr.mxu0 0.0
    %6278 = vmatpush2.xpose.msra.mxu0 0.0
    %6279 = vmatprep.subr.mxu0 0.0
    %6280 = vmatpush2.xpose.msra.mxu0 0.0
    %6281 = vmatprep.subr.mxu0 0.0
    %6282 = vmatpush2.xpose.msra.mxu0 0.0
    %6283 = vmatprep.subr.mxu0 0.0
    %6284 = vmatpush2.xpose.msra.mxu0 0.0
    %6285 = vmatprep.subr.mxu0 0.0
    %6286 = vmatpush2.xpose.msra.mxu0 0.0
    %6287 = vmatprep.subr.mxu0 0.0
    %6288 = vmatpush2.xpose.msra.mxu0 0.0
    %6289 = vmatprep.subr.mxu0 0.0
    %6290 = vmatpush2.xpose.msra.mxu0 0.0
    %6291 = vmatprep.subr.mxu0 0.0
    %6292 = vmatpush2.xpose.msra.mxu0 0.0
    %6293 = vmatprep.subr.mxu0 0.0
    %6294 = vmatpush2.xpose.msra.mxu0 0.0
    %6295 = vmatprep.subr.mxu0 0.0
    %6296 = vmatpush2.xpose.msra.mxu0 0.0
    %6297 = vmatprep.subr.mxu0 0.0
    %6298 = vmatpush2.xpose.msra.mxu0 0.0
    %6299 = vmatprep.subr.mxu0 0.0
    %6300 = vmatpush2.xpose.msra.mxu0 0.0
    %6301 = vmatprep.subr.mxu0 0.0
    %6302 = vmatpush2.xpose.msra.mxu0 0.0
    %6303 = vmatprep.subr.mxu0 0.0
    %6304 = vmatpush2.xpose.msra.mxu0 0.0
    %6305 = vmatprep.subr.mxu0 0.0
    %6306 = vmatpush2.xpose.msra.mxu0 0.0
    %6307 = vmatprep.mubr.f32.mxu0 0.0
    %6308 = vmatmul.mubr.f32.gmra.mxu0 %v6242
    %v6309 = vpop.f32.mrf.mxu0
    %v6310 = vadd.f32 0.0, %v6309
    %v6311 = vpop.f32.mrf.mxu0
    %6312 = vdwg.mxu0
    %v6313 = vld [vmem:[%s13] sm:$0xff]
    %v6314 = vld [vmem:[%s13 + $0x8] sm:$0xff]
    %v6315 = vld [vmem:[%s13 + $0x10] sm:$0xff]
    %v6316 = vld [vmem:[%s13 + $0x18] sm:$0xff]
    %v6317 = vld [vmem:[%s13 + $0x20] sm:$0xff]
    %v6318 = vld [vmem:[%s13 + $0x28] sm:$0xff]
    %v6319 = vld [vmem:[%s13 + $0x30] sm:$0xff]
    %v6320 = vld [vmem:[%s13 + $0x38] sm:$0xff]
    %v6321 = vld [vmem:[%s13 + $0x40] sm:$0xff]
    %v6322 = vld [vmem:[%s13 + $0x48] sm:$0xff]
    %v6323 = vld [vmem:[%s13 + $0x50] sm:$0xff]
    %v6324 = vld [vmem:[%s13 + $0x58] sm:$0xff]
    %v6325 = vld [vmem:[%s13 + $0x60] sm:$0xff]
    %v6326 = vld [vmem:[%s13 + $0x68] sm:$0xff]
    %v6327 = vld [vmem:[%s13 + $0x70] sm:$0xff]
    %v6328 = vld [vmem:[%s13 + $0x78] sm:$0xff]
    %6329 = vmatprep.subr.mxu0 0.0
    %6330 = vmatpush1.msra.mxu0 %v6328
    %6331 = vmatprep.subr.mxu0 0.0
    %6332 = vmatpush1.msra.mxu0 %v6327
    %6333 = vmatprep.subr.mxu0 0.0
    %6334 = vmatpush1.msra.mxu0 %v6326
    %6335 = vmatprep.subr.mxu0 0.0
    %6336 = vmatpush1.msra.mxu0 %v6325
    %6337 = vmatprep.subr.mxu0 0.0
    %6338 = vmatpush1.msra.mxu0 %v6324
    %6339 = vmatprep.subr.mxu0 0.0
    %6340 = vmatpush1.msra.mxu0 %v6323
    %6341 = vmatprep.subr.mxu0 0.0
    %6342 = vmatpush1.msra.mxu0 %v6322
    %6343 = vmatprep.subr.mxu0 0.0
    %6344 = vmatpush1.msra.mxu0 %v6321
    %6345 = vmatprep.subr.mxu0 0.0
    %6346 = vmatpush1.msra.mxu0 %v6320
    %6347 = vmatprep.subr.mxu0 0.0
    %6348 = vmatpush1.msra.mxu0 %v6319
    %6349 = vmatprep.subr.mxu0 0.0
    %6350 = vmatpush1.msra.mxu0 %v6318
    %6351 = vmatprep.subr.mxu0 0.0
    %6352 = vmatpush1.msra.mxu0 %v6317
    %6353 = vmatprep.subr.mxu0 0.0
    %6354 = vmatpush1.msra.mxu0 %v6316
    %6355 = vmatprep.subr.mxu0 0.0
    %6356 = vmatpush1.msra.mxu0 %v6315
    %6357 = vmatprep.subr.mxu0 0.0
    %6358 = vmatpush1.msra.mxu0 %v6314
    %6359 = vmatprep.subr.mxu0 0.0
    %6360 = vmatpush1.msra.mxu0 %v6313
    %6361 = vmatprep.subr.mxu0 0.0
    %6362 = vmatpush2.msra.mxu0 0.0
    %6363 = vmatprep.subr.mxu0 0.0
    %6364 = vmatpush2.msra.mxu0 0.0
    %6365 = vmatprep.subr.mxu0 0.0
    %6366 = vmatpush2.msra.mxu0 0.0
    %6367 = vmatprep.subr.mxu0 0.0
    %6368 = vmatpush2.msra.mxu0 0.0
    %6369 = vmatprep.subr.mxu0 0.0
    %6370 = vmatpush2.msra.mxu0 0.0
    %6371 = vmatprep.subr.mxu0 0.0
    %6372 = vmatpush2.msra.mxu0 0.0
    %6373 = vmatprep.subr.mxu0 0.0
    %6374 = vmatpush2.msra.mxu0 0.0
    %6375 = vmatprep.subr.mxu0 0.0
    %6376 = vmatpush2.msra.mxu0 0.0
    %6377 = vmatprep.subr.mxu0 0.0
    %6378 = vmatpush2.msra.mxu0 0.0
    %6379 = vmatprep.subr.mxu0 0.0
    %6380 = vmatpush2.msra.mxu0 0.0
    %6381 = vmatprep.subr.mxu0 0.0
    %6382 = vmatpush2.msra.mxu0 0.0
    %6383 = vmatprep.subr.mxu0 0.0
    %6384 = vmatpush2.msra.mxu0 0.0
    %6385 = vmatprep.subr.mxu0 0.0
    %6386 = vmatpush2.msra.mxu0 0.0
    %6387 = vmatprep.subr.mxu0 0.0
    %6388 = vmatpush2.msra.mxu0 0.0
    %6389 = vmatprep.subr.mxu0 0.0
    %6390 = vmatpush2.msra.mxu0 0.0
    %6391 = vmatprep.subr.mxu0 0.0
    %6392 = vmatpush2.msra.mxu0 0.0
    %6393 = vmatprep.mubr.f32.mxu0 0.0
    %6394 = vmatmul.mubr.f32.gmra.mxu0 %v6180
    %v6395 = vpop.f32.mrf.mxu0
    %v6396 = vadd.f32 0.0, %v6395
    %v6397 = vpop.f32.mrf.mxu0
    %6398 = vmatprep.mubr.f32.mxu0 0.0
    %6399 = vmatmul.mubr.f32.gmra.mxu0 %v6183
    %v6400 = vpop.f32.mrf.mxu0
    %v6401 = vadd.f32 0.0, %v6400
    %v6402 = vpop.f32.mrf.mxu0
    %6403 = vmatprep.mubr.f32.mxu0 0.0
    %6404 = vmatmul.mubr.f32.gmra.mxu0 %v6188
    %v6405 = vpop.f32.mrf.mxu0
    %v6406 = vadd.f32 0.0, %v6405
    %v6407 = vpop.f32.mrf.mxu0
    %6408 = vmatprep.mubr.f32.mxu0 0.0
    %6409 = vmatmul.mubr.f32.gmra.mxu0 %v6191
    %v6410 = vpop.f32.mrf.mxu0
    %v6411 = vadd.f32 0.0, %v6410
    %v6412 = vpop.f32.mrf.mxu0
    %6413 = vmatprep.mubr.f32.mxu0 0.0
    %6414 = vmatmul.mubr.f32.gmra.mxu0 %v6196
    %v6415 = vpop.f32.mrf.mxu0
    %v6416 = vadd.f32 0.0, %v6415
    %v6417 = vpop.f32.mrf.mxu0
    %6418 = vmatprep.mubr.f32.mxu0 0.0
    %6419 = vmatmul.mubr.f32.gmra.mxu0 %v6199
    %v6420 = vpop.f32.mrf.mxu0
    %v6421 = vadd.f32 0.0, %v6420
    %v6422 = vpop.f32.mrf.mxu0
    %6423 = vmatprep.mubr.f32.mxu0 0.0
    %6424 = vmatmul.mubr.f32.gmra.mxu0 %v6204
    %v6425 = vpop.f32.mrf.mxu0
    %v6426 = vadd.f32 0.0, %v6425
    %v6427 = vpop.f32.mrf.mxu0
    %6428 = vmatprep.mubr.f32.mxu0 0.0
    %6429 = vmatmul.mubr.f32.gmra.mxu0 %v6207
    %v6430 = vpop.f32.mrf.mxu0
    %v6431 = vadd.f32 0.0, %v6430
    %v6432 = vpop.f32.mrf.mxu0
    %6433 = vmatprep.mubr.f32.mxu0 0.0
    %6434 = vmatmul.mubr.f32.gmra.mxu0 %v6212
    %v6435 = vpop.f32.mrf.mxu0
    %v6436 = vadd.f32 0.0, %v6435
    %v6437 = vpop.f32.mrf.mxu0
    %6438 = vmatprep.mubr.f32.mxu0 0.0
    %6439 = vmatmul.mubr.f32.gmra.mxu0 %v6215
    %v6440 = vpop.f32.mrf.mxu0
    %v6441 = vadd.f32 0.0, %v6440
    %v6442 = vpop.f32.mrf.mxu0
    %6443 = vmatprep.mubr.f32.mxu0 0.0
    %6444 = vmatmul.mubr.f32.gmra.mxu0 %v6220
    %v6445 = vpop.f32.mrf.mxu0
    %v6446 = vadd.f32 0.0, %v6445
    %v6447 = vpop.f32.mrf.mxu0
    %6448 = vmatprep.mubr.f32.mxu0 0.0
    %6449 = vmatmul.mubr.f32.gmra.mxu0 %v6223
    %v6450 = vpop.f32.mrf.mxu0
    %v6451 = vadd.f32 0.0, %v6450
    %v6452 = vpop.f32.mrf.mxu0
    %6453 = vmatprep.mubr.f32.mxu0 0.0
    %6454 = vmatmul.mubr.f32.gmra.mxu0 %v6228
    %v6455 = vpop.f32.mrf.mxu0
    %v6456 = vadd.f32 0.0, %v6455
    %v6457 = vpop.f32.mrf.mxu0
    %6458 = vmatprep.mubr.f32.mxu0 0.0
    %6459 = vmatmul.mubr.f32.gmra.mxu0 %v6231
    %v6460 = vpop.f32.mrf.mxu0
    %v6461 = vadd.f32 0.0, %v6460
    %v6462 = vpop.f32.mrf.mxu0
    %6463 = vmatprep.mubr.f32.mxu0 0.0
    %6464 = vmatmul.mubr.f32.gmra.mxu0 %v6236
    %v6465 = vpop.f32.mrf.mxu0
    %v6466 = vadd.f32 0.0, %v6465
    %v6467 = vpop.f32.mrf.mxu0
    %6468 = vmatprep.mubr.f32.mxu0 0.0
    %6469 = vmatmul.mubr.f32.gmra.mxu0 %v6239
    %v6470 = vpop.f32.mrf.mxu0
    %v6471 = vadd.f32 0.0, %v6470
    %v6472 = vpop.f32.mrf.mxu0
    %6473 = vdwg.mxu0
    %6475 = vset.pattern.permute.xlu0 0
    %6476 = vperm.xlu0 %6475, %v6396
    %v6477 = vpop.permute.xlu0 %6476
    %6480 = vset.pattern.permute.xlu0 0
    %6481 = vperm.xlu0 %6480, %v6401
    %v6482 = vpop.permute.xlu0 %6481
    %6485 = vset.pattern.permute.xlu0 0
    %6486 = vperm.xlu0 %6485, %v6406
    %v6487 = vpop.permute.xlu0 %6486
    %6490 = vset.pattern.permute.xlu0 0
    %6491 = vperm.xlu0 %6490, %v6411
    %v6492 = vpop.permute.xlu0 %6491
    %6495 = vset.pattern.permute.xlu0 0
    %6496 = vperm.xlu0 %6495, %v6416
    %v6497 = vpop.permute.xlu0 %6496
    %6500 = vset.pattern.permute.xlu0 0
    %6501 = vperm.xlu0 %6500, %v6421
    %v6502 = vpop.permute.xlu0 %6501
    %6505 = vset.pattern.permute.xlu0 0
    %6506 = vperm.xlu0 %6505, %v6426
    %v6507 = vpop.permute.xlu0 %6506
    %6510 = vset.pattern.permute.xlu0 0
    %6511 = vperm.xlu0 %6510, %v6431
    %v6512 = vpop.permute.xlu0 %6511
    %6515 = vset.pattern.permute.xlu0 0
    %6516 = vperm.xlu0 %6515, %v6436
    %v6517 = vpop.permute.xlu0 %6516
    %6520 = vset.pattern.permute.xlu0 0
    %6521 = vperm.xlu0 %6520, %v6441
    %v6522 = vpop.permute.xlu0 %6521
    %6525 = vset.pattern.permute.xlu0 0
    %6526 = vperm.xlu0 %6525, %v6446
    %v6527 = vpop.permute.xlu0 %6526
    %6530 = vset.pattern.permute.xlu0 0
    %6531 = vperm.xlu0 %6530, %v6451
    %v6532 = vpop.permute.xlu0 %6531
    %6535 = vset.pattern.permute.xlu0 0
    %6536 = vperm.xlu0 %6535, %v6456
    %v6537 = vpop.permute.xlu0 %6536
    %6540 = vset.pattern.permute.xlu0 0
    %6541 = vperm.xlu0 %6540, %v6461
    %v6542 = vpop.permute.xlu0 %6541
    %6545 = vset.pattern.permute.xlu0 0
    %6546 = vperm.xlu0 %6545, %v6466
    %v6547 = vpop.permute.xlu0 %6546
    %6550 = vset.pattern.permute.xlu0 0
    %6551 = vperm.xlu0 %6550, %v6471
    %v6552 = vpop.permute.xlu0 %6551
    %v6554 = vlaneseq
    %v6555 = vshrl.u32 %v6554, 7
    %v6556 = vsub.s32 0, %v6555
    %v6557 = vrot.slane %v6310, %v6556
    %v6558 = vadd.f32 %v6477, %v6557
    %v6559 = vadd.f32 %v6482, %v6557
    %v6560 = vadd.f32 %v6487, %v6557
    %v6561 = vadd.f32 %v6492, %v6557
    %v6562 = vadd.f32 %v6497, %v6557
    %v6563 = vadd.f32 %v6502, %v6557
    %v6564 = vadd.f32 %v6507, %v6557
    %v6565 = vadd.f32 %v6512, %v6557
    %v6566 = vadd.f32 %v6517, %v6557
    %v6567 = vadd.f32 %v6522, %v6557
    %v6568 = vadd.f32 %v6527, %v6557
    %v6569 = vadd.f32 %v6532, %v6557
    %v6570 = vadd.f32 %v6537, %v6557
    %v6571 = vadd.f32 %v6542, %v6557
    %v6572 = vadd.f32 %v6547, %v6557
    %v6573 = vadd.f32 %v6552, %v6557
    %vm6574 = vcmp.gt.f32.partialorder %v6558, 0.0
    %vm6575 = vcmp.gt.f32.partialorder %v6559, 0.0
    %vm6576 = vcmp.gt.f32.partialorder %v6560, 0.0
    %vm6577 = vcmp.gt.f32.partialorder %v6561, 0.0
    %vm6578 = vcmp.gt.f32.partialorder %v6562, 0.0
    %vm6579 = vcmp.gt.f32.partialorder %v6563, 0.0
    %vm6580 = vcmp.gt.f32.partialorder %v6564, 0.0
    %vm6581 = vcmp.gt.f32.partialorder %v6565, 0.0
    %vm6582 = vcmp.gt.f32.partialorder %v6566, 0.0
    %vm6583 = vcmp.gt.f32.partialorder %v6567, 0.0
    %vm6584 = vcmp.gt.f32.partialorder %v6568, 0.0
    %vm6585 = vcmp.gt.f32.partialorder %v6569, 0.0
    %vm6586 = vcmp.gt.f32.partialorder %v6570, 0.0
    %vm6587 = vcmp.gt.f32.partialorder %v6571, 0.0
    %vm6588 = vcmp.gt.f32.partialorder %v6572, 0.0
    %vm6589 = vcmp.gt.f32.partialorder %v6573, 0.0
    %v6590 = vmul.f32 %v6558, 0.2
    %v6591 = vmul.f32 %v6559, 0.2
    %v6592 = vmul.f32 %v6560, 0.2
    %v6593 = vmul.f32 %v6561, 0.2
    %v6594 = vmul.f32 %v6562, 0.2
    %v6595 = vmul.f32 %v6563, 0.2
    %v6596 = vmul.f32 %v6564, 0.2
    %v6597 = vmul.f32 %v6565, 0.2
    %v6598 = vmul.f32 %v6566, 0.2
    %v6599 = vmul.f32 %v6567, 0.2
    %v6600 = vmul.f32 %v6568, 0.2
    %v6601 = vmul.f32 %v6569, 0.2
    %v6602 = vmul.f32 %v6570, 0.2
    %v6603 = vmul.f32 %v6571, 0.2
    %v6604 = vmul.f32 %v6572, 0.2
    %v6605 = vmul.f32 %v6573, 0.2
    %v6606 = vsel %vm6574, %v6558, %v6590
    %v6607 = vsel %vm6575, %v6559, %v6591
    %v6608 = vsel %vm6576, %v6560, %v6592
    %v6609 = vsel %vm6577, %v6561, %v6593
    %v6610 = vsel %vm6578, %v6562, %v6594
    %v6611 = vsel %vm6579, %v6563, %v6595
    %v6612 = vsel %vm6580, %v6564, %v6596
    %v6613 = vsel %vm6581, %v6565, %v6597
    %v6614 = vsel %vm6582, %v6566, %v6598
    %v6615 = vsel %vm6583, %v6567, %v6599
    %v6616 = vsel %vm6584, %v6568, %v6600
    %v6617 = vsel %vm6585, %v6569, %v6601
    %v6618 = vsel %vm6586, %v6570, %v6602
    %v6619 = vsel %vm6587, %v6571, %v6603
    %v6620 = vsel %vm6588, %v6572, %v6604
    %v6621 = vsel %vm6589, %v6573, %v6605
    %v6622 = vld [vmem:[%s1] sm:$0xff]
    %v6623 = vld [vmem:[%s1 + $0x20] sm:$0xff]
    %v6624 = vld [vmem:[%s1 + $0x40] sm:$0xff]
    %v6625 = vld [vmem:[%s1 + $0x60] sm:$0xff]
    %v6626 = vld [vmem:[%s1 + $0x80] sm:$0xff]
    %v6627 = vld [vmem:[%s1 + $0xa0] sm:$0xff]
    %v6628 = vld [vmem:[%s1 + $0xc0] sm:$0xff]
    %v6629 = vld [vmem:[%s1 + $0xe0] sm:$0xff]
    %v6630 = vld [vmem:[%s1 + $0x100] sm:$0xff]
    %v6631 = vld [vmem:[%s1 + $0x120] sm:$0xff]
    %v6632 = vld [vmem:[%s1 + $0x140] sm:$0xff]
    %v6633 = vld [vmem:[%s1 + $0x160] sm:$0xff]
    %v6634 = vld [vmem:[%s1 + $0x180] sm:$0xff]
    %v6635 = vld [vmem:[%s1 + $0x1a0] sm:$0xff]
    %v6636 = vld [vmem:[%s1 + $0x1c0] sm:$0xff]
    %v6637 = vld [vmem:[%s1 + $0x1e0] sm:$0xff]
    %v6638 = vadd.f32 %v6606, %v6622
    %v6639 = vadd.f32 %v6607, %v6623
    %v6640 = vadd.f32 %v6608, %v6624
    %v6641 = vadd.f32 %v6609, %v6625
    %v6642 = vadd.f32 %v6610, %v6626
    %v6643 = vadd.f32 %v6611, %v6627
    %v6644 = vadd.f32 %v6612, %v6628
    %v6645 = vadd.f32 %v6613, %v6629
    %v6646 = vadd.f32 %v6614, %v6630
    %v6647 = vadd.f32 %v6615, %v6631
    %v6648 = vadd.f32 %v6616, %v6632
    %v6649 = vadd.f32 %v6617, %v6633
    %v6650 = vadd.f32 %v6618, %v6634
    %v6651 = vadd.f32 %v6619, %v6635
    %v6652 = vadd.f32 %v6620, %v6636
    %v6653 = vadd.f32 %v6621, %v6637
    %6654 = vmax.xlane.f32.xlu0 %v6638
    %v6655 = vpop.xlane.xlu0 %6654
    %6656 = vmax.xlane.f32.xlu0 %v6639
    %v6657 = vpop.xlane.xlu0 %6656
    %6658 = vmax.xlane.f32.xlu0 %v6640
    %v6659 = vpop.xlane.xlu0 %6658
    %6660 = vmax.xlane.f32.xlu0 %v6641
    %v6661 = vpop.xlane.xlu0 %6660
    %6662 = vmax.xlane.f32.xlu0 %v6642
    %v6663 = vpop.xlane.xlu0 %6662
    %6664 = vmax.xlane.f32.xlu0 %v6643
    %v6665 = vpop.xlane.xlu0 %6664
    %6666 = vmax.xlane.f32.xlu0 %v6644
    %v6667 = vpop.xlane.xlu0 %6666
    %6668 = vmax.xlane.f32.xlu0 %v6645
    %v6669 = vpop.xlane.xlu0 %6668
    %6670 = vmax.xlane.f32.xlu0 %v6646
    %v6671 = vpop.xlane.xlu0 %6670
    %6672 = vmax.xlane.f32.xlu0 %v6647
    %v6673 = vpop.xlane.xlu0 %6672
    %6674 = vmax.xlane.f32.xlu0 %v6648
    %v6675 = vpop.xlane.xlu0 %6674
    %6676 = vmax.xlane.f32.xlu0 %v6649
    %v6677 = vpop.xlane.xlu0 %6676
    %6678 = vmax.xlane.f32.xlu0 %v6650
    %v6679 = vpop.xlane.xlu0 %6678
    %6680 = vmax.xlane.f32.xlu0 %v6651
    %v6681 = vpop.xlane.xlu0 %6680
    %6682 = vmax.xlane.f32.xlu0 %v6652
    %v6683 = vpop.xlane.xlu0 %6682
    %6684 = vmax.xlane.f32.xlu0 %v6653
    %v6685 = vpop.xlane.xlu0 %6684
    %v6686 = vsub.f32 %v6638, %v6655
    %v6687 = vsub.f32 %v6639, %v6657
    %v6688 = vsub.f32 %v6640, %v6659
    %v6689 = vsub.f32 %v6641, %v6661
    %v6690 = vsub.f32 %v6642, %v6663
    %v6691 = vsub.f32 %v6643, %v6665
    %v6692 = vsub.f32 %v6644, %v6667
    %v6693 = vsub.f32 %v6645, %v6669
    %v6694 = vsub.f32 %v6646, %v6671
    %v6695 = vsub.f32 %v6647, %v6673
    %v6696 = vsub.f32 %v6648, %v6675
    %v6697 = vsub.f32 %v6649, %v6677
    %v6698 = vsub.f32 %v6650, %v6679
    %v6699 = vsub.f32 %v6651, %v6681
    %v6700 = vsub.f32 %v6652, %v6683
    %v6701 = vsub.f32 %v6653, %v6685
    %v6702 = vmul.f32 %v6686, 1.442695
    %v6703 = vpow.pop %v6702
    %v6704 = vmul.f32 %v6687, 1.442695
    %v6705 = vpow.pop %v6704
    %v6706 = vmul.f32 %v6688, 1.442695
    %v6707 = vpow.pop %v6706
    %v6708 = vmul.f32 %v6689, 1.442695
    %v6709 = vpow.pop %v6708
    %v6710 = vmul.f32 %v6690, 1.442695
    %v6711 = vpow.pop %v6710
    %v6712 = vmul.f32 %v6691, 1.442695
    %v6713 = vpow.pop %v6712
    %v6714 = vmul.f32 %v6692, 1.442695
    %v6715 = vpow.pop %v6714
    %v6716 = vmul.f32 %v6693, 1.442695
    %v6717 = vpow.pop %v6716
    %v6718 = vmul.f32 %v6694, 1.442695
    %v6719 = vpow.pop %v6718
    %v6720 = vmul.f32 %v6695, 1.442695
    %v6721 = vpow.pop %v6720
    %v6722 = vmul.f32 %v6696, 1.442695
    %v6723 = vpow.pop %v6722
    %v6724 = vmul.f32 %v6697, 1.442695
    %v6725 = vpow.pop %v6724
    %v6726 = vmul.f32 %v6698, 1.442695
    %v6727 = vpow.pop %v6726
    %v6728 = vmul.f32 %v6699, 1.442695
    %v6729 = vpow.pop %v6728
    %v6730 = vmul.f32 %v6700, 1.442695
    %v6731 = vpow.pop %v6730
    %v6732 = vmul.f32 %v6701, 1.442695
    %v6733 = vpow.pop %v6732
    %6734 = vadd.xlane.f32.xlu0 %v6703
    %v6735 = vpop.xlane.xlu0 %6734
    %6736 = vadd.xlane.f32.xlu0 %v6705
    %v6737 = vpop.xlane.xlu0 %6736
    %6738 = vadd.xlane.f32.xlu0 %v6707
    %v6739 = vpop.xlane.xlu0 %6738
    %6740 = vadd.xlane.f32.xlu0 %v6709
    %v6741 = vpop.xlane.xlu0 %6740
    %6742 = vadd.xlane.f32.xlu0 %v6711
    %v6743 = vpop.xlane.xlu0 %6742
    %6744 = vadd.xlane.f32.xlu0 %v6713
    %v6745 = vpop.xlane.xlu0 %6744
    %6746 = vadd.xlane.f32.xlu0 %v6715
    %v6747 = vpop.xlane.xlu0 %6746
    %6748 = vadd.xlane.f32.xlu0 %v6717
    %v6749 = vpop.xlane.xlu0 %6748
    %6750 = vadd.xlane.f32.xlu0 %v6719
    %v6751 = vpop.xlane.xlu0 %6750
    %6752 = vadd.xlane.f32.xlu0 %v6721
    %v6753 = vpop.xlane.xlu0 %6752
    %6754 = vadd.xlane.f32.xlu0 %v6723
    %v6755 = vpop.xlane.xlu0 %6754
    %6756 = vadd.xlane.f32.xlu0 %v6725
    %v6757 = vpop.xlane.xlu0 %6756
    %6758 = vadd.xlane.f32.xlu0 %v6727
    %v6759 = vpop.xlane.xlu0 %6758
    %6760 = vadd.xlane.f32.xlu0 %v6729
    %v6761 = vpop.xlane.xlu0 %6760
    %6762 = vadd.xlane.f32.xlu0 %v6731
    %v6763 = vpop.xlane.xlu0 %6762
    %6764 = vadd.xlane.f32.xlu0 %v6733
    %v6765 = vpop.xlane.xlu0 %6764
    %v6766 = vrcp.pop %v6735
    %v6767 = vmul.f32 1.0, %v6766
    %v6768 = vrcp.pop %v6737
    %v6769 = vmul.f32 1.0, %v6768
    %v6770 = vrcp.pop %v6739
    %v6771 = vmul.f32 1.0, %v6770
    %v6772 = vrcp.pop %v6741
    %v6773 = vmul.f32 1.0, %v6772
    %v6774 = vrcp.pop %v6743
    %v6775 = vmul.f32 1.0, %v6774
    %v6776 = vrcp.pop %v6745
    %v6777 = vmul.f32 1.0, %v6776
    %v6778 = vrcp.pop %v6747
    %v6779 = vmul.f32 1.0, %v6778
    %v6780 = vrcp.pop %v6749
    %v6781 = vmul.f32 1.0, %v6780
    %v6782 = vrcp.pop %v6751
    %v6783 = vmul.f32 1.0, %v6782
    %v6784 = vrcp.pop %v6753
    %v6785 = vmul.f32 1.0, %v6784
    %v6786 = vrcp.pop %v6755
    %v6787 = vmul.f32 1.0, %v6786
    %v6788 = vrcp.pop %v6757
    %v6789 = vmul.f32 1.0, %v6788
    %v6790 = vrcp.pop %v6759
    %v6791 = vmul.f32 1.0, %v6790
    %v6792 = vrcp.pop %v6761
    %v6793 = vmul.f32 1.0, %v6792
    %v6794 = vrcp.pop %v6763
    %v6795 = vmul.f32 1.0, %v6794
    %v6796 = vrcp.pop %v6765
    %v6797 = vmul.f32 1.0, %v6796
    %v6798 = vpack.c.bf16 %v6705, %v6703
    %v6799 = vpack.c.bf16 %v6709, %v6707
    %v6800 = vpack.c.bf16 %v6713, %v6711
    %v6801 = vpack.c.bf16 %v6717, %v6715
    %v6802 = vpack.c.bf16 %v6721, %v6719
    %v6803 = vpack.c.bf16 %v6725, %v6723
    %v6804 = vpack.c.bf16 %v6729, %v6727
    %v6805 = vpack.c.bf16 %v6733, %v6731
    %v6806 = vpack.c.bf16 %v6183, %v6180
    %v6807 = vpack.c.bf16 %v6191, %v6188
    %v6808 = vpack.c.bf16 %v6199, %v6196
    %v6809 = vpack.c.bf16 %v6207, %v6204
    %v6810 = vpack.c.bf16 %v6215, %v6212
    %v6811 = vpack.c.bf16 %v6223, %v6220
    %v6812 = vpack.c.bf16 %v6231, %v6228
    %v6813 = vpack.c.bf16 %v6239, %v6236
    %6814 = vmatprep.subr.bf16.mxu0 0
    %6815 = vmatpush1.bf16.msra.mxu0 %v6813
    %6816 = vmatprep.subr.bf16.mxu0 0
    %6817 = vmatpush1.bf16.msra.mxu0 %v6812
    %6818 = vmatprep.subr.bf16.mxu0 0
    %6819 = vmatpush1.bf16.msra.mxu0 %v6811
    %6820 = vmatprep.subr.bf16.mxu0 0
    %6821 = vmatpush1.bf16.msra.mxu0 %v6810
    %6822 = vmatprep.subr.bf16.mxu0 0
    %6823 = vmatpush1.bf16.msra.mxu0 %v6809
    %6824 = vmatprep.subr.bf16.mxu0 0
    %6825 = vmatpush1.bf16.msra.mxu0 %v6808
    %6826 = vmatprep.subr.bf16.mxu0 0
    %6827 = vmatpush1.bf16.msra.mxu0 %v6807
    %6828 = vmatprep.subr.bf16.mxu0 0
    %6829 = vmatpush1.bf16.msra.mxu0 %v6806
    %6830 = vmatprep.subr.bf16.mxu0 0
    %6831 = vmatpush2.bf16.msra.mxu0 0
    %6832 = vmatprep.subr.bf16.mxu0 0
    %6833 = vmatpush2.bf16.msra.mxu0 0
    %6834 = vmatprep.subr.bf16.mxu0 0
    %6835 = vmatpush2.bf16.msra.mxu0 0
    %6836 = vmatprep.subr.bf16.mxu0 0
    %6837 = vmatpush2.bf16.msra.mxu0 0
    %6838 = vmatprep.subr.bf16.mxu0 0
    %6839 = vmatpush2.bf16.msra.mxu0 0
    %6840 = vmatprep.subr.bf16.mxu0 0
    %6841 = vmatpush2.bf16.msra.mxu0 0
    %6842 = vmatprep.subr.bf16.mxu0 0
    %6843 = vmatpush2.bf16.msra.mxu0 0
    %6844 = vmatprep.subr.bf16.mxu0 0
    %6845 = vmatpush2.bf16.msra.mxu0 0
    %6846 = vmatprep.mubr.bf16.mxu0 0
    %6847 = vmatmul.mubr.bf16.gmra.mxu0 %v6798
    %v6848 = vpop.f32.mrf.mxu0
    %v6849 = vadd.f32 0.0, %v6848
    %v6850 = vpop.f32.mrf.mxu0
    %v6851 = vpop.f32.mrf.mxu0
    %v6852 = vadd.f32 0.0, %v6851
    %v6853 = vpop.f32.mrf.mxu0
    %6854 = vmatprep.mubr.bf16.mxu0 0
    %6855 = vmatmul.mubr.bf16.gmra.mxu0 %v6799
    %v6856 = vpop.f32.mrf.mxu0
    %v6857 = vadd.f32 0.0, %v6856
    %v6858 = vpop.f32.mrf.mxu0
    %v6859 = vpop.f32.mrf.mxu0
    %v6860 = vadd.f32 0.0, %v6859
    %v6861 = vpop.f32.mrf.mxu0
    %6862 = vmatprep.mubr.bf16.mxu0 0
    %6863 = vmatmul.mubr.bf16.gmra.mxu0 %v6800
    %v6864 = vpop.f32.mrf.mxu0
    %v6865 = vadd.f32 0.0, %v6864
    %v6866 = vpop.f32.mrf.mxu0
    %v6867 = vpop.f32.mrf.mxu0
    %v6868 = vadd.f32 0.0, %v6867
    %v6869 = vpop.f32.mrf.mxu0
    %6870 = vmatprep.mubr.bf16.mxu0 0
    %6871 = vmatmul.mubr.bf16.gmra.mxu0 %v6801
    %v6872 = vpop.f32.mrf.mxu0
    %v6873 = vadd.f32 0.0, %v6872
    %v6874 = vpop.f32.mrf.mxu0
    %v6875 = vpop.f32.mrf.mxu0
    %v6876 = vadd.f32 0.0, %v6875
    %v6877 = vpop.f32.mrf.mxu0
    %6878 = vmatprep.mubr.bf16.mxu0 0
    %6879 = vmatmul.mubr.bf16.gmra.mxu0 %v6802
    %v6880 = vpop.f32.mrf.mxu0
    %v6881 = vadd.f32 0.0, %v6880
    %v6882 = vpop.f32.mrf.mxu0
    %v6883 = vpop.f32.mrf.mxu0
    %v6884 = vadd.f32 0.0, %v6883
    %v6885 = vpop.f32.mrf.mxu0
    %6886 = vmatprep.mubr.bf16.mxu0 0
    %6887 = vmatmul.mubr.bf16.gmra.mxu0 %v6803
    %v6888 = vpop.f32.mrf.mxu0
    %v6889 = vadd.f32 0.0, %v6888
    %v6890 = vpop.f32.mrf.mxu0
    %v6891 = vpop.f32.mrf.mxu0
    %v6892 = vadd.f32 0.0, %v6891
    %v6893 = vpop.f32.mrf.mxu0
    %6894 = vmatprep.mubr.bf16.mxu0 0
    %6895 = vmatmul.mubr.bf16.gmra.mxu0 %v6804
    %v6896 = vpop.f32.mrf.mxu0
    %v6897 = vadd.f32 0.0, %v6896
    %v6898 = vpop.f32.mrf.mxu0
    %v6899 = vpop.f32.mrf.mxu0
    %v6900 = vadd.f32 0.0, %v6899
    %v6901 = vpop.f32.mrf.mxu0
    %6902 = vmatprep.mubr.bf16.mxu0 0
    %6903 = vmatmul.mubr.bf16.gmra.mxu0 %v6805
    %v6904 = vpop.f32.mrf.mxu0
    %v6905 = vadd.f32 0.0, %v6904
    %v6906 = vpop.f32.mrf.mxu0
    %v6907 = vpop.f32.mrf.mxu0
    %v6908 = vadd.f32 0.0, %v6907
    %v6909 = vpop.f32.mrf.mxu0
    %6910 = vdwg.mxu0
    %v6911 = vmul.f32 %v6849, %v6767
    %v6912 = vmul.f32 %v6852, %v6769
    %v6913 = vmul.f32 %v6857, %v6771
    %v6914 = vmul.f32 %v6860, %v6773
    %v6915 = vmul.f32 %v6865, %v6775
    %v6916 = vmul.f32 %v6868, %v6777
    %v6917 = vmul.f32 %v6873, %v6779
    %v6918 = vmul.f32 %v6876, %v6781
    %v6919 = vmul.f32 %v6881, %v6783
    %v6920 = vmul.f32 %v6884, %v6785
    %v6921 = vmul.f32 %v6889, %v6787
    %v6922 = vmul.f32 %v6892, %v6789
    %v6923 = vmul.f32 %v6897, %v6791
    %v6924 = vmul.f32 %v6900, %v6793
    %v6925 = vmul.f32 %v6905, %v6795
    %v6926 = vmul.f32 %v6908, %v6797
    %v6927 = vld [vmem:[%s14] sm:$0x1]
    %v6929 = vlaneseq
    %v6930 = vshrl.u32 %v6929, 7
    %v6931 = vsub.s32 0, %v6930
    %v6932 = vrot.slane %v6927, %v6931
    %v6934 = vadd.f32 %v6911, %v6932
    %v6935 = vadd.f32 %v6912, %v6932
    %v6936 = vadd.f32 %v6913, %v6932
    %v6937 = vadd.f32 %v6914, %v6932
    %v6938 = vadd.f32 %v6915, %v6932
    %v6939 = vadd.f32 %v6916, %v6932
    %v6940 = vadd.f32 %v6917, %v6932
    %v6941 = vadd.f32 %v6918, %v6932
    %v6942 = vadd.f32 %v6919, %v6932
    %v6943 = vadd.f32 %v6920, %v6932
    %v6944 = vadd.f32 %v6921, %v6932
    %v6945 = vadd.f32 %v6922, %v6932
    %v6946 = vadd.f32 %v6923, %v6932
    %v6947 = vadd.f32 %v6924, %v6932
    %v6948 = vadd.f32 %v6925, %v6932
    %v6949 = vadd.f32 %v6926, %v6932
    %v6950 = vld [vmem:[%s2] sm:$0x3]
    %6951 = vmatprep.subr.mxu0 0.0
    %6952 = vmatpush1.msra.mxu0 %v6949
    %6953 = vmatprep.subr.mxu0 0.0
    %6954 = vmatpush1.msra.mxu0 %v6948
    %6955 = vmatprep.subr.mxu0 0.0
    %6956 = vmatpush1.msra.mxu0 %v6947
    %6957 = vmatprep.subr.mxu0 0.0
    %6958 = vmatpush1.msra.mxu0 %v6946
    %6959 = vmatprep.subr.mxu0 0.0
    %6960 = vmatpush1.msra.mxu0 %v6945
    %6961 = vmatprep.subr.mxu0 0.0
    %6962 = vmatpush1.msra.mxu0 %v6944
    %6963 = vmatprep.subr.mxu0 0.0
    %6964 = vmatpush1.msra.mxu0 %v6943
    %6965 = vmatprep.subr.mxu0 0.0
    %6966 = vmatpush1.msra.mxu0 %v6942
    %6967 = vmatprep.subr.mxu0 0.0
    %6968 = vmatpush1.msra.mxu0 %v6941
    %6969 = vmatprep.subr.mxu0 0.0
    %6970 = vmatpush1.msra.mxu0 %v6940
    %6971 = vmatprep.subr.mxu0 0.0
    %6972 = vmatpush1.msra.mxu0 %v6939
    %6973 = vmatprep.subr.mxu0 0.0
    %6974 = vmatpush1.msra.mxu0 %v6938
    %6975 = vmatprep.subr.mxu0 0.0
    %6976 = vmatpush1.msra.mxu0 %v6937
    %6977 = vmatprep.subr.mxu0 0.0
    %6978 = vmatpush1.msra.mxu0 %v6936
    %6979 = vmatprep.subr.mxu0 0.0
    %6980 = vmatpush1.msra.mxu0 %v6935
    %6981 = vmatprep.subr.mxu0 0.0
    %6982 = vmatpush1.msra.mxu0 %v6934
    %6983 = vmatprep.subr.mxu0 0.0
    %6984 = vmatpush2.msra.mxu0 0.0
    %6985 = vmatprep.subr.mxu0 0.0
    %6986 = vmatpush2.msra.mxu0 0.0
    %6987 = vmatprep.subr.mxu0 0.0
    %6988 = vmatpush2.msra.mxu0 0.0
    %6989 = vmatprep.subr.mxu0 0.0
    %6990 = vmatpush2.msra.mxu0 0.0
    %6991 = vmatprep.subr.mxu0 0.0
    %6992 = vmatpush2.msra.mxu0 0.0
    %6993 = vmatprep.subr.mxu0 0.0
    %6994 = vmatpush2.msra.mxu0 0.0
    %6995 = vmatprep.subr.mxu0 0.0
    %6996 = vmatpush2.msra.mxu0 0.0
    %6997 = vmatprep.subr.mxu0 0.0
    %6998 = vmatpush2.msra.mxu0 0.0
    %6999 = vmatprep.subr.mxu0 0.0
    %7000 = vmatpush2.msra.mxu0 0.0
    %7001 = vmatprep.subr.mxu0 0.0
    %7002 = vmatpush2.msra.mxu0 0.0
    %7003 = vmatprep.subr.mxu0 0.0
    %7004 = vmatpush2.msra.mxu0 0.0
    %7005 = vmatprep.subr.mxu0 0.0
    %7006 = vmatpush2.msra.mxu0 0.0
    %7007 = vmatprep.subr.mxu0 0.0
    %7008 = vmatpush2.msra.mxu0 0.0
    %7009 = vmatprep.subr.mxu0 0.0
    %7010 = vmatpush2.msra.mxu0 0.0
    %7011 = vmatprep.subr.mxu0 0.0
    %7012 = vmatpush2.msra.mxu0 0.0
    %7013 = vmatprep.subr.mxu0 0.0
    %7014 = vmatpush2.msra.mxu0 0.0
    %7015 = vmatprep.mubr.f32.mxu0 0.0
    %7016 = vmatmul.mubr.f32.gmra.mxu0 %v6950
    %v7017 = vpop.f32.mrf.mxu0
    %v7018 = vadd.f32 0.0, %v7017
    %v7019 = vpop.f32.mrf.mxu0
    %7020 = vdwg.mxu0
    %vm7021 = vcmask 123904
    %7022 = vst.msk [vmem:[#allocation6] sm:$0x3] %vm7021, %v7018
    %v7023 = vld [vmem:[%s16] sm:$0xff]
    %v7024 = vld [vmem:[%s16 + $0x8] sm:$0xff]
    %v7025 = vld [vmem:[%s16 + $0x10] sm:$0xff]
    %v7026 = vld [vmem:[%s16 + $0x18] sm:$0xff]
    %v7027 = vld [vmem:[%s16 + $0x20] sm:$0xff]
    %v7028 = vld [vmem:[%s16 + $0x28] sm:$0xff]
    %v7029 = vld [vmem:[%s16 + $0x30] sm:$0xff]
    %v7030 = vld [vmem:[%s16 + $0x38] sm:$0xff]
    %v7031 = vld [vmem:[%s16 + $0x40] sm:$0xff]
    %v7032 = vld [vmem:[%s16 + $0x48] sm:$0xff]
    %v7033 = vld [vmem:[%s16 + $0x50] sm:$0xff]
    %v7034 = vld [vmem:[%s16 + $0x58] sm:$0xff]
    %v7035 = vld [vmem:[%s16 + $0x60] sm:$0xff]
    %v7036 = vld [vmem:[%s16 + $0x68] sm:$0xff]
    %v7037 = vld [vmem:[%s16 + $0x70] sm:$0xff]
    %v7038 = vld [vmem:[%s16 + $0x78] sm:$0xff]
    %v7039 = vld [vmem:[%s17] sm:$0x1]
    %v7041 = vlaneseq
    %v7042 = vshrl.u32 %v7041, 7
    %v7043 = vsub.s32 0, %v7042
    %v7044 = vrot.slane %v7039, %v7043
    %7046 = vmatprep.subr.mxu0 0.0
    %7047 = vmatpush1.msra.mxu0 %v7038
    %7048 = vmatprep.subr.mxu0 0.0
    %7049 = vmatpush1.msra.mxu0 %v7037
    %7050 = vmatprep.subr.mxu0 0.0
    %7051 = vmatpush1.msra.mxu0 %v7036
    %7052 = vmatprep.subr.mxu0 0.0
    %7053 = vmatpush1.msra.mxu0 %v7035
    %7054 = vmatprep.subr.mxu0 0.0
    %7055 = vmatpush1.msra.mxu0 %v7034
    %7056 = vmatprep.subr.mxu0 0.0
    %7057 = vmatpush1.msra.mxu0 %v7033
    %7058 = vmatprep.subr.mxu0 0.0
    %7059 = vmatpush1.msra.mxu0 %v7032
    %7060 = vmatprep.subr.mxu0 0.0
    %7061 = vmatpush1.msra.mxu0 %v7031
    %7062 = vmatprep.subr.mxu0 0.0
    %7063 = vmatpush1.msra.mxu0 %v7030
    %7064 = vmatprep.subr.mxu0 0.0
    %7065 = vmatpush1.msra.mxu0 %v7029
    %7066 = vmatprep.subr.mxu0 0.0
    %7067 = vmatpush1.msra.mxu0 %v7028
    %7068 = vmatprep.subr.mxu0 0.0
    %7069 = vmatpush1.msra.mxu0 %v7027
    %7070 = vmatprep.subr.mxu0 0.0
    %7071 = vmatpush1.msra.mxu0 %v7026
    %7072 = vmatprep.subr.mxu0 0.0
    %7073 = vmatpush1.msra.mxu0 %v7025
    %7074 = vmatprep.subr.mxu0 0.0
    %7075 = vmatpush1.msra.mxu0 %v7024
    %7076 = vmatprep.subr.mxu0 0.0
    %7077 = vmatpush1.msra.mxu0 %v7023
    %7078 = vmatprep.subr.mxu0 0.0
    %7079 = vmatpush2.msra.mxu0 0.0
    %7080 = vmatprep.subr.mxu0 0.0
    %7081 = vmatpush2.msra.mxu0 0.0
    %7082 = vmatprep.subr.mxu0 0.0
    %7083 = vmatpush2.msra.mxu0 0.0
    %7084 = vmatprep.subr.mxu0 0.0
    %7085 = vmatpush2.msra.mxu0 0.0
    %7086 = vmatprep.subr.mxu0 0.0
    %7087 = vmatpush2.msra.mxu0 0.0
    %7088 = vmatprep.subr.mxu0 0.0
    %7089 = vmatpush2.msra.mxu0 0.0
    %7090 = vmatprep.subr.mxu0 0.0
    %7091 = vmatpush2.msra.mxu0 0.0
    %7092 = vmatprep.subr.mxu0 0.0
    %7093 = vmatpush2.msra.mxu0 0.0
    %7094 = vmatprep.subr.mxu0 0.0
    %7095 = vmatpush2.msra.mxu0 0.0
    %7096 = vmatprep.subr.mxu0 0.0
    %7097 = vmatpush2.msra.mxu0 0.0
    %7098 = vmatprep.subr.mxu0 0.0
    %7099 = vmatpush2.msra.mxu0 0.0
    %7100 = vmatprep.subr.mxu0 0.0
    %7101 = vmatpush2.msra.mxu0 0.0
    %7102 = vmatprep.subr.mxu0 0.0
    %7103 = vmatpush2.msra.mxu0 0.0
    %7104 = vmatprep.subr.mxu0 0.0
    %7105 = vmatpush2.msra.mxu0 0.0
    %7106 = vmatprep.subr.mxu0 0.0
    %7107 = vmatpush2.msra.mxu0 0.0
    %7108 = vmatprep.subr.mxu0 0.0
    %7109 = vmatpush2.msra.mxu0 0.0
    %7110 = vmatprep.mubr.f32.mxu0 0.0
    %7111 = vmatmul.mubr.f32.gmra.mxu0 %v7018
    %v7112 = vpop.f32.mrf.mxu0
    %v7113 = vadd.f32 %v7044, %v7112
    %v7114 = vpop.f32.mrf.mxu0
    %7115 = vdwg.mxu0
    %v7116 = vmax.f32 %v7113, 0.0
    %v7117 = vld [vmem:[%s18] sm:$0xff]
    %v7118 = vld [vmem:[%s18 + $0x8] sm:$0xff]
    %v7119 = vld [vmem:[%s18 + $0x10] sm:$0xff]
    %v7120 = vld [vmem:[%s18 + $0x18] sm:$0xff]
    %v7121 = vld [vmem:[%s19] sm:$0x1]
    %v7123 = vlaneseq
    %v7124 = vshrl.u32 %v7123, 7
    %v7125 = vsub.s32 0, %v7124
    %v7126 = vrot.slane %v7121, %v7125
    %vm7128 = vcmask 261120
    %v7130 = vsel %vm7128, %v7116, 0
    %7132 = vmatprep.subr.mxu0 0.0
    %7133 = vmatpush1.msra.mxu0 0.0
    %7134 = vmatprep.subr.mxu0 0.0
    %7135 = vmatpush1.msra.mxu0 0.0
    %7136 = vmatprep.subr.mxu0 0.0
    %7137 = vmatpush1.msra.mxu0 0.0
    %7138 = vmatprep.subr.mxu0 0.0
    %7139 = vmatpush1.msra.mxu0 0.0
    %7140 = vmatprep.subr.mxu0 0.0
    %7141 = vmatpush1.msra.mxu0 0.0
    %7142 = vmatprep.subr.mxu0 0.0
    %7143 = vmatpush1.msra.mxu0 0.0
    %7144 = vmatprep.subr.mxu0 0.0
    %7145 = vmatpush1.msra.mxu0 0.0
    %7146 = vmatprep.subr.mxu0 0.0
    %7147 = vmatpush1.msra.mxu0 0.0
    %7148 = vmatprep.subr.mxu0 0.0
    %7149 = vmatpush1.msra.mxu0 0.0
    %7150 = vmatprep.subr.mxu0 0.0
    %7151 = vmatpush1.msra.mxu0 0.0
    %7152 = vmatprep.subr.mxu0 0.0
    %7153 = vmatpush1.msra.mxu0 0.0
    %7154 = vmatprep.subr.mxu0 0.0
    %7155 = vmatpush1.msra.mxu0 0.0
    %7156 = vmatprep.subr.mxu0 0.0
    %7157 = vmatpush1.msra.mxu0 %v7120
    %7158 = vmatprep.subr.mxu0 0.0
    %7159 = vmatpush1.msra.mxu0 %v7119
    %7160 = vmatprep.subr.mxu0 0.0
    %7161 = vmatpush1.msra.mxu0 %v7118
    %7162 = vmatprep.subr.mxu0 0.0
    %7163 = vmatpush1.msra.mxu0 %v7117
    %7164 = vmatprep.subr.mxu0 0.0
    %7165 = vmatpush2.msra.mxu0 0.0
    %7166 = vmatprep.subr.mxu0 0.0
    %7167 = vmatpush2.msra.mxu0 0.0
    %7168 = vmatprep.subr.mxu0 0.0
    %7169 = vmatpush2.msra.mxu0 0.0
    %7170 = vmatprep.subr.mxu0 0.0
    %7171 = vmatpush2.msra.mxu0 0.0
    %7172 = vmatprep.subr.mxu0 0.0
    %7173 = vmatpush2.msra.mxu0 0.0
    %7174 = vmatprep.subr.mxu0 0.0
    %7175 = vmatpush2.msra.mxu0 0.0
    %7176 = vmatprep.subr.mxu0 0.0
    %7177 = vmatpush2.msra.mxu0 0.0
    %7178 = vmatprep.subr.mxu0 0.0
    %7179 = vmatpush2.msra.mxu0 0.0
    %7180 = vmatprep.subr.mxu0 0.0
    %7181 = vmatpush2.msra.mxu0 0.0
    %7182 = vmatprep.subr.mxu0 0.0
    %7183 = vmatpush2.msra.mxu0 0.0
    %7184 = vmatprep.subr.mxu0 0.0
    %7185 = vmatpush2.msra.mxu0 0.0
    %7186 = vmatprep.subr.mxu0 0.0
    %7187 = vmatpush2.msra.mxu0 0.0
    %7188 = vmatprep.subr.mxu0 0.0
    %7189 = vmatpush2.msra.mxu0 0.0
    %7190 = vmatprep.subr.mxu0 0.0
    %7191 = vmatpush2.msra.mxu0 0.0
    %7192 = vmatprep.subr.mxu0 0.0
    %7193 = vmatpush2.msra.mxu0 0.0
    %7194 = vmatprep.subr.mxu0 0.0
    %7195 = vmatpush2.msra.mxu0 0.0
    %7196 = vmatprep.mubr.f32.mxu0 0.0
    %7197 = vmatmul.mubr.f32.gmra.mxu0 %v7130
    %v7198 = vpop.f32.mrf.mxu0
    %v7199 = vadd.f32 %v7126, %v7198
    %v7200 = vpop.f32.mrf.mxu0
    %7201 = vdwg.mxu0
    %vm7202 = vcmask 9216
    %7203 = vst.msk [vmem:[#allocation4] sm:$0x3] %vm7202, %v7199
    // Predicated region
    $region82: #{tpu_custom_call.1} parent=1 // pred_check
      _
    $region83: #{tpu_custom_call.1} parent=1 // pred_check_branch
      %7205 = sbr.rel (0) target = $region85
    $region84: #{tpu_custom_call.1} parent=1 // pred_region
      %s7207 = ssub.s32 32, 32
      %7208 = vsyncadd [#allocation5], %s7207
      %s7210 = sshll.u32 [#allocation4], 4
      %s7211 = int_to_ptr.vmem [resolvable:$true] %s7210
      %7213 = dma.vmem_to_hbm [thread:$0]  %s7211, 32, %s20, [#allocation5]
    $region85: #{tpu_custom_call.1} parent=1 // pred_fallthru
      _
    // Predicated region
    $region86: #{tpu_custom_call.1} parent=1 // pred_check
      _
    $region87: #{tpu_custom_call.1} parent=1 // pred_check_branch
      %7215 = sbr.rel (0) target = $region89
    $region88: #{tpu_custom_call.1} parent=1 // pred_region
      %s7217 = ssub.s32 32, 32
      %7218 = vsyncadd [#allocation7], %s7217
      %s7220 = sshll.u32 [#allocation6], 4
      %s7221 = int_to_ptr.vmem [resolvable:$true] %s7220
      %7223 = dma.vmem_to_hbm [thread:$0]  %s7221, 32, %s21, [#allocation7]
    $region89: #{tpu_custom_call.1} parent=1 // pred_fallthru
      _
    // Predicated region
    $region90: #{tpu_custom_call.1} parent=1 // pred_check
      _
    $region91: #{tpu_custom_call.1} parent=1 // pred_check_branch
      %7225 = sbr.rel (0) target = $region93
    $region92: #{tpu_custom_call.1} parent=1 // pred_region
      %7226 = dma.done [#allocation5], 32
    $region93: #{tpu_custom_call.1} parent=1 // pred_fallthru
      _
    // Predicated region
    $region94: #{tpu_custom_call.1} parent=1 // pred_check
      _
    $region95: #{tpu_custom_call.1} parent=1 // pred_check_branch
      %7228 = sbr.rel (0) target = $region97
    $region96: #{tpu_custom_call.1} parent=1 // pred_region
      %7229 = dma.done [#allocation7], 32
    $region97: #{tpu_custom_call.1} parent=1 // pred_fallthru
      _
    %7230 = vsyncpa [#allocation5], 1
    %7231 = vsyncpa [#allocation7], 1

</llo_original>
